<compile_context>
chip_gen: v7x
topology: tpu7x:2x2x1
jax: 0.10.0
libtpu: 0.0.40
codegen_flags: <defaults>
</compile_context>

<pallas_src>
import functools

import jax
import jax.numpy as jnp
from jax.experimental import pallas as pl
from jax.experimental.pallas import tpu as pltpu


# ----------------------------------------------------------------------------
# Pallas kernel
# ----------------------------------------------------------------------------
def _res_cbam_kernel(Bt, C, H, W, HW,
                     x_ref, dw_ref, pw_ref, bnb_ref,
                     w1_ref, b1_ref, w2_ref, b2_ref, sa_ref,
                     o_ref):
    f32 = jnp.float32

    # ---- hoisted constants: index maps & edge masks (built once per step) ---
    lane = jax.lax.broadcasted_iota(jnp.int32, (1, HW), 1)
    if (W & (W - 1)) == 0:                       # power-of-two fast path
        w_idx = lane & (W - 1)
        h_idx = lane >> (W.bit_length() - 1)
    else:
        w_idx = lane % W
        h_idx = lane // W

    def _valid(dh, dw):
        """(1, HW) mask: source pixel (h+dh, w+dw) lies inside the image."""
        conds = []
        if dw < 0:
            conds.append(w_idx >= -dw)
        elif dw > 0:
            conds.append(w_idx <= W - 1 - dw)
        if dh < 0:
            conds.append(h_idx >= -dh)
        elif dh > 0:
            conds.append(h_idx <= H - 1 - dh)
        if not conds:
            return None
        m = conds[0]
        for c in conds[1:]:
            m = m & c
        return m

    dw_masks = [_valid(t // 3 - 1, t % 3 - 1) for t in range(9)]
    sa_masks = [_valid(t // 7 - 3, t % 7 - 3) for t in range(49)]
    is_avg_col = jax.lax.broadcasted_iota(jnp.int32, (C, 2), 1) == 0

    def shift(v, dh, dw):
        """In-register roll so that shifted[p] == v[p + dh*W + dw] (pre-mask)."""
        s = dh * W + dw
        if s == 0:
            return v
        return pltpu.roll(v, (-s) % HW, axis=1)

    # ---- weights resident across the whole batch block ----------------------
    dw_taps = dw_ref[...]        # (9, C, 1)   BN scale folded in
    pw = pw_ref[...]             # (C, C)      BN scale folded in, f32
    bnb = bnb_ref[...]           # (C, 1)      folded BN bias (shared by both convs)
    w1 = w1_ref[...]             # (Cr, C)
    b1 = b1_ref[...]             # (Cr, 1)
    w2 = w2_ref[...]             # (C, Cr)
    b2 = b2_ref[...]             # (C, 1)

    for b in range(Bt):
        x = x_ref[b].astype(f32)                     # (C, HW) lane-dense

        # ---- depthwise 3x3 conv (padding=1) + BN bias + ReLU ----------------
        acc = x * dw_taps[4]                          # center tap, no mask
        for t in range(9):
            if t == 4:
                continue
            sh = shift(x, t // 3 - 1, t % 3 - 1)
            acc = acc + jnp.where(dw_masks[t], sh, 0.0) * dw_taps[t]
        a = jnp.maximum(acc + bnb, 0.0)

        # ---- pointwise 1x1 conv == (C,C) @ (C,HW) matmul + BN bias + ReLU ---
        a = jnp.dot(pw, a, preferred_element_type=f32)
        a = jnp.maximum(a + bnb, 0.0)

        # ---- channel attention: avg & max columns share one MLP pass --------
        avg_ch = jnp.mean(a, axis=1, keepdims=True)   # (C, 1)
        max_ch = jnp.max(a, axis=1, keepdims=True)    # (C, 1)
        pooled = jnp.where(is_avg_col, avg_ch, max_ch)            # (C, 2)
        hid = jnp.maximum(
            jnp.dot(w1, pooled, preferred_element_type=f32) + b1, 0.0)   # (Cr, 2)
        z = jnp.dot(w2, hid, preferred_element_type=f32) + b2            # (C, 2)
        ca = jax.nn.sigmoid(jnp.sum(z, axis=1, keepdims=True))    # mlp(avg)+mlp(max)
        a = a * ca

        # ---- spatial attention: 7x7 conv on the (avg,max) pooled maps -------
        avg_sp = jnp.mean(a, axis=0, keepdims=True)   # (1, HW)
        max_sp = jnp.max(a, axis=0, keepdims=True)    # (1, HW)
        logits = avg_sp * sa_ref[0, 24] + max_sp * sa_ref[1, 24]  # center tap
        for t in range(49):
            if t == 24:
                continue
            dh, dwc = t // 7 - 3, t % 7 - 3
            contrib = (shift(avg_sp, dh, dwc) * sa_ref[0, t]
                       + shift(max_sp, dh, dwc) * sa_ref[1, t])
            logits = logits + jnp.where(sa_masks[t], contrib, 0.0)
        a = a * jax.nn.sigmoid(logits)

        # ---- residual + ReLU (lane-dense store) ------------------------------
        o_ref[b] = jnp.maximum(a + x, 0.0).astype(o_ref.dtype)


# ----------------------------------------------------------------------------
# Wrapper: parameter re-layout + pallas_call (no activation transposes)
# ----------------------------------------------------------------------------
def res_cbam_pallas(x_nchw, params, *, block_b=8):
    B, C, H, W = x_nchw.shape
    HW = H * W
    eps = 1e-5
    if HW % 128 != 0 or C % 8 != 0:
        raise ValueError("res_cbam_pallas expects C % 8 == 0 and H*W % 128 == 0 "
                         f"for lane-dense tiling; got C={C}, H*W={HW}.")

    gamma, beta = params["bn_gamma"], params["bn_beta"]
    rmean, rvar = params["bn_mean"], params["bn_var"]
    Cr = params["mlp_w1"].shape[0]

    # Folded inference BatchNorm: scale into the conv weights, only bias left.
    scale = (gamma / jnp.sqrt(rvar + eps)).astype(jnp.float32)        # (C,)
    bnb = (beta - rmean * scale).reshape(C, 1).astype(jnp.float32)    # (C, 1)

    dw_k = jnp.transpose(params["dw_w"].reshape(C, 9) * scale[:, None],
                         (1, 0))[:, :, None].astype(jnp.float32)      # (9, C, 1)
    pw_k = (params["pw_w"][:, :, 0, 0] * scale[:, None]).astype(jnp.float32)  # (C, C)
    w1_k = params["mlp_w1"].astype(jnp.float32)                       # (Cr, C)
    b1_k = params["mlp_b1"].reshape(Cr, 1).astype(jnp.float32)
    w2_k = params["mlp_w2"].astype(jnp.float32)                       # (C, Cr)
    b2_k = params["mlp_b2"].reshape(C, 1).astype(jnp.float32)
    sa_k = params["sa_w"].reshape(2, 49).astype(jnp.float32)          # SMEM scalars

    # NCHW -> (B, C, H*W) is a free reshape of the contiguous array.
    x_flat = x_nchw.reshape(B, C, HW).astype(jnp.float32)

    # Several batch elements per grid step amortize per-step overhead and keep
    # the (small) weights resident across more work per DMA.
    Bt = max(1, min(block_b, B))
    B_pad = ((B + Bt - 1) // Bt) * Bt
    if B_pad != B:
        x_flat = jnp.concatenate(
            [x_flat, jnp.zeros((B_pad - B, C, HW), jnp.float32)], axis=0)

    kernel = functools.partial(_res_cbam_kernel, Bt, C, H, W, HW)

    out_flat = pl.pallas_call(
        kernel,
        out_shape=jax.ShapeDtypeStruct((B_pad, C, HW), jnp.float32),
        grid=(B_pad // Bt,),
        in_specs=[
            pl.BlockSpec((Bt, C, HW), lambda i: (i, 0, 0)),     # x block
            pl.BlockSpec((9, C, 1), lambda i: (0, 0, 0)),       # depthwise taps
            pl.BlockSpec((C, C), lambda i: (0, 0)),             # pointwise weight
            pl.BlockSpec((C, 1), lambda i: (0, 0)),             # folded BN bias
            pl.BlockSpec((Cr, C), lambda i: (0, 0)),            # mlp w1
            pl.BlockSpec((Cr, 1), lambda i: (0, 0)),            # mlp b1
            pl.BlockSpec((C, Cr), lambda i: (0, 0)),            # mlp w2
            pl.BlockSpec((C, 1), lambda i: (0, 0)),             # mlp b2
            pl.BlockSpec(memory_space=pltpu.MemorySpace.SMEM),  # 7x7 tap scalars
        ],
        out_specs=pl.BlockSpec((Bt, C, HW), lambda i: (i, 0, 0)),
        compiler_params=pltpu.CompilerParams(
            dimension_semantics=("parallel",)),
    )(x_flat, dw_k, pw_k, bnb, w1_k, b1_k, w2_k, b2_k, sa_k)

    return out_flat[:B].reshape(B, C, H, W)


# ----------------------------------------------------------------------------
# Pure-JAX reference (NCHW, mirrors the PyTorch forward)
# ----------------------------------------------------------------------------
def res_cbam_ref(x, params):
    B, C, H, W = x.shape
    eps = 1e-5
    gamma, beta = params["bn_gamma"], params["bn_beta"]
    rmean, rvar = params["bn_mean"], params["bn_var"]
    w1, b1 = params["mlp_w1"], params["mlp_b1"]
    w2, b2 = params["mlp_w2"], params["mlp_b2"]
    dn = ("NCHW", "OIHW", "NCHW")

    def bn(y):
        s = gamma / jnp.sqrt(rvar + eps)
        b = beta - rmean * s
        return y * s[None, :, None, None] + b[None, :, None, None]

    out = jax.lax.conv_general_dilated(
        x, params["dw_w"], (1, 1), "SAME",
        feature_group_count=C, dimension_numbers=dn)
    out = jax.nn.relu(bn(out))
    out = jax.lax.conv_general_dilated(
        out, params["pw_w"], (1, 1), "SAME", dimension_numbers=dn)
    out = jax.nn.relu(bn(out))

    avg = out.mean(axis=(2, 3))
    mx = out.max(axis=(2, 3))

    def mlp(v):
        return jax.nn.relu(v @ w1.T + b1) @ w2.T + b2

    ca = jax.nn.sigmoid(mlp(avg) + mlp(mx))[:, :, None, None]
    out = out * ca

    avg_c = out.mean(axis=1, keepdims=True)
    max_c = out.max(axis=1, keepdims=True)
    cat = jnp.concatenate([avg_c, max_c], axis=1)
    sattn = jax.nn.sigmoid(jax.lax.conv_general_dilated(
        cat, params["sa_w"], (1, 1), "SAME", dimension_numbers=dn))
    out = out * sattn
    return jax.nn.relu(out + x)


# ----------------------------------------------------------------------------
# Deterministic parameter init (shapes per ResCBAM.__init__)
# ----------------------------------------------------------------------------
def init_params(key, C, reduction):
    Cr = C // reduction
    ks = jax.random.split(key, 11)
    return {
        "dw_w": 0.2 * jax.random.normal(ks[0], (C, 1, 3, 3), jnp.float32),
        "pw_w": 0.2 * jax.random.normal(ks[1], (C, C, 1, 1), jnp.float32),
        "bn_gamma": 1.0 + 0.1 * jax.random.normal(ks[2], (C,), jnp.float32),
        "bn_beta": 0.1 * jax.random.normal(ks[3], (C,), jnp.float32),
        "bn_mean": 0.1 * jax.random.normal(ks[4], (C,), jnp.float32),
        "bn_var": 0.5 + jax.random.uniform(ks[5], (C,), jnp.float32),
        "mlp_w1": 0.2 * jax.random.normal(ks[6], (Cr, C), jnp.float32),
        "mlp_b1": 0.1 * jax.random.normal(ks[7], (Cr,), jnp.float32),
        "mlp_w2": 0.2 * jax.random.normal(ks[8], (C, Cr), jnp.float32),
        "mlp_b2": 0.1 * jax.random.normal(ks[9], (C,), jnp.float32),
        "sa_w": 0.2 * jax.random.normal(ks[10], (1, 2, 7, 7), jnp.float32),
    }


if __name__ == "__main__":
    B, C, H, W, reduction = 2, 32, 16, 16, 16   # Cr = C // reduction = 2
    key = jax.random.PRNGKey(0)
    kx, kp = jax.random.split(key)
    x = jax.random.normal(kx, (B, C, H, W), jnp.float32)
    params = init_params(kp, C, reduction)

    out = jax.block_until_ready(res_cbam_pallas(x, params))
    ref = jax.block_until_ready(res_cbam_ref(x, params))

    assert out.shape == (B, C, H, W)
    err = float(jnp.max(jnp.abs(out - ref)))
    # Kernel and reference both run f32; the only expected deviation comes from
    # default-precision TPU matmul/conv rounding and summation-order differences
    # (typically <1e-3).  Keep a conservative bound.
    if err > 2e-2:
        raise SystemExit(f"numerical mismatch vs reference: max abs err = {err}")
    print("KERNEL_OK")
</pallas_src>

<mosaic_0001>
module attributes {stable_mosaic.version = 11 : i64} {
  func.func @_res_cbam_kernel(%arg0: i32, %arg1: memref<2x32x256xf32, #tpu.memory_space<vmem>>, %arg2: memref<9x32x1xf32, #tpu.memory_space<vmem>>, %arg3: memref<32x32xf32, #tpu.memory_space<vmem>>, %arg4: memref<32x1xf32, #tpu.memory_space<vmem>>, %arg5: memref<2x32xf32, #tpu.memory_space<vmem>>, %arg6: memref<2x1xf32, #tpu.memory_space<vmem>>, %arg7: memref<32x2xf32, #tpu.memory_space<vmem>>, %arg8: memref<32x1xf32, #tpu.memory_space<vmem>>, %arg9: memref<2x49xf32, #tpu.memory_space<smem>>, %arg10: memref<2x32x256xf32, #tpu.memory_space<vmem>>) attributes {dimension_semantics = [#tpu.dimension_semantics<parallel>], iteration_bounds = array<i64: 1>, scalar_prefetch = 0 : i64, scratch_operands = 0 : i64, tpu.core_type = #tpu.core_type<tc>, window_params = [{transform_indices = @transform_0, window_bounds = array<i64: 2, 32, 256>}, {pipeline_mode = #tpu.pipeline_mode<synchronous>, transform_indices = @transform_1, window_bounds = array<i64: 9, 32, 1>}, {pipeline_mode = #tpu.pipeline_mode<synchronous>, transform_indices = @transform_2, window_bounds = array<i64: 32, 32>}, {pipeline_mode = #tpu.pipeline_mode<synchronous>, transform_indices = @transform_3, window_bounds = array<i64: 32, 1>}, {pipeline_mode = #tpu.pipeline_mode<synchronous>, transform_indices = @transform_4, window_bounds = array<i64: 2, 32>}, {pipeline_mode = #tpu.pipeline_mode<synchronous>, transform_indices = @transform_5, window_bounds = array<i64: 2, 1>}, {pipeline_mode = #tpu.pipeline_mode<synchronous>, transform_indices = @transform_6, window_bounds = array<i64: 32, 2>}, {pipeline_mode = #tpu.pipeline_mode<synchronous>, transform_indices = @transform_7, window_bounds = array<i64: 32, 1>}, {transform_indices = @transform_8, window_bounds = array<i64: 2, 49>}, {transform_indices = @transform_9, window_bounds = array<i64: 2, 32, 256>}]} {
    %0 = tpu.iota {dimensions = array<i32: 1>} : vector<1x256xi32>
    %c15_i32 = arith.constant 15 : i32
    %1 = vector.broadcast %c15_i32 : i32 to vector<1x256xi32>
    %2 = arith.andi %0, %1 : vector<1x256xi32>
    %c4_i32 = arith.constant 4 : i32
    %3 = vector.broadcast %c4_i32 : i32 to vector<1x256xi32>
    %4 = arith.shrsi %0, %3 : vector<1x256xi32>
    %c1_i32 = arith.constant 1 : i32
    %5 = vector.broadcast %c1_i32 : i32 to vector<1x256xi32>
    %6 = arith.cmpi sge, %2, %5 : vector<1x256xi32>
    %c1_i32_0 = arith.constant 1 : i32
    %7 = vector.broadcast %c1_i32_0 : i32 to vector<1x256xi32>
    %8 = arith.cmpi sge, %4, %7 : vector<1x256xi32>
    %9 = arith.andi %6, %8 : vector<1x256xi1>
    %c1_i32_1 = arith.constant 1 : i32
    %10 = vector.broadcast %c1_i32_1 : i32 to vector<1x256xi32>
    %11 = arith.cmpi sge, %4, %10 : vector<1x256xi32>
    %c14_i32 = arith.constant 14 : i32
    %12 = vector.broadcast %c14_i32 : i32 to vector<1x256xi32>
    %13 = arith.cmpi sle, %2, %12 : vector<1x256xi32>
    %c1_i32_2 = arith.constant 1 : i32
    %14 = vector.broadcast %c1_i32_2 : i32 to vector<1x256xi32>
    %15 = arith.cmpi sge, %4, %14 : vector<1x256xi32>
    %16 = arith.andi %13, %15 : vector<1x256xi1>
    %c1_i32_3 = arith.constant 1 : i32
    %17 = vector.broadcast %c1_i32_3 : i32 to vector<1x256xi32>
    %18 = arith.cmpi sge, %2, %17 : vector<1x256xi32>
    %c14_i32_4 = arith.constant 14 : i32
    %19 = vector.broadcast %c14_i32_4 : i32 to vector<1x256xi32>
    %20 = arith.cmpi sle, %2, %19 : vector<1x256xi32>
    %c1_i32_5 = arith.constant 1 : i32
    %21 = vector.broadcast %c1_i32_5 : i32 to vector<1x256xi32>
    %22 = arith.cmpi sge, %2, %21 : vector<1x256xi32>
    %c14_i32_6 = arith.constant 14 : i32
    %23 = vector.broadcast %c14_i32_6 : i32 to vector<1x256xi32>
    %24 = arith.cmpi sle, %4, %23 : vector<1x256xi32>
    %25 = arith.andi %22, %24 : vector<1x256xi1>
    %c14_i32_7 = arith.constant 14 : i32
    %26 = vector.broadcast %c14_i32_7 : i32 to vector<1x256xi32>
    %27 = arith.cmpi sle, %4, %26 : vector<1x256xi32>
    %c14_i32_8 = arith.constant 14 : i32
    %28 = vector.broadcast %c14_i32_8 : i32 to vector<1x256xi32>
    %29 = arith.cmpi sle, %2, %28 : vector<1x256xi32>
    %c14_i32_9 = arith.constant 14 : i32
    %30 = vector.broadcast %c14_i32_9 : i32 to vector<1x256xi32>
    %31 = arith.cmpi sle, %4, %30 : vector<1x256xi32>
    %32 = arith.andi %29, %31 : vector<1x256xi1>
    %c3_i32 = arith.constant 3 : i32
    %33 = vector.broadcast %c3_i32 : i32 to vector<1x256xi32>
    %34 = arith.cmpi sge, %2, %33 : vector<1x256xi32>
    %c3_i32_10 = arith.constant 3 : i32
    %35 = vector.broadcast %c3_i32_10 : i32 to vector<1x256xi32>
    %36 = arith.cmpi sge, %4, %35 : vector<1x256xi32>
    %37 = arith.andi %34, %36 : vector<1x256xi1>
    %c2_i32 = arith.constant 2 : i32
    %38 = vector.broadcast %c2_i32 : i32 to vector<1x256xi32>
    %39 = arith.cmpi sge, %2, %38 : vector<1x256xi32>
    %c3_i32_11 = arith.constant 3 : i32
    %40 = vector.broadcast %c3_i32_11 : i32 to vector<1x256xi32>
    %41 = arith.cmpi sge, %4, %40 : vector<1x256xi32>
    %42 = arith.andi %39, %41 : vector<1x256xi1>
    %c1_i32_12 = arith.constant 1 : i32
    %43 = vector.broadcast %c1_i32_12 : i32 to vector<1x256xi32>
    %44 = arith.cmpi sge, %2, %43 : vector<1x256xi32>
    %c3_i32_13 = arith.constant 3 : i32
    %45 = vector.broadcast %c3_i32_13 : i32 to vector<1x256xi32>
    %46 = arith.cmpi sge, %4, %45 : vector<1x256xi32>
    %47 = arith.andi %44, %46 : vector<1x256xi1>
    %c3_i32_14 = arith.constant 3 : i32
    %48 = vector.broadcast %c3_i32_14 : i32 to vector<1x256xi32>
    %49 = arith.cmpi sge, %4, %48 : vector<1x256xi32>
    %c14_i32_15 = arith.constant 14 : i32
    %50 = vector.broadcast %c14_i32_15 : i32 to vector<1x256xi32>
    %51 = arith.cmpi sle, %2, %50 : vector<1x256xi32>
    %c3_i32_16 = arith.constant 3 : i32
    %52 = vector.broadcast %c3_i32_16 : i32 to vector<1x256xi32>
    %53 = arith.cmpi sge, %4, %52 : vector<1x256xi32>
    %54 = arith.andi %51, %53 : vector<1x256xi1>
    %c13_i32 = arith.constant 13 : i32
    %55 = vector.broadcast %c13_i32 : i32 to vector<1x256xi32>
    %56 = arith.cmpi sle, %2, %55 : vector<1x256xi32>
    %c3_i32_17 = arith.constant 3 : i32
    %57 = vector.broadcast %c3_i32_17 : i32 to vector<1x256xi32>
    %58 = arith.cmpi sge, %4, %57 : vector<1x256xi32>
    %59 = arith.andi %56, %58 : vector<1x256xi1>
    %c12_i32 = arith.constant 12 : i32
    %60 = vector.broadcast %c12_i32 : i32 to vector<1x256xi32>
    %61 = arith.cmpi sle, %2, %60 : vector<1x256xi32>
    %c3_i32_18 = arith.constant 3 : i32
    %62 = vector.broadcast %c3_i32_18 : i32 to vector<1x256xi32>
    %63 = arith.cmpi sge, %4, %62 : vector<1x256xi32>
    %64 = arith.andi %61, %63 : vector<1x256xi1>
    %c3_i32_19 = arith.constant 3 : i32
    %65 = vector.broadcast %c3_i32_19 : i32 to vector<1x256xi32>
    %66 = arith.cmpi sge, %2, %65 : vector<1x256xi32>
    %c2_i32_20 = arith.constant 2 : i32
    %67 = vector.broadcast %c2_i32_20 : i32 to vector<1x256xi32>
    %68 = arith.cmpi sge, %4, %67 : vector<1x256xi32>
    %69 = arith.andi %66, %68 : vector<1x256xi1>
    %c2_i32_21 = arith.constant 2 : i32
    %70 = vector.broadcast %c2_i32_21 : i32 to vector<1x256xi32>
    %71 = arith.cmpi sge, %2, %70 : vector<1x256xi32>
    %c2_i32_22 = arith.constant 2 : i32
    %72 = vector.broadcast %c2_i32_22 : i32 to vector<1x256xi32>
    %73 = arith.cmpi sge, %4, %72 : vector<1x256xi32>
    %74 = arith.andi %71, %73 : vector<1x256xi1>
    %c1_i32_23 = arith.constant 1 : i32
    %75 = vector.broadcast %c1_i32_23 : i32 to vector<1x256xi32>
    %76 = arith.cmpi sge, %2, %75 : vector<1x256xi32>
    %c2_i32_24 = arith.constant 2 : i32
    %77 = vector.broadcast %c2_i32_24 : i32 to vector<1x256xi32>
    %78 = arith.cmpi sge, %4, %77 : vector<1x256xi32>
    %79 = arith.andi %76, %78 : vector<1x256xi1>
    %c2_i32_25 = arith.constant 2 : i32
    %80 = vector.broadcast %c2_i32_25 : i32 to vector<1x256xi32>
    %81 = arith.cmpi sge, %4, %80 : vector<1x256xi32>
    %c14_i32_26 = arith.constant 14 : i32
    %82 = vector.broadcast %c14_i32_26 : i32 to vector<1x256xi32>
    %83 = arith.cmpi sle, %2, %82 : vector<1x256xi32>
    %c2_i32_27 = arith.constant 2 : i32
    %84 = vector.broadcast %c2_i32_27 : i32 to vector<1x256xi32>
    %85 = arith.cmpi sge, %4, %84 : vector<1x256xi32>
    %86 = arith.andi %83, %85 : vector<1x256xi1>
    %c13_i32_28 = arith.constant 13 : i32
    %87 = vector.broadcast %c13_i32_28 : i32 to vector<1x256xi32>
    %88 = arith.cmpi sle, %2, %87 : vector<1x256xi32>
    %c2_i32_29 = arith.constant 2 : i32
    %89 = vector.broadcast %c2_i32_29 : i32 to vector<1x256xi32>
    %90 = arith.cmpi sge, %4, %89 : vector<1x256xi32>
    %91 = arith.andi %88, %90 : vector<1x256xi1>
    %c12_i32_30 = arith.constant 12 : i32
    %92 = vector.broadcast %c12_i32_30 : i32 to vector<1x256xi32>
    %93 = arith.cmpi sle, %2, %92 : vector<1x256xi32>
    %c2_i32_31 = arith.constant 2 : i32
    %94 = vector.broadcast %c2_i32_31 : i32 to vector<1x256xi32>
    %95 = arith.cmpi sge, %4, %94 : vector<1x256xi32>
    %96 = arith.andi %93, %95 : vector<1x256xi1>
    %c3_i32_32 = arith.constant 3 : i32
    %97 = vector.broadcast %c3_i32_32 : i32 to vector<1x256xi32>
    %98 = arith.cmpi sge, %2, %97 : vector<1x256xi32>
    %c1_i32_33 = arith.constant 1 : i32
    %99 = vector.broadcast %c1_i32_33 : i32 to vector<1x256xi32>
    %100 = arith.cmpi sge, %4, %99 : vector<1x256xi32>
    %101 = arith.andi %98, %100 : vector<1x256xi1>
    %c2_i32_34 = arith.constant 2 : i32
    %102 = vector.broadcast %c2_i32_34 : i32 to vector<1x256xi32>
    %103 = arith.cmpi sge, %2, %102 : vector<1x256xi32>
    %c1_i32_35 = arith.constant 1 : i32
    %104 = vector.broadcast %c1_i32_35 : i32 to vector<1x256xi32>
    %105 = arith.cmpi sge, %4, %104 : vector<1x256xi32>
    %106 = arith.andi %103, %105 : vector<1x256xi1>
    %c1_i32_36 = arith.constant 1 : i32
    %107 = vector.broadcast %c1_i32_36 : i32 to vector<1x256xi32>
    %108 = arith.cmpi sge, %2, %107 : vector<1x256xi32>
    %c1_i32_37 = arith.constant 1 : i32
    %109 = vector.broadcast %c1_i32_37 : i32 to vector<1x256xi32>
    %110 = arith.cmpi sge, %4, %109 : vector<1x256xi32>
    %111 = arith.andi %108, %110 : vector<1x256xi1>
    %c1_i32_38 = arith.constant 1 : i32
    %112 = vector.broadcast %c1_i32_38 : i32 to vector<1x256xi32>
    %113 = arith.cmpi sge, %4, %112 : vector<1x256xi32>
    %c14_i32_39 = arith.constant 14 : i32
    %114 = vector.broadcast %c14_i32_39 : i32 to vector<1x256xi32>
    %115 = arith.cmpi sle, %2, %114 : vector<1x256xi32>
    %c1_i32_40 = arith.constant 1 : i32
    %116 = vector.broadcast %c1_i32_40 : i32 to vector<1x256xi32>
    %117 = arith.cmpi sge, %4, %116 : vector<1x256xi32>
    %118 = arith.andi %115, %117 : vector<1x256xi1>
    %c13_i32_41 = arith.constant 13 : i32
    %119 = vector.broadcast %c13_i32_41 : i32 to vector<1x256xi32>
    %120 = arith.cmpi sle, %2, %119 : vector<1x256xi32>
    %c1_i32_42 = arith.constant 1 : i32
    %121 = vector.broadcast %c1_i32_42 : i32 to vector<1x256xi32>
    %122 = arith.cmpi sge, %4, %121 : vector<1x256xi32>
    %123 = arith.andi %120, %122 : vector<1x256xi1>
    %c12_i32_43 = arith.constant 12 : i32
    %124 = vector.broadcast %c12_i32_43 : i32 to vector<1x256xi32>
    %125 = arith.cmpi sle, %2, %124 : vector<1x256xi32>
    %c1_i32_44 = arith.constant 1 : i32
    %126 = vector.broadcast %c1_i32_44 : i32 to vector<1x256xi32>
    %127 = arith.cmpi sge, %4, %126 : vector<1x256xi32>
    %128 = arith.andi %125, %127 : vector<1x256xi1>
    %c3_i32_45 = arith.constant 3 : i32
    %129 = vector.broadcast %c3_i32_45 : i32 to vector<1x256xi32>
    %130 = arith.cmpi sge, %2, %129 : vector<1x256xi32>
    %c2_i32_46 = arith.constant 2 : i32
    %131 = vector.broadcast %c2_i32_46 : i32 to vector<1x256xi32>
    %132 = arith.cmpi sge, %2, %131 : vector<1x256xi32>
    %c1_i32_47 = arith.constant 1 : i32
    %133 = vector.broadcast %c1_i32_47 : i32 to vector<1x256xi32>
    %134 = arith.cmpi sge, %2, %133 : vector<1x256xi32>
    %c14_i32_48 = arith.constant 14 : i32
    %135 = vector.broadcast %c14_i32_48 : i32 to vector<1x256xi32>
    %136 = arith.cmpi sle, %2, %135 : vector<1x256xi32>
    %c13_i32_49 = arith.constant 13 : i32
    %137 = vector.broadcast %c13_i32_49 : i32 to vector<1x256xi32>
    %138 = arith.cmpi sle, %2, %137 : vector<1x256xi32>
    %c12_i32_50 = arith.constant 12 : i32
    %139 = vector.broadcast %c12_i32_50 : i32 to vector<1x256xi32>
    %140 = arith.cmpi sle, %2, %139 : vector<1x256xi32>
    %c3_i32_51 = arith.constant 3 : i32
    %141 = vector.broadcast %c3_i32_51 : i32 to vector<1x256xi32>
    %142 = arith.cmpi sge, %2, %141 : vector<1x256xi32>
    %c14_i32_52 = arith.constant 14 : i32
    %143 = vector.broadcast %c14_i32_52 : i32 to vector<1x256xi32>
    %144 = arith.cmpi sle, %4, %143 : vector<1x256xi32>
    %145 = arith.andi %142, %144 : vector<1x256xi1>
    %c2_i32_53 = arith.constant 2 : i32
    %146 = vector.broadcast %c2_i32_53 : i32 to vector<1x256xi32>
    %147 = arith.cmpi sge, %2, %146 : vector<1x256xi32>
    %c14_i32_54 = arith.constant 14 : i32
    %148 = vector.broadcast %c14_i32_54 : i32 to vector<1x256xi32>
    %149 = arith.cmpi sle, %4, %148 : vector<1x256xi32>
    %150 = arith.andi %147, %149 : vector<1x256xi1>
    %c1_i32_55 = arith.constant 1 : i32
    %151 = vector.broadcast %c1_i32_55 : i32 to vector<1x256xi32>
    %152 = arith.cmpi sge, %2, %151 : vector<1x256xi32>
    %c14_i32_56 = arith.constant 14 : i32
    %153 = vector.broadcast %c14_i32_56 : i32 to vector<1x256xi32>
    %154 = arith.cmpi sle, %4, %153 : vector<1x256xi32>
    %155 = arith.andi %152, %154 : vector<1x256xi1>
    %c14_i32_57 = arith.constant 14 : i32
    %156 = vector.broadcast %c14_i32_57 : i32 to vector<1x256xi32>
    %157 = arith.cmpi sle, %4, %156 : vector<1x256xi32>
    %c14_i32_58 = arith.constant 14 : i32
    %158 = vector.broadcast %c14_i32_58 : i32 to vector<1x256xi32>
    %159 = arith.cmpi sle, %2, %158 : vector<1x256xi32>
    %c14_i32_59 = arith.constant 14 : i32
    %160 = vector.broadcast %c14_i32_59 : i32 to vector<1x256xi32>
    %161 = arith.cmpi sle, %4, %160 : vector<1x256xi32>
    %162 = arith.andi %159, %161 : vector<1x256xi1>
    %c13_i32_60 = arith.constant 13 : i32
    %163 = vector.broadcast %c13_i32_60 : i32 to vector<1x256xi32>
    %164 = arith.cmpi sle, %2, %163 : vector<1x256xi32>
    %c14_i32_61 = arith.constant 14 : i32
    %165 = vector.broadcast %c14_i32_61 : i32 to vector<1x256xi32>
    %166 = arith.cmpi sle, %4, %165 : vector<1x256xi32>
    %167 = arith.andi %164, %166 : vector<1x256xi1>
    %c12_i32_62 = arith.constant 12 : i32
    %168 = vector.broadcast %c12_i32_62 : i32 to vector<1x256xi32>
    %169 = arith.cmpi sle, %2, %168 : vector<1x256xi32>
    %c14_i32_63 = arith.constant 14 : i32
    %170 = vector.broadcast %c14_i32_63 : i32 to vector<1x256xi32>
    %171 = arith.cmpi sle, %4, %170 : vector<1x256xi32>
    %172 = arith.andi %169, %171 : vector<1x256xi1>
    %c3_i32_64 = arith.constant 3 : i32
    %173 = vector.broadcast %c3_i32_64 : i32 to vector<1x256xi32>
    %174 = arith.cmpi sge, %2, %173 : vector<1x256xi32>
    %c13_i32_65 = arith.constant 13 : i32
    %175 = vector.broadcast %c13_i32_65 : i32 to vector<1x256xi32>
    %176 = arith.cmpi sle, %4, %175 : vector<1x256xi32>
    %177 = arith.andi %174, %176 : vector<1x256xi1>
    %c2_i32_66 = arith.constant 2 : i32
    %178 = vector.broadcast %c2_i32_66 : i32 to vector<1x256xi32>
    %179 = arith.cmpi sge, %2, %178 : vector<1x256xi32>
    %c13_i32_67 = arith.constant 13 : i32
    %180 = vector.broadcast %c13_i32_67 : i32 to vector<1x256xi32>
    %181 = arith.cmpi sle, %4, %180 : vector<1x256xi32>
    %182 = arith.andi %179, %181 : vector<1x256xi1>
    %c1_i32_68 = arith.constant 1 : i32
    %183 = vector.broadcast %c1_i32_68 : i32 to vector<1x256xi32>
    %184 = arith.cmpi sge, %2, %183 : vector<1x256xi32>
    %c13_i32_69 = arith.constant 13 : i32
    %185 = vector.broadcast %c13_i32_69 : i32 to vector<1x256xi32>
    %186 = arith.cmpi sle, %4, %185 : vector<1x256xi32>
    %187 = arith.andi %184, %186 : vector<1x256xi1>
    %c13_i32_70 = arith.constant 13 : i32
    %188 = vector.broadcast %c13_i32_70 : i32 to vector<1x256xi32>
    %189 = arith.cmpi sle, %4, %188 : vector<1x256xi32>
    %c14_i32_71 = arith.constant 14 : i32
    %190 = vector.broadcast %c14_i32_71 : i32 to vector<1x256xi32>
    %191 = arith.cmpi sle, %2, %190 : vector<1x256xi32>
    %c13_i32_72 = arith.constant 13 : i32
    %192 = vector.broadcast %c13_i32_72 : i32 to vector<1x256xi32>
    %193 = arith.cmpi sle, %4, %192 : vector<1x256xi32>
    %194 = arith.andi %191, %193 : vector<1x256xi1>
    %c13_i32_73 = arith.constant 13 : i32
    %195 = vector.broadcast %c13_i32_73 : i32 to vector<1x256xi32>
    %196 = arith.cmpi sle, %2, %195 : vector<1x256xi32>
    %c13_i32_74 = arith.constant 13 : i32
    %197 = vector.broadcast %c13_i32_74 : i32 to vector<1x256xi32>
    %198 = arith.cmpi sle, %4, %197 : vector<1x256xi32>
    %199 = arith.andi %196, %198 : vector<1x256xi1>
    %c12_i32_75 = arith.constant 12 : i32
    %200 = vector.broadcast %c12_i32_75 : i32 to vector<1x256xi32>
    %201 = arith.cmpi sle, %2, %200 : vector<1x256xi32>
    %c13_i32_76 = arith.constant 13 : i32
    %202 = vector.broadcast %c13_i32_76 : i32 to vector<1x256xi32>
    %203 = arith.cmpi sle, %4, %202 : vector<1x256xi32>
    %204 = arith.andi %201, %203 : vector<1x256xi1>
    %c3_i32_77 = arith.constant 3 : i32
    %205 = vector.broadcast %c3_i32_77 : i32 to vector<1x256xi32>
    %206 = arith.cmpi sge, %2, %205 : vector<1x256xi32>
    %c12_i32_78 = arith.constant 12 : i32
    %207 = vector.broadcast %c12_i32_78 : i32 to vector<1x256xi32>
    %208 = arith.cmpi sle, %4, %207 : vector<1x256xi32>
    %209 = arith.andi %206, %208 : vector<1x256xi1>
    %c2_i32_79 = arith.constant 2 : i32
    %210 = vector.broadcast %c2_i32_79 : i32 to vector<1x256xi32>
    %211 = arith.cmpi sge, %2, %210 : vector<1x256xi32>
    %c12_i32_80 = arith.constant 12 : i32
    %212 = vector.broadcast %c12_i32_80 : i32 to vector<1x256xi32>
    %213 = arith.cmpi sle, %4, %212 : vector<1x256xi32>
    %214 = arith.andi %211, %213 : vector<1x256xi1>
    %c1_i32_81 = arith.constant 1 : i32
    %215 = vector.broadcast %c1_i32_81 : i32 to vector<1x256xi32>
    %216 = arith.cmpi sge, %2, %215 : vector<1x256xi32>
    %c12_i32_82 = arith.constant 12 : i32
    %217 = vector.broadcast %c12_i32_82 : i32 to vector<1x256xi32>
    %218 = arith.cmpi sle, %4, %217 : vector<1x256xi32>
    %219 = arith.andi %216, %218 : vector<1x256xi1>
    %c12_i32_83 = arith.constant 12 : i32
    %220 = vector.broadcast %c12_i32_83 : i32 to vector<1x256xi32>
    %221 = arith.cmpi sle, %4, %220 : vector<1x256xi32>
    %c14_i32_84 = arith.constant 14 : i32
    %222 = vector.broadcast %c14_i32_84 : i32 to vector<1x256xi32>
    %223 = arith.cmpi sle, %2, %222 : vector<1x256xi32>
    %c12_i32_85 = arith.constant 12 : i32
    %224 = vector.broadcast %c12_i32_85 : i32 to vector<1x256xi32>
    %225 = arith.cmpi sle, %4, %224 : vector<1x256xi32>
    %226 = arith.andi %223, %225 : vector<1x256xi1>
    %c13_i32_86 = arith.constant 13 : i32
    %227 = vector.broadcast %c13_i32_86 : i32 to vector<1x256xi32>
    %228 = arith.cmpi sle, %2, %227 : vector<1x256xi32>
    %c12_i32_87 = arith.constant 12 : i32
    %229 = vector.broadcast %c12_i32_87 : i32 to vector<1x256xi32>
    %230 = arith.cmpi sle, %4, %229 : vector<1x256xi32>
    %231 = arith.andi %228, %230 : vector<1x256xi1>
    %c12_i32_88 = arith.constant 12 : i32
    %232 = vector.broadcast %c12_i32_88 : i32 to vector<1x256xi32>
    %233 = arith.cmpi sle, %2, %232 : vector<1x256xi32>
    %c12_i32_89 = arith.constant 12 : i32
    %234 = vector.broadcast %c12_i32_89 : i32 to vector<1x256xi32>
    %235 = arith.cmpi sle, %4, %234 : vector<1x256xi32>
    %236 = arith.andi %233, %235 : vector<1x256xi1>
    %237 = tpu.iota {dimensions = array<i32: 1>} : vector<32x2xi32>
    %c0_i32 = arith.constant 0 : i32
    %238 = vector.broadcast %c0_i32 : i32 to vector<32x2xi32>
    %239 = arith.cmpi eq, %237, %238 : vector<32x2xi32>
    %c0 = arith.constant 0 : index
    %c0_90 = arith.constant 0 : index
    %c0_91 = arith.constant 0 : index
    %240 = vector.load %arg2[%c0, %c0_90, %c0_91] : memref<9x32x1xf32, #tpu.memory_space<vmem>>, vector<9x32x1xf32>
    %c0_92 = arith.constant 0 : index
    %c0_93 = arith.constant 0 : index
    %241 = vector.load %arg3[%c0_92, %c0_93] : memref<32x32xf32, #tpu.memory_space<vmem>>, vector<32x32xf32>
    %c0_94 = arith.constant 0 : index
    %c0_95 = arith.constant 0 : index
    %242 = vector.load %arg4[%c0_94, %c0_95] : memref<32x1xf32, #tpu.memory_space<vmem>>, vector<32x1xf32>
    %c0_96 = arith.constant 0 : index
    %c0_97 = arith.constant 0 : index
    %243 = vector.load %arg5[%c0_96, %c0_97] : memref<2x32xf32, #tpu.memory_space<vmem>>, vector<2x32xf32>
    %c0_98 = arith.constant 0 : index
    %c0_99 = arith.constant 0 : index
    %244 = vector.load %arg6[%c0_98, %c0_99] : memref<2x1xf32, #tpu.memory_space<vmem>>, vector<2x1xf32>
    %c0_100 = arith.constant 0 : index
    %c0_101 = arith.constant 0 : index
    %245 = vector.load %arg7[%c0_100, %c0_101] : memref<32x2xf32, #tpu.memory_space<vmem>>, vector<32x2xf32>
    %c0_102 = arith.constant 0 : index
    %c0_103 = arith.constant 0 : index
    %246 = vector.load %arg8[%c0_102, %c0_103] : memref<32x1xf32, #tpu.memory_space<vmem>>, vector<32x1xf32>
    %c0_104 = arith.constant 0 : index
    %c0_105 = arith.constant 0 : index
    %c0_106 = arith.constant 0 : index
    %247 = vector.load %arg1[%c0_104, %c0_105, %c0_106] : memref<2x32x256xf32, #tpu.memory_space<vmem>>, vector<1x32x256xf32>
    %248 = vector.shape_cast %247 : vector<1x32x256xf32> to vector<32x256xf32>
    %249 = vector.extract_strided_slice %240 {offsets = [4, 0, 0], sizes = [1, 32, 1], strides = [1, 1, 1]} : vector<9x32x1xf32> to vector<1x32x1xf32>
    %250 = vector.shape_cast %249 : vector<1x32x1xf32> to vector<32x1xf32>
    %251 = vector.broadcast %250 : vector<32x1xf32> to vector<32x256xf32>
    %252 = arith.mulf %248, %251 : vector<32x256xf32>
    %c17_i32 = arith.constant 17 : i32
    %253 = tpu.dynamic_rotate %248 by %c17_i32 dim 1 : vector<32x256xf32>, i32 -> vector<32x256xf32>
    %cst = arith.constant 0.000000e+00 : f32
    %254 = vector.shape_cast %9 : vector<1x256xi1> to vector<1x256xi1>
    %255 = vector.broadcast %254 : vector<1x256xi1> to vector<32x256xi1>
    %256 = vector.broadcast %cst : f32 to vector<32x256xf32>
    %257 = arith.select %255, %253, %256 : vector<32x256xi1>, vector<32x256xf32>
    %258 = vector.extract_strided_slice %240 {offsets = [0, 0, 0], sizes = [1, 32, 1], strides = [1, 1, 1]} : vector<9x32x1xf32> to vector<1x32x1xf32>
    %259 = vector.shape_cast %258 : vector<1x32x1xf32> to vector<32x1xf32>
    %260 = vector.broadcast %259 : vector<32x1xf32> to vector<32x256xf32>
    %261 = arith.mulf %257, %260 : vector<32x256xf32>
    %262 = arith.addf %252, %261 : vector<32x256xf32>
    %c16_i32 = arith.constant 16 : i32
    %263 = tpu.dynamic_rotate %248 by %c16_i32 dim 1 : vector<32x256xf32>, i32 -> vector<32x256xf32>
    %cst_107 = arith.constant 0.000000e+00 : f32
    %264 = vector.shape_cast %11 : vector<1x256xi1> to vector<1x256xi1>
    %265 = vector.broadcast %264 : vector<1x256xi1> to vector<32x256xi1>
    %266 = vector.broadcast %cst_107 : f32 to vector<32x256xf32>
    %267 = arith.select %265, %263, %266 : vector<32x256xi1>, vector<32x256xf32>
    %268 = vector.extract_strided_slice %240 {offsets = [1, 0, 0], sizes = [1, 32, 1], strides = [1, 1, 1]} : vector<9x32x1xf32> to vector<1x32x1xf32>
    %269 = vector.shape_cast %268 : vector<1x32x1xf32> to vector<32x1xf32>
    %270 = vector.broadcast %269 : vector<32x1xf32> to vector<32x256xf32>
    %271 = arith.mulf %267, %270 : vector<32x256xf32>
    %272 = arith.addf %262, %271 : vector<32x256xf32>
    %c15_i32_108 = arith.constant 15 : i32
    %273 = tpu.dynamic_rotate %248 by %c15_i32_108 dim 1 : vector<32x256xf32>, i32 -> vector<32x256xf32>
    %cst_109 = arith.constant 0.000000e+00 : f32
    %274 = vector.shape_cast %16 : vector<1x256xi1> to vector<1x256xi1>
    %275 = vector.broadcast %274 : vector<1x256xi1> to vector<32x256xi1>
    %276 = vector.broadcast %cst_109 : f32 to vector<32x256xf32>
    %277 = arith.select %275, %273, %276 : vector<32x256xi1>, vector<32x256xf32>
    %278 = vector.extract_strided_slice %240 {offsets = [2, 0, 0], sizes = [1, 32, 1], strides = [1, 1, 1]} : vector<9x32x1xf32> to vector<1x32x1xf32>
    %279 = vector.shape_cast %278 : vector<1x32x1xf32> to vector<32x1xf32>
    %280 = vector.broadcast %279 : vector<32x1xf32> to vector<32x256xf32>
    %281 = arith.mulf %277, %280 : vector<32x256xf32>
    %282 = arith.addf %272, %281 : vector<32x256xf32>
    %c1_i32_110 = arith.constant 1 : i32
    %283 = tpu.dynamic_rotate %248 by %c1_i32_110 dim 1 : vector<32x256xf32>, i32 -> vector<32x256xf32>
    %cst_111 = arith.constant 0.000000e+00 : f32
    %284 = vector.shape_cast %18 : vector<1x256xi1> to vector<1x256xi1>
    %285 = vector.broadcast %284 : vector<1x256xi1> to vector<32x256xi1>
    %286 = vector.broadcast %cst_111 : f32 to vector<32x256xf32>
    %287 = arith.select %285, %283, %286 : vector<32x256xi1>, vector<32x256xf32>
    %288 = vector.extract_strided_slice %240 {offsets = [3, 0, 0], sizes = [1, 32, 1], strides = [1, 1, 1]} : vector<9x32x1xf32> to vector<1x32x1xf32>
    %289 = vector.shape_cast %288 : vector<1x32x1xf32> to vector<32x1xf32>
    %290 = vector.broadcast %289 : vector<32x1xf32> to vector<32x256xf32>
    %291 = arith.mulf %287, %290 : vector<32x256xf32>
    %292 = arith.addf %282, %291 : vector<32x256xf32>
    %c255_i32 = arith.constant 255 : i32
    %293 = tpu.dynamic_rotate %248 by %c255_i32 dim 1 : vector<32x256xf32>, i32 -> vector<32x256xf32>
    %cst_112 = arith.constant 0.000000e+00 : f32
    %294 = vector.shape_cast %20 : vector<1x256xi1> to vector<1x256xi1>
    %295 = vector.broadcast %294 : vector<1x256xi1> to vector<32x256xi1>
    %296 = vector.broadcast %cst_112 : f32 to vector<32x256xf32>
    %297 = arith.select %295, %293, %296 : vector<32x256xi1>, vector<32x256xf32>
    %298 = vector.extract_strided_slice %240 {offsets = [5, 0, 0], sizes = [1, 32, 1], strides = [1, 1, 1]} : vector<9x32x1xf32> to vector<1x32x1xf32>
    %299 = vector.shape_cast %298 : vector<1x32x1xf32> to vector<32x1xf32>
    %300 = vector.broadcast %299 : vector<32x1xf32> to vector<32x256xf32>
    %301 = arith.mulf %297, %300 : vector<32x256xf32>
    %302 = arith.addf %292, %301 : vector<32x256xf32>
    %c241_i32 = arith.constant 241 : i32
    %303 = tpu.dynamic_rotate %248 by %c241_i32 dim 1 : vector<32x256xf32>, i32 -> vector<32x256xf32>
    %cst_113 = arith.constant 0.000000e+00 : f32
    %304 = vector.shape_cast %25 : vector<1x256xi1> to vector<1x256xi1>
    %305 = vector.broadcast %304 : vector<1x256xi1> to vector<32x256xi1>
    %306 = vector.broadcast %cst_113 : f32 to vector<32x256xf32>
    %307 = arith.select %305, %303, %306 : vector<32x256xi1>, vector<32x256xf32>
    %308 = vector.extract_strided_slice %240 {offsets = [6, 0, 0], sizes = [1, 32, 1], strides = [1, 1, 1]} : vector<9x32x1xf32> to vector<1x32x1xf32>
    %309 = vector.shape_cast %308 : vector<1x32x1xf32> to vector<32x1xf32>
    %310 = vector.broadcast %309 : vector<32x1xf32> to vector<32x256xf32>
    %311 = arith.mulf %307, %310 : vector<32x256xf32>
    %312 = arith.addf %302, %311 : vector<32x256xf32>
    %c240_i32 = arith.constant 240 : i32
    %313 = tpu.dynamic_rotate %248 by %c240_i32 dim 1 : vector<32x256xf32>, i32 -> vector<32x256xf32>
    %cst_114 = arith.constant 0.000000e+00 : f32
    %314 = vector.shape_cast %27 : vector<1x256xi1> to vector<1x256xi1>
    %315 = vector.broadcast %314 : vector<1x256xi1> to vector<32x256xi1>
    %316 = vector.broadcast %cst_114 : f32 to vector<32x256xf32>
    %317 = arith.select %315, %313, %316 : vector<32x256xi1>, vector<32x256xf32>
    %318 = vector.extract_strided_slice %240 {offsets = [7, 0, 0], sizes = [1, 32, 1], strides = [1, 1, 1]} : vector<9x32x1xf32> to vector<1x32x1xf32>
    %319 = vector.shape_cast %318 : vector<1x32x1xf32> to vector<32x1xf32>
    %320 = vector.broadcast %319 : vector<32x1xf32> to vector<32x256xf32>
    %321 = arith.mulf %317, %320 : vector<32x256xf32>
    %322 = arith.addf %312, %321 : vector<32x256xf32>
    %c239_i32 = arith.constant 239 : i32
    %323 = tpu.dynamic_rotate %248 by %c239_i32 dim 1 : vector<32x256xf32>, i32 -> vector<32x256xf32>
    %cst_115 = arith.constant 0.000000e+00 : f32
    %324 = vector.shape_cast %32 : vector<1x256xi1> to vector<1x256xi1>
    %325 = vector.broadcast %324 : vector<1x256xi1> to vector<32x256xi1>
    %326 = vector.broadcast %cst_115 : f32 to vector<32x256xf32>
    %327 = arith.select %325, %323, %326 : vector<32x256xi1>, vector<32x256xf32>
    %328 = vector.extract_strided_slice %240 {offsets = [8, 0, 0], sizes = [1, 32, 1], strides = [1, 1, 1]} : vector<9x32x1xf32> to vector<1x32x1xf32>
    %329 = vector.shape_cast %328 : vector<1x32x1xf32> to vector<32x1xf32>
    %330 = vector.broadcast %329 : vector<32x1xf32> to vector<32x256xf32>
    %331 = arith.mulf %327, %330 : vector<32x256xf32>
    %332 = arith.addf %322, %331 : vector<32x256xf32>
    %333 = vector.broadcast %242 : vector<32x1xf32> to vector<32x256xf32>
    %334 = arith.addf %332, %333 : vector<32x256xf32>
    %cst_116 = arith.constant 0.000000e+00 : f32
    %335 = vector.broadcast %cst_116 : f32 to vector<32x256xf32>
    %336 = arith.maximumf %334, %335 : vector<32x256xf32>
    %cst_117 = arith.constant dense<0.000000e+00> : vector<32x256xf32>
    %337 = tpu.matmul %241, %336, %cst_117 {dimension_numbers = #tpu.dot_dimension_numbers<[1], [0], [0], [1], [0, 0, 1, 1], [], []>} : vector<32x32xf32>, vector<32x256xf32>, vector<32x256xf32> -> vector<32x256xf32>
    %338 = vector.broadcast %242 : vector<32x1xf32> to vector<32x256xf32>
    %339 = arith.addf %337, %338 : vector<32x256xf32>
    %cst_118 = arith.constant 0.000000e+00 : f32
    %340 = vector.broadcast %cst_118 : f32 to vector<32x256xf32>
    %341 = arith.maximumf %339, %340 : vector<32x256xf32>
    %cst_119 = arith.constant dense<0.000000e+00> : vector<32xf32>
    %342 = vector.multi_reduction <add>, %341, %cst_119 [1] : vector<32x256xf32> to vector<32xf32>
    %343 = vector.shape_cast %342 : vector<32xf32> to vector<32x1xf32>
    %cst_120 = arith.constant 2.560000e+02 : f32
    %344 = vector.broadcast %cst_120 : f32 to vector<32x1xf32>
    %345 = arith.divf %343, %344 : vector<32x1xf32>
    %cst_121 = arith.constant dense<0xFF800000> : vector<32xf32>
    %346 = vector.multi_reduction <maximumf>, %341, %cst_121 [1] : vector<32x256xf32> to vector<32xf32>
    %347 = vector.shape_cast %346 : vector<32xf32> to vector<32x1xf32>
    %348 = vector.shape_cast %345 : vector<32x1xf32> to vector<32x1xf32>
    %349 = vector.broadcast %348 : vector<32x1xf32> to vector<32x2xf32>
    %350 = vector.shape_cast %347 : vector<32x1xf32> to vector<32x1xf32>
    %351 = vector.broadcast %350 : vector<32x1xf32> to vector<32x2xf32>
    %352 = arith.select %239, %349, %351 : vector<32x2xi1>, vector<32x2xf32>
    %cst_122 = arith.constant dense<0.000000e+00> : vector<2x2xf32>
    %353 = tpu.matmul %243, %352, %cst_122 {dimension_numbers = #tpu.dot_dimension_numbers<[1], [0], [0], [1], [0, 0, 1, 1], [], []>} : vector<2x32xf32>, vector<32x2xf32>, vector<2x2xf32> -> vector<2x2xf32>
    %354 = vector.broadcast %244 : vector<2x1xf32> to vector<2x2xf32>
    %355 = arith.addf %353, %354 : vector<2x2xf32>
    %cst_123 = arith.constant 0.000000e+00 : f32
    %356 = vector.broadcast %cst_123 : f32 to vector<2x2xf32>
    %357 = arith.maximumf %355, %356 : vector<2x2xf32>
    %cst_124 = arith.constant dense<0.000000e+00> : vector<32x2xf32>
    %358 = tpu.matmul %245, %357, %cst_124 {dimension_numbers = #tpu.dot_dimension_numbers<[1], [0], [0], [1], [0, 0, 1, 1], [], []>} : vector<32x2xf32>, vector<2x2xf32>, vector<32x2xf32> -> vector<32x2xf32>
    %359 = vector.broadcast %246 : vector<32x1xf32> to vector<32x2xf32>
    %360 = arith.addf %358, %359 : vector<32x2xf32>
    %cst_125 = arith.constant dense<0.000000e+00> : vector<32xf32>
    %361 = vector.multi_reduction <add>, %360, %cst_125 [1] : vector<32x2xf32> to vector<32xf32>
    %362 = vector.shape_cast %361 : vector<32xf32> to vector<32x1xf32>
    %363 = arith.negf %362 : vector<32x1xf32>
    %364 = math.exp %363 : vector<32x1xf32>
    %cst_126 = arith.constant 1.000000e+00 : f32
    %365 = vector.broadcast %cst_126 : f32 to vector<32x1xf32>
    %366 = arith.addf %365, %364 : vector<32x1xf32>
    %367 = arith.divf %365, %366 : vector<32x1xf32>
    %368 = vector.broadcast %367 : vector<32x1xf32> to vector<32x256xf32>
    %369 = arith.mulf %341, %368 : vector<32x256xf32>
    %cst_127 = arith.constant dense<0.000000e+00> : vector<256xf32>
    %370 = vector.multi_reduction <add>, %369, %cst_127 [0] : vector<32x256xf32> to vector<256xf32>
    %371 = vector.shape_cast %370 : vector<256xf32> to vector<1x256xf32>
    %cst_128 = arith.constant 3.200000e+01 : f32
    %372 = vector.broadcast %cst_128 : f32 to vector<1x256xf32>
    %373 = arith.divf %371, %372 : vector<1x256xf32>
    %cst_129 = arith.constant dense<0xFF800000> : vector<256xf32>
    %374 = vector.multi_reduction <maximumf>, %369, %cst_129 [0] : vector<32x256xf32> to vector<256xf32>
    %375 = vector.shape_cast %374 : vector<256xf32> to vector<1x256xf32>
    %c0_130 = arith.constant 0 : index
    %c24 = arith.constant 24 : index
    %376 = memref.load %arg9[%c0_130, %c24] : memref<2x49xf32, #tpu.memory_space<smem>>
    %377 = vector.broadcast %376 : f32 to vector<1x256xf32>
    %378 = arith.mulf %373, %377 : vector<1x256xf32>
    %c1 = arith.constant 1 : index
    %c24_131 = arith.constant 24 : index
    %379 = memref.load %arg9[%c1, %c24_131] : memref<2x49xf32, #tpu.memory_space<smem>>
    %380 = vector.broadcast %379 : f32 to vector<1x256xf32>
    %381 = arith.mulf %375, %380 : vector<1x256xf32>
    %382 = arith.addf %378, %381 : vector<1x256xf32>
    %c51_i32 = arith.constant 51 : i32
    %383 = tpu.dynamic_rotate %373 by %c51_i32 dim 1 : vector<1x256xf32>, i32 -> vector<1x256xf32>
    %c0_132 = arith.constant 0 : index
    %c0_133 = arith.constant 0 : index
    %384 = memref.load %arg9[%c0_132, %c0_133] : memref<2x49xf32, #tpu.memory_space<smem>>
    %385 = vector.broadcast %384 : f32 to vector<1x256xf32>
    %386 = arith.mulf %383, %385 : vector<1x256xf32>
    %c51_i32_134 = arith.constant 51 : i32
    %387 = tpu.dynamic_rotate %375 by %c51_i32_134 dim 1 : vector<1x256xf32>, i32 -> vector<1x256xf32>
    %c1_135 = arith.constant 1 : index
    %c0_136 = arith.constant 0 : index
    %388 = memref.load %arg9[%c1_135, %c0_136] : memref<2x49xf32, #tpu.memory_space<smem>>
    %389 = vector.broadcast %388 : f32 to vector<1x256xf32>
    %390 = arith.mulf %387, %389 : vector<1x256xf32>
    %391 = arith.addf %386, %390 : vector<1x256xf32>
    %cst_137 = arith.constant 0.000000e+00 : f32
    %392 = vector.broadcast %cst_137 : f32 to vector<1x256xf32>
    %393 = arith.select %37, %391, %392 : vector<1x256xi1>, vector<1x256xf32>
    %394 = arith.addf %382, %393 : vector<1x256xf32>
    %c50_i32 = arith.constant 50 : i32
    %395 = tpu.dynamic_rotate %373 by %c50_i32 dim 1 : vector<1x256xf32>, i32 -> vector<1x256xf32>
    %c0_138 = arith.constant 0 : index
    %c1_139 = arith.constant 1 : index
    %396 = memref.load %arg9[%c0_138, %c1_139] : memref<2x49xf32, #tpu.memory_space<smem>>
    %397 = vector.broadcast %396 : f32 to vector<1x256xf32>
    %398 = arith.mulf %395, %397 : vector<1x256xf32>
    %c50_i32_140 = arith.constant 50 : i32
    %399 = tpu.dynamic_rotate %375 by %c50_i32_140 dim 1 : vector<1x256xf32>, i32 -> vector<1x256xf32>
    %c1_141 = arith.constant 1 : index
    %c1_142 = arith.constant 1 : index
    %400 = memref.load %arg9[%c1_141, %c1_142] : memref<2x49xf32, #tpu.memory_space<smem>>
    %401 = vector.broadcast %400 : f32 to vector<1x256xf32>
    %402 = arith.mulf %399, %401 : vector<1x256xf32>
    %403 = arith.addf %398, %402 : vector<1x256xf32>
    %cst_143 = arith.constant 0.000000e+00 : f32
    %404 = vector.broadcast %cst_143 : f32 to vector<1x256xf32>
    %405 = arith.select %42, %403, %404 : vector<1x256xi1>, vector<1x256xf32>
    %406 = arith.addf %394, %405 : vector<1x256xf32>
    %c49_i32 = arith.constant 49 : i32
    %407 = tpu.dynamic_rotate %373 by %c49_i32 dim 1 : vector<1x256xf32>, i32 -> vector<1x256xf32>
    %c0_144 = arith.constant 0 : index
    %c2 = arith.constant 2 : index
    %408 = memref.load %arg9[%c0_144, %c2] : memref<2x49xf32, #tpu.memory_space<smem>>
    %409 = vector.broadcast %408 : f32 to vector<1x256xf32>
    %410 = arith.mulf %407, %409 : vector<1x256xf32>
    %c49_i32_145 = arith.constant 49 : i32
    %411 = tpu.dynamic_rotate %375 by %c49_i32_145 dim 1 : vector<1x256xf32>, i32 -> vector<1x256xf32>
    %c1_146 = arith.constant 1 : index
    %c2_147 = arith.constant 2 : index
    %412 = memref.load %arg9[%c1_146, %c2_147] : memref<2x49xf32, #tpu.memory_space<smem>>
    %413 = vector.broadcast %412 : f32 to vector<1x256xf32>
    %414 = arith.mulf %411, %413 : vector<1x256xf32>
    %415 = arith.addf %410, %414 : vector<1x256xf32>
    %cst_148 = arith.constant 0.000000e+00 : f32
    %416 = vector.broadcast %cst_148 : f32 to vector<1x256xf32>
    %417 = arith.select %47, %415, %416 : vector<1x256xi1>, vector<1x256xf32>
    %418 = arith.addf %406, %417 : vector<1x256xf32>
    %c48_i32 = arith.constant 48 : i32
    %419 = tpu.dynamic_rotate %373 by %c48_i32 dim 1 : vector<1x256xf32>, i32 -> vector<1x256xf32>
    %c0_149 = arith.constant 0 : index
    %c3 = arith.constant 3 : index
    %420 = memref.load %arg9[%c0_149, %c3] : memref<2x49xf32, #tpu.memory_space<smem>>
    %421 = vector.broadcast %420 : f32 to vector<1x256xf32>
    %422 = arith.mulf %419, %421 : vector<1x256xf32>
    %c48_i32_150 = arith.constant 48 : i32
    %423 = tpu.dynamic_rotate %375 by %c48_i32_150 dim 1 : vector<1x256xf32>, i32 -> vector<1x256xf32>
    %c1_151 = arith.constant 1 : index
    %c3_152 = arith.constant 3 : index
    %424 = memref.load %arg9[%c1_151, %c3_152] : memref<2x49xf32, #tpu.memory_space<smem>>
    %425 = vector.broadcast %424 : f32 to vector<1x256xf32>
    %426 = arith.mulf %423, %425 : vector<1x256xf32>
    %427 = arith.addf %422, %426 : vector<1x256xf32>
    %cst_153 = arith.constant 0.000000e+00 : f32
    %428 = vector.broadcast %cst_153 : f32 to vector<1x256xf32>
    %429 = arith.select %49, %427, %428 : vector<1x256xi1>, vector<1x256xf32>
    %430 = arith.addf %418, %429 : vector<1x256xf32>
    %c47_i32 = arith.constant 47 : i32
    %431 = tpu.dynamic_rotate %373 by %c47_i32 dim 1 : vector<1x256xf32>, i32 -> vector<1x256xf32>
    %c0_154 = arith.constant 0 : index
    %c4 = arith.constant 4 : index
    %432 = memref.load %arg9[%c0_154, %c4] : memref<2x49xf32, #tpu.memory_space<smem>>
    %433 = vector.broadcast %432 : f32 to vector<1x256xf32>
    %434 = arith.mulf %431, %433 : vector<1x256xf32>
    %c47_i32_155 = arith.constant 47 : i32
    %435 = tpu.dynamic_rotate %375 by %c47_i32_155 dim 1 : vector<1x256xf32>, i32 -> vector<1x256xf32>
    %c1_156 = arith.constant 1 : index
    %c4_157 = arith.constant 4 : index
    %436 = memref.load %arg9[%c1_156, %c4_157] : memref<2x49xf32, #tpu.memory_space<smem>>
    %437 = vector.broadcast %436 : f32 to vector<1x256xf32>
    %438 = arith.mulf %435, %437 : vector<1x256xf32>
    %439 = arith.addf %434, %438 : vector<1x256xf32>
    %cst_158 = arith.constant 0.000000e+00 : f32
    %440 = vector.broadcast %cst_158 : f32 to vector<1x256xf32>
    %441 = arith.select %54, %439, %440 : vector<1x256xi1>, vector<1x256xf32>
    %442 = arith.addf %430, %441 : vector<1x256xf32>
    %c46_i32 = arith.constant 46 : i32
    %443 = tpu.dynamic_rotate %373 by %c46_i32 dim 1 : vector<1x256xf32>, i32 -> vector<1x256xf32>
    %c0_159 = arith.constant 0 : index
    %c5 = arith.constant 5 : index
    %444 = memref.load %arg9[%c0_159, %c5] : memref<2x49xf32, #tpu.memory_space<smem>>
    %445 = vector.broadcast %444 : f32 to vector<1x256xf32>
    %446 = arith.mulf %443, %445 : vector<1x256xf32>
    %c46_i32_160 = arith.constant 46 : i32
    %447 = tpu.dynamic_rotate %375 by %c46_i32_160 dim 1 : vector<1x256xf32>, i32 -> vector<1x256xf32>
    %c1_161 = arith.constant 1 : index
    %c5_162 = arith.constant 5 : index
    %448 = memref.load %arg9[%c1_161, %c5_162] : memref<2x49xf32, #tpu.memory_space<smem>>
    %449 = vector.broadcast %448 : f32 to vector<1x256xf32>
    %450 = arith.mulf %447, %449 : vector<1x256xf32>
    %451 = arith.addf %446, %450 : vector<1x256xf32>
    %cst_163 = arith.constant 0.000000e+00 : f32
    %452 = vector.broadcast %cst_163 : f32 to vector<1x256xf32>
    %453 = arith.select %59, %451, %452 : vector<1x256xi1>, vector<1x256xf32>
    %454 = arith.addf %442, %453 : vector<1x256xf32>
    %c45_i32 = arith.constant 45 : i32
    %455 = tpu.dynamic_rotate %373 by %c45_i32 dim 1 : vector<1x256xf32>, i32 -> vector<1x256xf32>
    %c0_164 = arith.constant 0 : index
    %c6 = arith.constant 6 : index
    %456 = memref.load %arg9[%c0_164, %c6] : memref<2x49xf32, #tpu.memory_space<smem>>
    %457 = vector.broadcast %456 : f32 to vector<1x256xf32>
    %458 = arith.mulf %455, %457 : vector<1x256xf32>
    %c45_i32_165 = arith.constant 45 : i32
    %459 = tpu.dynamic_rotate %375 by %c45_i32_165 dim 1 : vector<1x256xf32>, i32 -> vector<1x256xf32>
    %c1_166 = arith.constant 1 : index
    %c6_167 = arith.constant 6 : index
    %460 = memref.load %arg9[%c1_166, %c6_167] : memref<2x49xf32, #tpu.memory_space<smem>>
    %461 = vector.broadcast %460 : f32 to vector<1x256xf32>
    %462 = arith.mulf %459, %461 : vector<1x256xf32>
    %463 = arith.addf %458, %462 : vector<1x256xf32>
    %cst_168 = arith.constant 0.000000e+00 : f32
    %464 = vector.broadcast %cst_168 : f32 to vector<1x256xf32>
    %465 = arith.select %64, %463, %464 : vector<1x256xi1>, vector<1x256xf32>
    %466 = arith.addf %454, %465 : vector<1x256xf32>
    %c35_i32 = arith.constant 35 : i32
    %467 = tpu.dynamic_rotate %373 by %c35_i32 dim 1 : vector<1x256xf32>, i32 -> vector<1x256xf32>
    %c0_169 = arith.constant 0 : index
    %c7 = arith.constant 7 : index
    %468 = memref.load %arg9[%c0_169, %c7] : memref<2x49xf32, #tpu.memory_space<smem>>
    %469 = vector.broadcast %468 : f32 to vector<1x256xf32>
    %470 = arith.mulf %467, %469 : vector<1x256xf32>
    %c35_i32_170 = arith.constant 35 : i32
    %471 = tpu.dynamic_rotate %375 by %c35_i32_170 dim 1 : vector<1x256xf32>, i32 -> vector<1x256xf32>
    %c1_171 = arith.constant 1 : index
    %c7_172 = arith.constant 7 : index
    %472 = memref.load %arg9[%c1_171, %c7_172] : memref<2x49xf32, #tpu.memory_space<smem>>
    %473 = vector.broadcast %472 : f32 to vector<1x256xf32>
    %474 = arith.mulf %471, %473 : vector<1x256xf32>
    %475 = arith.addf %470, %474 : vector<1x256xf32>
    %cst_173 = arith.constant 0.000000e+00 : f32
    %476 = vector.broadcast %cst_173 : f32 to vector<1x256xf32>
    %477 = arith.select %69, %475, %476 : vector<1x256xi1>, vector<1x256xf32>
    %478 = arith.addf %466, %477 : vector<1x256xf32>
    %c34_i32 = arith.constant 34 : i32
    %479 = tpu.dynamic_rotate %373 by %c34_i32 dim 1 : vector<1x256xf32>, i32 -> vector<1x256xf32>
    %c0_174 = arith.constant 0 : index
    %c8 = arith.constant 8 : index
    %480 = memref.load %arg9[%c0_174, %c8] : memref<2x49xf32, #tpu.memory_space<smem>>
    %481 = vector.broadcast %480 : f32 to vector<1x256xf32>
    %482 = arith.mulf %479, %481 : vector<1x256xf32>
    %c34_i32_175 = arith.constant 34 : i32
    %483 = tpu.dynamic_rotate %375 by %c34_i32_175 dim 1 : vector<1x256xf32>, i32 -> vector<1x256xf32>
    %c1_176 = arith.constant 1 : index
    %c8_177 = arith.constant 8 : index
    %484 = memref.load %arg9[%c1_176, %c8_177] : memref<2x49xf32, #tpu.memory_space<smem>>
    %485 = vector.broadcast %484 : f32 to vector<1x256xf32>
    %486 = arith.mulf %483, %485 : vector<1x256xf32>
    %487 = arith.addf %482, %486 : vector<1x256xf32>
    %cst_178 = arith.constant 0.000000e+00 : f32
    %488 = vector.broadcast %cst_178 : f32 to vector<1x256xf32>
    %489 = arith.select %74, %487, %488 : vector<1x256xi1>, vector<1x256xf32>
    %490 = arith.addf %478, %489 : vector<1x256xf32>
    %c33_i32 = arith.constant 33 : i32
    %491 = tpu.dynamic_rotate %373 by %c33_i32 dim 1 : vector<1x256xf32>, i32 -> vector<1x256xf32>
    %c0_179 = arith.constant 0 : index
    %c9 = arith.constant 9 : index
    %492 = memref.load %arg9[%c0_179, %c9] : memref<2x49xf32, #tpu.memory_space<smem>>
    %493 = vector.broadcast %492 : f32 to vector<1x256xf32>
    %494 = arith.mulf %491, %493 : vector<1x256xf32>
    %c33_i32_180 = arith.constant 33 : i32
    %495 = tpu.dynamic_rotate %375 by %c33_i32_180 dim 1 : vector<1x256xf32>, i32 -> vector<1x256xf32>
    %c1_181 = arith.constant 1 : index
    %c9_182 = arith.constant 9 : index
    %496 = memref.load %arg9[%c1_181, %c9_182] : memref<2x49xf32, #tpu.memory_space<smem>>
    %497 = vector.broadcast %496 : f32 to vector<1x256xf32>
    %498 = arith.mulf %495, %497 : vector<1x256xf32>
    %499 = arith.addf %494, %498 : vector<1x256xf32>
    %cst_183 = arith.constant 0.000000e+00 : f32
    %500 = vector.broadcast %cst_183 : f32 to vector<1x256xf32>
    %501 = arith.select %79, %499, %500 : vector<1x256xi1>, vector<1x256xf32>
    %502 = arith.addf %490, %501 : vector<1x256xf32>
    %c32_i32 = arith.constant 32 : i32
    %503 = tpu.dynamic_rotate %373 by %c32_i32 dim 1 : vector<1x256xf32>, i32 -> vector<1x256xf32>
    %c0_184 = arith.constant 0 : index
    %c10 = arith.constant 10 : index
    %504 = memref.load %arg9[%c0_184, %c10] : memref<2x49xf32, #tpu.memory_space<smem>>
    %505 = vector.broadcast %504 : f32 to vector<1x256xf32>
    %506 = arith.mulf %503, %505 : vector<1x256xf32>
    %c32_i32_185 = arith.constant 32 : i32
    %507 = tpu.dynamic_rotate %375 by %c32_i32_185 dim 1 : vector<1x256xf32>, i32 -> vector<1x256xf32>
    %c1_186 = arith.constant 1 : index
    %c10_187 = arith.constant 10 : index
    %508 = memref.load %arg9[%c1_186, %c10_187] : memref<2x49xf32, #tpu.memory_space<smem>>
    %509 = vector.broadcast %508 : f32 to vector<1x256xf32>
    %510 = arith.mulf %507, %509 : vector<1x256xf32>
    %511 = arith.addf %506, %510 : vector<1x256xf32>
    %cst_188 = arith.constant 0.000000e+00 : f32
    %512 = vector.broadcast %cst_188 : f32 to vector<1x256xf32>
    %513 = arith.select %81, %511, %512 : vector<1x256xi1>, vector<1x256xf32>
    %514 = arith.addf %502, %513 : vector<1x256xf32>
    %c31_i32 = arith.constant 31 : i32
    %515 = tpu.dynamic_rotate %373 by %c31_i32 dim 1 : vector<1x256xf32>, i32 -> vector<1x256xf32>
    %c0_189 = arith.constant 0 : index
    %c11 = arith.constant 11 : index
    %516 = memref.load %arg9[%c0_189, %c11] : memref<2x49xf32, #tpu.memory_space<smem>>
    %517 = vector.broadcast %516 : f32 to vector<1x256xf32>
    %518 = arith.mulf %515, %517 : vector<1x256xf32>
    %c31_i32_190 = arith.constant 31 : i32
    %519 = tpu.dynamic_rotate %375 by %c31_i32_190 dim 1 : vector<1x256xf32>, i32 -> vector<1x256xf32>
    %c1_191 = arith.constant 1 : index
    %c11_192 = arith.constant 11 : index
    %520 = memref.load %arg9[%c1_191, %c11_192] : memref<2x49xf32, #tpu.memory_space<smem>>
    %521 = vector.broadcast %520 : f32 to vector<1x256xf32>
    %522 = arith.mulf %519, %521 : vector<1x256xf32>
    %523 = arith.addf %518, %522 : vector<1x256xf32>
    %cst_193 = arith.constant 0.000000e+00 : f32
    %524 = vector.broadcast %cst_193 : f32 to vector<1x256xf32>
    %525 = arith.select %86, %523, %524 : vector<1x256xi1>, vector<1x256xf32>
    %526 = arith.addf %514, %525 : vector<1x256xf32>
    %c30_i32 = arith.constant 30 : i32
    %527 = tpu.dynamic_rotate %373 by %c30_i32 dim 1 : vector<1x256xf32>, i32 -> vector<1x256xf32>
    %c0_194 = arith.constant 0 : index
    %c12 = arith.constant 12 : index
    %528 = memref.load %arg9[%c0_194, %c12] : memref<2x49xf32, #tpu.memory_space<smem>>
    %529 = vector.broadcast %528 : f32 to vector<1x256xf32>
    %530 = arith.mulf %527, %529 : vector<1x256xf32>
    %c30_i32_195 = arith.constant 30 : i32
    %531 = tpu.dynamic_rotate %375 by %c30_i32_195 dim 1 : vector<1x256xf32>, i32 -> vector<1x256xf32>
    %c1_196 = arith.constant 1 : index
    %c12_197 = arith.constant 12 : index
    %532 = memref.load %arg9[%c1_196, %c12_197] : memref<2x49xf32, #tpu.memory_space<smem>>
    %533 = vector.broadcast %532 : f32 to vector<1x256xf32>
    %534 = arith.mulf %531, %533 : vector<1x256xf32>
    %535 = arith.addf %530, %534 : vector<1x256xf32>
    %cst_198 = arith.constant 0.000000e+00 : f32
    %536 = vector.broadcast %cst_198 : f32 to vector<1x256xf32>
    %537 = arith.select %91, %535, %536 : vector<1x256xi1>, vector<1x256xf32>
    %538 = arith.addf %526, %537 : vector<1x256xf32>
    %c29_i32 = arith.constant 29 : i32
    %539 = tpu.dynamic_rotate %373 by %c29_i32 dim 1 : vector<1x256xf32>, i32 -> vector<1x256xf32>
    %c0_199 = arith.constant 0 : index
    %c13 = arith.constant 13 : index
    %540 = memref.load %arg9[%c0_199, %c13] : memref<2x49xf32, #tpu.memory_space<smem>>
    %541 = vector.broadcast %540 : f32 to vector<1x256xf32>
    %542 = arith.mulf %539, %541 : vector<1x256xf32>
    %c29_i32_200 = arith.constant 29 : i32
    %543 = tpu.dynamic_rotate %375 by %c29_i32_200 dim 1 : vector<1x256xf32>, i32 -> vector<1x256xf32>
    %c1_201 = arith.constant 1 : index
    %c13_202 = arith.constant 13 : index
    %544 = memref.load %arg9[%c1_201, %c13_202] : memref<2x49xf32, #tpu.memory_space<smem>>
    %545 = vector.broadcast %544 : f32 to vector<1x256xf32>
    %546 = arith.mulf %543, %545 : vector<1x256xf32>
    %547 = arith.addf %542, %546 : vector<1x256xf32>
    %cst_203 = arith.constant 0.000000e+00 : f32
    %548 = vector.broadcast %cst_203 : f32 to vector<1x256xf32>
    %549 = arith.select %96, %547, %548 : vector<1x256xi1>, vector<1x256xf32>
    %550 = arith.addf %538, %549 : vector<1x256xf32>
    %c19_i32 = arith.constant 19 : i32
    %551 = tpu.dynamic_rotate %373 by %c19_i32 dim 1 : vector<1x256xf32>, i32 -> vector<1x256xf32>
    %c0_204 = arith.constant 0 : index
    %c14 = arith.constant 14 : index
    %552 = memref.load %arg9[%c0_204, %c14] : memref<2x49xf32, #tpu.memory_space<smem>>
    %553 = vector.broadcast %552 : f32 to vector<1x256xf32>
    %554 = arith.mulf %551, %553 : vector<1x256xf32>
    %c19_i32_205 = arith.constant 19 : i32
    %555 = tpu.dynamic_rotate %375 by %c19_i32_205 dim 1 : vector<1x256xf32>, i32 -> vector<1x256xf32>
    %c1_206 = arith.constant 1 : index
    %c14_207 = arith.constant 14 : index
    %556 = memref.load %arg9[%c1_206, %c14_207] : memref<2x49xf32, #tpu.memory_space<smem>>
    %557 = vector.broadcast %556 : f32 to vector<1x256xf32>
    %558 = arith.mulf %555, %557 : vector<1x256xf32>
    %559 = arith.addf %554, %558 : vector<1x256xf32>
    %cst_208 = arith.constant 0.000000e+00 : f32
    %560 = vector.broadcast %cst_208 : f32 to vector<1x256xf32>
    %561 = arith.select %101, %559, %560 : vector<1x256xi1>, vector<1x256xf32>
    %562 = arith.addf %550, %561 : vector<1x256xf32>
    %c18_i32 = arith.constant 18 : i32
    %563 = tpu.dynamic_rotate %373 by %c18_i32 dim 1 : vector<1x256xf32>, i32 -> vector<1x256xf32>
    %c0_209 = arith.constant 0 : index
    %c15 = arith.constant 15 : index
    %564 = memref.load %arg9[%c0_209, %c15] : memref<2x49xf32, #tpu.memory_space<smem>>
    %565 = vector.broadcast %564 : f32 to vector<1x256xf32>
    %566 = arith.mulf %563, %565 : vector<1x256xf32>
    %c18_i32_210 = arith.constant 18 : i32
    %567 = tpu.dynamic_rotate %375 by %c18_i32_210 dim 1 : vector<1x256xf32>, i32 -> vector<1x256xf32>
    %c1_211 = arith.constant 1 : index
    %c15_212 = arith.constant 15 : index
    %568 = memref.load %arg9[%c1_211, %c15_212] : memref<2x49xf32, #tpu.memory_space<smem>>
    %569 = vector.broadcast %568 : f32 to vector<1x256xf32>
    %570 = arith.mulf %567, %569 : vector<1x256xf32>
    %571 = arith.addf %566, %570 : vector<1x256xf32>
    %cst_213 = arith.constant 0.000000e+00 : f32
    %572 = vector.broadcast %cst_213 : f32 to vector<1x256xf32>
    %573 = arith.select %106, %571, %572 : vector<1x256xi1>, vector<1x256xf32>
    %574 = arith.addf %562, %573 : vector<1x256xf32>
    %c17_i32_214 = arith.constant 17 : i32
    %575 = tpu.dynamic_rotate %373 by %c17_i32_214 dim 1 : vector<1x256xf32>, i32 -> vector<1x256xf32>
    %c0_215 = arith.constant 0 : index
    %c16 = arith.constant 16 : index
    %576 = memref.load %arg9[%c0_215, %c16] : memref<2x49xf32, #tpu.memory_space<smem>>
    %577 = vector.broadcast %576 : f32 to vector<1x256xf32>
    %578 = arith.mulf %575, %577 : vector<1x256xf32>
    %c17_i32_216 = arith.constant 17 : i32
    %579 = tpu.dynamic_rotate %375 by %c17_i32_216 dim 1 : vector<1x256xf32>, i32 -> vector<1x256xf32>
    %c1_217 = arith.constant 1 : index
    %c16_218 = arith.constant 16 : index
    %580 = memref.load %arg9[%c1_217, %c16_218] : memref<2x49xf32, #tpu.memory_space<smem>>
    %581 = vector.broadcast %580 : f32 to vector<1x256xf32>
    %582 = arith.mulf %579, %581 : vector<1x256xf32>
    %583 = arith.addf %578, %582 : vector<1x256xf32>
    %cst_219 = arith.constant 0.000000e+00 : f32
    %584 = vector.broadcast %cst_219 : f32 to vector<1x256xf32>
    %585 = arith.select %111, %583, %584 : vector<1x256xi1>, vector<1x256xf32>
    %586 = arith.addf %574, %585 : vector<1x256xf32>
    %c16_i32_220 = arith.constant 16 : i32
    %587 = tpu.dynamic_rotate %373 by %c16_i32_220 dim 1 : vector<1x256xf32>, i32 -> vector<1x256xf32>
    %c0_221 = arith.constant 0 : index
    %c17 = arith.constant 17 : index
    %588 = memref.load %arg9[%c0_221, %c17] : memref<2x49xf32, #tpu.memory_space<smem>>
    %589 = vector.broadcast %588 : f32 to vector<1x256xf32>
    %590 = arith.mulf %587, %589 : vector<1x256xf32>
    %c16_i32_222 = arith.constant 16 : i32
    %591 = tpu.dynamic_rotate %375 by %c16_i32_222 dim 1 : vector<1x256xf32>, i32 -> vector<1x256xf32>
    %c1_223 = arith.constant 1 : index
    %c17_224 = arith.constant 17 : index
    %592 = memref.load %arg9[%c1_223, %c17_224] : memref<2x49xf32, #tpu.memory_space<smem>>
    %593 = vector.broadcast %592 : f32 to vector<1x256xf32>
    %594 = arith.mulf %591, %593 : vector<1x256xf32>
    %595 = arith.addf %590, %594 : vector<1x256xf32>
    %cst_225 = arith.constant 0.000000e+00 : f32
    %596 = vector.broadcast %cst_225 : f32 to vector<1x256xf32>
    %597 = arith.select %113, %595, %596 : vector<1x256xi1>, vector<1x256xf32>
    %598 = arith.addf %586, %597 : vector<1x256xf32>
    %c15_i32_226 = arith.constant 15 : i32
    %599 = tpu.dynamic_rotate %373 by %c15_i32_226 dim 1 : vector<1x256xf32>, i32 -> vector<1x256xf32>
    %c0_227 = arith.constant 0 : index
    %c18 = arith.constant 18 : index
    %600 = memref.load %arg9[%c0_227, %c18] : memref<2x49xf32, #tpu.memory_space<smem>>
    %601 = vector.broadcast %600 : f32 to vector<1x256xf32>
    %602 = arith.mulf %599, %601 : vector<1x256xf32>
    %c15_i32_228 = arith.constant 15 : i32
    %603 = tpu.dynamic_rotate %375 by %c15_i32_228 dim 1 : vector<1x256xf32>, i32 -> vector<1x256xf32>
    %c1_229 = arith.constant 1 : index
    %c18_230 = arith.constant 18 : index
    %604 = memref.load %arg9[%c1_229, %c18_230] : memref<2x49xf32, #tpu.memory_space<smem>>
    %605 = vector.broadcast %604 : f32 to vector<1x256xf32>
    %606 = arith.mulf %603, %605 : vector<1x256xf32>
    %607 = arith.addf %602, %606 : vector<1x256xf32>
    %cst_231 = arith.constant 0.000000e+00 : f32
    %608 = vector.broadcast %cst_231 : f32 to vector<1x256xf32>
    %609 = arith.select %118, %607, %608 : vector<1x256xi1>, vector<1x256xf32>
    %610 = arith.addf %598, %609 : vector<1x256xf32>
    %c14_i32_232 = arith.constant 14 : i32
    %611 = tpu.dynamic_rotate %373 by %c14_i32_232 dim 1 : vector<1x256xf32>, i32 -> vector<1x256xf32>
    %c0_233 = arith.constant 0 : index
    %c19 = arith.constant 19 : index
    %612 = memref.load %arg9[%c0_233, %c19] : memref<2x49xf32, #tpu.memory_space<smem>>
    %613 = vector.broadcast %612 : f32 to vector<1x256xf32>
    %614 = arith.mulf %611, %613 : vector<1x256xf32>
    %c14_i32_234 = arith.constant 14 : i32
    %615 = tpu.dynamic_rotate %375 by %c14_i32_234 dim 1 : vector<1x256xf32>, i32 -> vector<1x256xf32>
    %c1_235 = arith.constant 1 : index
    %c19_236 = arith.constant 19 : index
    %616 = memref.load %arg9[%c1_235, %c19_236] : memref<2x49xf32, #tpu.memory_space<smem>>
    %617 = vector.broadcast %616 : f32 to vector<1x256xf32>
    %618 = arith.mulf %615, %617 : vector<1x256xf32>
    %619 = arith.addf %614, %618 : vector<1x256xf32>
    %cst_237 = arith.constant 0.000000e+00 : f32
    %620 = vector.broadcast %cst_237 : f32 to vector<1x256xf32>
    %621 = arith.select %123, %619, %620 : vector<1x256xi1>, vector<1x256xf32>
    %622 = arith.addf %610, %621 : vector<1x256xf32>
    %c13_i32_238 = arith.constant 13 : i32
    %623 = tpu.dynamic_rotate %373 by %c13_i32_238 dim 1 : vector<1x256xf32>, i32 -> vector<1x256xf32>
    %c0_239 = arith.constant 0 : index
    %c20 = arith.constant 20 : index
    %624 = memref.load %arg9[%c0_239, %c20] : memref<2x49xf32, #tpu.memory_space<smem>>
    %625 = vector.broadcast %624 : f32 to vector<1x256xf32>
    %626 = arith.mulf %623, %625 : vector<1x256xf32>
    %c13_i32_240 = arith.constant 13 : i32
    %627 = tpu.dynamic_rotate %375 by %c13_i32_240 dim 1 : vector<1x256xf32>, i32 -> vector<1x256xf32>
    %c1_241 = arith.constant 1 : index
    %c20_242 = arith.constant 20 : index
    %628 = memref.load %arg9[%c1_241, %c20_242] : memref<2x49xf32, #tpu.memory_space<smem>>
    %629 = vector.broadcast %628 : f32 to vector<1x256xf32>
    %630 = arith.mulf %627, %629 : vector<1x256xf32>
    %631 = arith.addf %626, %630 : vector<1x256xf32>
    %cst_243 = arith.constant 0.000000e+00 : f32
    %632 = vector.broadcast %cst_243 : f32 to vector<1x256xf32>
    %633 = arith.select %128, %631, %632 : vector<1x256xi1>, vector<1x256xf32>
    %634 = arith.addf %622, %633 : vector<1x256xf32>
    %c3_i32_244 = arith.constant 3 : i32
    %635 = tpu.dynamic_rotate %373 by %c3_i32_244 dim 1 : vector<1x256xf32>, i32 -> vector<1x256xf32>
    %c0_245 = arith.constant 0 : index
    %c21 = arith.constant 21 : index
    %636 = memref.load %arg9[%c0_245, %c21] : memref<2x49xf32, #tpu.memory_space<smem>>
    %637 = vector.broadcast %636 : f32 to vector<1x256xf32>
    %638 = arith.mulf %635, %637 : vector<1x256xf32>
    %c3_i32_246 = arith.constant 3 : i32
    %639 = tpu.dynamic_rotate %375 by %c3_i32_246 dim 1 : vector<1x256xf32>, i32 -> vector<1x256xf32>
    %c1_247 = arith.constant 1 : index
    %c21_248 = arith.constant 21 : index
    %640 = memref.load %arg9[%c1_247, %c21_248] : memref<2x49xf32, #tpu.memory_space<smem>>
    %641 = vector.broadcast %640 : f32 to vector<1x256xf32>
    %642 = arith.mulf %639, %641 : vector<1x256xf32>
    %643 = arith.addf %638, %642 : vector<1x256xf32>
    %cst_249 = arith.constant 0.000000e+00 : f32
    %644 = vector.broadcast %cst_249 : f32 to vector<1x256xf32>
    %645 = arith.select %130, %643, %644 : vector<1x256xi1>, vector<1x256xf32>
    %646 = arith.addf %634, %645 : vector<1x256xf32>
    %c2_i32_250 = arith.constant 2 : i32
    %647 = tpu.dynamic_rotate %373 by %c2_i32_250 dim 1 : vector<1x256xf32>, i32 -> vector<1x256xf32>
    %c0_251 = arith.constant 0 : index
    %c22 = arith.constant 22 : index
    %648 = memref.load %arg9[%c0_251, %c22] : memref<2x49xf32, #tpu.memory_space<smem>>
    %649 = vector.broadcast %648 : f32 to vector<1x256xf32>
    %650 = arith.mulf %647, %649 : vector<1x256xf32>
    %c2_i32_252 = arith.constant 2 : i32
    %651 = tpu.dynamic_rotate %375 by %c2_i32_252 dim 1 : vector<1x256xf32>, i32 -> vector<1x256xf32>
    %c1_253 = arith.constant 1 : index
    %c22_254 = arith.constant 22 : index
    %652 = memref.load %arg9[%c1_253, %c22_254] : memref<2x49xf32, #tpu.memory_space<smem>>
    %653 = vector.broadcast %652 : f32 to vector<1x256xf32>
    %654 = arith.mulf %651, %653 : vector<1x256xf32>
    %655 = arith.addf %650, %654 : vector<1x256xf32>
    %cst_255 = arith.constant 0.000000e+00 : f32
    %656 = vector.broadcast %cst_255 : f32 to vector<1x256xf32>
    %657 = arith.select %132, %655, %656 : vector<1x256xi1>, vector<1x256xf32>
    %658 = arith.addf %646, %657 : vector<1x256xf32>
    %c1_i32_256 = arith.constant 1 : i32
    %659 = tpu.dynamic_rotate %373 by %c1_i32_256 dim 1 : vector<1x256xf32>, i32 -> vector<1x256xf32>
    %c0_257 = arith.constant 0 : index
    %c23 = arith.constant 23 : index
    %660 = memref.load %arg9[%c0_257, %c23] : memref<2x49xf32, #tpu.memory_space<smem>>
    %661 = vector.broadcast %660 : f32 to vector<1x256xf32>
    %662 = arith.mulf %659, %661 : vector<1x256xf32>
    %c1_i32_258 = arith.constant 1 : i32
    %663 = tpu.dynamic_rotate %375 by %c1_i32_258 dim 1 : vector<1x256xf32>, i32 -> vector<1x256xf32>
    %c1_259 = arith.constant 1 : index
    %c23_260 = arith.constant 23 : index
    %664 = memref.load %arg9[%c1_259, %c23_260] : memref<2x49xf32, #tpu.memory_space<smem>>
    %665 = vector.broadcast %664 : f32 to vector<1x256xf32>
    %666 = arith.mulf %663, %665 : vector<1x256xf32>
    %667 = arith.addf %662, %666 : vector<1x256xf32>
    %cst_261 = arith.constant 0.000000e+00 : f32
    %668 = vector.broadcast %cst_261 : f32 to vector<1x256xf32>
    %669 = arith.select %134, %667, %668 : vector<1x256xi1>, vector<1x256xf32>
    %670 = arith.addf %658, %669 : vector<1x256xf32>
    %c255_i32_262 = arith.constant 255 : i32
    %671 = tpu.dynamic_rotate %373 by %c255_i32_262 dim 1 : vector<1x256xf32>, i32 -> vector<1x256xf32>
    %c0_263 = arith.constant 0 : index
    %c25 = arith.constant 25 : index
    %672 = memref.load %arg9[%c0_263, %c25] : memref<2x49xf32, #tpu.memory_space<smem>>
    %673 = vector.broadcast %672 : f32 to vector<1x256xf32>
    %674 = arith.mulf %671, %673 : vector<1x256xf32>
    %c255_i32_264 = arith.constant 255 : i32
    %675 = tpu.dynamic_rotate %375 by %c255_i32_264 dim 1 : vector<1x256xf32>, i32 -> vector<1x256xf32>
    %c1_265 = arith.constant 1 : index
    %c25_266 = arith.constant 25 : index
    %676 = memref.load %arg9[%c1_265, %c25_266] : memref<2x49xf32, #tpu.memory_space<smem>>
    %677 = vector.broadcast %676 : f32 to vector<1x256xf32>
    %678 = arith.mulf %675, %677 : vector<1x256xf32>
    %679 = arith.addf %674, %678 : vector<1x256xf32>
    %cst_267 = arith.constant 0.000000e+00 : f32
    %680 = vector.broadcast %cst_267 : f32 to vector<1x256xf32>
    %681 = arith.select %136, %679, %680 : vector<1x256xi1>, vector<1x256xf32>
    %682 = arith.addf %670, %681 : vector<1x256xf32>
    %c254_i32 = arith.constant 254 : i32
    %683 = tpu.dynamic_rotate %373 by %c254_i32 dim 1 : vector<1x256xf32>, i32 -> vector<1x256xf32>
    %c0_268 = arith.constant 0 : index
    %c26 = arith.constant 26 : index
    %684 = memref.load %arg9[%c0_268, %c26] : memref<2x49xf32, #tpu.memory_space<smem>>
    %685 = vector.broadcast %684 : f32 to vector<1x256xf32>
    %686 = arith.mulf %683, %685 : vector<1x256xf32>
    %c254_i32_269 = arith.constant 254 : i32
    %687 = tpu.dynamic_rotate %375 by %c254_i32_269 dim 1 : vector<1x256xf32>, i32 -> vector<1x256xf32>
    %c1_270 = arith.constant 1 : index
    %c26_271 = arith.constant 26 : index
    %688 = memref.load %arg9[%c1_270, %c26_271] : memref<2x49xf32, #tpu.memory_space<smem>>
    %689 = vector.broadcast %688 : f32 to vector<1x256xf32>
    %690 = arith.mulf %687, %689 : vector<1x256xf32>
    %691 = arith.addf %686, %690 : vector<1x256xf32>
    %cst_272 = arith.constant 0.000000e+00 : f32
    %692 = vector.broadcast %cst_272 : f32 to vector<1x256xf32>
    %693 = arith.select %138, %691, %692 : vector<1x256xi1>, vector<1x256xf32>
    %694 = arith.addf %682, %693 : vector<1x256xf32>
    %c253_i32 = arith.constant 253 : i32
    %695 = tpu.dynamic_rotate %373 by %c253_i32 dim 1 : vector<1x256xf32>, i32 -> vector<1x256xf32>
    %c0_273 = arith.constant 0 : index
    %c27 = arith.constant 27 : index
    %696 = memref.load %arg9[%c0_273, %c27] : memref<2x49xf32, #tpu.memory_space<smem>>
    %697 = vector.broadcast %696 : f32 to vector<1x256xf32>
    %698 = arith.mulf %695, %697 : vector<1x256xf32>
    %c253_i32_274 = arith.constant 253 : i32
    %699 = tpu.dynamic_rotate %375 by %c253_i32_274 dim 1 : vector<1x256xf32>, i32 -> vector<1x256xf32>
    %c1_275 = arith.constant 1 : index
    %c27_276 = arith.constant 27 : index
    %700 = memref.load %arg9[%c1_275, %c27_276] : memref<2x49xf32, #tpu.memory_space<smem>>
    %701 = vector.broadcast %700 : f32 to vector<1x256xf32>
    %702 = arith.mulf %699, %701 : vector<1x256xf32>
    %703 = arith.addf %698, %702 : vector<1x256xf32>
    %cst_277 = arith.constant 0.000000e+00 : f32
    %704 = vector.broadcast %cst_277 : f32 to vector<1x256xf32>
    %705 = arith.select %140, %703, %704 : vector<1x256xi1>, vector<1x256xf32>
    %706 = arith.addf %694, %705 : vector<1x256xf32>
    %c243_i32 = arith.constant 243 : i32
    %707 = tpu.dynamic_rotate %373 by %c243_i32 dim 1 : vector<1x256xf32>, i32 -> vector<1x256xf32>
    %c0_278 = arith.constant 0 : index
    %c28 = arith.constant 28 : index
    %708 = memref.load %arg9[%c0_278, %c28] : memref<2x49xf32, #tpu.memory_space<smem>>
    %709 = vector.broadcast %708 : f32 to vector<1x256xf32>
    %710 = arith.mulf %707, %709 : vector<1x256xf32>
    %c243_i32_279 = arith.constant 243 : i32
    %711 = tpu.dynamic_rotate %375 by %c243_i32_279 dim 1 : vector<1x256xf32>, i32 -> vector<1x256xf32>
    %c1_280 = arith.constant 1 : index
    %c28_281 = arith.constant 28 : index
    %712 = memref.load %arg9[%c1_280, %c28_281] : memref<2x49xf32, #tpu.memory_space<smem>>
    %713 = vector.broadcast %712 : f32 to vector<1x256xf32>
    %714 = arith.mulf %711, %713 : vector<1x256xf32>
    %715 = arith.addf %710, %714 : vector<1x256xf32>
    %cst_282 = arith.constant 0.000000e+00 : f32
    %716 = vector.broadcast %cst_282 : f32 to vector<1x256xf32>
    %717 = arith.select %145, %715, %716 : vector<1x256xi1>, vector<1x256xf32>
    %718 = arith.addf %706, %717 : vector<1x256xf32>
    %c242_i32 = arith.constant 242 : i32
    %719 = tpu.dynamic_rotate %373 by %c242_i32 dim 1 : vector<1x256xf32>, i32 -> vector<1x256xf32>
    %c0_283 = arith.constant 0 : index
    %c29 = arith.constant 29 : index
    %720 = memref.load %arg9[%c0_283, %c29] : memref<2x49xf32, #tpu.memory_space<smem>>
    %721 = vector.broadcast %720 : f32 to vector<1x256xf32>
    %722 = arith.mulf %719, %721 : vector<1x256xf32>
    %c242_i32_284 = arith.constant 242 : i32
    %723 = tpu.dynamic_rotate %375 by %c242_i32_284 dim 1 : vector<1x256xf32>, i32 -> vector<1x256xf32>
    %c1_285 = arith.constant 1 : index
    %c29_286 = arith.constant 29 : index
    %724 = memref.load %arg9[%c1_285, %c29_286] : memref<2x49xf32, #tpu.memory_space<smem>>
    %725 = vector.broadcast %724 : f32 to vector<1x256xf32>
    %726 = arith.mulf %723, %725 : vector<1x256xf32>
    %727 = arith.addf %722, %726 : vector<1x256xf32>
    %cst_287 = arith.constant 0.000000e+00 : f32
    %728 = vector.broadcast %cst_287 : f32 to vector<1x256xf32>
    %729 = arith.select %150, %727, %728 : vector<1x256xi1>, vector<1x256xf32>
    %730 = arith.addf %718, %729 : vector<1x256xf32>
    %c241_i32_288 = arith.constant 241 : i32
    %731 = tpu.dynamic_rotate %373 by %c241_i32_288 dim 1 : vector<1x256xf32>, i32 -> vector<1x256xf32>
    %c0_289 = arith.constant 0 : index
    %c30 = arith.constant 30 : index
    %732 = memref.load %arg9[%c0_289, %c30] : memref<2x49xf32, #tpu.memory_space<smem>>
    %733 = vector.broadcast %732 : f32 to vector<1x256xf32>
    %734 = arith.mulf %731, %733 : vector<1x256xf32>
    %c241_i32_290 = arith.constant 241 : i32
    %735 = tpu.dynamic_rotate %375 by %c241_i32_290 dim 1 : vector<1x256xf32>, i32 -> vector<1x256xf32>
    %c1_291 = arith.constant 1 : index
    %c30_292 = arith.constant 30 : index
    %736 = memref.load %arg9[%c1_291, %c30_292] : memref<2x49xf32, #tpu.memory_space<smem>>
    %737 = vector.broadcast %736 : f32 to vector<1x256xf32>
    %738 = arith.mulf %735, %737 : vector<1x256xf32>
    %739 = arith.addf %734, %738 : vector<1x256xf32>
    %cst_293 = arith.constant 0.000000e+00 : f32
    %740 = vector.broadcast %cst_293 : f32 to vector<1x256xf32>
    %741 = arith.select %155, %739, %740 : vector<1x256xi1>, vector<1x256xf32>
    %742 = arith.addf %730, %741 : vector<1x256xf32>
    %c240_i32_294 = arith.constant 240 : i32
    %743 = tpu.dynamic_rotate %373 by %c240_i32_294 dim 1 : vector<1x256xf32>, i32 -> vector<1x256xf32>
    %c0_295 = arith.constant 0 : index
    %c31 = arith.constant 31 : index
    %744 = memref.load %arg9[%c0_295, %c31] : memref<2x49xf32, #tpu.memory_space<smem>>
    %745 = vector.broadcast %744 : f32 to vector<1x256xf32>
    %746 = arith.mulf %743, %745 : vector<1x256xf32>
    %c240_i32_296 = arith.constant 240 : i32
    %747 = tpu.dynamic_rotate %375 by %c240_i32_296 dim 1 : vector<1x256xf32>, i32 -> vector<1x256xf32>
    %c1_297 = arith.constant 1 : index
    %c31_298 = arith.constant 31 : index
    %748 = memref.load %arg9[%c1_297, %c31_298] : memref<2x49xf32, #tpu.memory_space<smem>>
    %749 = vector.broadcast %748 : f32 to vector<1x256xf32>
    %750 = arith.mulf %747, %749 : vector<1x256xf32>
    %751 = arith.addf %746, %750 : vector<1x256xf32>
    %cst_299 = arith.constant 0.000000e+00 : f32
    %752 = vector.broadcast %cst_299 : f32 to vector<1x256xf32>
    %753 = arith.select %157, %751, %752 : vector<1x256xi1>, vector<1x256xf32>
    %754 = arith.addf %742, %753 : vector<1x256xf32>
    %c239_i32_300 = arith.constant 239 : i32
    %755 = tpu.dynamic_rotate %373 by %c239_i32_300 dim 1 : vector<1x256xf32>, i32 -> vector<1x256xf32>
    %c0_301 = arith.constant 0 : index
    %c32 = arith.constant 32 : index
    %756 = memref.load %arg9[%c0_301, %c32] : memref<2x49xf32, #tpu.memory_space<smem>>
    %757 = vector.broadcast %756 : f32 to vector<1x256xf32>
    %758 = arith.mulf %755, %757 : vector<1x256xf32>
    %c239_i32_302 = arith.constant 239 : i32
    %759 = tpu.dynamic_rotate %375 by %c239_i32_302 dim 1 : vector<1x256xf32>, i32 -> vector<1x256xf32>
    %c1_303 = arith.constant 1 : index
    %c32_304 = arith.constant 32 : index
    %760 = memref.load %arg9[%c1_303, %c32_304] : memref<2x49xf32, #tpu.memory_space<smem>>
    %761 = vector.broadcast %760 : f32 to vector<1x256xf32>
    %762 = arith.mulf %759, %761 : vector<1x256xf32>
    %763 = arith.addf %758, %762 : vector<1x256xf32>
    %cst_305 = arith.constant 0.000000e+00 : f32
    %764 = vector.broadcast %cst_305 : f32 to vector<1x256xf32>
    %765 = arith.select %162, %763, %764 : vector<1x256xi1>, vector<1x256xf32>
    %766 = arith.addf %754, %765 : vector<1x256xf32>
    %c238_i32 = arith.constant 238 : i32
    %767 = tpu.dynamic_rotate %373 by %c238_i32 dim 1 : vector<1x256xf32>, i32 -> vector<1x256xf32>
    %c0_306 = arith.constant 0 : index
    %c33 = arith.constant 33 : index
    %768 = memref.load %arg9[%c0_306, %c33] : memref<2x49xf32, #tpu.memory_space<smem>>
    %769 = vector.broadcast %768 : f32 to vector<1x256xf32>
    %770 = arith.mulf %767, %769 : vector<1x256xf32>
    %c238_i32_307 = arith.constant 238 : i32
    %771 = tpu.dynamic_rotate %375 by %c238_i32_307 dim 1 : vector<1x256xf32>, i32 -> vector<1x256xf32>
    %c1_308 = arith.constant 1 : index
    %c33_309 = arith.constant 33 : index
    %772 = memref.load %arg9[%c1_308, %c33_309] : memref<2x49xf32, #tpu.memory_space<smem>>
    %773 = vector.broadcast %772 : f32 to vector<1x256xf32>
    %774 = arith.mulf %771, %773 : vector<1x256xf32>
    %775 = arith.addf %770, %774 : vector<1x256xf32>
    %cst_310 = arith.constant 0.000000e+00 : f32
    %776 = vector.broadcast %cst_310 : f32 to vector<1x256xf32>
    %777 = arith.select %167, %775, %776 : vector<1x256xi1>, vector<1x256xf32>
    %778 = arith.addf %766, %777 : vector<1x256xf32>
    %c237_i32 = arith.constant 237 : i32
    %779 = tpu.dynamic_rotate %373 by %c237_i32 dim 1 : vector<1x256xf32>, i32 -> vector<1x256xf32>
    %c0_311 = arith.constant 0 : index
    %c34 = arith.constant 34 : index
    %780 = memref.load %arg9[%c0_311, %c34] : memref<2x49xf32, #tpu.memory_space<smem>>
    %781 = vector.broadcast %780 : f32 to vector<1x256xf32>
    %782 = arith.mulf %779, %781 : vector<1x256xf32>
    %c237_i32_312 = arith.constant 237 : i32
    %783 = tpu.dynamic_rotate %375 by %c237_i32_312 dim 1 : vector<1x256xf32>, i32 -> vector<1x256xf32>
    %c1_313 = arith.constant 1 : index
    %c34_314 = arith.constant 34 : index
    %784 = memref.load %arg9[%c1_313, %c34_314] : memref<2x49xf32, #tpu.memory_space<smem>>
    %785 = vector.broadcast %784 : f32 to vector<1x256xf32>
    %786 = arith.mulf %783, %785 : vector<1x256xf32>
    %787 = arith.addf %782, %786 : vector<1x256xf32>
    %cst_315 = arith.constant 0.000000e+00 : f32
    %788 = vector.broadcast %cst_315 : f32 to vector<1x256xf32>
    %789 = arith.select %172, %787, %788 : vector<1x256xi1>, vector<1x256xf32>
    %790 = arith.addf %778, %789 : vector<1x256xf32>
    %c227_i32 = arith.constant 227 : i32
    %791 = tpu.dynamic_rotate %373 by %c227_i32 dim 1 : vector<1x256xf32>, i32 -> vector<1x256xf32>
    %c0_316 = arith.constant 0 : index
    %c35 = arith.constant 35 : index
    %792 = memref.load %arg9[%c0_316, %c35] : memref<2x49xf32, #tpu.memory_space<smem>>
    %793 = vector.broadcast %792 : f32 to vector<1x256xf32>
    %794 = arith.mulf %791, %793 : vector<1x256xf32>
    %c227_i32_317 = arith.constant 227 : i32
    %795 = tpu.dynamic_rotate %375 by %c227_i32_317 dim 1 : vector<1x256xf32>, i32 -> vector<1x256xf32>
    %c1_318 = arith.constant 1 : index
    %c35_319 = arith.constant 35 : index
    %796 = memref.load %arg9[%c1_318, %c35_319] : memref<2x49xf32, #tpu.memory_space<smem>>
    %797 = vector.broadcast %796 : f32 to vector<1x256xf32>
    %798 = arith.mulf %795, %797 : vector<1x256xf32>
    %799 = arith.addf %794, %798 : vector<1x256xf32>
    %cst_320 = arith.constant 0.000000e+00 : f32
    %800 = vector.broadcast %cst_320 : f32 to vector<1x256xf32>
    %801 = arith.select %177, %799, %800 : vector<1x256xi1>, vector<1x256xf32>
    %802 = arith.addf %790, %801 : vector<1x256xf32>
    %c226_i32 = arith.constant 226 : i32
    %803 = tpu.dynamic_rotate %373 by %c226_i32 dim 1 : vector<1x256xf32>, i32 -> vector<1x256xf32>
    %c0_321 = arith.constant 0 : index
    %c36 = arith.constant 36 : index
    %804 = memref.load %arg9[%c0_321, %c36] : memref<2x49xf32, #tpu.memory_space<smem>>
    %805 = vector.broadcast %804 : f32 to vector<1x256xf32>
    %806 = arith.mulf %803, %805 : vector<1x256xf32>
    %c226_i32_322 = arith.constant 226 : i32
    %807 = tpu.dynamic_rotate %375 by %c226_i32_322 dim 1 : vector<1x256xf32>, i32 -> vector<1x256xf32>
    %c1_323 = arith.constant 1 : index
    %c36_324 = arith.constant 36 : index
    %808 = memref.load %arg9[%c1_323, %c36_324] : memref<2x49xf32, #tpu.memory_space<smem>>
    %809 = vector.broadcast %808 : f32 to vector<1x256xf32>
    %810 = arith.mulf %807, %809 : vector<1x256xf32>
    %811 = arith.addf %806, %810 : vector<1x256xf32>
    %cst_325 = arith.constant 0.000000e+00 : f32
    %812 = vector.broadcast %cst_325 : f32 to vector<1x256xf32>
    %813 = arith.select %182, %811, %812 : vector<1x256xi1>, vector<1x256xf32>
    %814 = arith.addf %802, %813 : vector<1x256xf32>
    %c225_i32 = arith.constant 225 : i32
    %815 = tpu.dynamic_rotate %373 by %c225_i32 dim 1 : vector<1x256xf32>, i32 -> vector<1x256xf32>
    %c0_326 = arith.constant 0 : index
    %c37 = arith.constant 37 : index
    %816 = memref.load %arg9[%c0_326, %c37] : memref<2x49xf32, #tpu.memory_space<smem>>
    %817 = vector.broadcast %816 : f32 to vector<1x256xf32>
    %818 = arith.mulf %815, %817 : vector<1x256xf32>
    %c225_i32_327 = arith.constant 225 : i32
    %819 = tpu.dynamic_rotate %375 by %c225_i32_327 dim 1 : vector<1x256xf32>, i32 -> vector<1x256xf32>
    %c1_328 = arith.constant 1 : index
    %c37_329 = arith.constant 37 : index
    %820 = memref.load %arg9[%c1_328, %c37_329] : memref<2x49xf32, #tpu.memory_space<smem>>
    %821 = vector.broadcast %820 : f32 to vector<1x256xf32>
    %822 = arith.mulf %819, %821 : vector<1x256xf32>
    %823 = arith.addf %818, %822 : vector<1x256xf32>
    %cst_330 = arith.constant 0.000000e+00 : f32
    %824 = vector.broadcast %cst_330 : f32 to vector<1x256xf32>
    %825 = arith.select %187, %823, %824 : vector<1x256xi1>, vector<1x256xf32>
    %826 = arith.addf %814, %825 : vector<1x256xf32>
    %c224_i32 = arith.constant 224 : i32
    %827 = tpu.dynamic_rotate %373 by %c224_i32 dim 1 : vector<1x256xf32>, i32 -> vector<1x256xf32>
    %c0_331 = arith.constant 0 : index
    %c38 = arith.constant 38 : index
    %828 = memref.load %arg9[%c0_331, %c38] : memref<2x49xf32, #tpu.memory_space<smem>>
    %829 = vector.broadcast %828 : f32 to vector<1x256xf32>
    %830 = arith.mulf %827, %829 : vector<1x256xf32>
    %c224_i32_332 = arith.constant 224 : i32
    %831 = tpu.dynamic_rotate %375 by %c224_i32_332 dim 1 : vector<1x256xf32>, i32 -> vector<1x256xf32>
    %c1_333 = arith.constant 1 : index
    %c38_334 = arith.constant 38 : index
    %832 = memref.load %arg9[%c1_333, %c38_334] : memref<2x49xf32, #tpu.memory_space<smem>>
    %833 = vector.broadcast %832 : f32 to vector<1x256xf32>
    %834 = arith.mulf %831, %833 : vector<1x256xf32>
    %835 = arith.addf %830, %834 : vector<1x256xf32>
    %cst_335 = arith.constant 0.000000e+00 : f32
    %836 = vector.broadcast %cst_335 : f32 to vector<1x256xf32>
    %837 = arith.select %189, %835, %836 : vector<1x256xi1>, vector<1x256xf32>
    %838 = arith.addf %826, %837 : vector<1x256xf32>
    %c223_i32 = arith.constant 223 : i32
    %839 = tpu.dynamic_rotate %373 by %c223_i32 dim 1 : vector<1x256xf32>, i32 -> vector<1x256xf32>
    %c0_336 = arith.constant 0 : index
    %c39 = arith.constant 39 : index
    %840 = memref.load %arg9[%c0_336, %c39] : memref<2x49xf32, #tpu.memory_space<smem>>
    %841 = vector.broadcast %840 : f32 to vector<1x256xf32>
    %842 = arith.mulf %839, %841 : vector<1x256xf32>
    %c223_i32_337 = arith.constant 223 : i32
    %843 = tpu.dynamic_rotate %375 by %c223_i32_337 dim 1 : vector<1x256xf32>, i32 -> vector<1x256xf32>
    %c1_338 = arith.constant 1 : index
    %c39_339 = arith.constant 39 : index
    %844 = memref.load %arg9[%c1_338, %c39_339] : memref<2x49xf32, #tpu.memory_space<smem>>
    %845 = vector.broadcast %844 : f32 to vector<1x256xf32>
    %846 = arith.mulf %843, %845 : vector<1x256xf32>
    %847 = arith.addf %842, %846 : vector<1x256xf32>
    %cst_340 = arith.constant 0.000000e+00 : f32
    %848 = vector.broadcast %cst_340 : f32 to vector<1x256xf32>
    %849 = arith.select %194, %847, %848 : vector<1x256xi1>, vector<1x256xf32>
    %850 = arith.addf %838, %849 : vector<1x256xf32>
    %c222_i32 = arith.constant 222 : i32
    %851 = tpu.dynamic_rotate %373 by %c222_i32 dim 1 : vector<1x256xf32>, i32 -> vector<1x256xf32>
    %c0_341 = arith.constant 0 : index
    %c40 = arith.constant 40 : index
    %852 = memref.load %arg9[%c0_341, %c40] : memref<2x49xf32, #tpu.memory_space<smem>>
    %853 = vector.broadcast %852 : f32 to vector<1x256xf32>
    %854 = arith.mulf %851, %853 : vector<1x256xf32>
    %c222_i32_342 = arith.constant 222 : i32
    %855 = tpu.dynamic_rotate %375 by %c222_i32_342 dim 1 : vector<1x256xf32>, i32 -> vector<1x256xf32>
    %c1_343 = arith.constant 1 : index
    %c40_344 = arith.constant 40 : index
    %856 = memref.load %arg9[%c1_343, %c40_344] : memref<2x49xf32, #tpu.memory_space<smem>>
    %857 = vector.broadcast %856 : f32 to vector<1x256xf32>
    %858 = arith.mulf %855, %857 : vector<1x256xf32>
    %859 = arith.addf %854, %858 : vector<1x256xf32>
    %cst_345 = arith.constant 0.000000e+00 : f32
    %860 = vector.broadcast %cst_345 : f32 to vector<1x256xf32>
    %861 = arith.select %199, %859, %860 : vector<1x256xi1>, vector<1x256xf32>
    %862 = arith.addf %850, %861 : vector<1x256xf32>
    %c221_i32 = arith.constant 221 : i32
    %863 = tpu.dynamic_rotate %373 by %c221_i32 dim 1 : vector<1x256xf32>, i32 -> vector<1x256xf32>
    %c0_346 = arith.constant 0 : index
    %c41 = arith.constant 41 : index
    %864 = memref.load %arg9[%c0_346, %c41] : memref<2x49xf32, #tpu.memory_space<smem>>
    %865 = vector.broadcast %864 : f32 to vector<1x256xf32>
    %866 = arith.mulf %863, %865 : vector<1x256xf32>
    %c221_i32_347 = arith.constant 221 : i32
    %867 = tpu.dynamic_rotate %375 by %c221_i32_347 dim 1 : vector<1x256xf32>, i32 -> vector<1x256xf32>
    %c1_348 = arith.constant 1 : index
    %c41_349 = arith.constant 41 : index
    %868 = memref.load %arg9[%c1_348, %c41_349] : memref<2x49xf32, #tpu.memory_space<smem>>
    %869 = vector.broadcast %868 : f32 to vector<1x256xf32>
    %870 = arith.mulf %867, %869 : vector<1x256xf32>
    %871 = arith.addf %866, %870 : vector<1x256xf32>
    %cst_350 = arith.constant 0.000000e+00 : f32
    %872 = vector.broadcast %cst_350 : f32 to vector<1x256xf32>
    %873 = arith.select %204, %871, %872 : vector<1x256xi1>, vector<1x256xf32>
    %874 = arith.addf %862, %873 : vector<1x256xf32>
    %c211_i32 = arith.constant 211 : i32
    %875 = tpu.dynamic_rotate %373 by %c211_i32 dim 1 : vector<1x256xf32>, i32 -> vector<1x256xf32>
    %c0_351 = arith.constant 0 : index
    %c42 = arith.constant 42 : index
    %876 = memref.load %arg9[%c0_351, %c42] : memref<2x49xf32, #tpu.memory_space<smem>>
    %877 = vector.broadcast %876 : f32 to vector<1x256xf32>
    %878 = arith.mulf %875, %877 : vector<1x256xf32>
    %c211_i32_352 = arith.constant 211 : i32
    %879 = tpu.dynamic_rotate %375 by %c211_i32_352 dim 1 : vector<1x256xf32>, i32 -> vector<1x256xf32>
    %c1_353 = arith.constant 1 : index
    %c42_354 = arith.constant 42 : index
    %880 = memref.load %arg9[%c1_353, %c42_354] : memref<2x49xf32, #tpu.memory_space<smem>>
    %881 = vector.broadcast %880 : f32 to vector<1x256xf32>
    %882 = arith.mulf %879, %881 : vector<1x256xf32>
    %883 = arith.addf %878, %882 : vector<1x256xf32>
    %cst_355 = arith.constant 0.000000e+00 : f32
    %884 = vector.broadcast %cst_355 : f32 to vector<1x256xf32>
    %885 = arith.select %209, %883, %884 : vector<1x256xi1>, vector<1x256xf32>
    %886 = arith.addf %874, %885 : vector<1x256xf32>
    %c210_i32 = arith.constant 210 : i32
    %887 = tpu.dynamic_rotate %373 by %c210_i32 dim 1 : vector<1x256xf32>, i32 -> vector<1x256xf32>
    %c0_356 = arith.constant 0 : index
    %c43 = arith.constant 43 : index
    %888 = memref.load %arg9[%c0_356, %c43] : memref<2x49xf32, #tpu.memory_space<smem>>
    %889 = vector.broadcast %888 : f32 to vector<1x256xf32>
    %890 = arith.mulf %887, %889 : vector<1x256xf32>
    %c210_i32_357 = arith.constant 210 : i32
    %891 = tpu.dynamic_rotate %375 by %c210_i32_357 dim 1 : vector<1x256xf32>, i32 -> vector<1x256xf32>
    %c1_358 = arith.constant 1 : index
    %c43_359 = arith.constant 43 : index
    %892 = memref.load %arg9[%c1_358, %c43_359] : memref<2x49xf32, #tpu.memory_space<smem>>
    %893 = vector.broadcast %892 : f32 to vector<1x256xf32>
    %894 = arith.mulf %891, %893 : vector<1x256xf32>
    %895 = arith.addf %890, %894 : vector<1x256xf32>
    %cst_360 = arith.constant 0.000000e+00 : f32
    %896 = vector.broadcast %cst_360 : f32 to vector<1x256xf32>
    %897 = arith.select %214, %895, %896 : vector<1x256xi1>, vector<1x256xf32>
    %898 = arith.addf %886, %897 : vector<1x256xf32>
    %c209_i32 = arith.constant 209 : i32
    %899 = tpu.dynamic_rotate %373 by %c209_i32 dim 1 : vector<1x256xf32>, i32 -> vector<1x256xf32>
    %c0_361 = arith.constant 0 : index
    %c44 = arith.constant 44 : index
    %900 = memref.load %arg9[%c0_361, %c44] : memref<2x49xf32, #tpu.memory_space<smem>>
    %901 = vector.broadcast %900 : f32 to vector<1x256xf32>
    %902 = arith.mulf %899, %901 : vector<1x256xf32>
    %c209_i32_362 = arith.constant 209 : i32
    %903 = tpu.dynamic_rotate %375 by %c209_i32_362 dim 1 : vector<1x256xf32>, i32 -> vector<1x256xf32>
    %c1_363 = arith.constant 1 : index
    %c44_364 = arith.constant 44 : index
    %904 = memref.load %arg9[%c1_363, %c44_364] : memref<2x49xf32, #tpu.memory_space<smem>>
    %905 = vector.broadcast %904 : f32 to vector<1x256xf32>
    %906 = arith.mulf %903, %905 : vector<1x256xf32>
    %907 = arith.addf %902, %906 : vector<1x256xf32>
    %cst_365 = arith.constant 0.000000e+00 : f32
    %908 = vector.broadcast %cst_365 : f32 to vector<1x256xf32>
    %909 = arith.select %219, %907, %908 : vector<1x256xi1>, vector<1x256xf32>
    %910 = arith.addf %898, %909 : vector<1x256xf32>
    %c208_i32 = arith.constant 208 : i32
    %911 = tpu.dynamic_rotate %373 by %c208_i32 dim 1 : vector<1x256xf32>, i32 -> vector<1x256xf32>
    %c0_366 = arith.constant 0 : index
    %c45 = arith.constant 45 : index
    %912 = memref.load %arg9[%c0_366, %c45] : memref<2x49xf32, #tpu.memory_space<smem>>
    %913 = vector.broadcast %912 : f32 to vector<1x256xf32>
    %914 = arith.mulf %911, %913 : vector<1x256xf32>
    %c208_i32_367 = arith.constant 208 : i32
    %915 = tpu.dynamic_rotate %375 by %c208_i32_367 dim 1 : vector<1x256xf32>, i32 -> vector<1x256xf32>
    %c1_368 = arith.constant 1 : index
    %c45_369 = arith.constant 45 : index
    %916 = memref.load %arg9[%c1_368, %c45_369] : memref<2x49xf32, #tpu.memory_space<smem>>
    %917 = vector.broadcast %916 : f32 to vector<1x256xf32>
    %918 = arith.mulf %915, %917 : vector<1x256xf32>
    %919 = arith.addf %914, %918 : vector<1x256xf32>
    %cst_370 = arith.constant 0.000000e+00 : f32
    %920 = vector.broadcast %cst_370 : f32 to vector<1x256xf32>
    %921 = arith.select %221, %919, %920 : vector<1x256xi1>, vector<1x256xf32>
    %922 = arith.addf %910, %921 : vector<1x256xf32>
    %c207_i32 = arith.constant 207 : i32
    %923 = tpu.dynamic_rotate %373 by %c207_i32 dim 1 : vector<1x256xf32>, i32 -> vector<1x256xf32>
    %c0_371 = arith.constant 0 : index
    %c46 = arith.constant 46 : index
    %924 = memref.load %arg9[%c0_371, %c46] : memref<2x49xf32, #tpu.memory_space<smem>>
    %925 = vector.broadcast %924 : f32 to vector<1x256xf32>
    %926 = arith.mulf %923, %925 : vector<1x256xf32>
    %c207_i32_372 = arith.constant 207 : i32
    %927 = tpu.dynamic_rotate %375 by %c207_i32_372 dim 1 : vector<1x256xf32>, i32 -> vector<1x256xf32>
    %c1_373 = arith.constant 1 : index
    %c46_374 = arith.constant 46 : index
    %928 = memref.load %arg9[%c1_373, %c46_374] : memref<2x49xf32, #tpu.memory_space<smem>>
    %929 = vector.broadcast %928 : f32 to vector<1x256xf32>
    %930 = arith.mulf %927, %929 : vector<1x256xf32>
    %931 = arith.addf %926, %930 : vector<1x256xf32>
    %cst_375 = arith.constant 0.000000e+00 : f32
    %932 = vector.broadcast %cst_375 : f32 to vector<1x256xf32>
    %933 = arith.select %226, %931, %932 : vector<1x256xi1>, vector<1x256xf32>
    %934 = arith.addf %922, %933 : vector<1x256xf32>
    %c206_i32 = arith.constant 206 : i32
    %935 = tpu.dynamic_rotate %373 by %c206_i32 dim 1 : vector<1x256xf32>, i32 -> vector<1x256xf32>
    %c0_376 = arith.constant 0 : index
    %c47 = arith.constant 47 : index
    %936 = memref.load %arg9[%c0_376, %c47] : memref<2x49xf32, #tpu.memory_space<smem>>
    %937 = vector.broadcast %936 : f32 to vector<1x256xf32>
    %938 = arith.mulf %935, %937 : vector<1x256xf32>
    %c206_i32_377 = arith.constant 206 : i32
    %939 = tpu.dynamic_rotate %375 by %c206_i32_377 dim 1 : vector<1x256xf32>, i32 -> vector<1x256xf32>
    %c1_378 = arith.constant 1 : index
    %c47_379 = arith.constant 47 : index
    %940 = memref.load %arg9[%c1_378, %c47_379] : memref<2x49xf32, #tpu.memory_space<smem>>
    %941 = vector.broadcast %940 : f32 to vector<1x256xf32>
    %942 = arith.mulf %939, %941 : vector<1x256xf32>
    %943 = arith.addf %938, %942 : vector<1x256xf32>
    %cst_380 = arith.constant 0.000000e+00 : f32
    %944 = vector.broadcast %cst_380 : f32 to vector<1x256xf32>
    %945 = arith.select %231, %943, %944 : vector<1x256xi1>, vector<1x256xf32>
    %946 = arith.addf %934, %945 : vector<1x256xf32>
    %c205_i32 = arith.constant 205 : i32
    %947 = tpu.dynamic_rotate %373 by %c205_i32 dim 1 : vector<1x256xf32>, i32 -> vector<1x256xf32>
    %c0_381 = arith.constant 0 : index
    %c48 = arith.constant 48 : index
    %948 = memref.load %arg9[%c0_381, %c48] : memref<2x49xf32, #tpu.memory_space<smem>>
    %949 = vector.broadcast %948 : f32 to vector<1x256xf32>
    %950 = arith.mulf %947, %949 : vector<1x256xf32>
    %c205_i32_382 = arith.constant 205 : i32
    %951 = tpu.dynamic_rotate %375 by %c205_i32_382 dim 1 : vector<1x256xf32>, i32 -> vector<1x256xf32>
    %c1_383 = arith.constant 1 : index
    %c48_384 = arith.constant 48 : index
    %952 = memref.load %arg9[%c1_383, %c48_384] : memref<2x49xf32, #tpu.memory_space<smem>>
    %953 = vector.broadcast %952 : f32 to vector<1x256xf32>
    %954 = arith.mulf %951, %953 : vector<1x256xf32>
    %955 = arith.addf %950, %954 : vector<1x256xf32>
    %cst_385 = arith.constant 0.000000e+00 : f32
    %956 = vector.broadcast %cst_385 : f32 to vector<1x256xf32>
    %957 = arith.select %236, %955, %956 : vector<1x256xi1>, vector<1x256xf32>
    %958 = arith.addf %946, %957 : vector<1x256xf32>
    %959 = arith.negf %958 : vector<1x256xf32>
    %960 = math.exp %959 : vector<1x256xf32>
    %cst_386 = arith.constant 1.000000e+00 : f32
    %961 = vector.broadcast %cst_386 : f32 to vector<1x256xf32>
    %962 = arith.addf %961, %960 : vector<1x256xf32>
    %963 = arith.divf %961, %962 : vector<1x256xf32>
    %964 = vector.broadcast %963 : vector<1x256xf32> to vector<32x256xf32>
    %965 = arith.mulf %369, %964 : vector<32x256xf32>
    %966 = arith.addf %965, %248 : vector<32x256xf32>
    %cst_387 = arith.constant 0.000000e+00 : f32
    %967 = vector.broadcast %cst_387 : f32 to vector<32x256xf32>
    %968 = arith.maximumf %966, %967 : vector<32x256xf32>
    %c0_388 = arith.constant 0 : index
    %c0_389 = arith.constant 0 : index
    %c0_390 = arith.constant 0 : index
    %969 = vector.load %arg10[%c0_388, %c0_389, %c0_390] : memref<2x32x256xf32, #tpu.memory_space<vmem>>, vector<1x32x256xf32>
    %970 = vector.shape_cast %969 : vector<1x32x256xf32> to vector<32x256xf32>
    %971 = vector.shape_cast %968 : vector<32x256xf32> to vector<1x32x256xf32>
    tpu.vector_store %arg10[%c0_388, %c0_389, %c0_390], %971 {strides = array<i32>} : memref<2x32x256xf32, #tpu.memory_space<vmem>>, vector<1x32x256xf32>,
    %c1_391 = arith.constant 1 : index
    %c0_392 = arith.constant 0 : index
    %c0_393 = arith.constant 0 : index
    %972 = vector.load %arg1[%c1_391, %c0_392, %c0_393] : memref<2x32x256xf32, #tpu.memory_space<vmem>>, vector<1x32x256xf32>
    %973 = vector.shape_cast %972 : vector<1x32x256xf32> to vector<32x256xf32>
    %974 = vector.extract_strided_slice %240 {offsets = [4, 0, 0], sizes = [1, 32, 1], strides = [1, 1, 1]} : vector<9x32x1xf32> to vector<1x32x1xf32>
    %975 = vector.shape_cast %974 : vector<1x32x1xf32> to vector<32x1xf32>
    %976 = vector.broadcast %975 : vector<32x1xf32> to vector<32x256xf32>
    %977 = arith.mulf %973, %976 : vector<32x256xf32>
    %c17_i32_394 = arith.constant 17 : i32
    %978 = tpu.dynamic_rotate %973 by %c17_i32_394 dim 1 : vector<32x256xf32>, i32 -> vector<32x256xf32>
    %cst_395 = arith.constant 0.000000e+00 : f32
    %979 = vector.shape_cast %9 : vector<1x256xi1> to vector<1x256xi1>
    %980 = vector.broadcast %979 : vector<1x256xi1> to vector<32x256xi1>
    %981 = vector.broadcast %cst_395 : f32 to vector<32x256xf32>
    %982 = arith.select %980, %978, %981 : vector<32x256xi1>, vector<32x256xf32>
    %983 = vector.extract_strided_slice %240 {offsets = [0, 0, 0], sizes = [1, 32, 1], strides = [1, 1, 1]} : vector<9x32x1xf32> to vector<1x32x1xf32>
    %984 = vector.shape_cast %983 : vector<1x32x1xf32> to vector<32x1xf32>
    %985 = vector.broadcast %984 : vector<32x1xf32> to vector<32x256xf32>
    %986 = arith.mulf %982, %985 : vector<32x256xf32>
    %987 = arith.addf %977, %986 : vector<32x256xf32>
    %c16_i32_396 = arith.constant 16 : i32
    %988 = tpu.dynamic_rotate %973 by %c16_i32_396 dim 1 : vector<32x256xf32>, i32 -> vector<32x256xf32>
    %cst_397 = arith.constant 0.000000e+00 : f32
    %989 = vector.shape_cast %11 : vector<1x256xi1> to vector<1x256xi1>
    %990 = vector.broadcast %989 : vector<1x256xi1> to vector<32x256xi1>
    %991 = vector.broadcast %cst_397 : f32 to vector<32x256xf32>
    %992 = arith.select %990, %988, %991 : vector<32x256xi1>, vector<32x256xf32>
    %993 = vector.extract_strided_slice %240 {offsets = [1, 0, 0], sizes = [1, 32, 1], strides = [1, 1, 1]} : vector<9x32x1xf32> to vector<1x32x1xf32>
    %994 = vector.shape_cast %993 : vector<1x32x1xf32> to vector<32x1xf32>
    %995 = vector.broadcast %994 : vector<32x1xf32> to vector<32x256xf32>
    %996 = arith.mulf %992, %995 : vector<32x256xf32>
    %997 = arith.addf %987, %996 : vector<32x256xf32>
    %c15_i32_398 = arith.constant 15 : i32
    %998 = tpu.dynamic_rotate %973 by %c15_i32_398 dim 1 : vector<32x256xf32>, i32 -> vector<32x256xf32>
    %cst_399 = arith.constant 0.000000e+00 : f32
    %999 = vector.shape_cast %16 : vector<1x256xi1> to vector<1x256xi1>
    %1000 = vector.broadcast %999 : vector<1x256xi1> to vector<32x256xi1>
    %1001 = vector.broadcast %cst_399 : f32 to vector<32x256xf32>
    %1002 = arith.select %1000, %998, %1001 : vector<32x256xi1>, vector<32x256xf32>
    %1003 = vector.extract_strided_slice %240 {offsets = [2, 0, 0], sizes = [1, 32, 1], strides = [1, 1, 1]} : vector<9x32x1xf32> to vector<1x32x1xf32>
    %1004 = vector.shape_cast %1003 : vector<1x32x1xf32> to vector<32x1xf32>
    %1005 = vector.broadcast %1004 : vector<32x1xf32> to vector<32x256xf32>
    %1006 = arith.mulf %1002, %1005 : vector<32x256xf32>
    %1007 = arith.addf %997, %1006 : vector<32x256xf32>
    %c1_i32_400 = arith.constant 1 : i32
    %1008 = tpu.dynamic_rotate %973 by %c1_i32_400 dim 1 : vector<32x256xf32>, i32 -> vector<32x256xf32>
    %cst_401 = arith.constant 0.000000e+00 : f32
    %1009 = vector.shape_cast %18 : vector<1x256xi1> to vector<1x256xi1>
    %1010 = vector.broadcast %1009 : vector<1x256xi1> to vector<32x256xi1>
    %1011 = vector.broadcast %cst_401 : f32 to vector<32x256xf32>
    %1012 = arith.select %1010, %1008, %1011 : vector<32x256xi1>, vector<32x256xf32>
    %1013 = vector.extract_strided_slice %240 {offsets = [3, 0, 0], sizes = [1, 32, 1], strides = [1, 1, 1]} : vector<9x32x1xf32> to vector<1x32x1xf32>
    %1014 = vector.shape_cast %1013 : vector<1x32x1xf32> to vector<32x1xf32>
    %1015 = vector.broadcast %1014 : vector<32x1xf32> to vector<32x256xf32>
    %1016 = arith.mulf %1012, %1015 : vector<32x256xf32>
    %1017 = arith.addf %1007, %1016 : vector<32x256xf32>
    %c255_i32_402 = arith.constant 255 : i32
    %1018 = tpu.dynamic_rotate %973 by %c255_i32_402 dim 1 : vector<32x256xf32>, i32 -> vector<32x256xf32>
    %cst_403 = arith.constant 0.000000e+00 : f32
    %1019 = vector.shape_cast %20 : vector<1x256xi1> to vector<1x256xi1>
    %1020 = vector.broadcast %1019 : vector<1x256xi1> to vector<32x256xi1>
    %1021 = vector.broadcast %cst_403 : f32 to vector<32x256xf32>
    %1022 = arith.select %1020, %1018, %1021 : vector<32x256xi1>, vector<32x256xf32>
    %1023 = vector.extract_strided_slice %240 {offsets = [5, 0, 0], sizes = [1, 32, 1], strides = [1, 1, 1]} : vector<9x32x1xf32> to vector<1x32x1xf32>
    %1024 = vector.shape_cast %1023 : vector<1x32x1xf32> to vector<32x1xf32>
    %1025 = vector.broadcast %1024 : vector<32x1xf32> to vector<32x256xf32>
    %1026 = arith.mulf %1022, %1025 : vector<32x256xf32>
    %1027 = arith.addf %1017, %1026 : vector<32x256xf32>
    %c241_i32_404 = arith.constant 241 : i32
    %1028 = tpu.dynamic_rotate %973 by %c241_i32_404 dim 1 : vector<32x256xf32>, i32 -> vector<32x256xf32>
    %cst_405 = arith.constant 0.000000e+00 : f32
    %1029 = vector.shape_cast %25 : vector<1x256xi1> to vector<1x256xi1>
    %1030 = vector.broadcast %1029 : vector<1x256xi1> to vector<32x256xi1>
    %1031 = vector.broadcast %cst_405 : f32 to vector<32x256xf32>
    %1032 = arith.select %1030, %1028, %1031 : vector<32x256xi1>, vector<32x256xf32>
    %1033 = vector.extract_strided_slice %240 {offsets = [6, 0, 0], sizes = [1, 32, 1], strides = [1, 1, 1]} : vector<9x32x1xf32> to vector<1x32x1xf32>
    %1034 = vector.shape_cast %1033 : vector<1x32x1xf32> to vector<32x1xf32>
    %1035 = vector.broadcast %1034 : vector<32x1xf32> to vector<32x256xf32>
    %1036 = arith.mulf %1032, %1035 : vector<32x256xf32>
    %1037 = arith.addf %1027, %1036 : vector<32x256xf32>
    %c240_i32_406 = arith.constant 240 : i32
    %1038 = tpu.dynamic_rotate %973 by %c240_i32_406 dim 1 : vector<32x256xf32>, i32 -> vector<32x256xf32>
    %cst_407 = arith.constant 0.000000e+00 : f32
    %1039 = vector.shape_cast %27 : vector<1x256xi1> to vector<1x256xi1>
    %1040 = vector.broadcast %1039 : vector<1x256xi1> to vector<32x256xi1>
    %1041 = vector.broadcast %cst_407 : f32 to vector<32x256xf32>
    %1042 = arith.select %1040, %1038, %1041 : vector<32x256xi1>, vector<32x256xf32>
    %1043 = vector.extract_strided_slice %240 {offsets = [7, 0, 0], sizes = [1, 32, 1], strides = [1, 1, 1]} : vector<9x32x1xf32> to vector<1x32x1xf32>
    %1044 = vector.shape_cast %1043 : vector<1x32x1xf32> to vector<32x1xf32>
    %1045 = vector.broadcast %1044 : vector<32x1xf32> to vector<32x256xf32>
    %1046 = arith.mulf %1042, %1045 : vector<32x256xf32>
    %1047 = arith.addf %1037, %1046 : vector<32x256xf32>
    %c239_i32_408 = arith.constant 239 : i32
    %1048 = tpu.dynamic_rotate %973 by %c239_i32_408 dim 1 : vector<32x256xf32>, i32 -> vector<32x256xf32>
    %cst_409 = arith.constant 0.000000e+00 : f32
    %1049 = vector.shape_cast %32 : vector<1x256xi1> to vector<1x256xi1>
    %1050 = vector.broadcast %1049 : vector<1x256xi1> to vector<32x256xi1>
    %1051 = vector.broadcast %cst_409 : f32 to vector<32x256xf32>
    %1052 = arith.select %1050, %1048, %1051 : vector<32x256xi1>, vector<32x256xf32>
    %1053 = vector.extract_strided_slice %240 {offsets = [8, 0, 0], sizes = [1, 32, 1], strides = [1, 1, 1]} : vector<9x32x1xf32> to vector<1x32x1xf32>
    %1054 = vector.shape_cast %1053 : vector<1x32x1xf32> to vector<32x1xf32>
    %1055 = vector.broadcast %1054 : vector<32x1xf32> to vector<32x256xf32>
    %1056 = arith.mulf %1052, %1055 : vector<32x256xf32>
    %1057 = arith.addf %1047, %1056 : vector<32x256xf32>
    %1058 = vector.broadcast %242 : vector<32x1xf32> to vector<32x256xf32>
    %1059 = arith.addf %1057, %1058 : vector<32x256xf32>
    %cst_410 = arith.constant 0.000000e+00 : f32
    %1060 = vector.broadcast %cst_410 : f32 to vector<32x256xf32>
    %1061 = arith.maximumf %1059, %1060 : vector<32x256xf32>
    %cst_411 = arith.constant dense<0.000000e+00> : vector<32x256xf32>
    %1062 = tpu.matmul %241, %1061, %cst_411 {dimension_numbers = #tpu.dot_dimension_numbers<[1], [0], [0], [1], [0, 0, 1, 1], [], []>} : vector<32x32xf32>, vector<32x256xf32>, vector<32x256xf32> -> vector<32x256xf32>
    %1063 = vector.broadcast %242 : vector<32x1xf32> to vector<32x256xf32>
    %1064 = arith.addf %1062, %1063 : vector<32x256xf32>
    %cst_412 = arith.constant 0.000000e+00 : f32
    %1065 = vector.broadcast %cst_412 : f32 to vector<32x256xf32>
    %1066 = arith.maximumf %1064, %1065 : vector<32x256xf32>
    %cst_413 = arith.constant dense<0.000000e+00> : vector<32xf32>
    %1067 = vector.multi_reduction <add>, %1066, %cst_413 [1] : vector<32x256xf32> to vector<32xf32>
    %1068 = vector.shape_cast %1067 : vector<32xf32> to vector<32x1xf32>
    %cst_414 = arith.constant 2.560000e+02 : f32
    %1069 = vector.broadcast %cst_414 : f32 to vector<32x1xf32>
    %1070 = arith.divf %1068, %1069 : vector<32x1xf32>
    %cst_415 = arith.constant dense<0xFF800000> : vector<32xf32>
    %1071 = vector.multi_reduction <maximumf>, %1066, %cst_415 [1] : vector<32x256xf32> to vector<32xf32>
    %1072 = vector.shape_cast %1071 : vector<32xf32> to vector<32x1xf32>
    %1073 = vector.shape_cast %1070 : vector<32x1xf32> to vector<32x1xf32>
    %1074 = vector.broadcast %1073 : vector<32x1xf32> to vector<32x2xf32>
    %1075 = vector.shape_cast %1072 : vector<32x1xf32> to vector<32x1xf32>
    %1076 = vector.broadcast %1075 : vector<32x1xf32> to vector<32x2xf32>
    %1077 = arith.select %239, %1074, %1076 : vector<32x2xi1>, vector<32x2xf32>
    %cst_416 = arith.constant dense<0.000000e+00> : vector<2x2xf32>
    %1078 = tpu.matmul %243, %1077, %cst_416 {dimension_numbers = #tpu.dot_dimension_numbers<[1], [0], [0], [1], [0, 0, 1, 1], [], []>} : vector<2x32xf32>, vector<32x2xf32>, vector<2x2xf32> -> vector<2x2xf32>
    %1079 = vector.broadcast %244 : vector<2x1xf32> to vector<2x2xf32>
    %1080 = arith.addf %1078, %1079 : vector<2x2xf32>
    %cst_417 = arith.constant 0.000000e+00 : f32
    %1081 = vector.broadcast %cst_417 : f32 to vector<2x2xf32>
    %1082 = arith.maximumf %1080, %1081 : vector<2x2xf32>
    %cst_418 = arith.constant dense<0.000000e+00> : vector<32x2xf32>
    %1083 = tpu.matmul %245, %1082, %cst_418 {dimension_numbers = #tpu.dot_dimension_numbers<[1], [0], [0], [1], [0, 0, 1, 1], [], []>} : vector<32x2xf32>, vector<2x2xf32>, vector<32x2xf32> -> vector<32x2xf32>
    %1084 = vector.broadcast %246 : vector<32x1xf32> to vector<32x2xf32>
    %1085 = arith.addf %1083, %1084 : vector<32x2xf32>
    %cst_419 = arith.constant dense<0.000000e+00> : vector<32xf32>
    %1086 = vector.multi_reduction <add>, %1085, %cst_419 [1] : vector<32x2xf32> to vector<32xf32>
    %1087 = vector.shape_cast %1086 : vector<32xf32> to vector<32x1xf32>
    %1088 = arith.negf %1087 : vector<32x1xf32>
    %1089 = math.exp %1088 : vector<32x1xf32>
    %cst_420 = arith.constant 1.000000e+00 : f32
    %1090 = vector.broadcast %cst_420 : f32 to vector<32x1xf32>
    %1091 = arith.addf %1090, %1089 : vector<32x1xf32>
    %1092 = arith.divf %1090, %1091 : vector<32x1xf32>
    %1093 = vector.broadcast %1092 : vector<32x1xf32> to vector<32x256xf32>
    %1094 = arith.mulf %1066, %1093 : vector<32x256xf32>
    %cst_421 = arith.constant dense<0.000000e+00> : vector<256xf32>
    %1095 = vector.multi_reduction <add>, %1094, %cst_421 [0] : vector<32x256xf32> to vector<256xf32>
    %1096 = vector.shape_cast %1095 : vector<256xf32> to vector<1x256xf32>
    %cst_422 = arith.constant 3.200000e+01 : f32
    %1097 = vector.broadcast %cst_422 : f32 to vector<1x256xf32>
    %1098 = arith.divf %1096, %1097 : vector<1x256xf32>
    %cst_423 = arith.constant dense<0xFF800000> : vector<256xf32>
    %1099 = vector.multi_reduction <maximumf>, %1094, %cst_423 [0] : vector<32x256xf32> to vector<256xf32>
    %1100 = vector.shape_cast %1099 : vector<256xf32> to vector<1x256xf32>
    %c0_424 = arith.constant 0 : index
    %c24_425 = arith.constant 24 : index
    %1101 = memref.load %arg9[%c0_424, %c24_425] : memref<2x49xf32, #tpu.memory_space<smem>>
    %1102 = vector.broadcast %1101 : f32 to vector<1x256xf32>
    %1103 = arith.mulf %1098, %1102 : vector<1x256xf32>
    %c1_426 = arith.constant 1 : index
    %c24_427 = arith.constant 24 : index
    %1104 = memref.load %arg9[%c1_426, %c24_427] : memref<2x49xf32, #tpu.memory_space<smem>>
    %1105 = vector.broadcast %1104 : f32 to vector<1x256xf32>
    %1106 = arith.mulf %1100, %1105 : vector<1x256xf32>
    %1107 = arith.addf %1103, %1106 : vector<1x256xf32>
    %c51_i32_428 = arith.constant 51 : i32
    %1108 = tpu.dynamic_rotate %1098 by %c51_i32_428 dim 1 : vector<1x256xf32>, i32 -> vector<1x256xf32>
    %c0_429 = arith.constant 0 : index
    %c0_430 = arith.constant 0 : index
    %1109 = memref.load %arg9[%c0_429, %c0_430] : memref<2x49xf32, #tpu.memory_space<smem>>
    %1110 = vector.broadcast %1109 : f32 to vector<1x256xf32>
    %1111 = arith.mulf %1108, %1110 : vector<1x256xf32>
    %c51_i32_431 = arith.constant 51 : i32
    %1112 = tpu.dynamic_rotate %1100 by %c51_i32_431 dim 1 : vector<1x256xf32>, i32 -> vector<1x256xf32>
    %c1_432 = arith.constant 1 : index
    %c0_433 = arith.constant 0 : index
    %1113 = memref.load %arg9[%c1_432, %c0_433] : memref<2x49xf32, #tpu.memory_space<smem>>
    %1114 = vector.broadcast %1113 : f32 to vector<1x256xf32>
    %1115 = arith.mulf %1112, %1114 : vector<1x256xf32>
    %1116 = arith.addf %1111, %1115 : vector<1x256xf32>
    %cst_434 = arith.constant 0.000000e+00 : f32
    %1117 = vector.broadcast %cst_434 : f32 to vector<1x256xf32>
    %1118 = arith.select %37, %1116, %1117 : vector<1x256xi1>, vector<1x256xf32>
    %1119 = arith.addf %1107, %1118 : vector<1x256xf32>
    %c50_i32_435 = arith.constant 50 : i32
    %1120 = tpu.dynamic_rotate %1098 by %c50_i32_435 dim 1 : vector<1x256xf32>, i32 -> vector<1x256xf32>
    %c0_436 = arith.constant 0 : index
    %c1_437 = arith.constant 1 : index
    %1121 = memref.load %arg9[%c0_436, %c1_437] : memref<2x49xf32, #tpu.memory_space<smem>>
    %1122 = vector.broadcast %1121 : f32 to vector<1x256xf32>
    %1123 = arith.mulf %1120, %1122 : vector<1x256xf32>
    %c50_i32_438 = arith.constant 50 : i32
    %1124 = tpu.dynamic_rotate %1100 by %c50_i32_438 dim 1 : vector<1x256xf32>, i32 -> vector<1x256xf32>
    %c1_439 = arith.constant 1 : index
    %c1_440 = arith.constant 1 : index
    %1125 = memref.load %arg9[%c1_439, %c1_440] : memref<2x49xf32, #tpu.memory_space<smem>>
    %1126 = vector.broadcast %1125 : f32 to vector<1x256xf32>
    %1127 = arith.mulf %1124, %1126 : vector<1x256xf32>
    %1128 = arith.addf %1123, %1127 : vector<1x256xf32>
    %cst_441 = arith.constant 0.000000e+00 : f32
    %1129 = vector.broadcast %cst_441 : f32 to vector<1x256xf32>
    %1130 = arith.select %42, %1128, %1129 : vector<1x256xi1>, vector<1x256xf32>
    %1131 = arith.addf %1119, %1130 : vector<1x256xf32>
    %c49_i32_442 = arith.constant 49 : i32
    %1132 = tpu.dynamic_rotate %1098 by %c49_i32_442 dim 1 : vector<1x256xf32>, i32 -> vector<1x256xf32>
    %c0_443 = arith.constant 0 : index
    %c2_444 = arith.constant 2 : index
    %1133 = memref.load %arg9[%c0_443, %c2_444] : memref<2x49xf32, #tpu.memory_space<smem>>
    %1134 = vector.broadcast %1133 : f32 to vector<1x256xf32>
    %1135 = arith.mulf %1132, %1134 : vector<1x256xf32>
    %c49_i32_445 = arith.constant 49 : i32
    %1136 = tpu.dynamic_rotate %1100 by %c49_i32_445 dim 1 : vector<1x256xf32>, i32 -> vector<1x256xf32>
    %c1_446 = arith.constant 1 : index
    %c2_447 = arith.constant 2 : index
    %1137 = memref.load %arg9[%c1_446, %c2_447] : memref<2x49xf32, #tpu.memory_space<smem>>
    %1138 = vector.broadcast %1137 : f32 to vector<1x256xf32>
    %1139 = arith.mulf %1136, %1138 : vector<1x256xf32>
    %1140 = arith.addf %1135, %1139 : vector<1x256xf32>
    %cst_448 = arith.constant 0.000000e+00 : f32
    %1141 = vector.broadcast %cst_448 : f32 to vector<1x256xf32>
    %1142 = arith.select %47, %1140, %1141 : vector<1x256xi1>, vector<1x256xf32>
    %1143 = arith.addf %1131, %1142 : vector<1x256xf32>
    %c48_i32_449 = arith.constant 48 : i32
    %1144 = tpu.dynamic_rotate %1098 by %c48_i32_449 dim 1 : vector<1x256xf32>, i32 -> vector<1x256xf32>
    %c0_450 = arith.constant 0 : index
    %c3_451 = arith.constant 3 : index
    %1145 = memref.load %arg9[%c0_450, %c3_451] : memref<2x49xf32, #tpu.memory_space<smem>>
    %1146 = vector.broadcast %1145 : f32 to vector<1x256xf32>
    %1147 = arith.mulf %1144, %1146 : vector<1x256xf32>
    %c48_i32_452 = arith.constant 48 : i32
    %1148 = tpu.dynamic_rotate %1100 by %c48_i32_452 dim 1 : vector<1x256xf32>, i32 -> vector<1x256xf32>
    %c1_453 = arith.constant 1 : index
    %c3_454 = arith.constant 3 : index
    %1149 = memref.load %arg9[%c1_453, %c3_454] : memref<2x49xf32, #tpu.memory_space<smem>>
    %1150 = vector.broadcast %1149 : f32 to vector<1x256xf32>
    %1151 = arith.mulf %1148, %1150 : vector<1x256xf32>
    %1152 = arith.addf %1147, %1151 : vector<1x256xf32>
    %cst_455 = arith.constant 0.000000e+00 : f32
    %1153 = vector.broadcast %cst_455 : f32 to vector<1x256xf32>
    %1154 = arith.select %49, %1152, %1153 : vector<1x256xi1>, vector<1x256xf32>
    %1155 = arith.addf %1143, %1154 : vector<1x256xf32>
    %c47_i32_456 = arith.constant 47 : i32
    %1156 = tpu.dynamic_rotate %1098 by %c47_i32_456 dim 1 : vector<1x256xf32>, i32 -> vector<1x256xf32>
    %c0_457 = arith.constant 0 : index
    %c4_458 = arith.constant 4 : index
    %1157 = memref.load %arg9[%c0_457, %c4_458] : memref<2x49xf32, #tpu.memory_space<smem>>
    %1158 = vector.broadcast %1157 : f32 to vector<1x256xf32>
    %1159 = arith.mulf %1156, %1158 : vector<1x256xf32>
    %c47_i32_459 = arith.constant 47 : i32
    %1160 = tpu.dynamic_rotate %1100 by %c47_i32_459 dim 1 : vector<1x256xf32>, i32 -> vector<1x256xf32>
    %c1_460 = arith.constant 1 : index
    %c4_461 = arith.constant 4 : index
    %1161 = memref.load %arg9[%c1_460, %c4_461] : memref<2x49xf32, #tpu.memory_space<smem>>
    %1162 = vector.broadcast %1161 : f32 to vector<1x256xf32>
    %1163 = arith.mulf %1160, %1162 : vector<1x256xf32>
    %1164 = arith.addf %1159, %1163 : vector<1x256xf32>
    %cst_462 = arith.constant 0.000000e+00 : f32
    %1165 = vector.broadcast %cst_462 : f32 to vector<1x256xf32>
    %1166 = arith.select %54, %1164, %1165 : vector<1x256xi1>, vector<1x256xf32>
    %1167 = arith.addf %1155, %1166 : vector<1x256xf32>
    %c46_i32_463 = arith.constant 46 : i32
    %1168 = tpu.dynamic_rotate %1098 by %c46_i32_463 dim 1 : vector<1x256xf32>, i32 -> vector<1x256xf32>
    %c0_464 = arith.constant 0 : index
    %c5_465 = arith.constant 5 : index
    %1169 = memref.load %arg9[%c0_464, %c5_465] : memref<2x49xf32, #tpu.memory_space<smem>>
    %1170 = vector.broadcast %1169 : f32 to vector<1x256xf32>
    %1171 = arith.mulf %1168, %1170 : vector<1x256xf32>
    %c46_i32_466 = arith.constant 46 : i32
    %1172 = tpu.dynamic_rotate %1100 by %c46_i32_466 dim 1 : vector<1x256xf32>, i32 -> vector<1x256xf32>
    %c1_467 = arith.constant 1 : index
    %c5_468 = arith.constant 5 : index
    %1173 = memref.load %arg9[%c1_467, %c5_468] : memref<2x49xf32, #tpu.memory_space<smem>>
    %1174 = vector.broadcast %1173 : f32 to vector<1x256xf32>
    %1175 = arith.mulf %1172, %1174 : vector<1x256xf32>
    %1176 = arith.addf %1171, %1175 : vector<1x256xf32>
    %cst_469 = arith.constant 0.000000e+00 : f32
    %1177 = vector.broadcast %cst_469 : f32 to vector<1x256xf32>
    %1178 = arith.select %59, %1176, %1177 : vector<1x256xi1>, vector<1x256xf32>
    %1179 = arith.addf %1167, %1178 : vector<1x256xf32>
    %c45_i32_470 = arith.constant 45 : i32
    %1180 = tpu.dynamic_rotate %1098 by %c45_i32_470 dim 1 : vector<1x256xf32>, i32 -> vector<1x256xf32>
    %c0_471 = arith.constant 0 : index
    %c6_472 = arith.constant 6 : index
    %1181 = memref.load %arg9[%c0_471, %c6_472] : memref<2x49xf32, #tpu.memory_space<smem>>
    %1182 = vector.broadcast %1181 : f32 to vector<1x256xf32>
    %1183 = arith.mulf %1180, %1182 : vector<1x256xf32>
    %c45_i32_473 = arith.constant 45 : i32
    %1184 = tpu.dynamic_rotate %1100 by %c45_i32_473 dim 1 : vector<1x256xf32>, i32 -> vector<1x256xf32>
    %c1_474 = arith.constant 1 : index
    %c6_475 = arith.constant 6 : index
    %1185 = memref.load %arg9[%c1_474, %c6_475] : memref<2x49xf32, #tpu.memory_space<smem>>
    %1186 = vector.broadcast %1185 : f32 to vector<1x256xf32>
    %1187 = arith.mulf %1184, %1186 : vector<1x256xf32>
    %1188 = arith.addf %1183, %1187 : vector<1x256xf32>
    %cst_476 = arith.constant 0.000000e+00 : f32
    %1189 = vector.broadcast %cst_476 : f32 to vector<1x256xf32>
    %1190 = arith.select %64, %1188, %1189 : vector<1x256xi1>, vector<1x256xf32>
    %1191 = arith.addf %1179, %1190 : vector<1x256xf32>
    %c35_i32_477 = arith.constant 35 : i32
    %1192 = tpu.dynamic_rotate %1098 by %c35_i32_477 dim 1 : vector<1x256xf32>, i32 -> vector<1x256xf32>
    %c0_478 = arith.constant 0 : index
    %c7_479 = arith.constant 7 : index
    %1193 = memref.load %arg9[%c0_478, %c7_479] : memref<2x49xf32, #tpu.memory_space<smem>>
    %1194 = vector.broadcast %1193 : f32 to vector<1x256xf32>
    %1195 = arith.mulf %1192, %1194 : vector<1x256xf32>
    %c35_i32_480 = arith.constant 35 : i32
    %1196 = tpu.dynamic_rotate %1100 by %c35_i32_480 dim 1 : vector<1x256xf32>, i32 -> vector<1x256xf32>
    %c1_481 = arith.constant 1 : index
    %c7_482 = arith.constant 7 : index
    %1197 = memref.load %arg9[%c1_481, %c7_482] : memref<2x49xf32, #tpu.memory_space<smem>>
    %1198 = vector.broadcast %1197 : f32 to vector<1x256xf32>
    %1199 = arith.mulf %1196, %1198 : vector<1x256xf32>
    %1200 = arith.addf %1195, %1199 : vector<1x256xf32>
    %cst_483 = arith.constant 0.000000e+00 : f32
    %1201 = vector.broadcast %cst_483 : f32 to vector<1x256xf32>
    %1202 = arith.select %69, %1200, %1201 : vector<1x256xi1>, vector<1x256xf32>
    %1203 = arith.addf %1191, %1202 : vector<1x256xf32>
    %c34_i32_484 = arith.constant 34 : i32
    %1204 = tpu.dynamic_rotate %1098 by %c34_i32_484 dim 1 : vector<1x256xf32>, i32 -> vector<1x256xf32>
    %c0_485 = arith.constant 0 : index
    %c8_486 = arith.constant 8 : index
    %1205 = memref.load %arg9[%c0_485, %c8_486] : memref<2x49xf32, #tpu.memory_space<smem>>
    %1206 = vector.broadcast %1205 : f32 to vector<1x256xf32>
    %1207 = arith.mulf %1204, %1206 : vector<1x256xf32>
    %c34_i32_487 = arith.constant 34 : i32
    %1208 = tpu.dynamic_rotate %1100 by %c34_i32_487 dim 1 : vector<1x256xf32>, i32 -> vector<1x256xf32>
    %c1_488 = arith.constant 1 : index
    %c8_489 = arith.constant 8 : index
    %1209 = memref.load %arg9[%c1_488, %c8_489] : memref<2x49xf32, #tpu.memory_space<smem>>
    %1210 = vector.broadcast %1209 : f32 to vector<1x256xf32>
    %1211 = arith.mulf %1208, %1210 : vector<1x256xf32>
    %1212 = arith.addf %1207, %1211 : vector<1x256xf32>
    %cst_490 = arith.constant 0.000000e+00 : f32
    %1213 = vector.broadcast %cst_490 : f32 to vector<1x256xf32>
    %1214 = arith.select %74, %1212, %1213 : vector<1x256xi1>, vector<1x256xf32>
    %1215 = arith.addf %1203, %1214 : vector<1x256xf32>
    %c33_i32_491 = arith.constant 33 : i32
    %1216 = tpu.dynamic_rotate %1098 by %c33_i32_491 dim 1 : vector<1x256xf32>, i32 -> vector<1x256xf32>
    %c0_492 = arith.constant 0 : index
    %c9_493 = arith.constant 9 : index
    %1217 = memref.load %arg9[%c0_492, %c9_493] : memref<2x49xf32, #tpu.memory_space<smem>>
    %1218 = vector.broadcast %1217 : f32 to vector<1x256xf32>
    %1219 = arith.mulf %1216, %1218 : vector<1x256xf32>
    %c33_i32_494 = arith.constant 33 : i32
    %1220 = tpu.dynamic_rotate %1100 by %c33_i32_494 dim 1 : vector<1x256xf32>, i32 -> vector<1x256xf32>
    %c1_495 = arith.constant 1 : index
    %c9_496 = arith.constant 9 : index
    %1221 = memref.load %arg9[%c1_495, %c9_496] : memref<2x49xf32, #tpu.memory_space<smem>>
    %1222 = vector.broadcast %1221 : f32 to vector<1x256xf32>
    %1223 = arith.mulf %1220, %1222 : vector<1x256xf32>
    %1224 = arith.addf %1219, %1223 : vector<1x256xf32>
    %cst_497 = arith.constant 0.000000e+00 : f32
    %1225 = vector.broadcast %cst_497 : f32 to vector<1x256xf32>
    %1226 = arith.select %79, %1224, %1225 : vector<1x256xi1>, vector<1x256xf32>
    %1227 = arith.addf %1215, %1226 : vector<1x256xf32>
    %c32_i32_498 = arith.constant 32 : i32
    %1228 = tpu.dynamic_rotate %1098 by %c32_i32_498 dim 1 : vector<1x256xf32>, i32 -> vector<1x256xf32>
    %c0_499 = arith.constant 0 : index
    %c10_500 = arith.constant 10 : index
    %1229 = memref.load %arg9[%c0_499, %c10_500] : memref<2x49xf32, #tpu.memory_space<smem>>
    %1230 = vector.broadcast %1229 : f32 to vector<1x256xf32>
    %1231 = arith.mulf %1228, %1230 : vector<1x256xf32>
    %c32_i32_501 = arith.constant 32 : i32
    %1232 = tpu.dynamic_rotate %1100 by %c32_i32_501 dim 1 : vector<1x256xf32>, i32 -> vector<1x256xf32>
    %c1_502 = arith.constant 1 : index
    %c10_503 = arith.constant 10 : index
    %1233 = memref.load %arg9[%c1_502, %c10_503] : memref<2x49xf32, #tpu.memory_space<smem>>
    %1234 = vector.broadcast %1233 : f32 to vector<1x256xf32>
    %1235 = arith.mulf %1232, %1234 : vector<1x256xf32>
    %1236 = arith.addf %1231, %1235 : vector<1x256xf32>
    %cst_504 = arith.constant 0.000000e+00 : f32
    %1237 = vector.broadcast %cst_504 : f32 to vector<1x256xf32>
    %1238 = arith.select %81, %1236, %1237 : vector<1x256xi1>, vector<1x256xf32>
    %1239 = arith.addf %1227, %1238 : vector<1x256xf32>
    %c31_i32_505 = arith.constant 31 : i32
    %1240 = tpu.dynamic_rotate %1098 by %c31_i32_505 dim 1 : vector<1x256xf32>, i32 -> vector<1x256xf32>
    %c0_506 = arith.constant 0 : index
    %c11_507 = arith.constant 11 : index
    %1241 = memref.load %arg9[%c0_506, %c11_507] : memref<2x49xf32, #tpu.memory_space<smem>>
    %1242 = vector.broadcast %1241 : f32 to vector<1x256xf32>
    %1243 = arith.mulf %1240, %1242 : vector<1x256xf32>
    %c31_i32_508 = arith.constant 31 : i32
    %1244 = tpu.dynamic_rotate %1100 by %c31_i32_508 dim 1 : vector<1x256xf32>, i32 -> vector<1x256xf32>
    %c1_509 = arith.constant 1 : index
    %c11_510 = arith.constant 11 : index
    %1245 = memref.load %arg9[%c1_509, %c11_510] : memref<2x49xf32, #tpu.memory_space<smem>>
    %1246 = vector.broadcast %1245 : f32 to vector<1x256xf32>
    %1247 = arith.mulf %1244, %1246 : vector<1x256xf32>
    %1248 = arith.addf %1243, %1247 : vector<1x256xf32>
    %cst_511 = arith.constant 0.000000e+00 : f32
    %1249 = vector.broadcast %cst_511 : f32 to vector<1x256xf32>
    %1250 = arith.select %86, %1248, %1249 : vector<1x256xi1>, vector<1x256xf32>
    %1251 = arith.addf %1239, %1250 : vector<1x256xf32>
    %c30_i32_512 = arith.constant 30 : i32
    %1252 = tpu.dynamic_rotate %1098 by %c30_i32_512 dim 1 : vector<1x256xf32>, i32 -> vector<1x256xf32>
    %c0_513 = arith.constant 0 : index
    %c12_514 = arith.constant 12 : index
    %1253 = memref.load %arg9[%c0_513, %c12_514] : memref<2x49xf32, #tpu.memory_space<smem>>
    %1254 = vector.broadcast %1253 : f32 to vector<1x256xf32>
    %1255 = arith.mulf %1252, %1254 : vector<1x256xf32>
    %c30_i32_515 = arith.constant 30 : i32
    %1256 = tpu.dynamic_rotate %1100 by %c30_i32_515 dim 1 : vector<1x256xf32>, i32 -> vector<1x256xf32>
    %c1_516 = arith.constant 1 : index
    %c12_517 = arith.constant 12 : index
    %1257 = memref.load %arg9[%c1_516, %c12_517] : memref<2x49xf32, #tpu.memory_space<smem>>
    %1258 = vector.broadcast %1257 : f32 to vector<1x256xf32>
    %1259 = arith.mulf %1256, %1258 : vector<1x256xf32>
    %1260 = arith.addf %1255, %1259 : vector<1x256xf32>
    %cst_518 = arith.constant 0.000000e+00 : f32
    %1261 = vector.broadcast %cst_518 : f32 to vector<1x256xf32>
    %1262 = arith.select %91, %1260, %1261 : vector<1x256xi1>, vector<1x256xf32>
    %1263 = arith.addf %1251, %1262 : vector<1x256xf32>
    %c29_i32_519 = arith.constant 29 : i32
    %1264 = tpu.dynamic_rotate %1098 by %c29_i32_519 dim 1 : vector<1x256xf32>, i32 -> vector<1x256xf32>
    %c0_520 = arith.constant 0 : index
    %c13_521 = arith.constant 13 : index
    %1265 = memref.load %arg9[%c0_520, %c13_521] : memref<2x49xf32, #tpu.memory_space<smem>>
    %1266 = vector.broadcast %1265 : f32 to vector<1x256xf32>
    %1267 = arith.mulf %1264, %1266 : vector<1x256xf32>
    %c29_i32_522 = arith.constant 29 : i32
    %1268 = tpu.dynamic_rotate %1100 by %c29_i32_522 dim 1 : vector<1x256xf32>, i32 -> vector<1x256xf32>
    %c1_523 = arith.constant 1 : index
    %c13_524 = arith.constant 13 : index
    %1269 = memref.load %arg9[%c1_523, %c13_524] : memref<2x49xf32, #tpu.memory_space<smem>>
    %1270 = vector.broadcast %1269 : f32 to vector<1x256xf32>
    %1271 = arith.mulf %1268, %1270 : vector<1x256xf32>
    %1272 = arith.addf %1267, %1271 : vector<1x256xf32>
    %cst_525 = arith.constant 0.000000e+00 : f32
    %1273 = vector.broadcast %cst_525 : f32 to vector<1x256xf32>
    %1274 = arith.select %96, %1272, %1273 : vector<1x256xi1>, vector<1x256xf32>
    %1275 = arith.addf %1263, %1274 : vector<1x256xf32>
    %c19_i32_526 = arith.constant 19 : i32
    %1276 = tpu.dynamic_rotate %1098 by %c19_i32_526 dim 1 : vector<1x256xf32>, i32 -> vector<1x256xf32>
    %c0_527 = arith.constant 0 : index
    %c14_528 = arith.constant 14 : index
    %1277 = memref.load %arg9[%c0_527, %c14_528] : memref<2x49xf32, #tpu.memory_space<smem>>
    %1278 = vector.broadcast %1277 : f32 to vector<1x256xf32>
    %1279 = arith.mulf %1276, %1278 : vector<1x256xf32>
    %c19_i32_529 = arith.constant 19 : i32
    %1280 = tpu.dynamic_rotate %1100 by %c19_i32_529 dim 1 : vector<1x256xf32>, i32 -> vector<1x256xf32>
    %c1_530 = arith.constant 1 : index
    %c14_531 = arith.constant 14 : index
    %1281 = memref.load %arg9[%c1_530, %c14_531] : memref<2x49xf32, #tpu.memory_space<smem>>
    %1282 = vector.broadcast %1281 : f32 to vector<1x256xf32>
    %1283 = arith.mulf %1280, %1282 : vector<1x256xf32>
    %1284 = arith.addf %1279, %1283 : vector<1x256xf32>
    %cst_532 = arith.constant 0.000000e+00 : f32
    %1285 = vector.broadcast %cst_532 : f32 to vector<1x256xf32>
    %1286 = arith.select %101, %1284, %1285 : vector<1x256xi1>, vector<1x256xf32>
    %1287 = arith.addf %1275, %1286 : vector<1x256xf32>
    %c18_i32_533 = arith.constant 18 : i32
    %1288 = tpu.dynamic_rotate %1098 by %c18_i32_533 dim 1 : vector<1x256xf32>, i32 -> vector<1x256xf32>
    %c0_534 = arith.constant 0 : index
    %c15_535 = arith.constant 15 : index
    %1289 = memref.load %arg9[%c0_534, %c15_535] : memref<2x49xf32, #tpu.memory_space<smem>>
    %1290 = vector.broadcast %1289 : f32 to vector<1x256xf32>
    %1291 = arith.mulf %1288, %1290 : vector<1x256xf32>
    %c18_i32_536 = arith.constant 18 : i32
    %1292 = tpu.dynamic_rotate %1100 by %c18_i32_536 dim 1 : vector<1x256xf32>, i32 -> vector<1x256xf32>
    %c1_537 = arith.constant 1 : index
    %c15_538 = arith.constant 15 : index
    %1293 = memref.load %arg9[%c1_537, %c15_538] : memref<2x49xf32, #tpu.memory_space<smem>>
    %1294 = vector.broadcast %1293 : f32 to vector<1x256xf32>
    %1295 = arith.mulf %1292, %1294 : vector<1x256xf32>
    %1296 = arith.addf %1291, %1295 : vector<1x256xf32>
    %cst_539 = arith.constant 0.000000e+00 : f32
    %1297 = vector.broadcast %cst_539 : f32 to vector<1x256xf32>
    %1298 = arith.select %106, %1296, %1297 : vector<1x256xi1>, vector<1x256xf32>
    %1299 = arith.addf %1287, %1298 : vector<1x256xf32>
    %c17_i32_540 = arith.constant 17 : i32
    %1300 = tpu.dynamic_rotate %1098 by %c17_i32_540 dim 1 : vector<1x256xf32>, i32 -> vector<1x256xf32>
    %c0_541 = arith.constant 0 : index
    %c16_542 = arith.constant 16 : index
    %1301 = memref.load %arg9[%c0_541, %c16_542] : memref<2x49xf32, #tpu.memory_space<smem>>
    %1302 = vector.broadcast %1301 : f32 to vector<1x256xf32>
    %1303 = arith.mulf %1300, %1302 : vector<1x256xf32>
    %c17_i32_543 = arith.constant 17 : i32
    %1304 = tpu.dynamic_rotate %1100 by %c17_i32_543 dim 1 : vector<1x256xf32>, i32 -> vector<1x256xf32>
    %c1_544 = arith.constant 1 : index
    %c16_545 = arith.constant 16 : index
    %1305 = memref.load %arg9[%c1_544, %c16_545] : memref<2x49xf32, #tpu.memory_space<smem>>
    %1306 = vector.broadcast %1305 : f32 to vector<1x256xf32>
    %1307 = arith.mulf %1304, %1306 : vector<1x256xf32>
    %1308 = arith.addf %1303, %1307 : vector<1x256xf32>
    %cst_546 = arith.constant 0.000000e+00 : f32
    %1309 = vector.broadcast %cst_546 : f32 to vector<1x256xf32>
    %1310 = arith.select %111, %1308, %1309 : vector<1x256xi1>, vector<1x256xf32>
    %1311 = arith.addf %1299, %1310 : vector<1x256xf32>
    %c16_i32_547 = arith.constant 16 : i32
    %1312 = tpu.dynamic_rotate %1098 by %c16_i32_547 dim 1 : vector<1x256xf32>, i32 -> vector<1x256xf32>
    %c0_548 = arith.constant 0 : index
    %c17_549 = arith.constant 17 : index
    %1313 = memref.load %arg9[%c0_548, %c17_549] : memref<2x49xf32, #tpu.memory_space<smem>>
    %1314 = vector.broadcast %1313 : f32 to vector<1x256xf32>
    %1315 = arith.mulf %1312, %1314 : vector<1x256xf32>
    %c16_i32_550 = arith.constant 16 : i32
    %1316 = tpu.dynamic_rotate %1100 by %c16_i32_550 dim 1 : vector<1x256xf32>, i32 -> vector<1x256xf32>
    %c1_551 = arith.constant 1 : index
    %c17_552 = arith.constant 17 : index
    %1317 = memref.load %arg9[%c1_551, %c17_552] : memref<2x49xf32, #tpu.memory_space<smem>>
    %1318 = vector.broadcast %1317 : f32 to vector<1x256xf32>
    %1319 = arith.mulf %1316, %1318 : vector<1x256xf32>
    %1320 = arith.addf %1315, %1319 : vector<1x256xf32>
    %cst_553 = arith.constant 0.000000e+00 : f32
    %1321 = vector.broadcast %cst_553 : f32 to vector<1x256xf32>
    %1322 = arith.select %113, %1320, %1321 : vector<1x256xi1>, vector<1x256xf32>
    %1323 = arith.addf %1311, %1322 : vector<1x256xf32>
    %c15_i32_554 = arith.constant 15 : i32
    %1324 = tpu.dynamic_rotate %1098 by %c15_i32_554 dim 1 : vector<1x256xf32>, i32 -> vector<1x256xf32>
    %c0_555 = arith.constant 0 : index
    %c18_556 = arith.constant 18 : index
    %1325 = memref.load %arg9[%c0_555, %c18_556] : memref<2x49xf32, #tpu.memory_space<smem>>
    %1326 = vector.broadcast %1325 : f32 to vector<1x256xf32>
    %1327 = arith.mulf %1324, %1326 : vector<1x256xf32>
    %c15_i32_557 = arith.constant 15 : i32
    %1328 = tpu.dynamic_rotate %1100 by %c15_i32_557 dim 1 : vector<1x256xf32>, i32 -> vector<1x256xf32>
    %c1_558 = arith.constant 1 : index
    %c18_559 = arith.constant 18 : index
    %1329 = memref.load %arg9[%c1_558, %c18_559] : memref<2x49xf32, #tpu.memory_space<smem>>
    %1330 = vector.broadcast %1329 : f32 to vector<1x256xf32>
    %1331 = arith.mulf %1328, %1330 : vector<1x256xf32>
    %1332 = arith.addf %1327, %1331 : vector<1x256xf32>
    %cst_560 = arith.constant 0.000000e+00 : f32
    %1333 = vector.broadcast %cst_560 : f32 to vector<1x256xf32>
    %1334 = arith.select %118, %1332, %1333 : vector<1x256xi1>, vector<1x256xf32>
    %1335 = arith.addf %1323, %1334 : vector<1x256xf32>
    %c14_i32_561 = arith.constant 14 : i32
    %1336 = tpu.dynamic_rotate %1098 by %c14_i32_561 dim 1 : vector<1x256xf32>, i32 -> vector<1x256xf32>
    %c0_562 = arith.constant 0 : index
    %c19_563 = arith.constant 19 : index
    %1337 = memref.load %arg9[%c0_562, %c19_563] : memref<2x49xf32, #tpu.memory_space<smem>>
    %1338 = vector.broadcast %1337 : f32 to vector<1x256xf32>
    %1339 = arith.mulf %1336, %1338 : vector<1x256xf32>
    %c14_i32_564 = arith.constant 14 : i32
    %1340 = tpu.dynamic_rotate %1100 by %c14_i32_564 dim 1 : vector<1x256xf32>, i32 -> vector<1x256xf32>
    %c1_565 = arith.constant 1 : index
    %c19_566 = arith.constant 19 : index
    %1341 = memref.load %arg9[%c1_565, %c19_566] : memref<2x49xf32, #tpu.memory_space<smem>>
    %1342 = vector.broadcast %1341 : f32 to vector<1x256xf32>
    %1343 = arith.mulf %1340, %1342 : vector<1x256xf32>
    %1344 = arith.addf %1339, %1343 : vector<1x256xf32>
    %cst_567 = arith.constant 0.000000e+00 : f32
    %1345 = vector.broadcast %cst_567 : f32 to vector<1x256xf32>
    %1346 = arith.select %123, %1344, %1345 : vector<1x256xi1>, vector<1x256xf32>
    %1347 = arith.addf %1335, %1346 : vector<1x256xf32>
    %c13_i32_568 = arith.constant 13 : i32
    %1348 = tpu.dynamic_rotate %1098 by %c13_i32_568 dim 1 : vector<1x256xf32>, i32 -> vector<1x256xf32>
    %c0_569 = arith.constant 0 : index
    %c20_570 = arith.constant 20 : index
    %1349 = memref.load %arg9[%c0_569, %c20_570] : memref<2x49xf32, #tpu.memory_space<smem>>
    %1350 = vector.broadcast %1349 : f32 to vector<1x256xf32>
    %1351 = arith.mulf %1348, %1350 : vector<1x256xf32>
    %c13_i32_571 = arith.constant 13 : i32
    %1352 = tpu.dynamic_rotate %1100 by %c13_i32_571 dim 1 : vector<1x256xf32>, i32 -> vector<1x256xf32>
    %c1_572 = arith.constant 1 : index
    %c20_573 = arith.constant 20 : index
    %1353 = memref.load %arg9[%c1_572, %c20_573] : memref<2x49xf32, #tpu.memory_space<smem>>
    %1354 = vector.broadcast %1353 : f32 to vector<1x256xf32>
    %1355 = arith.mulf %1352, %1354 : vector<1x256xf32>
    %1356 = arith.addf %1351, %1355 : vector<1x256xf32>
    %cst_574 = arith.constant 0.000000e+00 : f32
    %1357 = vector.broadcast %cst_574 : f32 to vector<1x256xf32>
    %1358 = arith.select %128, %1356, %1357 : vector<1x256xi1>, vector<1x256xf32>
    %1359 = arith.addf %1347, %1358 : vector<1x256xf32>
    %c3_i32_575 = arith.constant 3 : i32
    %1360 = tpu.dynamic_rotate %1098 by %c3_i32_575 dim 1 : vector<1x256xf32>, i32 -> vector<1x256xf32>
    %c0_576 = arith.constant 0 : index
    %c21_577 = arith.constant 21 : index
    %1361 = memref.load %arg9[%c0_576, %c21_577] : memref<2x49xf32, #tpu.memory_space<smem>>
    %1362 = vector.broadcast %1361 : f32 to vector<1x256xf32>
    %1363 = arith.mulf %1360, %1362 : vector<1x256xf32>
    %c3_i32_578 = arith.constant 3 : i32
    %1364 = tpu.dynamic_rotate %1100 by %c3_i32_578 dim 1 : vector<1x256xf32>, i32 -> vector<1x256xf32>
    %c1_579 = arith.constant 1 : index
    %c21_580 = arith.constant 21 : index
    %1365 = memref.load %arg9[%c1_579, %c21_580] : memref<2x49xf32, #tpu.memory_space<smem>>
    %1366 = vector.broadcast %1365 : f32 to vector<1x256xf32>
    %1367 = arith.mulf %1364, %1366 : vector<1x256xf32>
    %1368 = arith.addf %1363, %1367 : vector<1x256xf32>
    %cst_581 = arith.constant 0.000000e+00 : f32
    %1369 = vector.broadcast %cst_581 : f32 to vector<1x256xf32>
    %1370 = arith.select %130, %1368, %1369 : vector<1x256xi1>, vector<1x256xf32>
    %1371 = arith.addf %1359, %1370 : vector<1x256xf32>
    %c2_i32_582 = arith.constant 2 : i32
    %1372 = tpu.dynamic_rotate %1098 by %c2_i32_582 dim 1 : vector<1x256xf32>, i32 -> vector<1x256xf32>
    %c0_583 = arith.constant 0 : index
    %c22_584 = arith.constant 22 : index
    %1373 = memref.load %arg9[%c0_583, %c22_584] : memref<2x49xf32, #tpu.memory_space<smem>>
    %1374 = vector.broadcast %1373 : f32 to vector<1x256xf32>
    %1375 = arith.mulf %1372, %1374 : vector<1x256xf32>
    %c2_i32_585 = arith.constant 2 : i32
    %1376 = tpu.dynamic_rotate %1100 by %c2_i32_585 dim 1 : vector<1x256xf32>, i32 -> vector<1x256xf32>
    %c1_586 = arith.constant 1 : index
    %c22_587 = arith.constant 22 : index
    %1377 = memref.load %arg9[%c1_586, %c22_587] : memref<2x49xf32, #tpu.memory_space<smem>>
    %1378 = vector.broadcast %1377 : f32 to vector<1x256xf32>
    %1379 = arith.mulf %1376, %1378 : vector<1x256xf32>
    %1380 = arith.addf %1375, %1379 : vector<1x256xf32>
    %cst_588 = arith.constant 0.000000e+00 : f32
    %1381 = vector.broadcast %cst_588 : f32 to vector<1x256xf32>
    %1382 = arith.select %132, %1380, %1381 : vector<1x256xi1>, vector<1x256xf32>
    %1383 = arith.addf %1371, %1382 : vector<1x256xf32>
    %c1_i32_589 = arith.constant 1 : i32
    %1384 = tpu.dynamic_rotate %1098 by %c1_i32_589 dim 1 : vector<1x256xf32>, i32 -> vector<1x256xf32>
    %c0_590 = arith.constant 0 : index
    %c23_591 = arith.constant 23 : index
    %1385 = memref.load %arg9[%c0_590, %c23_591] : memref<2x49xf32, #tpu.memory_space<smem>>
    %1386 = vector.broadcast %1385 : f32 to vector<1x256xf32>
    %1387 = arith.mulf %1384, %1386 : vector<1x256xf32>
    %c1_i32_592 = arith.constant 1 : i32
    %1388 = tpu.dynamic_rotate %1100 by %c1_i32_592 dim 1 : vector<1x256xf32>, i32 -> vector<1x256xf32>
    %c1_593 = arith.constant 1 : index
    %c23_594 = arith.constant 23 : index
    %1389 = memref.load %arg9[%c1_593, %c23_594] : memref<2x49xf32, #tpu.memory_space<smem>>
    %1390 = vector.broadcast %1389 : f32 to vector<1x256xf32>
    %1391 = arith.mulf %1388, %1390 : vector<1x256xf32>
    %1392 = arith.addf %1387, %1391 : vector<1x256xf32>
    %cst_595 = arith.constant 0.000000e+00 : f32
    %1393 = vector.broadcast %cst_595 : f32 to vector<1x256xf32>
    %1394 = arith.select %134, %1392, %1393 : vector<1x256xi1>, vector<1x256xf32>
    %1395 = arith.addf %1383, %1394 : vector<1x256xf32>
    %c255_i32_596 = arith.constant 255 : i32
    %1396 = tpu.dynamic_rotate %1098 by %c255_i32_596 dim 1 : vector<1x256xf32>, i32 -> vector<1x256xf32>
    %c0_597 = arith.constant 0 : index
    %c25_598 = arith.constant 25 : index
    %1397 = memref.load %arg9[%c0_597, %c25_598] : memref<2x49xf32, #tpu.memory_space<smem>>
    %1398 = vector.broadcast %1397 : f32 to vector<1x256xf32>
    %1399 = arith.mulf %1396, %1398 : vector<1x256xf32>
    %c255_i32_599 = arith.constant 255 : i32
    %1400 = tpu.dynamic_rotate %1100 by %c255_i32_599 dim 1 : vector<1x256xf32>, i32 -> vector<1x256xf32>
    %c1_600 = arith.constant 1 : index
    %c25_601 = arith.constant 25 : index
    %1401 = memref.load %arg9[%c1_600, %c25_601] : memref<2x49xf32, #tpu.memory_space<smem>>
    %1402 = vector.broadcast %1401 : f32 to vector<1x256xf32>
    %1403 = arith.mulf %1400, %1402 : vector<1x256xf32>
    %1404 = arith.addf %1399, %1403 : vector<1x256xf32>
    %cst_602 = arith.constant 0.000000e+00 : f32
    %1405 = vector.broadcast %cst_602 : f32 to vector<1x256xf32>
    %1406 = arith.select %136, %1404, %1405 : vector<1x256xi1>, vector<1x256xf32>
    %1407 = arith.addf %1395, %1406 : vector<1x256xf32>
    %c254_i32_603 = arith.constant 254 : i32
    %1408 = tpu.dynamic_rotate %1098 by %c254_i32_603 dim 1 : vector<1x256xf32>, i32 -> vector<1x256xf32>
    %c0_604 = arith.constant 0 : index
    %c26_605 = arith.constant 26 : index
    %1409 = memref.load %arg9[%c0_604, %c26_605] : memref<2x49xf32, #tpu.memory_space<smem>>
    %1410 = vector.broadcast %1409 : f32 to vector<1x256xf32>
    %1411 = arith.mulf %1408, %1410 : vector<1x256xf32>
    %c254_i32_606 = arith.constant 254 : i32
    %1412 = tpu.dynamic_rotate %1100 by %c254_i32_606 dim 1 : vector<1x256xf32>, i32 -> vector<1x256xf32>
    %c1_607 = arith.constant 1 : index
    %c26_608 = arith.constant 26 : index
    %1413 = memref.load %arg9[%c1_607, %c26_608] : memref<2x49xf32, #tpu.memory_space<smem>>
    %1414 = vector.broadcast %1413 : f32 to vector<1x256xf32>
    %1415 = arith.mulf %1412, %1414 : vector<1x256xf32>
    %1416 = arith.addf %1411, %1415 : vector<1x256xf32>
    %cst_609 = arith.constant 0.000000e+00 : f32
    %1417 = vector.broadcast %cst_609 : f32 to vector<1x256xf32>
    %1418 = arith.select %138, %1416, %1417 : vector<1x256xi1>, vector<1x256xf32>
    %1419 = arith.addf %1407, %1418 : vector<1x256xf32>
    %c253_i32_610 = arith.constant 253 : i32
    %1420 = tpu.dynamic_rotate %1098 by %c253_i32_610 dim 1 : vector<1x256xf32>, i32 -> vector<1x256xf32>
    %c0_611 = arith.constant 0 : index
    %c27_612 = arith.constant 27 : index
    %1421 = memref.load %arg9[%c0_611, %c27_612] : memref<2x49xf32, #tpu.memory_space<smem>>
    %1422 = vector.broadcast %1421 : f32 to vector<1x256xf32>
    %1423 = arith.mulf %1420, %1422 : vector<1x256xf32>
    %c253_i32_613 = arith.constant 253 : i32
    %1424 = tpu.dynamic_rotate %1100 by %c253_i32_613 dim 1 : vector<1x256xf32>, i32 -> vector<1x256xf32>
    %c1_614 = arith.constant 1 : index
    %c27_615 = arith.constant 27 : index
    %1425 = memref.load %arg9[%c1_614, %c27_615] : memref<2x49xf32, #tpu.memory_space<smem>>
    %1426 = vector.broadcast %1425 : f32 to vector<1x256xf32>
    %1427 = arith.mulf %1424, %1426 : vector<1x256xf32>
    %1428 = arith.addf %1423, %1427 : vector<1x256xf32>
    %cst_616 = arith.constant 0.000000e+00 : f32
    %1429 = vector.broadcast %cst_616 : f32 to vector<1x256xf32>
    %1430 = arith.select %140, %1428, %1429 : vector<1x256xi1>, vector<1x256xf32>
    %1431 = arith.addf %1419, %1430 : vector<1x256xf32>
    %c243_i32_617 = arith.constant 243 : i32
    %1432 = tpu.dynamic_rotate %1098 by %c243_i32_617 dim 1 : vector<1x256xf32>, i32 -> vector<1x256xf32>
    %c0_618 = arith.constant 0 : index
    %c28_619 = arith.constant 28 : index
    %1433 = memref.load %arg9[%c0_618, %c28_619] : memref<2x49xf32, #tpu.memory_space<smem>>
    %1434 = vector.broadcast %1433 : f32 to vector<1x256xf32>
    %1435 = arith.mulf %1432, %1434 : vector<1x256xf32>
    %c243_i32_620 = arith.constant 243 : i32
    %1436 = tpu.dynamic_rotate %1100 by %c243_i32_620 dim 1 : vector<1x256xf32>, i32 -> vector<1x256xf32>
    %c1_621 = arith.constant 1 : index
    %c28_622 = arith.constant 28 : index
    %1437 = memref.load %arg9[%c1_621, %c28_622] : memref<2x49xf32, #tpu.memory_space<smem>>
    %1438 = vector.broadcast %1437 : f32 to vector<1x256xf32>
    %1439 = arith.mulf %1436, %1438 : vector<1x256xf32>
    %1440 = arith.addf %1435, %1439 : vector<1x256xf32>
    %cst_623 = arith.constant 0.000000e+00 : f32
    %1441 = vector.broadcast %cst_623 : f32 to vector<1x256xf32>
    %1442 = arith.select %145, %1440, %1441 : vector<1x256xi1>, vector<1x256xf32>
    %1443 = arith.addf %1431, %1442 : vector<1x256xf32>
    %c242_i32_624 = arith.constant 242 : i32
    %1444 = tpu.dynamic_rotate %1098 by %c242_i32_624 dim 1 : vector<1x256xf32>, i32 -> vector<1x256xf32>
    %c0_625 = arith.constant 0 : index
    %c29_626 = arith.constant 29 : index
    %1445 = memref.load %arg9[%c0_625, %c29_626] : memref<2x49xf32, #tpu.memory_space<smem>>
    %1446 = vector.broadcast %1445 : f32 to vector<1x256xf32>
    %1447 = arith.mulf %1444, %1446 : vector<1x256xf32>
    %c242_i32_627 = arith.constant 242 : i32
    %1448 = tpu.dynamic_rotate %1100 by %c242_i32_627 dim 1 : vector<1x256xf32>, i32 -> vector<1x256xf32>
    %c1_628 = arith.constant 1 : index
    %c29_629 = arith.constant 29 : index
    %1449 = memref.load %arg9[%c1_628, %c29_629] : memref<2x49xf32, #tpu.memory_space<smem>>
    %1450 = vector.broadcast %1449 : f32 to vector<1x256xf32>
    %1451 = arith.mulf %1448, %1450 : vector<1x256xf32>
    %1452 = arith.addf %1447, %1451 : vector<1x256xf32>
    %cst_630 = arith.constant 0.000000e+00 : f32
    %1453 = vector.broadcast %cst_630 : f32 to vector<1x256xf32>
    %1454 = arith.select %150, %1452, %1453 : vector<1x256xi1>, vector<1x256xf32>
    %1455 = arith.addf %1443, %1454 : vector<1x256xf32>
    %c241_i32_631 = arith.constant 241 : i32
    %1456 = tpu.dynamic_rotate %1098 by %c241_i32_631 dim 1 : vector<1x256xf32>, i32 -> vector<1x256xf32>
    %c0_632 = arith.constant 0 : index
    %c30_633 = arith.constant 30 : index
    %1457 = memref.load %arg9[%c0_632, %c30_633] : memref<2x49xf32, #tpu.memory_space<smem>>
    %1458 = vector.broadcast %1457 : f32 to vector<1x256xf32>
    %1459 = arith.mulf %1456, %1458 : vector<1x256xf32>
    %c241_i32_634 = arith.constant 241 : i32
    %1460 = tpu.dynamic_rotate %1100 by %c241_i32_634 dim 1 : vector<1x256xf32>, i32 -> vector<1x256xf32>
    %c1_635 = arith.constant 1 : index
    %c30_636 = arith.constant 30 : index
    %1461 = memref.load %arg9[%c1_635, %c30_636] : memref<2x49xf32, #tpu.memory_space<smem>>
    %1462 = vector.broadcast %1461 : f32 to vector<1x256xf32>
    %1463 = arith.mulf %1460, %1462 : vector<1x256xf32>
    %1464 = arith.addf %1459, %1463 : vector<1x256xf32>
    %cst_637 = arith.constant 0.000000e+00 : f32
    %1465 = vector.broadcast %cst_637 : f32 to vector<1x256xf32>
    %1466 = arith.select %155, %1464, %1465 : vector<1x256xi1>, vector<1x256xf32>
    %1467 = arith.addf %1455, %1466 : vector<1x256xf32>
    %c240_i32_638 = arith.constant 240 : i32
    %1468 = tpu.dynamic_rotate %1098 by %c240_i32_638 dim 1 : vector<1x256xf32>, i32 -> vector<1x256xf32>
    %c0_639 = arith.constant 0 : index
    %c31_640 = arith.constant 31 : index
    %1469 = memref.load %arg9[%c0_639, %c31_640] : memref<2x49xf32, #tpu.memory_space<smem>>
    %1470 = vector.broadcast %1469 : f32 to vector<1x256xf32>
    %1471 = arith.mulf %1468, %1470 : vector<1x256xf32>
    %c240_i32_641 = arith.constant 240 : i32
    %1472 = tpu.dynamic_rotate %1100 by %c240_i32_641 dim 1 : vector<1x256xf32>, i32 -> vector<1x256xf32>
    %c1_642 = arith.constant 1 : index
    %c31_643 = arith.constant 31 : index
    %1473 = memref.load %arg9[%c1_642, %c31_643] : memref<2x49xf32, #tpu.memory_space<smem>>
    %1474 = vector.broadcast %1473 : f32 to vector<1x256xf32>
    %1475 = arith.mulf %1472, %1474 : vector<1x256xf32>
    %1476 = arith.addf %1471, %1475 : vector<1x256xf32>
    %cst_644 = arith.constant 0.000000e+00 : f32
    %1477 = vector.broadcast %cst_644 : f32 to vector<1x256xf32>
    %1478 = arith.select %157, %1476, %1477 : vector<1x256xi1>, vector<1x256xf32>
    %1479 = arith.addf %1467, %1478 : vector<1x256xf32>
    %c239_i32_645 = arith.constant 239 : i32
    %1480 = tpu.dynamic_rotate %1098 by %c239_i32_645 dim 1 : vector<1x256xf32>, i32 -> vector<1x256xf32>
    %c0_646 = arith.constant 0 : index
    %c32_647 = arith.constant 32 : index
    %1481 = memref.load %arg9[%c0_646, %c32_647] : memref<2x49xf32, #tpu.memory_space<smem>>
    %1482 = vector.broadcast %1481 : f32 to vector<1x256xf32>
    %1483 = arith.mulf %1480, %1482 : vector<1x256xf32>
    %c239_i32_648 = arith.constant 239 : i32
    %1484 = tpu.dynamic_rotate %1100 by %c239_i32_648 dim 1 : vector<1x256xf32>, i32 -> vector<1x256xf32>
    %c1_649 = arith.constant 1 : index
    %c32_650 = arith.constant 32 : index
    %1485 = memref.load %arg9[%c1_649, %c32_650] : memref<2x49xf32, #tpu.memory_space<smem>>
    %1486 = vector.broadcast %1485 : f32 to vector<1x256xf32>
    %1487 = arith.mulf %1484, %1486 : vector<1x256xf32>
    %1488 = arith.addf %1483, %1487 : vector<1x256xf32>
    %cst_651 = arith.constant 0.000000e+00 : f32
    %1489 = vector.broadcast %cst_651 : f32 to vector<1x256xf32>
    %1490 = arith.select %162, %1488, %1489 : vector<1x256xi1>, vector<1x256xf32>
    %1491 = arith.addf %1479, %1490 : vector<1x256xf32>
    %c238_i32_652 = arith.constant 238 : i32
    %1492 = tpu.dynamic_rotate %1098 by %c238_i32_652 dim 1 : vector<1x256xf32>, i32 -> vector<1x256xf32>
    %c0_653 = arith.constant 0 : index
    %c33_654 = arith.constant 33 : index
    %1493 = memref.load %arg9[%c0_653, %c33_654] : memref<2x49xf32, #tpu.memory_space<smem>>
    %1494 = vector.broadcast %1493 : f32 to vector<1x256xf32>
    %1495 = arith.mulf %1492, %1494 : vector<1x256xf32>
    %c238_i32_655 = arith.constant 238 : i32
    %1496 = tpu.dynamic_rotate %1100 by %c238_i32_655 dim 1 : vector<1x256xf32>, i32 -> vector<1x256xf32>
    %c1_656 = arith.constant 1 : index
    %c33_657 = arith.constant 33 : index
    %1497 = memref.load %arg9[%c1_656, %c33_657] : memref<2x49xf32, #tpu.memory_space<smem>>
    %1498 = vector.broadcast %1497 : f32 to vector<1x256xf32>
    %1499 = arith.mulf %1496, %1498 : vector<1x256xf32>
    %1500 = arith.addf %1495, %1499 : vector<1x256xf32>
    %cst_658 = arith.constant 0.000000e+00 : f32
    %1501 = vector.broadcast %cst_658 : f32 to vector<1x256xf32>
    %1502 = arith.select %167, %1500, %1501 : vector<1x256xi1>, vector<1x256xf32>
    %1503 = arith.addf %1491, %1502 : vector<1x256xf32>
    %c237_i32_659 = arith.constant 237 : i32
    %1504 = tpu.dynamic_rotate %1098 by %c237_i32_659 dim 1 : vector<1x256xf32>, i32 -> vector<1x256xf32>
    %c0_660 = arith.constant 0 : index
    %c34_661 = arith.constant 34 : index
    %1505 = memref.load %arg9[%c0_660, %c34_661] : memref<2x49xf32, #tpu.memory_space<smem>>
    %1506 = vector.broadcast %1505 : f32 to vector<1x256xf32>
    %1507 = arith.mulf %1504, %1506 : vector<1x256xf32>
    %c237_i32_662 = arith.constant 237 : i32
    %1508 = tpu.dynamic_rotate %1100 by %c237_i32_662 dim 1 : vector<1x256xf32>, i32 -> vector<1x256xf32>
    %c1_663 = arith.constant 1 : index
    %c34_664 = arith.constant 34 : index
    %1509 = memref.load %arg9[%c1_663, %c34_664] : memref<2x49xf32, #tpu.memory_space<smem>>
    %1510 = vector.broadcast %1509 : f32 to vector<1x256xf32>
    %1511 = arith.mulf %1508, %1510 : vector<1x256xf32>
    %1512 = arith.addf %1507, %1511 : vector<1x256xf32>
    %cst_665 = arith.constant 0.000000e+00 : f32
    %1513 = vector.broadcast %cst_665 : f32 to vector<1x256xf32>
    %1514 = arith.select %172, %1512, %1513 : vector<1x256xi1>, vector<1x256xf32>
    %1515 = arith.addf %1503, %1514 : vector<1x256xf32>
    %c227_i32_666 = arith.constant 227 : i32
    %1516 = tpu.dynamic_rotate %1098 by %c227_i32_666 dim 1 : vector<1x256xf32>, i32 -> vector<1x256xf32>
    %c0_667 = arith.constant 0 : index
    %c35_668 = arith.constant 35 : index
    %1517 = memref.load %arg9[%c0_667, %c35_668] : memref<2x49xf32, #tpu.memory_space<smem>>
    %1518 = vector.broadcast %1517 : f32 to vector<1x256xf32>
    %1519 = arith.mulf %1516, %1518 : vector<1x256xf32>
    %c227_i32_669 = arith.constant 227 : i32
    %1520 = tpu.dynamic_rotate %1100 by %c227_i32_669 dim 1 : vector<1x256xf32>, i32 -> vector<1x256xf32>
    %c1_670 = arith.constant 1 : index
    %c35_671 = arith.constant 35 : index
    %1521 = memref.load %arg9[%c1_670, %c35_671] : memref<2x49xf32, #tpu.memory_space<smem>>
    %1522 = vector.broadcast %1521 : f32 to vector<1x256xf32>
    %1523 = arith.mulf %1520, %1522 : vector<1x256xf32>
    %1524 = arith.addf %1519, %1523 : vector<1x256xf32>
    %cst_672 = arith.constant 0.000000e+00 : f32
    %1525 = vector.broadcast %cst_672 : f32 to vector<1x256xf32>
    %1526 = arith.select %177, %1524, %1525 : vector<1x256xi1>, vector<1x256xf32>
    %1527 = arith.addf %1515, %1526 : vector<1x256xf32>
    %c226_i32_673 = arith.constant 226 : i32
    %1528 = tpu.dynamic_rotate %1098 by %c226_i32_673 dim 1 : vector<1x256xf32>, i32 -> vector<1x256xf32>
    %c0_674 = arith.constant 0 : index
    %c36_675 = arith.constant 36 : index
    %1529 = memref.load %arg9[%c0_674, %c36_675] : memref<2x49xf32, #tpu.memory_space<smem>>
    %1530 = vector.broadcast %1529 : f32 to vector<1x256xf32>
    %1531 = arith.mulf %1528, %1530 : vector<1x256xf32>
    %c226_i32_676 = arith.constant 226 : i32
    %1532 = tpu.dynamic_rotate %1100 by %c226_i32_676 dim 1 : vector<1x256xf32>, i32 -> vector<1x256xf32>
    %c1_677 = arith.constant 1 : index
    %c36_678 = arith.constant 36 : index
    %1533 = memref.load %arg9[%c1_677, %c36_678] : memref<2x49xf32, #tpu.memory_space<smem>>
    %1534 = vector.broadcast %1533 : f32 to vector<1x256xf32>
    %1535 = arith.mulf %1532, %1534 : vector<1x256xf32>
    %1536 = arith.addf %1531, %1535 : vector<1x256xf32>
    %cst_679 = arith.constant 0.000000e+00 : f32
    %1537 = vector.broadcast %cst_679 : f32 to vector<1x256xf32>
    %1538 = arith.select %182, %1536, %1537 : vector<1x256xi1>, vector<1x256xf32>
    %1539 = arith.addf %1527, %1538 : vector<1x256xf32>
    %c225_i32_680 = arith.constant 225 : i32
    %1540 = tpu.dynamic_rotate %1098 by %c225_i32_680 dim 1 : vector<1x256xf32>, i32 -> vector<1x256xf32>
    %c0_681 = arith.constant 0 : index
    %c37_682 = arith.constant 37 : index
    %1541 = memref.load %arg9[%c0_681, %c37_682] : memref<2x49xf32, #tpu.memory_space<smem>>
    %1542 = vector.broadcast %1541 : f32 to vector<1x256xf32>
    %1543 = arith.mulf %1540, %1542 : vector<1x256xf32>
    %c225_i32_683 = arith.constant 225 : i32
    %1544 = tpu.dynamic_rotate %1100 by %c225_i32_683 dim 1 : vector<1x256xf32>, i32 -> vector<1x256xf32>
    %c1_684 = arith.constant 1 : index
    %c37_685 = arith.constant 37 : index
    %1545 = memref.load %arg9[%c1_684, %c37_685] : memref<2x49xf32, #tpu.memory_space<smem>>
    %1546 = vector.broadcast %1545 : f32 to vector<1x256xf32>
    %1547 = arith.mulf %1544, %1546 : vector<1x256xf32>
    %1548 = arith.addf %1543, %1547 : vector<1x256xf32>
    %cst_686 = arith.constant 0.000000e+00 : f32
    %1549 = vector.broadcast %cst_686 : f32 to vector<1x256xf32>
    %1550 = arith.select %187, %1548, %1549 : vector<1x256xi1>, vector<1x256xf32>
    %1551 = arith.addf %1539, %1550 : vector<1x256xf32>
    %c224_i32_687 = arith.constant 224 : i32
    %1552 = tpu.dynamic_rotate %1098 by %c224_i32_687 dim 1 : vector<1x256xf32>, i32 -> vector<1x256xf32>
    %c0_688 = arith.constant 0 : index
    %c38_689 = arith.constant 38 : index
    %1553 = memref.load %arg9[%c0_688, %c38_689] : memref<2x49xf32, #tpu.memory_space<smem>>
    %1554 = vector.broadcast %1553 : f32 to vector<1x256xf32>
    %1555 = arith.mulf %1552, %1554 : vector<1x256xf32>
    %c224_i32_690 = arith.constant 224 : i32
    %1556 = tpu.dynamic_rotate %1100 by %c224_i32_690 dim 1 : vector<1x256xf32>, i32 -> vector<1x256xf32>
    %c1_691 = arith.constant 1 : index
    %c38_692 = arith.constant 38 : index
    %1557 = memref.load %arg9[%c1_691, %c38_692] : memref<2x49xf32, #tpu.memory_space<smem>>
    %1558 = vector.broadcast %1557 : f32 to vector<1x256xf32>
    %1559 = arith.mulf %1556, %1558 : vector<1x256xf32>
    %1560 = arith.addf %1555, %1559 : vector<1x256xf32>
    %cst_693 = arith.constant 0.000000e+00 : f32
    %1561 = vector.broadcast %cst_693 : f32 to vector<1x256xf32>
    %1562 = arith.select %189, %1560, %1561 : vector<1x256xi1>, vector<1x256xf32>
    %1563 = arith.addf %1551, %1562 : vector<1x256xf32>
    %c223_i32_694 = arith.constant 223 : i32
    %1564 = tpu.dynamic_rotate %1098 by %c223_i32_694 dim 1 : vector<1x256xf32>, i32 -> vector<1x256xf32>
    %c0_695 = arith.constant 0 : index
    %c39_696 = arith.constant 39 : index
    %1565 = memref.load %arg9[%c0_695, %c39_696] : memref<2x49xf32, #tpu.memory_space<smem>>
    %1566 = vector.broadcast %1565 : f32 to vector<1x256xf32>
    %1567 = arith.mulf %1564, %1566 : vector<1x256xf32>
    %c223_i32_697 = arith.constant 223 : i32
    %1568 = tpu.dynamic_rotate %1100 by %c223_i32_697 dim 1 : vector<1x256xf32>, i32 -> vector<1x256xf32>
    %c1_698 = arith.constant 1 : index
    %c39_699 = arith.constant 39 : index
    %1569 = memref.load %arg9[%c1_698, %c39_699] : memref<2x49xf32, #tpu.memory_space<smem>>
    %1570 = vector.broadcast %1569 : f32 to vector<1x256xf32>
    %1571 = arith.mulf %1568, %1570 : vector<1x256xf32>
    %1572 = arith.addf %1567, %1571 : vector<1x256xf32>
    %cst_700 = arith.constant 0.000000e+00 : f32
    %1573 = vector.broadcast %cst_700 : f32 to vector<1x256xf32>
    %1574 = arith.select %194, %1572, %1573 : vector<1x256xi1>, vector<1x256xf32>
    %1575 = arith.addf %1563, %1574 : vector<1x256xf32>
    %c222_i32_701 = arith.constant 222 : i32
    %1576 = tpu.dynamic_rotate %1098 by %c222_i32_701 dim 1 : vector<1x256xf32>, i32 -> vector<1x256xf32>
    %c0_702 = arith.constant 0 : index
    %c40_703 = arith.constant 40 : index
    %1577 = memref.load %arg9[%c0_702, %c40_703] : memref<2x49xf32, #tpu.memory_space<smem>>
    %1578 = vector.broadcast %1577 : f32 to vector<1x256xf32>
    %1579 = arith.mulf %1576, %1578 : vector<1x256xf32>
    %c222_i32_704 = arith.constant 222 : i32
    %1580 = tpu.dynamic_rotate %1100 by %c222_i32_704 dim 1 : vector<1x256xf32>, i32 -> vector<1x256xf32>
    %c1_705 = arith.constant 1 : index
    %c40_706 = arith.constant 40 : index
    %1581 = memref.load %arg9[%c1_705, %c40_706] : memref<2x49xf32, #tpu.memory_space<smem>>
    %1582 = vector.broadcast %1581 : f32 to vector<1x256xf32>
    %1583 = arith.mulf %1580, %1582 : vector<1x256xf32>
    %1584 = arith.addf %1579, %1583 : vector<1x256xf32>
    %cst_707 = arith.constant 0.000000e+00 : f32
    %1585 = vector.broadcast %cst_707 : f32 to vector<1x256xf32>
    %1586 = arith.select %199, %1584, %1585 : vector<1x256xi1>, vector<1x256xf32>
    %1587 = arith.addf %1575, %1586 : vector<1x256xf32>
    %c221_i32_708 = arith.constant 221 : i32
    %1588 = tpu.dynamic_rotate %1098 by %c221_i32_708 dim 1 : vector<1x256xf32>, i32 -> vector<1x256xf32>
    %c0_709 = arith.constant 0 : index
    %c41_710 = arith.constant 41 : index
    %1589 = memref.load %arg9[%c0_709, %c41_710] : memref<2x49xf32, #tpu.memory_space<smem>>
    %1590 = vector.broadcast %1589 : f32 to vector<1x256xf32>
    %1591 = arith.mulf %1588, %1590 : vector<1x256xf32>
    %c221_i32_711 = arith.constant 221 : i32
    %1592 = tpu.dynamic_rotate %1100 by %c221_i32_711 dim 1 : vector<1x256xf32>, i32 -> vector<1x256xf32>
    %c1_712 = arith.constant 1 : index
    %c41_713 = arith.constant 41 : index
    %1593 = memref.load %arg9[%c1_712, %c41_713] : memref<2x49xf32, #tpu.memory_space<smem>>
    %1594 = vector.broadcast %1593 : f32 to vector<1x256xf32>
    %1595 = arith.mulf %1592, %1594 : vector<1x256xf32>
    %1596 = arith.addf %1591, %1595 : vector<1x256xf32>
    %cst_714 = arith.constant 0.000000e+00 : f32
    %1597 = vector.broadcast %cst_714 : f32 to vector<1x256xf32>
    %1598 = arith.select %204, %1596, %1597 : vector<1x256xi1>, vector<1x256xf32>
    %1599 = arith.addf %1587, %1598 : vector<1x256xf32>
    %c211_i32_715 = arith.constant 211 : i32
    %1600 = tpu.dynamic_rotate %1098 by %c211_i32_715 dim 1 : vector<1x256xf32>, i32 -> vector<1x256xf32>
    %c0_716 = arith.constant 0 : index
    %c42_717 = arith.constant 42 : index
    %1601 = memref.load %arg9[%c0_716, %c42_717] : memref<2x49xf32, #tpu.memory_space<smem>>
    %1602 = vector.broadcast %1601 : f32 to vector<1x256xf32>
    %1603 = arith.mulf %1600, %1602 : vector<1x256xf32>
    %c211_i32_718 = arith.constant 211 : i32
    %1604 = tpu.dynamic_rotate %1100 by %c211_i32_718 dim 1 : vector<1x256xf32>, i32 -> vector<1x256xf32>
    %c1_719 = arith.constant 1 : index
    %c42_720 = arith.constant 42 : index
    %1605 = memref.load %arg9[%c1_719, %c42_720] : memref<2x49xf32, #tpu.memory_space<smem>>
    %1606 = vector.broadcast %1605 : f32 to vector<1x256xf32>
    %1607 = arith.mulf %1604, %1606 : vector<1x256xf32>
    %1608 = arith.addf %1603, %1607 : vector<1x256xf32>
    %cst_721 = arith.constant 0.000000e+00 : f32
    %1609 = vector.broadcast %cst_721 : f32 to vector<1x256xf32>
    %1610 = arith.select %209, %1608, %1609 : vector<1x256xi1>, vector<1x256xf32>
    %1611 = arith.addf %1599, %1610 : vector<1x256xf32>
    %c210_i32_722 = arith.constant 210 : i32
    %1612 = tpu.dynamic_rotate %1098 by %c210_i32_722 dim 1 : vector<1x256xf32>, i32 -> vector<1x256xf32>
    %c0_723 = arith.constant 0 : index
    %c43_724 = arith.constant 43 : index
    %1613 = memref.load %arg9[%c0_723, %c43_724] : memref<2x49xf32, #tpu.memory_space<smem>>
    %1614 = vector.broadcast %1613 : f32 to vector<1x256xf32>
    %1615 = arith.mulf %1612, %1614 : vector<1x256xf32>
    %c210_i32_725 = arith.constant 210 : i32
    %1616 = tpu.dynamic_rotate %1100 by %c210_i32_725 dim 1 : vector<1x256xf32>, i32 -> vector<1x256xf32>
    %c1_726 = arith.constant 1 : index
    %c43_727 = arith.constant 43 : index
    %1617 = memref.load %arg9[%c1_726, %c43_727] : memref<2x49xf32, #tpu.memory_space<smem>>
    %1618 = vector.broadcast %1617 : f32 to vector<1x256xf32>
    %1619 = arith.mulf %1616, %1618 : vector<1x256xf32>
    %1620 = arith.addf %1615, %1619 : vector<1x256xf32>
    %cst_728 = arith.constant 0.000000e+00 : f32
    %1621 = vector.broadcast %cst_728 : f32 to vector<1x256xf32>
    %1622 = arith.select %214, %1620, %1621 : vector<1x256xi1>, vector<1x256xf32>
    %1623 = arith.addf %1611, %1622 : vector<1x256xf32>
    %c209_i32_729 = arith.constant 209 : i32
    %1624 = tpu.dynamic_rotate %1098 by %c209_i32_729 dim 1 : vector<1x256xf32>, i32 -> vector<1x256xf32>
    %c0_730 = arith.constant 0 : index
    %c44_731 = arith.constant 44 : index
    %1625 = memref.load %arg9[%c0_730, %c44_731] : memref<2x49xf32, #tpu.memory_space<smem>>
    %1626 = vector.broadcast %1625 : f32 to vector<1x256xf32>
    %1627 = arith.mulf %1624, %1626 : vector<1x256xf32>
    %c209_i32_732 = arith.constant 209 : i32
    %1628 = tpu.dynamic_rotate %1100 by %c209_i32_732 dim 1 : vector<1x256xf32>, i32 -> vector<1x256xf32>
    %c1_733 = arith.constant 1 : index
    %c44_734 = arith.constant 44 : index
    %1629 = memref.load %arg9[%c1_733, %c44_734] : memref<2x49xf32, #tpu.memory_space<smem>>
    %1630 = vector.broadcast %1629 : f32 to vector<1x256xf32>
    %1631 = arith.mulf %1628, %1630 : vector<1x256xf32>
    %1632 = arith.addf %1627, %1631 : vector<1x256xf32>
    %cst_735 = arith.constant 0.000000e+00 : f32
    %1633 = vector.broadcast %cst_735 : f32 to vector<1x256xf32>
    %1634 = arith.select %219, %1632, %1633 : vector<1x256xi1>, vector<1x256xf32>
    %1635 = arith.addf %1623, %1634 : vector<1x256xf32>
    %c208_i32_736 = arith.constant 208 : i32
    %1636 = tpu.dynamic_rotate %1098 by %c208_i32_736 dim 1 : vector<1x256xf32>, i32 -> vector<1x256xf32>
    %c0_737 = arith.constant 0 : index
    %c45_738 = arith.constant 45 : index
    %1637 = memref.load %arg9[%c0_737, %c45_738] : memref<2x49xf32, #tpu.memory_space<smem>>
    %1638 = vector.broadcast %1637 : f32 to vector<1x256xf32>
    %1639 = arith.mulf %1636, %1638 : vector<1x256xf32>
    %c208_i32_739 = arith.constant 208 : i32
    %1640 = tpu.dynamic_rotate %1100 by %c208_i32_739 dim 1 : vector<1x256xf32>, i32 -> vector<1x256xf32>
    %c1_740 = arith.constant 1 : index
    %c45_741 = arith.constant 45 : index
    %1641 = memref.load %arg9[%c1_740, %c45_741] : memref<2x49xf32, #tpu.memory_space<smem>>
    %1642 = vector.broadcast %1641 : f32 to vector<1x256xf32>
    %1643 = arith.mulf %1640, %1642 : vector<1x256xf32>
    %1644 = arith.addf %1639, %1643 : vector<1x256xf32>
    %cst_742 = arith.constant 0.000000e+00 : f32
    %1645 = vector.broadcast %cst_742 : f32 to vector<1x256xf32>
    %1646 = arith.select %221, %1644, %1645 : vector<1x256xi1>, vector<1x256xf32>
    %1647 = arith.addf %1635, %1646 : vector<1x256xf32>
    %c207_i32_743 = arith.constant 207 : i32
    %1648 = tpu.dynamic_rotate %1098 by %c207_i32_743 dim 1 : vector<1x256xf32>, i32 -> vector<1x256xf32>
    %c0_744 = arith.constant 0 : index
    %c46_745 = arith.constant 46 : index
    %1649 = memref.load %arg9[%c0_744, %c46_745] : memref<2x49xf32, #tpu.memory_space<smem>>
    %1650 = vector.broadcast %1649 : f32 to vector<1x256xf32>
    %1651 = arith.mulf %1648, %1650 : vector<1x256xf32>
    %c207_i32_746 = arith.constant 207 : i32
    %1652 = tpu.dynamic_rotate %1100 by %c207_i32_746 dim 1 : vector<1x256xf32>, i32 -> vector<1x256xf32>
    %c1_747 = arith.constant 1 : index
    %c46_748 = arith.constant 46 : index
    %1653 = memref.load %arg9[%c1_747, %c46_748] : memref<2x49xf32, #tpu.memory_space<smem>>
    %1654 = vector.broadcast %1653 : f32 to vector<1x256xf32>
    %1655 = arith.mulf %1652, %1654 : vector<1x256xf32>
    %1656 = arith.addf %1651, %1655 : vector<1x256xf32>
    %cst_749 = arith.constant 0.000000e+00 : f32
    %1657 = vector.broadcast %cst_749 : f32 to vector<1x256xf32>
    %1658 = arith.select %226, %1656, %1657 : vector<1x256xi1>, vector<1x256xf32>
    %1659 = arith.addf %1647, %1658 : vector<1x256xf32>
    %c206_i32_750 = arith.constant 206 : i32
    %1660 = tpu.dynamic_rotate %1098 by %c206_i32_750 dim 1 : vector<1x256xf32>, i32 -> vector<1x256xf32>
    %c0_751 = arith.constant 0 : index
    %c47_752 = arith.constant 47 : index
    %1661 = memref.load %arg9[%c0_751, %c47_752] : memref<2x49xf32, #tpu.memory_space<smem>>
    %1662 = vector.broadcast %1661 : f32 to vector<1x256xf32>
    %1663 = arith.mulf %1660, %1662 : vector<1x256xf32>
    %c206_i32_753 = arith.constant 206 : i32
    %1664 = tpu.dynamic_rotate %1100 by %c206_i32_753 dim 1 : vector<1x256xf32>, i32 -> vector<1x256xf32>
    %c1_754 = arith.constant 1 : index
    %c47_755 = arith.constant 47 : index
    %1665 = memref.load %arg9[%c1_754, %c47_755] : memref<2x49xf32, #tpu.memory_space<smem>>
    %1666 = vector.broadcast %1665 : f32 to vector<1x256xf32>
    %1667 = arith.mulf %1664, %1666 : vector<1x256xf32>
    %1668 = arith.addf %1663, %1667 : vector<1x256xf32>
    %cst_756 = arith.constant 0.000000e+00 : f32
    %1669 = vector.broadcast %cst_756 : f32 to vector<1x256xf32>
    %1670 = arith.select %231, %1668, %1669 : vector<1x256xi1>, vector<1x256xf32>
    %1671 = arith.addf %1659, %1670 : vector<1x256xf32>
    %c205_i32_757 = arith.constant 205 : i32
    %1672 = tpu.dynamic_rotate %1098 by %c205_i32_757 dim 1 : vector<1x256xf32>, i32 -> vector<1x256xf32>
    %c0_758 = arith.constant 0 : index
    %c48_759 = arith.constant 48 : index
    %1673 = memref.load %arg9[%c0_758, %c48_759] : memref<2x49xf32, #tpu.memory_space<smem>>
    %1674 = vector.broadcast %1673 : f32 to vector<1x256xf32>
    %1675 = arith.mulf %1672, %1674 : vector<1x256xf32>
    %c205_i32_760 = arith.constant 205 : i32
    %1676 = tpu.dynamic_rotate %1100 by %c205_i32_760 dim 1 : vector<1x256xf32>, i32 -> vector<1x256xf32>
    %c1_761 = arith.constant 1 : index
    %c48_762 = arith.constant 48 : index
    %1677 = memref.load %arg9[%c1_761, %c48_762] : memref<2x49xf32, #tpu.memory_space<smem>>
    %1678 = vector.broadcast %1677 : f32 to vector<1x256xf32>
    %1679 = arith.mulf %1676, %1678 : vector<1x256xf32>
    %1680 = arith.addf %1675, %1679 : vector<1x256xf32>
    %cst_763 = arith.constant 0.000000e+00 : f32
    %1681 = vector.broadcast %cst_763 : f32 to vector<1x256xf32>
    %1682 = arith.select %236, %1680, %1681 : vector<1x256xi1>, vector<1x256xf32>
    %1683 = arith.addf %1671, %1682 : vector<1x256xf32>
    %1684 = arith.negf %1683 : vector<1x256xf32>
    %1685 = math.exp %1684 : vector<1x256xf32>
    %cst_764 = arith.constant 1.000000e+00 : f32
    %1686 = vector.broadcast %cst_764 : f32 to vector<1x256xf32>
    %1687 = arith.addf %1686, %1685 : vector<1x256xf32>
    %1688 = arith.divf %1686, %1687 : vector<1x256xf32>
    %1689 = vector.broadcast %1688 : vector<1x256xf32> to vector<32x256xf32>
    %1690 = arith.mulf %1094, %1689 : vector<32x256xf32>
    %1691 = arith.addf %1690, %973 : vector<32x256xf32>
    %cst_765 = arith.constant 0.000000e+00 : f32
    %1692 = vector.broadcast %cst_765 : f32 to vector<32x256xf32>
    %1693 = arith.maximumf %1691, %1692 : vector<32x256xf32>
    %c1_766 = arith.constant 1 : index
    %c0_767 = arith.constant 0 : index
    %c0_768 = arith.constant 0 : index
    %1694 = vector.load %arg10[%c1_766, %c0_767, %c0_768] : memref<2x32x256xf32, #tpu.memory_space<vmem>>, vector<1x32x256xf32>
    %1695 = vector.shape_cast %1694 : vector<1x32x256xf32> to vector<32x256xf32>
    %1696 = vector.shape_cast %1693 : vector<32x256xf32> to vector<1x32x256xf32>
    tpu.vector_store %arg10[%c1_766, %c0_767, %c0_768], %1696 {strides = array<i32>} : memref<2x32x256xf32, #tpu.memory_space<vmem>>, vector<1x32x256xf32>,
    return
  }
  func.func @transform_0(%arg0: i32) -> (i32, i32, i32) {
    %c0_i32 = arith.constant 0 : i32
    %c0_i32_0 = arith.constant 0 : i32
    %c0_i32_1 = arith.constant 0 : i32
    return %arg0, %c0_i32, %c0_i32_0 : i32, i32, i32
  }
  func.func @transform_1(%arg0: i32) -> (i32, i32, i32) {
    %c0_i32 = arith.constant 0 : i32
    %c0_i32_0 = arith.constant 0 : i32
    %c0_i32_1 = arith.constant 0 : i32
    %c0_i32_2 = arith.constant 0 : i32
    return %c0_i32, %c0_i32_0, %c0_i32_1 : i32, i32, i32
  }
  func.func @transform_2(%arg0: i32) -> (i32, i32) {
    %c0_i32 = arith.constant 0 : i32
    %c0_i32_0 = arith.constant 0 : i32
    %c0_i32_1 = arith.constant 0 : i32
    return %c0_i32, %c0_i32_0 : i32, i32
  }
  func.func @transform_3(%arg0: i32) -> (i32, i32) {
    %c0_i32 = arith.constant 0 : i32
    %c0_i32_0 = arith.constant 0 : i32
    %c0_i32_1 = arith.constant 0 : i32
    return %c0_i32, %c0_i32_0 : i32, i32
  }
  func.func @transform_4(%arg0: i32) -> (i32, i32) {
    %c0_i32 = arith.constant 0 : i32
    %c0_i32_0 = arith.constant 0 : i32
    %c0_i32_1 = arith.constant 0 : i32
    return %c0_i32, %c0_i32_0 : i32, i32
  }
  func.func @transform_5(%arg0: i32) -> (i32, i32) {
    %c0_i32 = arith.constant 0 : i32
    %c0_i32_0 = arith.constant 0 : i32
    %c0_i32_1 = arith.constant 0 : i32
    return %c0_i32, %c0_i32_0 : i32, i32
  }
  func.func @transform_6(%arg0: i32) -> (i32, i32) {
    %c0_i32 = arith.constant 0 : i32
    %c0_i32_0 = arith.constant 0 : i32
    %c0_i32_1 = arith.constant 0 : i32
    return %c0_i32, %c0_i32_0 : i32, i32
  }
  func.func @transform_7(%arg0: i32) -> (i32, i32) {
    %c0_i32 = arith.constant 0 : i32
    %c0_i32_0 = arith.constant 0 : i32
    %c0_i32_1 = arith.constant 0 : i32
    return %c0_i32, %c0_i32_0 : i32, i32
  }
  func.func @transform_8(%arg0: i32) -> (i32, i32) {
    %c0_i32 = arith.constant 0 : i32
    %c0_i32_0 = arith.constant 0 : i32
    %c0_i32_1 = arith.constant 0 : i32
    return %c0_i32, %c0_i32_0 : i32, i32
  }
  func.func @transform_9(%arg0: i32) -> (i32, i32, i32) {
    %c0_i32 = arith.constant 0 : i32
    %c0_i32_0 = arith.constant 0 : i32
    %c0_i32_1 = arith.constant 0 : i32
    return %arg0, %c0_i32, %c0_i32_0 : i32, i32, i32
  }
}

</mosaic_0001>

<llo_original>
// kernel: tpu_custom_call.1
$region0: #{tpu_custom_call.1}
  #allocation0 [shape = 'u32[]', space=smem, size = 0x4, offset = 0x4, fixed_abs, tag = 'smem constant byte address 0x4 - core index']
  #allocation1 [shape = 'u32[144,128]{1,0:T(1,128)}', space=vmem, size = 0x12000, scoped, tag = 'internal scratch']
  %s0 = inlined_call_operand.vmem [shape: f32[2,32,256], index: 0, kind: input, shape index: {}]
  %s1 = inlined_call_operand.vmem [shape: f32[9,32,1], index: 1, kind: input, shape index: {}]
  %s2 = inlined_call_operand.vmem [shape: f32[32,32], index: 2, kind: input, shape index: {}]
  %s3 = inlined_call_operand.vmem [shape: f32[32,1], index: 3, kind: input, shape index: {}]
  %s4 = inlined_call_operand.vmem [shape: f32[2,32], index: 4, kind: input, shape index: {}]
  %s5 = inlined_call_operand.vmem [shape: f32[2,1], index: 5, kind: input, shape index: {}]
  %s6 = inlined_call_operand.vmem [shape: f32[32,2], index: 6, kind: input, shape index: {}]
  %s7 = inlined_call_operand.vmem [shape: f32[32,1], index: 7, kind: input, shape index: {}]
  %s8 = inlined_call_operand.vmem [shape: f32[2,49], index: 8, kind: input, shape index: {}]
  %s9 = inlined_call_operand.hbm [shape: f32[2,32,256], index: 9, kind: output, shape index: {}]
  %s10 = sld [smem:[#allocation0]]
  $region50: #{tpu_custom_call.1} parent=0
    _
  %s12 = ssub.s32 1, %s10
  %s13 = scalar_select 0, %s12, %s10
  $region1: #{tpu_custom_call.1} parent=0
    #allocation2 [shape = 'u8[1024]{0}', space=smem, size = 0x400, scoped, tag = 'input window, operand 8, single buffered']
    #allocation3 [shape = 's32[1]{0}', space=sflag, size = 0x4, scoped, tag = 'scoped memory for tpu_custom_call.1']
    #allocation4 [shape = 's32[1]{0}', space=sflag, size = 0x4, scoped, tag = 'scoped memory for tpu_custom_call.1']
    #allocation5 [shape = 'u8[65536]{0}', space=vmem, size = 0x10000, scoped, tag = 'output window, operand 0, single buffered']
    %14 = vsyncpa [#allocation4], 0
    %15 = vsyncpa [#allocation3], 0
    // Predicated region
    $region2: #{tpu_custom_call.1} parent=1 // pred_check
      _
    $region3: #{tpu_custom_call.1} parent=1 // pred_check_branch
      %17 = sbr.rel (0) target = $region5
    $region4: #{tpu_custom_call.1} parent=1 // pred_region
      _
    $region5: #{tpu_custom_call.1} parent=1 // pred_fallthru
      _
    // Predicated region
    $region6: #{tpu_custom_call.1} parent=1 // pred_check
      _
    $region7: #{tpu_custom_call.1} parent=1 // pred_check_branch
      %19 = sbr.rel (0) target = $region9
    $region8: #{tpu_custom_call.1} parent=1 // pred_region
      _
    $region9: #{tpu_custom_call.1} parent=1 // pred_fallthru
      _
    // Predicated region
    $region10: #{tpu_custom_call.1} parent=1 // pred_check
      _
    $region11: #{tpu_custom_call.1} parent=1 // pred_check_branch
      %21 = sbr.rel (0) target = $region13
    $region12: #{tpu_custom_call.1} parent=1 // pred_region
      _
    $region13: #{tpu_custom_call.1} parent=1 // pred_fallthru
      _
    // Predicated region
    $region14: #{tpu_custom_call.1} parent=1 // pred_check
      _
    $region15: #{tpu_custom_call.1} parent=1 // pred_check_branch
      %23 = sbr.rel (0) target = $region17
    $region16: #{tpu_custom_call.1} parent=1 // pred_region
      _
    $region17: #{tpu_custom_call.1} parent=1 // pred_fallthru
      _
    // Predicated region
    $region18: #{tpu_custom_call.1} parent=1 // pred_check
      _
    $region19: #{tpu_custom_call.1} parent=1 // pred_check_branch
      %25 = sbr.rel (0) target = $region21
    $region20: #{tpu_custom_call.1} parent=1 // pred_region
      _
    $region21: #{tpu_custom_call.1} parent=1 // pred_fallthru
      _
    // Predicated region
    $region22: #{tpu_custom_call.1} parent=1 // pred_check
      _
    $region23: #{tpu_custom_call.1} parent=1 // pred_check_branch
      %27 = sbr.rel (0) target = $region25
    $region24: #{tpu_custom_call.1} parent=1 // pred_region
      _
    $region25: #{tpu_custom_call.1} parent=1 // pred_fallthru
      _
    // Predicated region
    $region26: #{tpu_custom_call.1} parent=1 // pred_check
      _
    $region27: #{tpu_custom_call.1} parent=1 // pred_check_branch
      %29 = sbr.rel (0) target = $region29
    $region28: #{tpu_custom_call.1} parent=1 // pred_region
      _
    $region29: #{tpu_custom_call.1} parent=1 // pred_fallthru
      _
    // Predicated region
    $region30: #{tpu_custom_call.1} parent=1 // pred_check
      _
    $region31: #{tpu_custom_call.1} parent=1 // pred_check_branch
      %31 = sbr.rel (0) target = $region33
    $region32: #{tpu_custom_call.1} parent=1 // pred_region
      _
    $region33: #{tpu_custom_call.1} parent=1 // pred_fallthru
      _
    // Predicated region
    $region34: #{tpu_custom_call.1} parent=1 // pred_check
      _
    $region35: #{tpu_custom_call.1} parent=1 // pred_check_branch
      %33 = sbr.rel (0) target = $region37
    $region36: #{tpu_custom_call.1} parent=1 // pred_region
      %s35 = ssub.s32 32, 32
      %36 = vsyncadd [#allocation4], %s35
      %s38 = sshll.u32 %s8, 4
      %s39 = int_to_ptr.vmem [resolvable:$true] %s38
      %41 = dma.vmem_to_smem %s39, 32, [#allocation2], [#allocation4]
    $region37: #{tpu_custom_call.1} parent=1 // pred_fallthru
      _
    // Predicated region
    $region38: #{tpu_custom_call.1} parent=1 // pred_check
      _
    $region39: #{tpu_custom_call.1} parent=1 // pred_check_branch
      %43 = sbr.rel (0) target = $region41
    $region40: #{tpu_custom_call.1} parent=1 // pred_region
      %44 = dma.done [#allocation4], 32
    $region41: #{tpu_custom_call.1} parent=1 // pred_fallthru
      _
    %45 = sfence
    %v46 = vlaneseq
    %v47 = vand.u32 %v46, 127
    %v48 = vadd.s32 %v47, 128
    %v49 = vand.u32 %v47, 15
    %v50 = vand.u32 %v48, 15
    %v51 = vshra.s32 %v47, 4
    %v52 = vshra.s32 %v48, 4
    %vm53 = vcmp.ge.s32.totalorder %v49, 1
    %vm54 = vcmp.ge.s32.totalorder %v50, 1
    %vm55 = vcmp.ge.s32.totalorder %v51, 1
    %vm56 = vcmp.ge.s32.totalorder %v52, 1
    %vm57 = vmand %vm53, %vm55
    %vm58 = vmand %vm54, %vm56
    %vm59 = vcmp.le.s32.totalorder %v49, 14
    %vm60 = vcmp.le.s32.totalorder %v50, 14
    %vm61 = vmand %vm59, %vm55
    %vm62 = vmand %vm60, %vm56
    %vm63 = vcmp.le.s32.totalorder %v51, 14
    %vm64 = vcmp.le.s32.totalorder %v52, 14
    %vm65 = vmand %vm53, %vm63
    %vm66 = vmand %vm54, %vm64
    %vm67 = vmand %vm59, %vm63
    %vm68 = vmand %vm60, %vm64
    %vm69 = vcmp.ge.s32.totalorder %v49, 3
    %vm70 = vcmp.ge.s32.totalorder %v50, 3
    %vm71 = vcmp.ge.s32.totalorder %v51, 3
    %vm72 = vcmp.ge.s32.totalorder %v52, 3
    %vm73 = vmand %vm69, %vm71
    %vm74 = vmand %vm70, %vm72
    %vm75 = vcmp.ge.s32.totalorder %v49, 2
    %vm76 = vcmp.ge.s32.totalorder %v50, 2
    %vm77 = vmand %vm75, %vm71
    %vm78 = vmand %vm76, %vm72
    %vm79 = vmand %vm53, %vm71
    %vm80 = vmand %vm54, %vm72
    %vm81 = vmand %vm59, %vm71
    %vm82 = vmand %vm60, %vm72
    %vm83 = vcmp.le.s32.totalorder %v49, 13
    %vm84 = vcmp.le.s32.totalorder %v50, 13
    %vm85 = vmand %vm83, %vm71
    %vm86 = vmand %vm84, %vm72
    %vm87 = vcmp.le.s32.totalorder %v49, 12
    %vm88 = vcmp.le.s32.totalorder %v50, 12
    %vm89 = vmand %vm87, %vm71
    %vm90 = vmand %vm88, %vm72
    %vm91 = vcmp.ge.s32.totalorder %v51, 2
    %vm92 = vcmp.ge.s32.totalorder %v52, 2
    %vm93 = vmand %vm69, %vm91
    %vm94 = vmand %vm70, %vm92
    %vm95 = vmand %vm75, %vm91
    %vm96 = vmand %vm76, %vm92
    %vm97 = vmand %vm53, %vm91
    %vm98 = vmand %vm54, %vm92
    %vm99 = vmand %vm59, %vm91
    %vm100 = vmand %vm60, %vm92
    %vm101 = vmand %vm83, %vm91
    %vm102 = vmand %vm84, %vm92
    %vm103 = vmand %vm87, %vm91
    %vm104 = vmand %vm88, %vm92
    %vm105 = vmand %vm69, %vm55
    %vm106 = vmand %vm70, %vm56
    %vm107 = vmand %vm75, %vm55
    %vm108 = vmand %vm76, %vm56
    %vm109 = vmand %vm83, %vm55
    %vm110 = vmand %vm84, %vm56
    %vm111 = vmand %vm87, %vm55
    %vm112 = vmand %vm88, %vm56
    %vm113 = vmand %vm69, %vm63
    %vm114 = vmand %vm70, %vm64
    %vm115 = vmand %vm75, %vm63
    %vm116 = vmand %vm76, %vm64
    %vm117 = vmand %vm83, %vm63
    %vm118 = vmand %vm84, %vm64
    %vm119 = vmand %vm87, %vm63
    %vm120 = vmand %vm88, %vm64
    %vm121 = vcmp.le.s32.totalorder %v51, 13
    %vm122 = vcmp.le.s32.totalorder %v52, 13
    %vm123 = vmand %vm69, %vm121
    %vm124 = vmand %vm70, %vm122
    %vm125 = vmand %vm75, %vm121
    %vm126 = vmand %vm76, %vm122
    %vm127 = vmand %vm53, %vm121
    %vm128 = vmand %vm54, %vm122
    %vm129 = vmand %vm59, %vm121
    %vm130 = vmand %vm60, %vm122
    %vm131 = vmand %vm83, %vm121
    %vm132 = vmand %vm84, %vm122
    %vm133 = vmand %vm87, %vm121
    %vm134 = vmand %vm88, %vm122
    %vm135 = vcmp.le.s32.totalorder %v51, 12
    %vm136 = vcmp.le.s32.totalorder %v52, 12
    %vm137 = vmand %vm69, %vm135
    %vm138 = vmand %vm70, %vm136
    %vm139 = vmand %vm75, %vm135
    %vm140 = vmand %vm76, %vm136
    %vm141 = vmand %vm53, %vm135
    %vm142 = vmand %vm54, %vm136
    %vm143 = vmand %vm59, %vm135
    %vm144 = vmand %vm60, %vm136
    %vm145 = vmand %vm83, %vm135
    %vm146 = vmand %vm84, %vm136
    %vm147 = vmand %vm87, %vm135
    %vm148 = vmand %vm88, %vm136
    %vm149 = vcmp.eq.s32.totalorder %v47, 0
    %v150 = vld [vmem:[%s1] sm:$0xff]
    %v151 = vld [vmem:[%s1 + $0x8] sm:$0xff]
    %v152 = vld [vmem:[%s1 + $0x10] sm:$0xff]
    %v153 = vld [vmem:[%s1 + $0x18] sm:$0xff]
    %v154 = vld [vmem:[%s1 + $0x20] sm:$0xff]
    %v155 = vld [vmem:[%s1 + $0x28] sm:$0xff]
    %v156 = vld [vmem:[%s1 + $0x30] sm:$0xff]
    %v157 = vld [vmem:[%s1 + $0x38] sm:$0xff]
    %v158 = vld [vmem:[%s1 + $0x40] sm:$0xff]
    %v159 = vld [vmem:[%s1 + $0x48] sm:$0xff]
    %v160 = vld [vmem:[%s1 + $0x50] sm:$0xff]
    %v161 = vld [vmem:[%s1 + $0x58] sm:$0xff]
    %v162 = vld [vmem:[%s1 + $0x60] sm:$0xff]
    %v163 = vld [vmem:[%s1 + $0x68] sm:$0xff]
    %v164 = vld [vmem:[%s1 + $0x70] sm:$0xff]
    %v165 = vld [vmem:[%s1 + $0x78] sm:$0xff]
    %v166 = vld [vmem:[%s1 + $0x80] sm:$0xff]
    %v167 = vld [vmem:[%s1 + $0x88] sm:$0xff]
    %v168 = vld [vmem:[%s1 + $0x90] sm:$0xff]
    %v169 = vld [vmem:[%s1 + $0x98] sm:$0xff]
    %v170 = vld [vmem:[%s1 + $0xa0] sm:$0xff]
    %v171 = vld [vmem:[%s1 + $0xa8] sm:$0xff]
    %v172 = vld [vmem:[%s1 + $0xb0] sm:$0xff]
    %v173 = vld [vmem:[%s1 + $0xb8] sm:$0xff]
    %v174 = vld [vmem:[%s1 + $0xc0] sm:$0xff]
    %v175 = vld [vmem:[%s1 + $0xc8] sm:$0xff]
    %v176 = vld [vmem:[%s1 + $0xd0] sm:$0xff]
    %v177 = vld [vmem:[%s1 + $0xd8] sm:$0xff]
    %v178 = vld [vmem:[%s1 + $0xe0] sm:$0xff]
    %v179 = vld [vmem:[%s1 + $0xe8] sm:$0xff]
    %v180 = vld [vmem:[%s1 + $0xf0] sm:$0xff]
    %v181 = vld [vmem:[%s1 + $0xf8] sm:$0xff]
    %v182 = vld [vmem:[%s1 + $0x100] sm:$0xff]
    %v183 = vld [vmem:[%s1 + $0x108] sm:$0xff]
    %v184 = vld [vmem:[%s1 + $0x110] sm:$0xff]
    %v185 = vld [vmem:[%s1 + $0x118] sm:$0xff]
    %v186 = vld [vmem:[%s2] sm:$0xff]
    %v187 = vld [vmem:[%s2 + $0x8] sm:$0xff]
    %v188 = vld [vmem:[%s2 + $0x10] sm:$0xff]
    %v189 = vld [vmem:[%s2 + $0x18] sm:$0xff]
    %v190 = vld [vmem:[%s3] sm:$0xff]
    %v191 = vld [vmem:[%s3 + $0x8] sm:$0xff]
    %v192 = vld [vmem:[%s3 + $0x10] sm:$0xff]
    %v193 = vld [vmem:[%s3 + $0x18] sm:$0xff]
    %v194 = vld [vmem:[%s4] sm:$0x3]
    %v195 = vld [vmem:[%s5] sm:$0x3]
    %v196 = vld [vmem:[%s6] sm:$0xff]
    %v197 = vld [vmem:[%s6 + $0x8] sm:$0xff]
    %v198 = vld [vmem:[%s6 + $0x10] sm:$0xff]
    %v199 = vld [vmem:[%s6 + $0x18] sm:$0xff]
    %v200 = vld [vmem:[%s7] sm:$0xff]
    %v201 = vld [vmem:[%s7 + $0x8] sm:$0xff]
    %v202 = vld [vmem:[%s7 + $0x10] sm:$0xff]
    %v203 = vld [vmem:[%s7 + $0x18] sm:$0xff]
    %v204 = vld [vmem:[%s0] sm:$0xff]
    %v205 = vld [vmem:[%s0 + $0x8] sm:$0xff]
    %v206 = vld [vmem:[%s0 + $0x10] sm:$0xff]
    %v207 = vld [vmem:[%s0 + $0x18] sm:$0xff]
    %v208 = vld [vmem:[%s0 + $0x20] sm:$0xff]
    %v209 = vld [vmem:[%s0 + $0x28] sm:$0xff]
    %v210 = vld [vmem:[%s0 + $0x30] sm:$0xff]
    %v211 = vld [vmem:[%s0 + $0x38] sm:$0xff]
    %213 = vset.pattern.permute.xlu0 0
    %214 = vperm.xlu0 %213, %v166
    %v215 = vpop.permute.xlu0 %214
    %218 = vset.pattern.permute.xlu0 0
    %219 = vperm.xlu0 %218, %v167
    %v220 = vpop.permute.xlu0 %219
    %223 = vset.pattern.permute.xlu0 0
    %224 = vperm.xlu0 %223, %v168
    %v225 = vpop.permute.xlu0 %224
    %228 = vset.pattern.permute.xlu0 0
    %229 = vperm.xlu0 %228, %v169
    %v230 = vpop.permute.xlu0 %229
    %v232 = vmul.f32 %v204, %v215
    %v233 = vmul.f32 %v205, %v215
    %v234 = vmul.f32 %v206, %v220
    %v235 = vmul.f32 %v207, %v220
    %v236 = vmul.f32 %v208, %v225
    %v237 = vmul.f32 %v209, %v225
    %v238 = vmul.f32 %v210, %v230
    %v239 = vmul.f32 %v211, %v230
    %240 = vrot.lane.b32.xlu0 %v204, 17
    %v241 = vpop.permute.xlu0 %240
    %242 = vrot.lane.b32.xlu0 %v206, 17
    %v243 = vpop.permute.xlu0 %242
    %244 = vrot.lane.b32.xlu0 %v208, 17
    %v245 = vpop.permute.xlu0 %244
    %246 = vrot.lane.b32.xlu0 %v210, 17
    %v247 = vpop.permute.xlu0 %246
    %248 = vrot.lane.b32.xlu0 %v205, 17
    %v249 = vpop.permute.xlu0 %248
    %250 = vrot.lane.b32.xlu0 %v207, 17
    %v251 = vpop.permute.xlu0 %250
    %252 = vrot.lane.b32.xlu0 %v209, 17
    %v253 = vpop.permute.xlu0 %252
    %254 = vrot.lane.b32.xlu0 %v211, 17
    %v255 = vpop.permute.xlu0 %254
    %vm256 = vcmp.lt.s32.totalorder %v47, 17
    %v257 = vsel %vm256, %v241, %v249
    %v258 = vsel %vm256, %v243, %v251
    %v259 = vsel %vm256, %v245, %v253
    %v260 = vsel %vm256, %v247, %v255
    %v261 = vsel %vm256, %v249, %v241
    %v262 = vsel %vm256, %v251, %v243
    %v263 = vsel %vm256, %v253, %v245
    %v264 = vsel %vm256, %v255, %v247
    %v265 = vsel %vm57, 1, 0
    %v266 = vsel %vm58, 1, 0
    %vm267 = vcmp.eq.s32.totalorder %v265, 1
    %vm268 = vcmp.eq.s32.totalorder %v266, 1
    %v269 = vsel %vm267, %v261, 0.0
    %v270 = vsel %vm268, %v257, 0.0
    %v271 = vsel %vm267, %v262, 0.0
    %v272 = vsel %vm268, %v258, 0.0
    %v273 = vsel %vm267, %v263, 0.0
    %v274 = vsel %vm268, %v259, 0.0
    %v275 = vsel %vm267, %v264, 0.0
    %v276 = vsel %vm268, %v260, 0.0
    %278 = vset.pattern.permute.xlu0 0
    %279 = vperm.xlu0 %278, %v150
    %v280 = vpop.permute.xlu0 %279
    %283 = vset.pattern.permute.xlu0 0
    %284 = vperm.xlu0 %283, %v151
    %v285 = vpop.permute.xlu0 %284
    %288 = vset.pattern.permute.xlu0 0
    %289 = vperm.xlu0 %288, %v152
    %v290 = vpop.permute.xlu0 %289
    %293 = vset.pattern.permute.xlu0 0
    %294 = vperm.xlu0 %293, %v153
    %v295 = vpop.permute.xlu0 %294
    %v297 = vmul.f32 %v269, %v280
    %v298 = vmul.f32 %v270, %v280
    %v299 = vmul.f32 %v271, %v285
    %v300 = vmul.f32 %v272, %v285
    %v301 = vmul.f32 %v273, %v290
    %v302 = vmul.f32 %v274, %v290
    %v303 = vmul.f32 %v275, %v295
    %v304 = vmul.f32 %v276, %v295
    %v305 = vadd.f32 %v232, %v297
    %v306 = vadd.f32 %v233, %v298
    %v307 = vadd.f32 %v234, %v299
    %v308 = vadd.f32 %v235, %v300
    %v309 = vadd.f32 %v236, %v301
    %v310 = vadd.f32 %v237, %v302
    %v311 = vadd.f32 %v238, %v303
    %v312 = vadd.f32 %v239, %v304
    %313 = vrot.lane.b32.xlu0 %v204, 16
    %v314 = vpop.permute.xlu0 %313
    %315 = vrot.lane.b32.xlu0 %v206, 16
    %v316 = vpop.permute.xlu0 %315
    %317 = vrot.lane.b32.xlu0 %v208, 16
    %v318 = vpop.permute.xlu0 %317
    %319 = vrot.lane.b32.xlu0 %v210, 16
    %v320 = vpop.permute.xlu0 %319
    %321 = vrot.lane.b32.xlu0 %v205, 16
    %v322 = vpop.permute.xlu0 %321
    %323 = vrot.lane.b32.xlu0 %v207, 16
    %v324 = vpop.permute.xlu0 %323
    %325 = vrot.lane.b32.xlu0 %v209, 16
    %v326 = vpop.permute.xlu0 %325
    %327 = vrot.lane.b32.xlu0 %v211, 16
    %v328 = vpop.permute.xlu0 %327
    %vm329 = vcmp.lt.s32.totalorder %v47, 16
    %v330 = vsel %vm329, %v314, %v322
    %v331 = vsel %vm329, %v316, %v324
    %v332 = vsel %vm329, %v318, %v326
    %v333 = vsel %vm329, %v320, %v328
    %v334 = vsel %vm329, %v322, %v314
    %v335 = vsel %vm329, %v324, %v316
    %v336 = vsel %vm329, %v326, %v318
    %v337 = vsel %vm329, %v328, %v320
    %v338 = vsel %vm55, 1, 0
    %v339 = vsel %vm56, 1, 0
    %vm340 = vcmp.eq.s32.totalorder %v338, 1
    %vm341 = vcmp.eq.s32.totalorder %v339, 1
    %v342 = vsel %vm340, %v334, 0.0
    %v343 = vsel %vm341, %v330, 0.0
    %v344 = vsel %vm340, %v335, 0.0
    %v345 = vsel %vm341, %v331, 0.0
    %v346 = vsel %vm340, %v336, 0.0
    %v347 = vsel %vm341, %v332, 0.0
    %v348 = vsel %vm340, %v337, 0.0
    %v349 = vsel %vm341, %v333, 0.0
    %351 = vset.pattern.permute.xlu0 0
    %352 = vperm.xlu0 %351, %v154
    %v353 = vpop.permute.xlu0 %352
    %356 = vset.pattern.permute.xlu0 0
    %357 = vperm.xlu0 %356, %v155
    %v358 = vpop.permute.xlu0 %357
    %361 = vset.pattern.permute.xlu0 0
    %362 = vperm.xlu0 %361, %v156
    %v363 = vpop.permute.xlu0 %362
    %366 = vset.pattern.permute.xlu0 0
    %367 = vperm.xlu0 %366, %v157
    %v368 = vpop.permute.xlu0 %367
    %v370 = vmul.f32 %v342, %v353
    %v371 = vmul.f32 %v343, %v353
    %v372 = vmul.f32 %v344, %v358
    %v373 = vmul.f32 %v345, %v358
    %v374 = vmul.f32 %v346, %v363
    %v375 = vmul.f32 %v347, %v363
    %v376 = vmul.f32 %v348, %v368
    %v377 = vmul.f32 %v349, %v368
    %v378 = vadd.f32 %v305, %v370
    %v379 = vadd.f32 %v306, %v371
    %v380 = vadd.f32 %v307, %v372
    %v381 = vadd.f32 %v308, %v373
    %v382 = vadd.f32 %v309, %v374
    %v383 = vadd.f32 %v310, %v375
    %v384 = vadd.f32 %v311, %v376
    %v385 = vadd.f32 %v312, %v377
    %386 = vrot.lane.b32.xlu0 %v204, 15
    %v387 = vpop.permute.xlu0 %386
    %388 = vrot.lane.b32.xlu0 %v206, 15
    %v389 = vpop.permute.xlu0 %388
    %390 = vrot.lane.b32.xlu0 %v208, 15
    %v391 = vpop.permute.xlu0 %390
    %392 = vrot.lane.b32.xlu0 %v210, 15
    %v393 = vpop.permute.xlu0 %392
    %394 = vrot.lane.b32.xlu0 %v205, 15
    %v395 = vpop.permute.xlu0 %394
    %396 = vrot.lane.b32.xlu0 %v207, 15
    %v397 = vpop.permute.xlu0 %396
    %398 = vrot.lane.b32.xlu0 %v209, 15
    %v399 = vpop.permute.xlu0 %398
    %400 = vrot.lane.b32.xlu0 %v211, 15
    %v401 = vpop.permute.xlu0 %400
    %vm402 = vcmp.lt.s32.totalorder %v47, 15
    %v403 = vsel %vm402, %v387, %v395
    %v404 = vsel %vm402, %v389, %v397
    %v405 = vsel %vm402, %v391, %v399
    %v406 = vsel %vm402, %v393, %v401
    %v407 = vsel %vm402, %v395, %v387
    %v408 = vsel %vm402, %v397, %v389
    %v409 = vsel %vm402, %v399, %v391
    %v410 = vsel %vm402, %v401, %v393
    %v411 = vsel %vm61, 1, 0
    %v412 = vsel %vm62, 1, 0
    %vm413 = vcmp.eq.s32.totalorder %v411, 1
    %vm414 = vcmp.eq.s32.totalorder %v412, 1
    %v415 = vsel %vm413, %v407, 0.0
    %v416 = vsel %vm414, %v403, 0.0
    %v417 = vsel %vm413, %v408, 0.0
    %v418 = vsel %vm414, %v404, 0.0
    %v419 = vsel %vm413, %v409, 0.0
    %v420 = vsel %vm414, %v405, 0.0
    %v421 = vsel %vm413, %v410, 0.0
    %v422 = vsel %vm414, %v406, 0.0
    %424 = vset.pattern.permute.xlu0 0
    %425 = vperm.xlu0 %424, %v158
    %v426 = vpop.permute.xlu0 %425
    %429 = vset.pattern.permute.xlu0 0
    %430 = vperm.xlu0 %429, %v159
    %v431 = vpop.permute.xlu0 %430
    %434 = vset.pattern.permute.xlu0 0
    %435 = vperm.xlu0 %434, %v160
    %v436 = vpop.permute.xlu0 %435
    %439 = vset.pattern.permute.xlu0 0
    %440 = vperm.xlu0 %439, %v161
    %v441 = vpop.permute.xlu0 %440
    %v443 = vmul.f32 %v415, %v426
    %v444 = vmul.f32 %v416, %v426
    %v445 = vmul.f32 %v417, %v431
    %v446 = vmul.f32 %v418, %v431
    %v447 = vmul.f32 %v419, %v436
    %v448 = vmul.f32 %v420, %v436
    %v449 = vmul.f32 %v421, %v441
    %v450 = vmul.f32 %v422, %v441
    %v451 = vadd.f32 %v378, %v443
    %v452 = vadd.f32 %v379, %v444
    %v453 = vadd.f32 %v380, %v445
    %v454 = vadd.f32 %v381, %v446
    %v455 = vadd.f32 %v382, %v447
    %v456 = vadd.f32 %v383, %v448
    %v457 = vadd.f32 %v384, %v449
    %v458 = vadd.f32 %v385, %v450
    %459 = vrot.lane.b32.xlu0 %v204, 1
    %v460 = vpop.permute.xlu0 %459
    %461 = vrot.lane.b32.xlu0 %v206, 1
    %v462 = vpop.permute.xlu0 %461
    %463 = vrot.lane.b32.xlu0 %v208, 1
    %v464 = vpop.permute.xlu0 %463
    %465 = vrot.lane.b32.xlu0 %v210, 1
    %v466 = vpop.permute.xlu0 %465
    %467 = vrot.lane.b32.xlu0 %v205, 1
    %v468 = vpop.permute.xlu0 %467
    %469 = vrot.lane.b32.xlu0 %v207, 1
    %v470 = vpop.permute.xlu0 %469
    %471 = vrot.lane.b32.xlu0 %v209, 1
    %v472 = vpop.permute.xlu0 %471
    %473 = vrot.lane.b32.xlu0 %v211, 1
    %v474 = vpop.permute.xlu0 %473
    %vm475 = vcmp.lt.s32.totalorder %v47, 1
    %v476 = vsel %vm475, %v460, %v468
    %v477 = vsel %vm475, %v462, %v470
    %v478 = vsel %vm475, %v464, %v472
    %v479 = vsel %vm475, %v466, %v474
    %v480 = vsel %vm475, %v468, %v460
    %v481 = vsel %vm475, %v470, %v462
    %v482 = vsel %vm475, %v472, %v464
    %v483 = vsel %vm475, %v474, %v466
    %v484 = vsel %vm53, 1, 0
    %v485 = vsel %vm54, 1, 0
    %vm486 = vcmp.eq.s32.totalorder %v484, 1
    %vm487 = vcmp.eq.s32.totalorder %v485, 1
    %v488 = vsel %vm486, %v480, 0.0
    %v489 = vsel %vm487, %v476, 0.0
    %v490 = vsel %vm486, %v481, 0.0
    %v491 = vsel %vm487, %v477, 0.0
    %v492 = vsel %vm486, %v482, 0.0
    %v493 = vsel %vm487, %v478, 0.0
    %v494 = vsel %vm486, %v483, 0.0
    %v495 = vsel %vm487, %v479, 0.0
    %497 = vset.pattern.permute.xlu0 0
    %498 = vperm.xlu0 %497, %v162
    %v499 = vpop.permute.xlu0 %498
    %502 = vset.pattern.permute.xlu0 0
    %503 = vperm.xlu0 %502, %v163
    %v504 = vpop.permute.xlu0 %503
    %507 = vset.pattern.permute.xlu0 0
    %508 = vperm.xlu0 %507, %v164
    %v509 = vpop.permute.xlu0 %508
    %512 = vset.pattern.permute.xlu0 0
    %513 = vperm.xlu0 %512, %v165
    %v514 = vpop.permute.xlu0 %513
    %v516 = vmul.f32 %v488, %v499
    %v517 = vmul.f32 %v489, %v499
    %v518 = vmul.f32 %v490, %v504
    %v519 = vmul.f32 %v491, %v504
    %v520 = vmul.f32 %v492, %v509
    %v521 = vmul.f32 %v493, %v509
    %v522 = vmul.f32 %v494, %v514
    %v523 = vmul.f32 %v495, %v514
    %v524 = vadd.f32 %v451, %v516
    %v525 = vadd.f32 %v452, %v517
    %v526 = vadd.f32 %v453, %v518
    %v527 = vadd.f32 %v454, %v519
    %v528 = vadd.f32 %v455, %v520
    %v529 = vadd.f32 %v456, %v521
    %v530 = vadd.f32 %v457, %v522
    %v531 = vadd.f32 %v458, %v523
    %532 = vrot.lane.b32.xlu0 %v204, 127
    %v533 = vpop.permute.xlu0 %532
    %534 = vrot.lane.b32.xlu0 %v206, 127
    %v535 = vpop.permute.xlu0 %534
    %536 = vrot.lane.b32.xlu0 %v208, 127
    %v537 = vpop.permute.xlu0 %536
    %538 = vrot.lane.b32.xlu0 %v210, 127
    %v539 = vpop.permute.xlu0 %538
    %540 = vrot.lane.b32.xlu0 %v205, 127
    %v541 = vpop.permute.xlu0 %540
    %542 = vrot.lane.b32.xlu0 %v207, 127
    %v543 = vpop.permute.xlu0 %542
    %544 = vrot.lane.b32.xlu0 %v209, 127
    %v545 = vpop.permute.xlu0 %544
    %546 = vrot.lane.b32.xlu0 %v211, 127
    %v547 = vpop.permute.xlu0 %546
    %vm548 = vcmp.lt.s32.totalorder %v47, 127
    %v549 = vsel %vm548, %v533, %v541
    %v550 = vsel %vm548, %v535, %v543
    %v551 = vsel %vm548, %v537, %v545
    %v552 = vsel %vm548, %v539, %v547
    %v553 = vsel %vm548, %v541, %v533
    %v554 = vsel %vm548, %v543, %v535
    %v555 = vsel %vm548, %v545, %v537
    %v556 = vsel %vm548, %v547, %v539
    %v557 = vsel %vm59, 1, 0
    %v558 = vsel %vm60, 1, 0
    %vm559 = vcmp.eq.s32.totalorder %v557, 1
    %vm560 = vcmp.eq.s32.totalorder %v558, 1
    %v561 = vsel %vm559, %v549, 0.0
    %v562 = vsel %vm560, %v553, 0.0
    %v563 = vsel %vm559, %v550, 0.0
    %v564 = vsel %vm560, %v554, 0.0
    %v565 = vsel %vm559, %v551, 0.0
    %v566 = vsel %vm560, %v555, 0.0
    %v567 = vsel %vm559, %v552, 0.0
    %v568 = vsel %vm560, %v556, 0.0
    %570 = vset.pattern.permute.xlu0 0
    %571 = vperm.xlu0 %570, %v170
    %v572 = vpop.permute.xlu0 %571
    %575 = vset.pattern.permute.xlu0 0
    %576 = vperm.xlu0 %575, %v171
    %v577 = vpop.permute.xlu0 %576
    %580 = vset.pattern.permute.xlu0 0
    %581 = vperm.xlu0 %580, %v172
    %v582 = vpop.permute.xlu0 %581
    %585 = vset.pattern.permute.xlu0 0
    %586 = vperm.xlu0 %585, %v173
    %v587 = vpop.permute.xlu0 %586
    %v589 = vmul.f32 %v561, %v572
    %v590 = vmul.f32 %v562, %v572
    %v591 = vmul.f32 %v563, %v577
    %v592 = vmul.f32 %v564, %v577
    %v593 = vmul.f32 %v565, %v582
    %v594 = vmul.f32 %v566, %v582
    %v595 = vmul.f32 %v567, %v587
    %v596 = vmul.f32 %v568, %v587
    %v597 = vadd.f32 %v524, %v589
    %v598 = vadd.f32 %v525, %v590
    %v599 = vadd.f32 %v526, %v591
    %v600 = vadd.f32 %v527, %v592
    %v601 = vadd.f32 %v528, %v593
    %v602 = vadd.f32 %v529, %v594
    %v603 = vadd.f32 %v530, %v595
    %v604 = vadd.f32 %v531, %v596
    %605 = vrot.lane.b32.xlu0 %v204, 113
    %v606 = vpop.permute.xlu0 %605
    %607 = vrot.lane.b32.xlu0 %v206, 113
    %v608 = vpop.permute.xlu0 %607
    %609 = vrot.lane.b32.xlu0 %v208, 113
    %v610 = vpop.permute.xlu0 %609
    %611 = vrot.lane.b32.xlu0 %v210, 113
    %v612 = vpop.permute.xlu0 %611
    %613 = vrot.lane.b32.xlu0 %v205, 113
    %v614 = vpop.permute.xlu0 %613
    %615 = vrot.lane.b32.xlu0 %v207, 113
    %v616 = vpop.permute.xlu0 %615
    %617 = vrot.lane.b32.xlu0 %v209, 113
    %v618 = vpop.permute.xlu0 %617
    %619 = vrot.lane.b32.xlu0 %v211, 113
    %v620 = vpop.permute.xlu0 %619
    %vm621 = vcmp.lt.s32.totalorder %v47, 113
    %v622 = vsel %vm621, %v606, %v614
    %v623 = vsel %vm621, %v608, %v616
    %v624 = vsel %vm621, %v610, %v618
    %v625 = vsel %vm621, %v612, %v620
    %v626 = vsel %vm621, %v614, %v606
    %v627 = vsel %vm621, %v616, %v608
    %v628 = vsel %vm621, %v618, %v610
    %v629 = vsel %vm621, %v620, %v612
    %v630 = vsel %vm65, 1, 0
    %v631 = vsel %vm66, 1, 0
    %vm632 = vcmp.eq.s32.totalorder %v630, 1
    %vm633 = vcmp.eq.s32.totalorder %v631, 1
    %v634 = vsel %vm632, %v622, 0.0
    %v635 = vsel %vm633, %v626, 0.0
    %v636 = vsel %vm632, %v623, 0.0
    %v637 = vsel %vm633, %v627, 0.0
    %v638 = vsel %vm632, %v624, 0.0
    %v639 = vsel %vm633, %v628, 0.0
    %v640 = vsel %vm632, %v625, 0.0
    %v641 = vsel %vm633, %v629, 0.0
    %643 = vset.pattern.permute.xlu0 0
    %644 = vperm.xlu0 %643, %v174
    %v645 = vpop.permute.xlu0 %644
    %648 = vset.pattern.permute.xlu0 0
    %649 = vperm.xlu0 %648, %v175
    %v650 = vpop.permute.xlu0 %649
    %653 = vset.pattern.permute.xlu0 0
    %654 = vperm.xlu0 %653, %v176
    %v655 = vpop.permute.xlu0 %654
    %658 = vset.pattern.permute.xlu0 0
    %659 = vperm.xlu0 %658, %v177
    %v660 = vpop.permute.xlu0 %659
    %v662 = vmul.f32 %v634, %v645
    %v663 = vmul.f32 %v635, %v645
    %v664 = vmul.f32 %v636, %v650
    %v665 = vmul.f32 %v637, %v650
    %v666 = vmul.f32 %v638, %v655
    %v667 = vmul.f32 %v639, %v655
    %v668 = vmul.f32 %v640, %v660
    %v669 = vmul.f32 %v641, %v660
    %v670 = vadd.f32 %v597, %v662
    %v671 = vadd.f32 %v598, %v663
    %v672 = vadd.f32 %v599, %v664
    %v673 = vadd.f32 %v600, %v665
    %v674 = vadd.f32 %v601, %v666
    %v675 = vadd.f32 %v602, %v667
    %v676 = vadd.f32 %v603, %v668
    %v677 = vadd.f32 %v604, %v669
    %678 = vrot.lane.b32.xlu0 %v204, 112
    %v679 = vpop.permute.xlu0 %678
    %680 = vrot.lane.b32.xlu0 %v206, 112
    %v681 = vpop.permute.xlu0 %680
    %682 = vrot.lane.b32.xlu0 %v208, 112
    %v683 = vpop.permute.xlu0 %682
    %684 = vrot.lane.b32.xlu0 %v210, 112
    %v685 = vpop.permute.xlu0 %684
    %686 = vrot.lane.b32.xlu0 %v205, 112
    %v687 = vpop.permute.xlu0 %686
    %688 = vrot.lane.b32.xlu0 %v207, 112
    %v689 = vpop.permute.xlu0 %688
    %690 = vrot.lane.b32.xlu0 %v209, 112
    %v691 = vpop.permute.xlu0 %690
    %692 = vrot.lane.b32.xlu0 %v211, 112
    %v693 = vpop.permute.xlu0 %692
    %vm694 = vcmp.lt.s32.totalorder %v47, 112
    %v695 = vsel %vm694, %v679, %v687
    %v696 = vsel %vm694, %v681, %v689
    %v697 = vsel %vm694, %v683, %v691
    %v698 = vsel %vm694, %v685, %v693
    %v699 = vsel %vm694, %v687, %v679
    %v700 = vsel %vm694, %v689, %v681
    %v701 = vsel %vm694, %v691, %v683
    %v702 = vsel %vm694, %v693, %v685
    %v703 = vsel %vm63, 1, 0
    %v704 = vsel %vm64, 1, 0
    %vm705 = vcmp.eq.s32.totalorder %v703, 1
    %vm706 = vcmp.eq.s32.totalorder %v704, 1
    %v707 = vsel %vm705, %v695, 0.0
    %v708 = vsel %vm706, %v699, 0.0
    %v709 = vsel %vm705, %v696, 0.0
    %v710 = vsel %vm706, %v700, 0.0
    %v711 = vsel %vm705, %v697, 0.0
    %v712 = vsel %vm706, %v701, 0.0
    %v713 = vsel %vm705, %v698, 0.0
    %v714 = vsel %vm706, %v702, 0.0
    %716 = vset.pattern.permute.xlu0 0
    %717 = vperm.xlu0 %716, %v178
    %v718 = vpop.permute.xlu0 %717
    %721 = vset.pattern.permute.xlu0 0
    %722 = vperm.xlu0 %721, %v179
    %v723 = vpop.permute.xlu0 %722
    %726 = vset.pattern.permute.xlu0 0
    %727 = vperm.xlu0 %726, %v180
    %v728 = vpop.permute.xlu0 %727
    %731 = vset.pattern.permute.xlu0 0
    %732 = vperm.xlu0 %731, %v181
    %v733 = vpop.permute.xlu0 %732
    %v735 = vmul.f32 %v707, %v718
    %v736 = vmul.f32 %v708, %v718
    %v737 = vmul.f32 %v709, %v723
    %v738 = vmul.f32 %v710, %v723
    %v739 = vmul.f32 %v711, %v728
    %v740 = vmul.f32 %v712, %v728
    %v741 = vmul.f32 %v713, %v733
    %v742 = vmul.f32 %v714, %v733
    %v743 = vadd.f32 %v670, %v735
    %v744 = vadd.f32 %v671, %v736
    %v745 = vadd.f32 %v672, %v737
    %v746 = vadd.f32 %v673, %v738
    %v747 = vadd.f32 %v674, %v739
    %v748 = vadd.f32 %v675, %v740
    %v749 = vadd.f32 %v676, %v741
    %v750 = vadd.f32 %v677, %v742
    %751 = vrot.lane.b32.xlu0 %v204, 111
    %v752 = vpop.permute.xlu0 %751
    %753 = vrot.lane.b32.xlu0 %v206, 111
    %v754 = vpop.permute.xlu0 %753
    %755 = vrot.lane.b32.xlu0 %v208, 111
    %v756 = vpop.permute.xlu0 %755
    %757 = vrot.lane.b32.xlu0 %v210, 111
    %v758 = vpop.permute.xlu0 %757
    %759 = vrot.lane.b32.xlu0 %v205, 111
    %v760 = vpop.permute.xlu0 %759
    %761 = vrot.lane.b32.xlu0 %v207, 111
    %v762 = vpop.permute.xlu0 %761
    %763 = vrot.lane.b32.xlu0 %v209, 111
    %v764 = vpop.permute.xlu0 %763
    %765 = vrot.lane.b32.xlu0 %v211, 111
    %v766 = vpop.permute.xlu0 %765
    %vm767 = vcmp.lt.s32.totalorder %v47, 111
    %v768 = vsel %vm767, %v752, %v760
    %v769 = vsel %vm767, %v754, %v762
    %v770 = vsel %vm767, %v756, %v764
    %v771 = vsel %vm767, %v758, %v766
    %v772 = vsel %vm767, %v760, %v752
    %v773 = vsel %vm767, %v762, %v754
    %v774 = vsel %vm767, %v764, %v756
    %v775 = vsel %vm767, %v766, %v758
    %v776 = vsel %vm67, 1, 0
    %v777 = vsel %vm68, 1, 0
    %vm778 = vcmp.eq.s32.totalorder %v776, 1
    %vm779 = vcmp.eq.s32.totalorder %v777, 1
    %v780 = vsel %vm778, %v768, 0.0
    %v781 = vsel %vm779, %v772, 0.0
    %v782 = vsel %vm778, %v769, 0.0
    %v783 = vsel %vm779, %v773, 0.0
    %v784 = vsel %vm778, %v770, 0.0
    %v785 = vsel %vm779, %v774, 0.0
    %v786 = vsel %vm778, %v771, 0.0
    %v787 = vsel %vm779, %v775, 0.0
    %789 = vset.pattern.permute.xlu0 0
    %790 = vperm.xlu0 %789, %v182
    %v791 = vpop.permute.xlu0 %790
    %794 = vset.pattern.permute.xlu0 0
    %795 = vperm.xlu0 %794, %v183
    %v796 = vpop.permute.xlu0 %795
    %799 = vset.pattern.permute.xlu0 0
    %800 = vperm.xlu0 %799, %v184
    %v801 = vpop.permute.xlu0 %800
    %804 = vset.pattern.permute.xlu0 0
    %805 = vperm.xlu0 %804, %v185
    %v806 = vpop.permute.xlu0 %805
    %v808 = vmul.f32 %v780, %v791
    %v809 = vmul.f32 %v781, %v791
    %v810 = vmul.f32 %v782, %v796
    %v811 = vmul.f32 %v783, %v796
    %v812 = vmul.f32 %v784, %v801
    %v813 = vmul.f32 %v785, %v801
    %v814 = vmul.f32 %v786, %v806
    %v815 = vmul.f32 %v787, %v806
    %v816 = vadd.f32 %v743, %v808
    %v817 = vadd.f32 %v744, %v809
    %v818 = vadd.f32 %v745, %v810
    %v819 = vadd.f32 %v746, %v811
    %v820 = vadd.f32 %v747, %v812
    %v821 = vadd.f32 %v748, %v813
    %v822 = vadd.f32 %v749, %v814
    %v823 = vadd.f32 %v750, %v815
    %825 = vset.pattern.permute.xlu0 0
    %826 = vperm.xlu0 %825, %v190
    %v827 = vpop.permute.xlu0 %826
    %830 = vset.pattern.permute.xlu0 0
    %831 = vperm.xlu0 %830, %v191
    %v832 = vpop.permute.xlu0 %831
    %835 = vset.pattern.permute.xlu0 0
    %836 = vperm.xlu0 %835, %v192
    %v837 = vpop.permute.xlu0 %836
    %840 = vset.pattern.permute.xlu0 0
    %841 = vperm.xlu0 %840, %v193
    %v842 = vpop.permute.xlu0 %841
    %v844 = vadd.f32 %v816, %v827
    %v845 = vadd.f32 %v817, %v827
    %v846 = vadd.f32 %v818, %v832
    %v847 = vadd.f32 %v819, %v832
    %v848 = vadd.f32 %v820, %v837
    %v849 = vadd.f32 %v821, %v837
    %v850 = vadd.f32 %v822, %v842
    %v851 = vadd.f32 %v823, %v842
    %v852 = vmax.f32 %v844, 0.0
    %v853 = vmax.f32 %v845, 0.0
    %v854 = vmax.f32 %v846, 0.0
    %v855 = vmax.f32 %v847, 0.0
    %v856 = vmax.f32 %v848, 0.0
    %v857 = vmax.f32 %v849, 0.0
    %v858 = vmax.f32 %v850, 0.0
    %v859 = vmax.f32 %v851, 0.0
    %vm860 = vcmask 261120
    %v862 = vsel %vm860, %v186, 0
    %v865 = vsel %vm860, %v187, 0
    %v868 = vsel %vm860, %v188, 0
    %v871 = vsel %vm860, %v189, 0
    %873 = vmatprep.subr.mxu0 %v853
    %874 = vmatpush1.msra.mxu0 %v852
    %875 = vmatprep.subr.mxu0 %v855
    %876 = vmatpush1.msra.mxu0 %v854
    %877 = vmatprep.subr.mxu0 %v857
    %878 = vmatpush1.msra.mxu0 %v856
    %879 = vmatprep.subr.mxu0 %v859
    %880 = vmatpush1.msra.mxu0 %v858
    %881 = vmatprep.subr.mxu0 0.0
    %882 = vmatpush1.msra.mxu0 0.0
    %883 = vmatprep.subr.mxu0 0.0
    %884 = vmatpush1.msra.mxu0 0.0
    %885 = vmatprep.subr.mxu0 0.0
    %886 = vmatpush1.msra.mxu0 0.0
    %887 = vmatprep.subr.mxu0 0.0
    %888 = vmatpush1.msra.mxu0 0.0
    %889 = vmatprep.subr.mxu0 0.0
    %890 = vmatpush1.msra.mxu0 0.0
    %891 = vmatprep.subr.mxu0 0.0
    %892 = vmatpush1.msra.mxu0 0.0
    %893 = vmatprep.subr.mxu0 0.0
    %894 = vmatpush1.msra.mxu0 0.0
    %895 = vmatprep.subr.mxu0 0.0
    %896 = vmatpush1.msra.mxu0 0.0
    %897 = vmatprep.subr.mxu0 0.0
    %898 = vmatpush1.msra.mxu0 0.0
    %899 = vmatprep.subr.mxu0 0.0
    %900 = vmatpush1.msra.mxu0 0.0
    %901 = vmatprep.subr.mxu0 0.0
    %902 = vmatpush1.msra.mxu0 0.0
    %903 = vmatprep.subr.mxu0 0.0
    %904 = vmatpush1.msra.mxu0 0.0
    %905 = vmatprep.subr.mxu0 0.0
    %906 = vmatpush1.msra.mxu0 0.0
    %907 = vmatprep.subr.mxu0 0.0
    %908 = vmatpush1.msra.mxu0 0.0
    %909 = vmatprep.subr.mxu0 0.0
    %910 = vmatpush1.msra.mxu0 0.0
    %911 = vmatprep.subr.mxu0 0.0
    %912 = vmatpush1.msra.mxu0 0.0
    %913 = vmatprep.subr.mxu0 0.0
    %914 = vmatpush1.msra.mxu0 0.0
    %915 = vmatprep.subr.mxu0 0.0
    %916 = vmatpush1.msra.mxu0 0.0
    %917 = vmatprep.subr.mxu0 0.0
    %918 = vmatpush1.msra.mxu0 0.0
    %919 = vmatprep.subr.mxu0 0.0
    %920 = vmatpush1.msra.mxu0 0.0
    %921 = vmatprep.subr.mxu0 0.0
    %922 = vmatpush1.msra.mxu0 0.0
    %923 = vmatprep.subr.mxu0 0.0
    %924 = vmatpush1.msra.mxu0 0.0
    %925 = vmatprep.subr.mxu0 0.0
    %926 = vmatpush1.msra.mxu0 0.0
    %927 = vmatprep.subr.mxu0 0.0
    %928 = vmatpush1.msra.mxu0 0.0
    %929 = vmatprep.subr.mxu0 0.0
    %930 = vmatpush1.msra.mxu0 0.0
    %931 = vmatprep.subr.mxu0 0.0
    %932 = vmatpush1.msra.mxu0 0.0
    %933 = vmatprep.subr.mxu0 0.0
    %934 = vmatpush1.msra.mxu0 0.0
    %935 = vmatprep.subr.mxu0 0.0
    %936 = vmatpush1.msra.mxu0 0.0
    %937 = vmatprep.mubr.f32.mxu0 0.0
    %938 = vmatmul.mubr.f32.gmra.mrb[0].mxu0 %v862
    %v939 = vpop.f32.mrb[0].mxu0
    %v940 = vadd.f32 %v827, %v939
    %v941 = vpop.f32.mrb[0].mxu0
    %v942 = vadd.f32 %v827, %v941
    %943 = vmatprep.mubr.f32.mxu0 0.0
    %944 = vmatmul.mubr.f32.gmra.mrb[0].mxu0 %v865
    %v945 = vpop.f32.mrb[0].mxu0
    %v946 = vadd.f32 %v832, %v945
    %v947 = vpop.f32.mrb[0].mxu0
    %v948 = vadd.f32 %v832, %v947
    %949 = vmatprep.mubr.f32.mxu0 0.0
    %950 = vmatmul.mubr.f32.gmra.mrb[0].mxu0 %v868
    %v951 = vpop.f32.mrb[0].mxu0
    %v952 = vadd.f32 %v837, %v951
    %v953 = vpop.f32.mrb[0].mxu0
    %v954 = vadd.f32 %v837, %v953
    %955 = vmatprep.mubr.f32.mxu0 0.0
    %956 = vmatmul.mubr.f32.gmra.mrb[0].mxu0 %v871
    %v957 = vpop.f32.mrb[0].mxu0
    %v958 = vadd.f32 %v842, %v957
    %v959 = vpop.f32.mrb[0].mxu0
    %v960 = vadd.f32 %v842, %v959
    %961 = vdwg.mxu0
    %v962 = vmax.f32 %v940, 0.0
    %v963 = vmax.f32 %v942, 0.0
    %v964 = vmax.f32 %v946, 0.0
    %v965 = vmax.f32 %v948, 0.0
    %v966 = vmax.f32 %v952, 0.0
    %v967 = vmax.f32 %v954, 0.0
    %v968 = vmax.f32 %v958, 0.0
    %v969 = vmax.f32 %v960, 0.0
    %v970 = vadd.f32 %v962, %v963
    %971 = vadd.xlane.f32.xlu0 %v970
    %v972 = vpop.xlane.xlu0 %971
    %v973 = vadd.f32 %v964, %v965
    %974 = vadd.xlane.f32.xlu0 %v973
    %v975 = vpop.xlane.xlu0 %974
    %v976 = vadd.f32 %v966, %v967
    %977 = vadd.xlane.f32.xlu0 %v976
    %v978 = vpop.xlane.xlu0 %977
    %v979 = vadd.f32 %v968, %v969
    %980 = vadd.xlane.f32.xlu0 %v979
    %v981 = vpop.xlane.xlu0 %980
    %v982 = vrcp.pop 256.0
    %v983 = vmul.f32 %v972, %v982
    %v984 = vmul.f32 %v975, %v982
    %v985 = vmul.f32 %v978, %v982
    %v986 = vmul.f32 %v981, %v982
    %v987 = vmax.f32 %v962, %v963
    %988 = vmax.xlane.f32.xlu0 %v987
    %v989 = vpop.xlane.xlu0 %988
    %v990 = vmax.f32 %v964, %v965
    %991 = vmax.xlane.f32.xlu0 %v990
    %v992 = vpop.xlane.xlu0 %991
    %v993 = vmax.f32 %v966, %v967
    %994 = vmax.xlane.f32.xlu0 %v993
    %v995 = vpop.xlane.xlu0 %994
    %v996 = vmax.f32 %v968, %v969
    %997 = vmax.xlane.f32.xlu0 %v996
    %v998 = vpop.xlane.xlu0 %997
    %v999 = vsel %vm149, %v983, %v989
    %v1000 = vsel %vm149, %v984, %v992
    %v1001 = vsel %vm149, %v985, %v995
    %v1002 = vsel %vm149, %v986, %v998
    %1004 = vset.pattern.permute.xlu0 0
    %1005 = vperm.xlu0 %1004, %v195
    %v1006 = vpop.permute.xlu0 %1005
    %v1009 = vsel %vm860, %v194, 0
    %1011 = vmatprep.subr.mxu0 0.0
    %1012 = vmatpush1.msra.mxu0 %v999
    %1013 = vmatprep.subr.mxu0 0.0
    %1014 = vmatpush1.msra.mxu0 %v1000
    %1015 = vmatprep.subr.mxu0 0.0
    %1016 = vmatpush1.msra.mxu0 %v1001
    %1017 = vmatprep.subr.mxu0 0.0
    %1018 = vmatpush1.msra.mxu0 %v1002
    %1019 = vmatprep.subr.mxu0 0.0
    %1020 = vmatpush1.msra.mxu0 0.0
    %1021 = vmatprep.subr.mxu0 0.0
    %1022 = vmatpush1.msra.mxu0 0.0
    %1023 = vmatprep.subr.mxu0 0.0
    %1024 = vmatpush1.msra.mxu0 0.0
    %1025 = vmatprep.subr.mxu0 0.0
    %1026 = vmatpush1.msra.mxu0 0.0
    %1027 = vmatprep.subr.mxu0 0.0
    %1028 = vmatpush1.msra.mxu0 0.0
    %1029 = vmatprep.subr.mxu0 0.0
    %1030 = vmatpush1.msra.mxu0 0.0
    %1031 = vmatprep.subr.mxu0 0.0
    %1032 = vmatpush1.msra.mxu0 0.0
    %1033 = vmatprep.subr.mxu0 0.0
    %1034 = vmatpush1.msra.mxu0 0.0
    %1035 = vmatprep.subr.mxu0 0.0
    %1036 = vmatpush1.msra.mxu0 0.0
    %1037 = vmatprep.subr.mxu0 0.0
    %1038 = vmatpush1.msra.mxu0 0.0
    %1039 = vmatprep.subr.mxu0 0.0
    %1040 = vmatpush1.msra.mxu0 0.0
    %1041 = vmatprep.subr.mxu0 0.0
    %1042 = vmatpush1.msra.mxu0 0.0
    %1043 = vmatprep.subr.mxu0 0.0
    %1044 = vmatpush1.msra.mxu0 0.0
    %1045 = vmatprep.subr.mxu0 0.0
    %1046 = vmatpush1.msra.mxu0 0.0
    %1047 = vmatprep.subr.mxu0 0.0
    %1048 = vmatpush1.msra.mxu0 0.0
    %1049 = vmatprep.subr.mxu0 0.0
    %1050 = vmatpush1.msra.mxu0 0.0
    %1051 = vmatprep.subr.mxu0 0.0
    %1052 = vmatpush1.msra.mxu0 0.0
    %1053 = vmatprep.subr.mxu0 0.0
    %1054 = vmatpush1.msra.mxu0 0.0
    %1055 = vmatprep.subr.mxu0 0.0
    %1056 = vmatpush1.msra.mxu0 0.0
    %1057 = vmatprep.subr.mxu0 0.0
    %1058 = vmatpush1.msra.mxu0 0.0
    %1059 = vmatprep.subr.mxu0 0.0
    %1060 = vmatpush1.msra.mxu0 0.0
    %1061 = vmatprep.subr.mxu0 0.0
    %1062 = vmatpush1.msra.mxu0 0.0
    %1063 = vmatprep.subr.mxu0 0.0
    %1064 = vmatpush1.msra.mxu0 0.0
    %1065 = vmatprep.subr.mxu0 0.0
    %1066 = vmatpush1.msra.mxu0 0.0
    %1067 = vmatprep.subr.mxu0 0.0
    %1068 = vmatpush1.msra.mxu0 0.0
    %1069 = vmatprep.subr.mxu0 0.0
    %1070 = vmatpush1.msra.mxu0 0.0
    %1071 = vmatprep.subr.mxu0 0.0
    %1072 = vmatpush1.msra.mxu0 0.0
    %1073 = vmatprep.subr.mxu0 0.0
    %1074 = vmatpush1.msra.mxu0 0.0
    %1075 = vmatprep.mubr.f32.mxu0 0.0
    %1076 = vmatmul.mubr.f32.gmra.mrb[0].mxu0 %v1009
    %v1077 = vpop.f32.mrb[0].mxu0
    %v1078 = vadd.f32 %v1006, %v1077
    %v1079 = vpop.f32.mrb[0].mxu0
    %1080 = vdwg.mxu0
    %v1081 = vmax.f32 %v1078, 0.0
    %1083 = vset.pattern.permute.xlu0 0
    %1084 = vperm.xlu0 %1083, %v200
    %v1085 = vpop.permute.xlu0 %1084
    %1088 = vset.pattern.permute.xlu0 0
    %1089 = vperm.xlu0 %1088, %v201
    %v1090 = vpop.permute.xlu0 %1089
    %1093 = vset.pattern.permute.xlu0 0
    %1094 = vperm.xlu0 %1093, %v202
    %v1095 = vpop.permute.xlu0 %1094
    %1098 = vset.pattern.permute.xlu0 0
    %1099 = vperm.xlu0 %1098, %v203
    %v1100 = vpop.permute.xlu0 %1099
    %vm1102 = vcmask 15360
    %v1104 = vsel %vm1102, %v196, 0
    %v1107 = vsel %vm1102, %v197, 0
    %v1110 = vsel %vm1102, %v198, 0
    %v1113 = vsel %vm1102, %v199, 0
    %vm1115 = vcmask 1041408
    %v1117 = vsel %vm1115, %v1081, 0
    %1119 = vmatprep.subr.mxu0 0.0
    %1120 = vmatpush1.msra.mxu0 %v1117
    %1121 = vmatprep.subr.mxu0 0.0
    %1122 = vmatpush1.msra.mxu0 0.0
    %1123 = vmatprep.subr.mxu0 0.0
    %1124 = vmatpush1.msra.mxu0 0.0
    %1125 = vmatprep.subr.mxu0 0.0
    %1126 = vmatpush1.msra.mxu0 0.0
    %1127 = vmatprep.subr.mxu0 0.0
    %1128 = vmatpush1.msra.mxu0 0.0
    %1129 = vmatprep.subr.mxu0 0.0
    %1130 = vmatpush1.msra.mxu0 0.0
    %1131 = vmatprep.subr.mxu0 0.0
    %1132 = vmatpush1.msra.mxu0 0.0
    %1133 = vmatprep.subr.mxu0 0.0
    %1134 = vmatpush1.msra.mxu0 0.0
    %1135 = vmatprep.subr.mxu0 0.0
    %1136 = vmatpush1.msra.mxu0 0.0
    %1137 = vmatprep.subr.mxu0 0.0
    %1138 = vmatpush1.msra.mxu0 0.0
    %1139 = vmatprep.subr.mxu0 0.0
    %1140 = vmatpush1.msra.mxu0 0.0
    %1141 = vmatprep.subr.mxu0 0.0
    %1142 = vmatpush1.msra.mxu0 0.0
    %1143 = vmatprep.subr.mxu0 0.0
    %1144 = vmatpush1.msra.mxu0 0.0
    %1145 = vmatprep.subr.mxu0 0.0
    %1146 = vmatpush1.msra.mxu0 0.0
    %1147 = vmatprep.subr.mxu0 0.0
    %1148 = vmatpush1.msra.mxu0 0.0
    %1149 = vmatprep.subr.mxu0 0.0
    %1150 = vmatpush1.msra.mxu0 0.0
    %1151 = vmatprep.subr.mxu0 0.0
    %1152 = vmatpush1.msra.mxu0 0.0
    %1153 = vmatprep.subr.mxu0 0.0
    %1154 = vmatpush1.msra.mxu0 0.0
    %1155 = vmatprep.subr.mxu0 0.0
    %1156 = vmatpush1.msra.mxu0 0.0
    %1157 = vmatprep.subr.mxu0 0.0
    %1158 = vmatpush1.msra.mxu0 0.0
    %1159 = vmatprep.subr.mxu0 0.0
    %1160 = vmatpush1.msra.mxu0 0.0
    %1161 = vmatprep.subr.mxu0 0.0
    %1162 = vmatpush1.msra.mxu0 0.0
    %1163 = vmatprep.subr.mxu0 0.0
    %1164 = vmatpush1.msra.mxu0 0.0
    %1165 = vmatprep.subr.mxu0 0.0
    %1166 = vmatpush1.msra.mxu0 0.0
    %1167 = vmatprep.subr.mxu0 0.0
    %1168 = vmatpush1.msra.mxu0 0.0
    %1169 = vmatprep.subr.mxu0 0.0
    %1170 = vmatpush1.msra.mxu0 0.0
    %1171 = vmatprep.subr.mxu0 0.0
    %1172 = vmatpush1.msra.mxu0 0.0
    %1173 = vmatprep.subr.mxu0 0.0
    %1174 = vmatpush1.msra.mxu0 0.0
    %1175 = vmatprep.subr.mxu0 0.0
    %1176 = vmatpush1.msra.mxu0 0.0
    %1177 = vmatprep.subr.mxu0 0.0
    %1178 = vmatpush1.msra.mxu0 0.0
    %1179 = vmatprep.subr.mxu0 0.0
    %1180 = vmatpush1.msra.mxu0 0.0
    %1181 = vmatprep.subr.mxu0 0.0
    %1182 = vmatpush1.msra.mxu0 0.0
    %1183 = vmatprep.mubr.f32.mxu0 0.0
    %1184 = vmatmul.mubr.f32.gmra.mrb[0].mxu0 %v1104
    %v1185 = vpop.f32.mrb[0].mxu0
    %v1186 = vadd.f32 %v1085, %v1185
    %v1187 = vpop.f32.mrb[0].mxu0
    %1188 = vmatprep.mubr.f32.mxu0 0.0
    %1189 = vmatmul.mubr.f32.gmra.mrb[0].mxu0 %v1107
    %v1190 = vpop.f32.mrb[0].mxu0
    %v1191 = vadd.f32 %v1090, %v1190
    %v1192 = vpop.f32.mrb[0].mxu0
    %1193 = vmatprep.mubr.f32.mxu0 0.0
    %1194 = vmatmul.mubr.f32.gmra.mrb[0].mxu0 %v1110
    %v1195 = vpop.f32.mrb[0].mxu0
    %v1196 = vadd.f32 %v1095, %v1195
    %v1197 = vpop.f32.mrb[0].mxu0
    %1198 = vmatprep.mubr.f32.mxu0 0.0
    %1199 = vmatmul.mubr.f32.gmra.mrb[0].mxu0 %v1113
    %v1200 = vpop.f32.mrb[0].mxu0
    %v1201 = vadd.f32 %v1100, %v1200
    %v1202 = vpop.f32.mrb[0].mxu0
    %1203 = vdwg.mxu0
    %v1204 = vsel %vm1102, %v1186, 0.0
    %1205 = vadd.xlane.f32.xlu0 %v1204
    %v1206 = vpop.xlane.xlu0 %1205
    %v1207 = vsel %vm1102, %v1191, 0.0
    %1208 = vadd.xlane.f32.xlu0 %v1207
    %v1209 = vpop.xlane.xlu0 %1208
    %v1210 = vsel %vm1102, %v1196, 0.0
    %1211 = vadd.xlane.f32.xlu0 %v1210
    %v1212 = vpop.xlane.xlu0 %1211
    %v1213 = vsel %vm1102, %v1201, 0.0
    %1214 = vadd.xlane.f32.xlu0 %v1213
    %v1215 = vpop.xlane.xlu0 %1214
    %v1216 = vxor.u32 %v1206, 2147483648
    %v1217 = vxor.u32 %v1209, 2147483648
    %v1218 = vxor.u32 %v1212, 2147483648
    %v1219 = vxor.u32 %v1215, 2147483648
    %v1220 = vmul.f32 %v1216, 1.442695
    %v1221 = vpow.pop %v1220
    %v1222 = vmul.f32 %v1217, 1.442695
    %v1223 = vpow.pop %v1222
    %v1224 = vmul.f32 %v1218, 1.442695
    %v1225 = vpow.pop %v1224
    %v1226 = vmul.f32 %v1219, 1.442695
    %v1227 = vpow.pop %v1226
    %v1228 = vadd.f32 %v1221, 1.0
    %v1229 = vadd.f32 %v1223, 1.0
    %v1230 = vadd.f32 %v1225, 1.0
    %v1231 = vadd.f32 %v1227, 1.0
    %v1232 = vrcp.pop %v1228
    %v1233 = vmul.f32 1.0, %v1232
    %v1234 = vrcp.pop %v1229
    %v1235 = vmul.f32 1.0, %v1234
    %v1236 = vrcp.pop %v1230
    %v1237 = vmul.f32 1.0, %v1236
    %v1238 = vrcp.pop %v1231
    %v1239 = vmul.f32 1.0, %v1238
    %v1240 = vmul.f32 %v962, %v1233
    %v1241 = vmul.f32 %v963, %v1233
    %v1242 = vmul.f32 %v964, %v1235
    %v1243 = vmul.f32 %v965, %v1235
    %v1244 = vmul.f32 %v966, %v1237
    %v1245 = vmul.f32 %v967, %v1237
    %v1246 = vmul.f32 %v968, %v1239
    %v1247 = vmul.f32 %v969, %v1239
    %v1248 = vadd.f32 %v1240, %v1242
    %v1249 = vadd.f32 %v1248, %v1244
    %v1250 = vadd.f32 %v1249, %v1246
    %v1251 = vrot.slane %v1250, 4
    %v1252 = vadd.f32 %v1250, %v1251
    %v1253 = vrot.slane %v1252, 2
    %v1254 = vadd.f32 %v1252, %v1253
    %v1255 = vrot.slane %v1254, 1
    %v1256 = vadd.f32 %v1254, %v1255
    %v1257 = vadd.f32 %v1241, %v1243
    %v1258 = vadd.f32 %v1257, %v1245
    %v1259 = vadd.f32 %v1258, %v1247
    %v1260 = vrot.slane %v1259, 4
    %v1261 = vadd.f32 %v1259, %v1260
    %v1262 = vrot.slane %v1261, 2
    %v1263 = vadd.f32 %v1261, %v1262
    %v1264 = vrot.slane %v1263, 1
    %v1265 = vadd.f32 %v1263, %v1264
    %v1266 = vrcp.pop 32.0
    %v1267 = vmul.f32 %v1256, %v1266
    %v1268 = vmul.f32 %v1265, %v1266
    %v1269 = vmax.f32 %v1240, %v1244
    %v1270 = vmax.f32 %v1242, %v1246
    %v1271 = vmax.f32 %v1269, %v1270
    %v1272 = vrot.slane %v1271, 4
    %v1273 = vmax.f32 %v1271, %v1272
    %v1274 = vrot.slane %v1273, 2
    %v1275 = vmax.f32 %v1273, %v1274
    %v1276 = vrot.slane %v1275, 1
    %v1277 = vmax.f32 %v1275, %v1276
    %v1278 = vmax.f32 %v1241, %v1245
    %v1279 = vmax.f32 %v1243, %v1247
    %v1280 = vmax.f32 %v1278, %v1279
    %v1281 = vrot.slane %v1280, 4
    %v1282 = vmax.f32 %v1280, %v1281
    %v1283 = vrot.slane %v1282, 2
    %v1284 = vmax.f32 %v1282, %v1283
    %v1285 = vrot.slane %v1284, 1
    %v1286 = vmax.f32 %v1284, %v1285
    %s1287 = sld [smem:[#allocation2 + $0x18]]
    %v1288 = vstv %s1287
    %v1289 = vmul.f32 %v1267, %v1288
    %v1290 = vmul.f32 %v1268, %v1288
    %s1291 = sld [smem:[#allocation2 + $0x98]]
    %v1292 = vstv %s1291
    %v1293 = vmul.f32 %v1277, %v1292
    %v1294 = vmul.f32 %v1286, %v1292
    %v1295 = vadd.f32 %v1289, %v1293
    %v1296 = vadd.f32 %v1290, %v1294
    %1297 = vrot.lane.b32.xlu0 %v1267, 51
    %v1298 = vpop.permute.xlu0 %1297
    %1299 = vrot.lane.b32.xlu0 %v1268, 51
    %v1300 = vpop.permute.xlu0 %1299
    %vm1301 = vcmp.lt.s32.totalorder %v47, 51
    %v1302 = vsel %vm1301, %v1298, %v1300
    %v1303 = vsel %vm1301, %v1300, %v1298
    %s1304 = sld [smem:[#allocation2]]
    %v1305 = vstv %s1304
    %v1306 = vmul.f32 %v1303, %v1305
    %v1307 = vmul.f32 %v1302, %v1305
    %1308 = vrot.lane.b32.xlu0 %v1277, 51
    %v1309 = vpop.permute.xlu0 %1308
    %1310 = vrot.lane.b32.xlu0 %v1286, 51
    %v1311 = vpop.permute.xlu0 %1310
    %v1312 = vsel %vm1301, %v1309, %v1311
    %v1313 = vsel %vm1301, %v1311, %v1309
    %s1314 = sld [smem:[#allocation2 + $0x80]]
    %v1315 = vstv %s1314
    %v1316 = vmul.f32 %v1313, %v1315
    %v1317 = vmul.f32 %v1312, %v1315
    %v1318 = vadd.f32 %v1306, %v1316
    %v1319 = vadd.f32 %v1307, %v1317
    %v1320 = vsel %vm73, %v1318, 0.0
    %v1321 = vsel %vm74, %v1319, 0.0
    %v1322 = vadd.f32 %v1295, %v1320
    %v1323 = vadd.f32 %v1296, %v1321
    %1324 = vrot.lane.b32.xlu0 %v1267, 50
    %v1325 = vpop.permute.xlu0 %1324
    %1326 = vrot.lane.b32.xlu0 %v1268, 50
    %v1327 = vpop.permute.xlu0 %1326
    %vm1328 = vcmp.lt.s32.totalorder %v47, 50
    %v1329 = vsel %vm1328, %v1325, %v1327
    %v1330 = vsel %vm1328, %v1327, %v1325
    %s1331 = sld [smem:[#allocation2 + $0x1]]
    %v1332 = vstv %s1331
    %v1333 = vmul.f32 %v1330, %v1332
    %v1334 = vmul.f32 %v1329, %v1332
    %1335 = vrot.lane.b32.xlu0 %v1277, 50
    %v1336 = vpop.permute.xlu0 %1335
    %1337 = vrot.lane.b32.xlu0 %v1286, 50
    %v1338 = vpop.permute.xlu0 %1337
    %v1339 = vsel %vm1328, %v1336, %v1338
    %v1340 = vsel %vm1328, %v1338, %v1336
    %s1341 = sld [smem:[#allocation2 + $0x81]]
    %v1342 = vstv %s1341
    %v1343 = vmul.f32 %v1340, %v1342
    %v1344 = vmul.f32 %v1339, %v1342
    %v1345 = vadd.f32 %v1333, %v1343
    %v1346 = vadd.f32 %v1334, %v1344
    %v1347 = vsel %vm77, %v1345, 0.0
    %v1348 = vsel %vm78, %v1346, 0.0
    %v1349 = vadd.f32 %v1322, %v1347
    %v1350 = vadd.f32 %v1323, %v1348
    %1351 = vrot.lane.b32.xlu0 %v1267, 49
    %v1352 = vpop.permute.xlu0 %1351
    %1353 = vrot.lane.b32.xlu0 %v1268, 49
    %v1354 = vpop.permute.xlu0 %1353
    %vm1355 = vcmp.lt.s32.totalorder %v47, 49
    %v1356 = vsel %vm1355, %v1352, %v1354
    %v1357 = vsel %vm1355, %v1354, %v1352
    %s1358 = sld [smem:[#allocation2 + $0x2]]
    %v1359 = vstv %s1358
    %v1360 = vmul.f32 %v1357, %v1359
    %v1361 = vmul.f32 %v1356, %v1359
    %1362 = vrot.lane.b32.xlu0 %v1277, 49
    %v1363 = vpop.permute.xlu0 %1362
    %1364 = vrot.lane.b32.xlu0 %v1286, 49
    %v1365 = vpop.permute.xlu0 %1364
    %v1366 = vsel %vm1355, %v1363, %v1365
    %v1367 = vsel %vm1355, %v1365, %v1363
    %s1368 = sld [smem:[#allocation2 + $0x82]]
    %v1369 = vstv %s1368
    %v1370 = vmul.f32 %v1367, %v1369
    %v1371 = vmul.f32 %v1366, %v1369
    %v1372 = vadd.f32 %v1360, %v1370
    %v1373 = vadd.f32 %v1361, %v1371
    %v1374 = vsel %vm79, %v1372, 0.0
    %v1375 = vsel %vm80, %v1373, 0.0
    %v1376 = vadd.f32 %v1349, %v1374
    %v1377 = vadd.f32 %v1350, %v1375
    %1378 = vrot.lane.b32.xlu0 %v1267, 48
    %v1379 = vpop.permute.xlu0 %1378
    %1380 = vrot.lane.b32.xlu0 %v1268, 48
    %v1381 = vpop.permute.xlu0 %1380
    %vm1382 = vcmp.lt.s32.totalorder %v47, 48
    %v1383 = vsel %vm1382, %v1379, %v1381
    %v1384 = vsel %vm1382, %v1381, %v1379
    %s1385 = sld [smem:[#allocation2 + $0x3]]
    %v1386 = vstv %s1385
    %v1387 = vmul.f32 %v1384, %v1386
    %v1388 = vmul.f32 %v1383, %v1386
    %1389 = vrot.lane.b32.xlu0 %v1277, 48
    %v1390 = vpop.permute.xlu0 %1389
    %1391 = vrot.lane.b32.xlu0 %v1286, 48
    %v1392 = vpop.permute.xlu0 %1391
    %v1393 = vsel %vm1382, %v1390, %v1392
    %v1394 = vsel %vm1382, %v1392, %v1390
    %s1395 = sld [smem:[#allocation2 + $0x83]]
    %v1396 = vstv %s1395
    %v1397 = vmul.f32 %v1394, %v1396
    %v1398 = vmul.f32 %v1393, %v1396
    %v1399 = vadd.f32 %v1387, %v1397
    %v1400 = vadd.f32 %v1388, %v1398
    %v1401 = vsel %vm71, %v1399, 0.0
    %v1402 = vsel %vm72, %v1400, 0.0
    %v1403 = vadd.f32 %v1376, %v1401
    %v1404 = vadd.f32 %v1377, %v1402
    %1405 = vrot.lane.b32.xlu0 %v1267, 47
    %v1406 = vpop.permute.xlu0 %1405
    %1407 = vrot.lane.b32.xlu0 %v1268, 47
    %v1408 = vpop.permute.xlu0 %1407
    %vm1409 = vcmp.lt.s32.totalorder %v47, 47
    %v1410 = vsel %vm1409, %v1406, %v1408
    %v1411 = vsel %vm1409, %v1408, %v1406
    %s1412 = sld [smem:[#allocation2 + $0x4]]
    %v1413 = vstv %s1412
    %v1414 = vmul.f32 %v1411, %v1413
    %v1415 = vmul.f32 %v1410, %v1413
    %1416 = vrot.lane.b32.xlu0 %v1277, 47
    %v1417 = vpop.permute.xlu0 %1416
    %1418 = vrot.lane.b32.xlu0 %v1286, 47
    %v1419 = vpop.permute.xlu0 %1418
    %v1420 = vsel %vm1409, %v1417, %v1419
    %v1421 = vsel %vm1409, %v1419, %v1417
    %s1422 = sld [smem:[#allocation2 + $0x84]]
    %v1423 = vstv %s1422
    %v1424 = vmul.f32 %v1421, %v1423
    %v1425 = vmul.f32 %v1420, %v1423
    %v1426 = vadd.f32 %v1414, %v1424
    %v1427 = vadd.f32 %v1415, %v1425
    %v1428 = vsel %vm81, %v1426, 0.0
    %v1429 = vsel %vm82, %v1427, 0.0
    %v1430 = vadd.f32 %v1403, %v1428
    %v1431 = vadd.f32 %v1404, %v1429
    %1432 = vrot.lane.b32.xlu0 %v1267, 46
    %v1433 = vpop.permute.xlu0 %1432
    %1434 = vrot.lane.b32.xlu0 %v1268, 46
    %v1435 = vpop.permute.xlu0 %1434
    %vm1436 = vcmp.lt.s32.totalorder %v47, 46
    %v1437 = vsel %vm1436, %v1433, %v1435
    %v1438 = vsel %vm1436, %v1435, %v1433
    %s1439 = sld [smem:[#allocation2 + $0x5]]
    %v1440 = vstv %s1439
    %v1441 = vmul.f32 %v1438, %v1440
    %v1442 = vmul.f32 %v1437, %v1440
    %1443 = vrot.lane.b32.xlu0 %v1277, 46
    %v1444 = vpop.permute.xlu0 %1443
    %1445 = vrot.lane.b32.xlu0 %v1286, 46
    %v1446 = vpop.permute.xlu0 %1445
    %v1447 = vsel %vm1436, %v1444, %v1446
    %v1448 = vsel %vm1436, %v1446, %v1444
    %s1449 = sld [smem:[#allocation2 + $0x85]]
    %v1450 = vstv %s1449
    %v1451 = vmul.f32 %v1448, %v1450
    %v1452 = vmul.f32 %v1447, %v1450
    %v1453 = vadd.f32 %v1441, %v1451
    %v1454 = vadd.f32 %v1442, %v1452
    %v1455 = vsel %vm85, %v1453, 0.0
    %v1456 = vsel %vm86, %v1454, 0.0
    %v1457 = vadd.f32 %v1430, %v1455
    %v1458 = vadd.f32 %v1431, %v1456
    %1459 = vrot.lane.b32.xlu0 %v1267, 45
    %v1460 = vpop.permute.xlu0 %1459
    %1461 = vrot.lane.b32.xlu0 %v1268, 45
    %v1462 = vpop.permute.xlu0 %1461
    %vm1463 = vcmp.lt.s32.totalorder %v47, 45
    %v1464 = vsel %vm1463, %v1460, %v1462
    %v1465 = vsel %vm1463, %v1462, %v1460
    %s1466 = sld [smem:[#allocation2 + $0x6]]
    %v1467 = vstv %s1466
    %v1468 = vmul.f32 %v1465, %v1467
    %v1469 = vmul.f32 %v1464, %v1467
    %1470 = vrot.lane.b32.xlu0 %v1277, 45
    %v1471 = vpop.permute.xlu0 %1470
    %1472 = vrot.lane.b32.xlu0 %v1286, 45
    %v1473 = vpop.permute.xlu0 %1472
    %v1474 = vsel %vm1463, %v1471, %v1473
    %v1475 = vsel %vm1463, %v1473, %v1471
    %s1476 = sld [smem:[#allocation2 + $0x86]]
    %v1477 = vstv %s1476
    %v1478 = vmul.f32 %v1475, %v1477
    %v1479 = vmul.f32 %v1474, %v1477
    %v1480 = vadd.f32 %v1468, %v1478
    %v1481 = vadd.f32 %v1469, %v1479
    %v1482 = vsel %vm89, %v1480, 0.0
    %v1483 = vsel %vm90, %v1481, 0.0
    %v1484 = vadd.f32 %v1457, %v1482
    %v1485 = vadd.f32 %v1458, %v1483
    %1486 = vrot.lane.b32.xlu0 %v1267, 35
    %v1487 = vpop.permute.xlu0 %1486
    %1488 = vrot.lane.b32.xlu0 %v1268, 35
    %v1489 = vpop.permute.xlu0 %1488
    %vm1490 = vcmp.lt.s32.totalorder %v47, 35
    %v1491 = vsel %vm1490, %v1487, %v1489
    %v1492 = vsel %vm1490, %v1489, %v1487
    %s1493 = sld [smem:[#allocation2 + $0x7]]
    %v1494 = vstv %s1493
    %v1495 = vmul.f32 %v1492, %v1494
    %v1496 = vmul.f32 %v1491, %v1494
    %1497 = vrot.lane.b32.xlu0 %v1277, 35
    %v1498 = vpop.permute.xlu0 %1497
    %1499 = vrot.lane.b32.xlu0 %v1286, 35
    %v1500 = vpop.permute.xlu0 %1499
    %v1501 = vsel %vm1490, %v1498, %v1500
    %v1502 = vsel %vm1490, %v1500, %v1498
    %s1503 = sld [smem:[#allocation2 + $0x87]]
    %v1504 = vstv %s1503
    %v1505 = vmul.f32 %v1502, %v1504
    %v1506 = vmul.f32 %v1501, %v1504
    %v1507 = vadd.f32 %v1495, %v1505
    %v1508 = vadd.f32 %v1496, %v1506
    %v1509 = vsel %vm93, %v1507, 0.0
    %v1510 = vsel %vm94, %v1508, 0.0
    %v1511 = vadd.f32 %v1484, %v1509
    %v1512 = vadd.f32 %v1485, %v1510
    %1513 = vrot.lane.b32.xlu0 %v1267, 34
    %v1514 = vpop.permute.xlu0 %1513
    %1515 = vrot.lane.b32.xlu0 %v1268, 34
    %v1516 = vpop.permute.xlu0 %1515
    %vm1517 = vcmp.lt.s32.totalorder %v47, 34
    %v1518 = vsel %vm1517, %v1514, %v1516
    %v1519 = vsel %vm1517, %v1516, %v1514
    %s1520 = sld [smem:[#allocation2 + $0x8]]
    %v1521 = vstv %s1520
    %v1522 = vmul.f32 %v1519, %v1521
    %v1523 = vmul.f32 %v1518, %v1521
    %1524 = vrot.lane.b32.xlu0 %v1277, 34
    %v1525 = vpop.permute.xlu0 %1524
    %1526 = vrot.lane.b32.xlu0 %v1286, 34
    %v1527 = vpop.permute.xlu0 %1526
    %v1528 = vsel %vm1517, %v1525, %v1527
    %v1529 = vsel %vm1517, %v1527, %v1525
    %s1530 = sld [smem:[#allocation2 + $0x88]]
    %v1531 = vstv %s1530
    %v1532 = vmul.f32 %v1529, %v1531
    %v1533 = vmul.f32 %v1528, %v1531
    %v1534 = vadd.f32 %v1522, %v1532
    %v1535 = vadd.f32 %v1523, %v1533
    %v1536 = vsel %vm95, %v1534, 0.0
    %v1537 = vsel %vm96, %v1535, 0.0
    %v1538 = vadd.f32 %v1511, %v1536
    %v1539 = vadd.f32 %v1512, %v1537
    %1540 = vrot.lane.b32.xlu0 %v1267, 33
    %v1541 = vpop.permute.xlu0 %1540
    %1542 = vrot.lane.b32.xlu0 %v1268, 33
    %v1543 = vpop.permute.xlu0 %1542
    %vm1544 = vcmp.lt.s32.totalorder %v47, 33
    %v1545 = vsel %vm1544, %v1541, %v1543
    %v1546 = vsel %vm1544, %v1543, %v1541
    %s1547 = sld [smem:[#allocation2 + $0x9]]
    %v1548 = vstv %s1547
    %v1549 = vmul.f32 %v1546, %v1548
    %v1550 = vmul.f32 %v1545, %v1548
    %1551 = vrot.lane.b32.xlu0 %v1277, 33
    %v1552 = vpop.permute.xlu0 %1551
    %1553 = vrot.lane.b32.xlu0 %v1286, 33
    %v1554 = vpop.permute.xlu0 %1553
    %v1555 = vsel %vm1544, %v1552, %v1554
    %v1556 = vsel %vm1544, %v1554, %v1552
    %s1557 = sld [smem:[#allocation2 + $0x89]]
    %v1558 = vstv %s1557
    %v1559 = vmul.f32 %v1556, %v1558
    %v1560 = vmul.f32 %v1555, %v1558
    %v1561 = vadd.f32 %v1549, %v1559
    %v1562 = vadd.f32 %v1550, %v1560
    %v1563 = vsel %vm97, %v1561, 0.0
    %v1564 = vsel %vm98, %v1562, 0.0
    %v1565 = vadd.f32 %v1538, %v1563
    %v1566 = vadd.f32 %v1539, %v1564
    %1567 = vrot.lane.b32.xlu0 %v1267, 32
    %v1568 = vpop.permute.xlu0 %1567
    %1569 = vrot.lane.b32.xlu0 %v1268, 32
    %v1570 = vpop.permute.xlu0 %1569
    %vm1571 = vcmp.lt.s32.totalorder %v47, 32
    %v1572 = vsel %vm1571, %v1568, %v1570
    %v1573 = vsel %vm1571, %v1570, %v1568
    %s1574 = sld [smem:[#allocation2 + $0xa]]
    %v1575 = vstv %s1574
    %v1576 = vmul.f32 %v1573, %v1575
    %v1577 = vmul.f32 %v1572, %v1575
    %1578 = vrot.lane.b32.xlu0 %v1277, 32
    %v1579 = vpop.permute.xlu0 %1578
    %1580 = vrot.lane.b32.xlu0 %v1286, 32
    %v1581 = vpop.permute.xlu0 %1580
    %v1582 = vsel %vm1571, %v1579, %v1581
    %v1583 = vsel %vm1571, %v1581, %v1579
    %s1584 = sld [smem:[#allocation2 + $0x8a]]
    %v1585 = vstv %s1584
    %v1586 = vmul.f32 %v1583, %v1585
    %v1587 = vmul.f32 %v1582, %v1585
    %v1588 = vadd.f32 %v1576, %v1586
    %v1589 = vadd.f32 %v1577, %v1587
    %v1590 = vsel %vm91, %v1588, 0.0
    %v1591 = vsel %vm92, %v1589, 0.0
    %v1592 = vadd.f32 %v1565, %v1590
    %v1593 = vadd.f32 %v1566, %v1591
    %1594 = vrot.lane.b32.xlu0 %v1267, 31
    %v1595 = vpop.permute.xlu0 %1594
    %1596 = vrot.lane.b32.xlu0 %v1268, 31
    %v1597 = vpop.permute.xlu0 %1596
    %vm1598 = vcmp.lt.s32.totalorder %v47, 31
    %v1599 = vsel %vm1598, %v1595, %v1597
    %v1600 = vsel %vm1598, %v1597, %v1595
    %s1601 = sld [smem:[#allocation2 + $0xb]]
    %v1602 = vstv %s1601
    %v1603 = vmul.f32 %v1600, %v1602
    %v1604 = vmul.f32 %v1599, %v1602
    %1605 = vrot.lane.b32.xlu0 %v1277, 31
    %v1606 = vpop.permute.xlu0 %1605
    %1607 = vrot.lane.b32.xlu0 %v1286, 31
    %v1608 = vpop.permute.xlu0 %1607
    %v1609 = vsel %vm1598, %v1606, %v1608
    %v1610 = vsel %vm1598, %v1608, %v1606
    %s1611 = sld [smem:[#allocation2 + $0x8b]]
    %v1612 = vstv %s1611
    %v1613 = vmul.f32 %v1610, %v1612
    %v1614 = vmul.f32 %v1609, %v1612
    %v1615 = vadd.f32 %v1603, %v1613
    %v1616 = vadd.f32 %v1604, %v1614
    %v1617 = vsel %vm99, %v1615, 0.0
    %v1618 = vsel %vm100, %v1616, 0.0
    %v1619 = vadd.f32 %v1592, %v1617
    %v1620 = vadd.f32 %v1593, %v1618
    %1621 = vrot.lane.b32.xlu0 %v1267, 30
    %v1622 = vpop.permute.xlu0 %1621
    %1623 = vrot.lane.b32.xlu0 %v1268, 30
    %v1624 = vpop.permute.xlu0 %1623
    %vm1625 = vcmp.lt.s32.totalorder %v47, 30
    %v1626 = vsel %vm1625, %v1622, %v1624
    %v1627 = vsel %vm1625, %v1624, %v1622
    %s1628 = sld [smem:[#allocation2 + $0xc]]
    %v1629 = vstv %s1628
    %v1630 = vmul.f32 %v1627, %v1629
    %v1631 = vmul.f32 %v1626, %v1629
    %1632 = vrot.lane.b32.xlu0 %v1277, 30
    %v1633 = vpop.permute.xlu0 %1632
    %1634 = vrot.lane.b32.xlu0 %v1286, 30
    %v1635 = vpop.permute.xlu0 %1634
    %v1636 = vsel %vm1625, %v1633, %v1635
    %v1637 = vsel %vm1625, %v1635, %v1633
    %s1638 = sld [smem:[#allocation2 + $0x8c]]
    %v1639 = vstv %s1638
    %v1640 = vmul.f32 %v1637, %v1639
    %v1641 = vmul.f32 %v1636, %v1639
    %v1642 = vadd.f32 %v1630, %v1640
    %v1643 = vadd.f32 %v1631, %v1641
    %v1644 = vsel %vm101, %v1642, 0.0
    %v1645 = vsel %vm102, %v1643, 0.0
    %v1646 = vadd.f32 %v1619, %v1644
    %v1647 = vadd.f32 %v1620, %v1645
    %1648 = vrot.lane.b32.xlu0 %v1267, 29
    %v1649 = vpop.permute.xlu0 %1648
    %1650 = vrot.lane.b32.xlu0 %v1268, 29
    %v1651 = vpop.permute.xlu0 %1650
    %vm1652 = vcmp.lt.s32.totalorder %v47, 29
    %v1653 = vsel %vm1652, %v1649, %v1651
    %v1654 = vsel %vm1652, %v1651, %v1649
    %s1655 = sld [smem:[#allocation2 + $0xd]]
    %v1656 = vstv %s1655
    %v1657 = vmul.f32 %v1654, %v1656
    %v1658 = vmul.f32 %v1653, %v1656
    %1659 = vrot.lane.b32.xlu0 %v1277, 29
    %v1660 = vpop.permute.xlu0 %1659
    %1661 = vrot.lane.b32.xlu0 %v1286, 29
    %v1662 = vpop.permute.xlu0 %1661
    %v1663 = vsel %vm1652, %v1660, %v1662
    %v1664 = vsel %vm1652, %v1662, %v1660
    %s1665 = sld [smem:[#allocation2 + $0x8d]]
    %v1666 = vstv %s1665
    %v1667 = vmul.f32 %v1664, %v1666
    %v1668 = vmul.f32 %v1663, %v1666
    %v1669 = vadd.f32 %v1657, %v1667
    %v1670 = vadd.f32 %v1658, %v1668
    %v1671 = vsel %vm103, %v1669, 0.0
    %v1672 = vsel %vm104, %v1670, 0.0
    %v1673 = vadd.f32 %v1646, %v1671
    %v1674 = vadd.f32 %v1647, %v1672
    %1675 = vrot.lane.b32.xlu0 %v1267, 19
    %v1676 = vpop.permute.xlu0 %1675
    %1677 = vrot.lane.b32.xlu0 %v1268, 19
    %v1678 = vpop.permute.xlu0 %1677
    %vm1679 = vcmp.lt.s32.totalorder %v47, 19
    %v1680 = vsel %vm1679, %v1676, %v1678
    %v1681 = vsel %vm1679, %v1678, %v1676
    %s1682 = sld [smem:[#allocation2 + $0xe]]
    %v1683 = vstv %s1682
    %v1684 = vmul.f32 %v1681, %v1683
    %v1685 = vmul.f32 %v1680, %v1683
    %1686 = vrot.lane.b32.xlu0 %v1277, 19
    %v1687 = vpop.permute.xlu0 %1686
    %1688 = vrot.lane.b32.xlu0 %v1286, 19
    %v1689 = vpop.permute.xlu0 %1688
    %v1690 = vsel %vm1679, %v1687, %v1689
    %v1691 = vsel %vm1679, %v1689, %v1687
    %s1692 = sld [smem:[#allocation2 + $0x8e]]
    %v1693 = vstv %s1692
    %v1694 = vmul.f32 %v1691, %v1693
    %v1695 = vmul.f32 %v1690, %v1693
    %v1696 = vadd.f32 %v1684, %v1694
    %v1697 = vadd.f32 %v1685, %v1695
    %v1698 = vsel %vm105, %v1696, 0.0
    %v1699 = vsel %vm106, %v1697, 0.0
    %v1700 = vadd.f32 %v1673, %v1698
    %v1701 = vadd.f32 %v1674, %v1699
    %1702 = vrot.lane.b32.xlu0 %v1267, 18
    %v1703 = vpop.permute.xlu0 %1702
    %1704 = vrot.lane.b32.xlu0 %v1268, 18
    %v1705 = vpop.permute.xlu0 %1704
    %vm1706 = vcmp.lt.s32.totalorder %v47, 18
    %v1707 = vsel %vm1706, %v1703, %v1705
    %v1708 = vsel %vm1706, %v1705, %v1703
    %s1709 = sld [smem:[#allocation2 + $0xf]]
    %v1710 = vstv %s1709
    %v1711 = vmul.f32 %v1708, %v1710
    %v1712 = vmul.f32 %v1707, %v1710
    %1713 = vrot.lane.b32.xlu0 %v1277, 18
    %v1714 = vpop.permute.xlu0 %1713
    %1715 = vrot.lane.b32.xlu0 %v1286, 18
    %v1716 = vpop.permute.xlu0 %1715
    %v1717 = vsel %vm1706, %v1714, %v1716
    %v1718 = vsel %vm1706, %v1716, %v1714
    %s1719 = sld [smem:[#allocation2 + $0x8f]]
    %v1720 = vstv %s1719
    %v1721 = vmul.f32 %v1718, %v1720
    %v1722 = vmul.f32 %v1717, %v1720
    %v1723 = vadd.f32 %v1711, %v1721
    %v1724 = vadd.f32 %v1712, %v1722
    %v1725 = vsel %vm107, %v1723, 0.0
    %v1726 = vsel %vm108, %v1724, 0.0
    %v1727 = vadd.f32 %v1700, %v1725
    %v1728 = vadd.f32 %v1701, %v1726
    %1729 = vrot.lane.b32.xlu0 %v1267, 17
    %v1730 = vpop.permute.xlu0 %1729
    %1731 = vrot.lane.b32.xlu0 %v1268, 17
    %v1732 = vpop.permute.xlu0 %1731
    %v1733 = vsel %vm256, %v1730, %v1732
    %v1734 = vsel %vm256, %v1732, %v1730
    %s1735 = sld [smem:[#allocation2 + $0x10]]
    %v1736 = vstv %s1735
    %v1737 = vmul.f32 %v1734, %v1736
    %v1738 = vmul.f32 %v1733, %v1736
    %1739 = vrot.lane.b32.xlu0 %v1277, 17
    %v1740 = vpop.permute.xlu0 %1739
    %1741 = vrot.lane.b32.xlu0 %v1286, 17
    %v1742 = vpop.permute.xlu0 %1741
    %v1743 = vsel %vm256, %v1740, %v1742
    %v1744 = vsel %vm256, %v1742, %v1740
    %s1745 = sld [smem:[#allocation2 + $0x90]]
    %v1746 = vstv %s1745
    %v1747 = vmul.f32 %v1744, %v1746
    %v1748 = vmul.f32 %v1743, %v1746
    %v1749 = vadd.f32 %v1737, %v1747
    %v1750 = vadd.f32 %v1738, %v1748
    %v1751 = vsel %vm57, %v1749, 0.0
    %v1752 = vsel %vm58, %v1750, 0.0
    %v1753 = vadd.f32 %v1727, %v1751
    %v1754 = vadd.f32 %v1728, %v1752
    %1755 = vrot.lane.b32.xlu0 %v1267, 16
    %v1756 = vpop.permute.xlu0 %1755
    %1757 = vrot.lane.b32.xlu0 %v1268, 16
    %v1758 = vpop.permute.xlu0 %1757
    %v1759 = vsel %vm329, %v1756, %v1758
    %v1760 = vsel %vm329, %v1758, %v1756
    %s1761 = sld [smem:[#allocation2 + $0x11]]
    %v1762 = vstv %s1761
    %v1763 = vmul.f32 %v1760, %v1762
    %v1764 = vmul.f32 %v1759, %v1762
    %1765 = vrot.lane.b32.xlu0 %v1277, 16
    %v1766 = vpop.permute.xlu0 %1765
    %1767 = vrot.lane.b32.xlu0 %v1286, 16
    %v1768 = vpop.permute.xlu0 %1767
    %v1769 = vsel %vm329, %v1766, %v1768
    %v1770 = vsel %vm329, %v1768, %v1766
    %s1771 = sld [smem:[#allocation2 + $0x91]]
    %v1772 = vstv %s1771
    %v1773 = vmul.f32 %v1770, %v1772
    %v1774 = vmul.f32 %v1769, %v1772
    %v1775 = vadd.f32 %v1763, %v1773
    %v1776 = vadd.f32 %v1764, %v1774
    %v1777 = vsel %vm55, %v1775, 0.0
    %v1778 = vsel %vm56, %v1776, 0.0
    %v1779 = vadd.f32 %v1753, %v1777
    %v1780 = vadd.f32 %v1754, %v1778
    %1781 = vrot.lane.b32.xlu0 %v1267, 15
    %v1782 = vpop.permute.xlu0 %1781
    %1783 = vrot.lane.b32.xlu0 %v1268, 15
    %v1784 = vpop.permute.xlu0 %1783
    %v1785 = vsel %vm402, %v1782, %v1784
    %v1786 = vsel %vm402, %v1784, %v1782
    %s1787 = sld [smem:[#allocation2 + $0x12]]
    %v1788 = vstv %s1787
    %v1789 = vmul.f32 %v1786, %v1788
    %v1790 = vmul.f32 %v1785, %v1788
    %1791 = vrot.lane.b32.xlu0 %v1277, 15
    %v1792 = vpop.permute.xlu0 %1791
    %1793 = vrot.lane.b32.xlu0 %v1286, 15
    %v1794 = vpop.permute.xlu0 %1793
    %v1795 = vsel %vm402, %v1792, %v1794
    %v1796 = vsel %vm402, %v1794, %v1792
    %s1797 = sld [smem:[#allocation2 + $0x92]]
    %v1798 = vstv %s1797
    %v1799 = vmul.f32 %v1796, %v1798
    %v1800 = vmul.f32 %v1795, %v1798
    %v1801 = vadd.f32 %v1789, %v1799
    %v1802 = vadd.f32 %v1790, %v1800
    %v1803 = vsel %vm61, %v1801, 0.0
    %v1804 = vsel %vm62, %v1802, 0.0
    %v1805 = vadd.f32 %v1779, %v1803
    %v1806 = vadd.f32 %v1780, %v1804
    %1807 = vrot.lane.b32.xlu0 %v1267, 14
    %v1808 = vpop.permute.xlu0 %1807
    %1809 = vrot.lane.b32.xlu0 %v1268, 14
    %v1810 = vpop.permute.xlu0 %1809
    %vm1811 = vcmp.lt.s32.totalorder %v47, 14
    %v1812 = vsel %vm1811, %v1808, %v1810
    %v1813 = vsel %vm1811, %v1810, %v1808
    %s1814 = sld [smem:[#allocation2 + $0x13]]
    %v1815 = vstv %s1814
    %v1816 = vmul.f32 %v1813, %v1815
    %v1817 = vmul.f32 %v1812, %v1815
    %1818 = vrot.lane.b32.xlu0 %v1277, 14
    %v1819 = vpop.permute.xlu0 %1818
    %1820 = vrot.lane.b32.xlu0 %v1286, 14
    %v1821 = vpop.permute.xlu0 %1820
    %v1822 = vsel %vm1811, %v1819, %v1821
    %v1823 = vsel %vm1811, %v1821, %v1819
    %s1824 = sld [smem:[#allocation2 + $0x93]]
    %v1825 = vstv %s1824
    %v1826 = vmul.f32 %v1823, %v1825
    %v1827 = vmul.f32 %v1822, %v1825
    %v1828 = vadd.f32 %v1816, %v1826
    %v1829 = vadd.f32 %v1817, %v1827
    %v1830 = vsel %vm109, %v1828, 0.0
    %v1831 = vsel %vm110, %v1829, 0.0
    %v1832 = vadd.f32 %v1805, %v1830
    %v1833 = vadd.f32 %v1806, %v1831
    %1834 = vrot.lane.b32.xlu0 %v1267, 13
    %v1835 = vpop.permute.xlu0 %1834
    %1836 = vrot.lane.b32.xlu0 %v1268, 13
    %v1837 = vpop.permute.xlu0 %1836
    %vm1838 = vcmp.lt.s32.totalorder %v47, 13
    %v1839 = vsel %vm1838, %v1835, %v1837
    %v1840 = vsel %vm1838, %v1837, %v1835
    %s1841 = sld [smem:[#allocation2 + $0x14]]
    %v1842 = vstv %s1841
    %v1843 = vmul.f32 %v1840, %v1842
    %v1844 = vmul.f32 %v1839, %v1842
    %1845 = vrot.lane.b32.xlu0 %v1277, 13
    %v1846 = vpop.permute.xlu0 %1845
    %1847 = vrot.lane.b32.xlu0 %v1286, 13
    %v1848 = vpop.permute.xlu0 %1847
    %v1849 = vsel %vm1838, %v1846, %v1848
    %v1850 = vsel %vm1838, %v1848, %v1846
    %s1851 = sld [smem:[#allocation2 + $0x94]]
    %v1852 = vstv %s1851
    %v1853 = vmul.f32 %v1850, %v1852
    %v1854 = vmul.f32 %v1849, %v1852
    %v1855 = vadd.f32 %v1843, %v1853
    %v1856 = vadd.f32 %v1844, %v1854
    %v1857 = vsel %vm111, %v1855, 0.0
    %v1858 = vsel %vm112, %v1856, 0.0
    %v1859 = vadd.f32 %v1832, %v1857
    %v1860 = vadd.f32 %v1833, %v1858
    %1861 = vrot.lane.b32.xlu0 %v1267, 3
    %v1862 = vpop.permute.xlu0 %1861
    %1863 = vrot.lane.b32.xlu0 %v1268, 3
    %v1864 = vpop.permute.xlu0 %1863
    %vm1865 = vcmp.lt.s32.totalorder %v47, 3
    %v1866 = vsel %vm1865, %v1862, %v1864
    %v1867 = vsel %vm1865, %v1864, %v1862
    %s1868 = sld [smem:[#allocation2 + $0x15]]
    %v1869 = vstv %s1868
    %v1870 = vmul.f32 %v1867, %v1869
    %v1871 = vmul.f32 %v1866, %v1869
    %1872 = vrot.lane.b32.xlu0 %v1277, 3
    %v1873 = vpop.permute.xlu0 %1872
    %1874 = vrot.lane.b32.xlu0 %v1286, 3
    %v1875 = vpop.permute.xlu0 %1874
    %v1876 = vsel %vm1865, %v1873, %v1875
    %v1877 = vsel %vm1865, %v1875, %v1873
    %s1878 = sld [smem:[#allocation2 + $0x95]]
    %v1879 = vstv %s1878
    %v1880 = vmul.f32 %v1877, %v1879
    %v1881 = vmul.f32 %v1876, %v1879
    %v1882 = vadd.f32 %v1870, %v1880
    %v1883 = vadd.f32 %v1871, %v1881
    %v1884 = vsel %vm69, %v1882, 0.0
    %v1885 = vsel %vm70, %v1883, 0.0
    %v1886 = vadd.f32 %v1859, %v1884
    %v1887 = vadd.f32 %v1860, %v1885
    %1888 = vrot.lane.b32.xlu0 %v1267, 2
    %v1889 = vpop.permute.xlu0 %1888
    %1890 = vrot.lane.b32.xlu0 %v1268, 2
    %v1891 = vpop.permute.xlu0 %1890
    %vm1892 = vcmp.lt.s32.totalorder %v47, 2
    %v1893 = vsel %vm1892, %v1889, %v1891
    %v1894 = vsel %vm1892, %v1891, %v1889
    %s1895 = sld [smem:[#allocation2 + $0x16]]
    %v1896 = vstv %s1895
    %v1897 = vmul.f32 %v1894, %v1896
    %v1898 = vmul.f32 %v1893, %v1896
    %1899 = vrot.lane.b32.xlu0 %v1277, 2
    %v1900 = vpop.permute.xlu0 %1899
    %1901 = vrot.lane.b32.xlu0 %v1286, 2
    %v1902 = vpop.permute.xlu0 %1901
    %v1903 = vsel %vm1892, %v1900, %v1902
    %v1904 = vsel %vm1892, %v1902, %v1900
    %s1905 = sld [smem:[#allocation2 + $0x96]]
    %v1906 = vstv %s1905
    %v1907 = vmul.f32 %v1904, %v1906
    %v1908 = vmul.f32 %v1903, %v1906
    %v1909 = vadd.f32 %v1897, %v1907
    %v1910 = vadd.f32 %v1898, %v1908
    %v1911 = vsel %vm75, %v1909, 0.0
    %v1912 = vsel %vm76, %v1910, 0.0
    %v1913 = vadd.f32 %v1886, %v1911
    %v1914 = vadd.f32 %v1887, %v1912
    %1915 = vrot.lane.b32.xlu0 %v1267, 1
    %v1916 = vpop.permute.xlu0 %1915
    %1917 = vrot.lane.b32.xlu0 %v1268, 1
    %v1918 = vpop.permute.xlu0 %1917
    %v1919 = vsel %vm475, %v1916, %v1918
    %v1920 = vsel %vm475, %v1918, %v1916
    %s1921 = sld [smem:[#allocation2 + $0x17]]
    %v1922 = vstv %s1921
    %v1923 = vmul.f32 %v1920, %v1922
    %v1924 = vmul.f32 %v1919, %v1922
    %1925 = vrot.lane.b32.xlu0 %v1277, 1
    %v1926 = vpop.permute.xlu0 %1925
    %1927 = vrot.lane.b32.xlu0 %v1286, 1
    %v1928 = vpop.permute.xlu0 %1927
    %v1929 = vsel %vm475, %v1926, %v1928
    %v1930 = vsel %vm475, %v1928, %v1926
    %s1931 = sld [smem:[#allocation2 + $0x97]]
    %v1932 = vstv %s1931
    %v1933 = vmul.f32 %v1930, %v1932
    %v1934 = vmul.f32 %v1929, %v1932
    %v1935 = vadd.f32 %v1923, %v1933
    %v1936 = vadd.f32 %v1924, %v1934
    %v1937 = vsel %vm53, %v1935, 0.0
    %v1938 = vsel %vm54, %v1936, 0.0
    %v1939 = vadd.f32 %v1913, %v1937
    %v1940 = vadd.f32 %v1914, %v1938
    %1941 = vrot.lane.b32.xlu0 %v1267, 127
    %v1942 = vpop.permute.xlu0 %1941
    %1943 = vrot.lane.b32.xlu0 %v1268, 127
    %v1944 = vpop.permute.xlu0 %1943
    %v1945 = vsel %vm548, %v1942, %v1944
    %v1946 = vsel %vm548, %v1944, %v1942
    %s1947 = sld [smem:[#allocation2 + $0x19]]
    %v1948 = vstv %s1947
    %v1949 = vmul.f32 %v1945, %v1948
    %v1950 = vmul.f32 %v1946, %v1948
    %1951 = vrot.lane.b32.xlu0 %v1277, 127
    %v1952 = vpop.permute.xlu0 %1951
    %1953 = vrot.lane.b32.xlu0 %v1286, 127
    %v1954 = vpop.permute.xlu0 %1953
    %v1955 = vsel %vm548, %v1952, %v1954
    %v1956 = vsel %vm548, %v1954, %v1952
    %s1957 = sld [smem:[#allocation2 + $0x99]]
    %v1958 = vstv %s1957
    %v1959 = vmul.f32 %v1955, %v1958
    %v1960 = vmul.f32 %v1956, %v1958
    %v1961 = vadd.f32 %v1949, %v1959
    %v1962 = vadd.f32 %v1950, %v1960
    %v1963 = vsel %vm59, %v1961, 0.0
    %v1964 = vsel %vm60, %v1962, 0.0
    %v1965 = vadd.f32 %v1939, %v1963
    %v1966 = vadd.f32 %v1940, %v1964
    %1967 = vrot.lane.b32.xlu0 %v1267, 126
    %v1968 = vpop.permute.xlu0 %1967
    %1969 = vrot.lane.b32.xlu0 %v1268, 126
    %v1970 = vpop.permute.xlu0 %1969
    %vm1971 = vcmp.lt.s32.totalorder %v47, 126
    %v1972 = vsel %vm1971, %v1968, %v1970
    %v1973 = vsel %vm1971, %v1970, %v1968
    %s1974 = sld [smem:[#allocation2 + $0x1a]]
    %v1975 = vstv %s1974
    %v1976 = vmul.f32 %v1972, %v1975
    %v1977 = vmul.f32 %v1973, %v1975
    %1978 = vrot.lane.b32.xlu0 %v1277, 126
    %v1979 = vpop.permute.xlu0 %1978
    %1980 = vrot.lane.b32.xlu0 %v1286, 126
    %v1981 = vpop.permute.xlu0 %1980
    %v1982 = vsel %vm1971, %v1979, %v1981
    %v1983 = vsel %vm1971, %v1981, %v1979
    %s1984 = sld [smem:[#allocation2 + $0x9a]]
    %v1985 = vstv %s1984
    %v1986 = vmul.f32 %v1982, %v1985
    %v1987 = vmul.f32 %v1983, %v1985
    %v1988 = vadd.f32 %v1976, %v1986
    %v1989 = vadd.f32 %v1977, %v1987
    %v1990 = vsel %vm83, %v1988, 0.0
    %v1991 = vsel %vm84, %v1989, 0.0
    %v1992 = vadd.f32 %v1965, %v1990
    %v1993 = vadd.f32 %v1966, %v1991
    %1994 = vrot.lane.b32.xlu0 %v1267, 125
    %v1995 = vpop.permute.xlu0 %1994
    %1996 = vrot.lane.b32.xlu0 %v1268, 125
    %v1997 = vpop.permute.xlu0 %1996
    %vm1998 = vcmp.lt.s32.totalorder %v47, 125
    %v1999 = vsel %vm1998, %v1995, %v1997
    %v2000 = vsel %vm1998, %v1997, %v1995
    %s2001 = sld [smem:[#allocation2 + $0x1b]]
    %v2002 = vstv %s2001
    %v2003 = vmul.f32 %v1999, %v2002
    %v2004 = vmul.f32 %v2000, %v2002
    %2005 = vrot.lane.b32.xlu0 %v1277, 125
    %v2006 = vpop.permute.xlu0 %2005
    %2007 = vrot.lane.b32.xlu0 %v1286, 125
    %v2008 = vpop.permute.xlu0 %2007
    %v2009 = vsel %vm1998, %v2006, %v2008
    %v2010 = vsel %vm1998, %v2008, %v2006
    %s2011 = sld [smem:[#allocation2 + $0x9b]]
    %v2012 = vstv %s2011
    %v2013 = vmul.f32 %v2009, %v2012
    %v2014 = vmul.f32 %v2010, %v2012
    %v2015 = vadd.f32 %v2003, %v2013
    %v2016 = vadd.f32 %v2004, %v2014
    %v2017 = vsel %vm87, %v2015, 0.0
    %v2018 = vsel %vm88, %v2016, 0.0
    %v2019 = vadd.f32 %v1992, %v2017
    %v2020 = vadd.f32 %v1993, %v2018
    %2021 = vrot.lane.b32.xlu0 %v1267, 115
    %v2022 = vpop.permute.xlu0 %2021
    %2023 = vrot.lane.b32.xlu0 %v1268, 115
    %v2024 = vpop.permute.xlu0 %2023
    %vm2025 = vcmp.lt.s32.totalorder %v47, 115
    %v2026 = vsel %vm2025, %v2022, %v2024
    %v2027 = vsel %vm2025, %v2024, %v2022
    %s2028 = sld [smem:[#allocation2 + $0x1c]]
    %v2029 = vstv %s2028
    %v2030 = vmul.f32 %v2026, %v2029
    %v2031 = vmul.f32 %v2027, %v2029
    %2032 = vrot.lane.b32.xlu0 %v1277, 115
    %v2033 = vpop.permute.xlu0 %2032
    %2034 = vrot.lane.b32.xlu0 %v1286, 115
    %v2035 = vpop.permute.xlu0 %2034
    %v2036 = vsel %vm2025, %v2033, %v2035
    %v2037 = vsel %vm2025, %v2035, %v2033
    %s2038 = sld [smem:[#allocation2 + $0x9c]]
    %v2039 = vstv %s2038
    %v2040 = vmul.f32 %v2036, %v2039
    %v2041 = vmul.f32 %v2037, %v2039
    %v2042 = vadd.f32 %v2030, %v2040
    %v2043 = vadd.f32 %v2031, %v2041
    %v2044 = vsel %vm113, %v2042, 0.0
    %v2045 = vsel %vm114, %v2043, 0.0
    %v2046 = vadd.f32 %v2019, %v2044
    %v2047 = vadd.f32 %v2020, %v2045
    %2048 = vrot.lane.b32.xlu0 %v1267, 114
    %v2049 = vpop.permute.xlu0 %2048
    %2050 = vrot.lane.b32.xlu0 %v1268, 114
    %v2051 = vpop.permute.xlu0 %2050
    %vm2052 = vcmp.lt.s32.totalorder %v47, 114
    %v2053 = vsel %vm2052, %v2049, %v2051
    %v2054 = vsel %vm2052, %v2051, %v2049
    %s2055 = sld [smem:[#allocation2 + $0x1d]]
    %v2056 = vstv %s2055
    %v2057 = vmul.f32 %v2053, %v2056
    %v2058 = vmul.f32 %v2054, %v2056
    %2059 = vrot.lane.b32.xlu0 %v1277, 114
    %v2060 = vpop.permute.xlu0 %2059
    %2061 = vrot.lane.b32.xlu0 %v1286, 114
    %v2062 = vpop.permute.xlu0 %2061
    %v2063 = vsel %vm2052, %v2060, %v2062
    %v2064 = vsel %vm2052, %v2062, %v2060
    %s2065 = sld [smem:[#allocation2 + $0x9d]]
    %v2066 = vstv %s2065
    %v2067 = vmul.f32 %v2063, %v2066
    %v2068 = vmul.f32 %v2064, %v2066
    %v2069 = vadd.f32 %v2057, %v2067
    %v2070 = vadd.f32 %v2058, %v2068
    %v2071 = vsel %vm115, %v2069, 0.0
    %v2072 = vsel %vm116, %v2070, 0.0
    %v2073 = vadd.f32 %v2046, %v2071
    %v2074 = vadd.f32 %v2047, %v2072
    %2075 = vrot.lane.b32.xlu0 %v1267, 113
    %v2076 = vpop.permute.xlu0 %2075
    %2077 = vrot.lane.b32.xlu0 %v1268, 113
    %v2078 = vpop.permute.xlu0 %2077
    %v2079 = vsel %vm621, %v2076, %v2078
    %v2080 = vsel %vm621, %v2078, %v2076
    %s2081 = sld [smem:[#allocation2 + $0x1e]]
    %v2082 = vstv %s2081
    %v2083 = vmul.f32 %v2079, %v2082
    %v2084 = vmul.f32 %v2080, %v2082
    %2085 = vrot.lane.b32.xlu0 %v1277, 113
    %v2086 = vpop.permute.xlu0 %2085
    %2087 = vrot.lane.b32.xlu0 %v1286, 113
    %v2088 = vpop.permute.xlu0 %2087
    %v2089 = vsel %vm621, %v2086, %v2088
    %v2090 = vsel %vm621, %v2088, %v2086
    %s2091 = sld [smem:[#allocation2 + $0x9e]]
    %v2092 = vstv %s2091
    %v2093 = vmul.f32 %v2089, %v2092
    %v2094 = vmul.f32 %v2090, %v2092
    %v2095 = vadd.f32 %v2083, %v2093
    %v2096 = vadd.f32 %v2084, %v2094
    %v2097 = vsel %vm65, %v2095, 0.0
    %v2098 = vsel %vm66, %v2096, 0.0
    %v2099 = vadd.f32 %v2073, %v2097
    %v2100 = vadd.f32 %v2074, %v2098
    %2101 = vrot.lane.b32.xlu0 %v1267, 112
    %v2102 = vpop.permute.xlu0 %2101
    %2103 = vrot.lane.b32.xlu0 %v1268, 112
    %v2104 = vpop.permute.xlu0 %2103
    %v2105 = vsel %vm694, %v2102, %v2104
    %v2106 = vsel %vm694, %v2104, %v2102
    %s2107 = sld [smem:[#allocation2 + $0x1f]]
    %v2108 = vstv %s2107
    %v2109 = vmul.f32 %v2105, %v2108
    %v2110 = vmul.f32 %v2106, %v2108
    %2111 = vrot.lane.b32.xlu0 %v1277, 112
    %v2112 = vpop.permute.xlu0 %2111
    %2113 = vrot.lane.b32.xlu0 %v1286, 112
    %v2114 = vpop.permute.xlu0 %2113
    %v2115 = vsel %vm694, %v2112, %v2114
    %v2116 = vsel %vm694, %v2114, %v2112
    %s2117 = sld [smem:[#allocation2 + $0x9f]]
    %v2118 = vstv %s2117
    %v2119 = vmul.f32 %v2115, %v2118
    %v2120 = vmul.f32 %v2116, %v2118
    %v2121 = vadd.f32 %v2109, %v2119
    %v2122 = vadd.f32 %v2110, %v2120
    %v2123 = vsel %vm63, %v2121, 0.0
    %v2124 = vsel %vm64, %v2122, 0.0
    %v2125 = vadd.f32 %v2099, %v2123
    %v2126 = vadd.f32 %v2100, %v2124
    %2127 = vrot.lane.b32.xlu0 %v1267, 111
    %v2128 = vpop.permute.xlu0 %2127
    %2129 = vrot.lane.b32.xlu0 %v1268, 111
    %v2130 = vpop.permute.xlu0 %2129
    %v2131 = vsel %vm767, %v2128, %v2130
    %v2132 = vsel %vm767, %v2130, %v2128
    %s2133 = sld [smem:[#allocation2 + $0x20]]
    %v2134 = vstv %s2133
    %v2135 = vmul.f32 %v2131, %v2134
    %v2136 = vmul.f32 %v2132, %v2134
    %2137 = vrot.lane.b32.xlu0 %v1277, 111
    %v2138 = vpop.permute.xlu0 %2137
    %2139 = vrot.lane.b32.xlu0 %v1286, 111
    %v2140 = vpop.permute.xlu0 %2139
    %v2141 = vsel %vm767, %v2138, %v2140
    %v2142 = vsel %vm767, %v2140, %v2138
    %s2143 = sld [smem:[#allocation2 + $0xa0]]
    %v2144 = vstv %s2143
    %v2145 = vmul.f32 %v2141, %v2144
    %v2146 = vmul.f32 %v2142, %v2144
    %v2147 = vadd.f32 %v2135, %v2145
    %v2148 = vadd.f32 %v2136, %v2146
    %v2149 = vsel %vm67, %v2147, 0.0
    %v2150 = vsel %vm68, %v2148, 0.0
    %v2151 = vadd.f32 %v2125, %v2149
    %v2152 = vadd.f32 %v2126, %v2150
    %2153 = vrot.lane.b32.xlu0 %v1267, 110
    %v2154 = vpop.permute.xlu0 %2153
    %2155 = vrot.lane.b32.xlu0 %v1268, 110
    %v2156 = vpop.permute.xlu0 %2155
    %vm2157 = vcmp.lt.s32.totalorder %v47, 110
    %v2158 = vsel %vm2157, %v2154, %v2156
    %v2159 = vsel %vm2157, %v2156, %v2154
    %s2160 = sld [smem:[#allocation2 + $0x21]]
    %v2161 = vstv %s2160
    %v2162 = vmul.f32 %v2158, %v2161
    %v2163 = vmul.f32 %v2159, %v2161
    %2164 = vrot.lane.b32.xlu0 %v1277, 110
    %v2165 = vpop.permute.xlu0 %2164
    %2166 = vrot.lane.b32.xlu0 %v1286, 110
    %v2167 = vpop.permute.xlu0 %2166
    %v2168 = vsel %vm2157, %v2165, %v2167
    %v2169 = vsel %vm2157, %v2167, %v2165
    %s2170 = sld [smem:[#allocation2 + $0xa1]]
    %v2171 = vstv %s2170
    %v2172 = vmul.f32 %v2168, %v2171
    %v2173 = vmul.f32 %v2169, %v2171
    %v2174 = vadd.f32 %v2162, %v2172
    %v2175 = vadd.f32 %v2163, %v2173
    %v2176 = vsel %vm117, %v2174, 0.0
    %v2177 = vsel %vm118, %v2175, 0.0
    %v2178 = vadd.f32 %v2151, %v2176
    %v2179 = vadd.f32 %v2152, %v2177
    %2180 = vrot.lane.b32.xlu0 %v1267, 109
    %v2181 = vpop.permute.xlu0 %2180
    %2182 = vrot.lane.b32.xlu0 %v1268, 109
    %v2183 = vpop.permute.xlu0 %2182
    %vm2184 = vcmp.lt.s32.totalorder %v47, 109
    %v2185 = vsel %vm2184, %v2181, %v2183
    %v2186 = vsel %vm2184, %v2183, %v2181
    %s2187 = sld [smem:[#allocation2 + $0x22]]
    %v2188 = vstv %s2187
    %v2189 = vmul.f32 %v2185, %v2188
    %v2190 = vmul.f32 %v2186, %v2188
    %2191 = vrot.lane.b32.xlu0 %v1277, 109
    %v2192 = vpop.permute.xlu0 %2191
    %2193 = vrot.lane.b32.xlu0 %v1286, 109
    %v2194 = vpop.permute.xlu0 %2193
    %v2195 = vsel %vm2184, %v2192, %v2194
    %v2196 = vsel %vm2184, %v2194, %v2192
    %s2197 = sld [smem:[#allocation2 + $0xa2]]
    %v2198 = vstv %s2197
    %v2199 = vmul.f32 %v2195, %v2198
    %v2200 = vmul.f32 %v2196, %v2198
    %v2201 = vadd.f32 %v2189, %v2199
    %v2202 = vadd.f32 %v2190, %v2200
    %v2203 = vsel %vm119, %v2201, 0.0
    %v2204 = vsel %vm120, %v2202, 0.0
    %v2205 = vadd.f32 %v2178, %v2203
    %v2206 = vadd.f32 %v2179, %v2204
    %2207 = vrot.lane.b32.xlu0 %v1267, 99
    %v2208 = vpop.permute.xlu0 %2207
    %2209 = vrot.lane.b32.xlu0 %v1268, 99
    %v2210 = vpop.permute.xlu0 %2209
    %vm2211 = vcmp.lt.s32.totalorder %v47, 99
    %v2212 = vsel %vm2211, %v2208, %v2210
    %v2213 = vsel %vm2211, %v2210, %v2208
    %s2214 = sld [smem:[#allocation2 + $0x23]]
    %v2215 = vstv %s2214
    %v2216 = vmul.f32 %v2212, %v2215
    %v2217 = vmul.f32 %v2213, %v2215
    %2218 = vrot.lane.b32.xlu0 %v1277, 99
    %v2219 = vpop.permute.xlu0 %2218
    %2220 = vrot.lane.b32.xlu0 %v1286, 99
    %v2221 = vpop.permute.xlu0 %2220
    %v2222 = vsel %vm2211, %v2219, %v2221
    %v2223 = vsel %vm2211, %v2221, %v2219
    %s2224 = sld [smem:[#allocation2 + $0xa3]]
    %v2225 = vstv %s2224
    %v2226 = vmul.f32 %v2222, %v2225
    %v2227 = vmul.f32 %v2223, %v2225
    %v2228 = vadd.f32 %v2216, %v2226
    %v2229 = vadd.f32 %v2217, %v2227
    %v2230 = vsel %vm123, %v2228, 0.0
    %v2231 = vsel %vm124, %v2229, 0.0
    %v2232 = vadd.f32 %v2205, %v2230
    %v2233 = vadd.f32 %v2206, %v2231
    %2234 = vrot.lane.b32.xlu0 %v1267, 98
    %v2235 = vpop.permute.xlu0 %2234
    %2236 = vrot.lane.b32.xlu0 %v1268, 98
    %v2237 = vpop.permute.xlu0 %2236
    %vm2238 = vcmp.lt.s32.totalorder %v47, 98
    %v2239 = vsel %vm2238, %v2235, %v2237
    %v2240 = vsel %vm2238, %v2237, %v2235
    %s2241 = sld [smem:[#allocation2 + $0x24]]
    %v2242 = vstv %s2241
    %v2243 = vmul.f32 %v2239, %v2242
    %v2244 = vmul.f32 %v2240, %v2242
    %2245 = vrot.lane.b32.xlu0 %v1277, 98
    %v2246 = vpop.permute.xlu0 %2245
    %2247 = vrot.lane.b32.xlu0 %v1286, 98
    %v2248 = vpop.permute.xlu0 %2247
    %v2249 = vsel %vm2238, %v2246, %v2248
    %v2250 = vsel %vm2238, %v2248, %v2246
    %s2251 = sld [smem:[#allocation2 + $0xa4]]
    %v2252 = vstv %s2251
    %v2253 = vmul.f32 %v2249, %v2252
    %v2254 = vmul.f32 %v2250, %v2252
    %v2255 = vadd.f32 %v2243, %v2253
    %v2256 = vadd.f32 %v2244, %v2254
    %v2257 = vsel %vm125, %v2255, 0.0
    %v2258 = vsel %vm126, %v2256, 0.0
    %v2259 = vadd.f32 %v2232, %v2257
    %v2260 = vadd.f32 %v2233, %v2258
    %2261 = vrot.lane.b32.xlu0 %v1267, 97
    %v2262 = vpop.permute.xlu0 %2261
    %2263 = vrot.lane.b32.xlu0 %v1268, 97
    %v2264 = vpop.permute.xlu0 %2263
    %vm2265 = vcmp.lt.s32.totalorder %v47, 97
    %v2266 = vsel %vm2265, %v2262, %v2264
    %v2267 = vsel %vm2265, %v2264, %v2262
    %s2268 = sld [smem:[#allocation2 + $0x25]]
    %v2269 = vstv %s2268
    %v2270 = vmul.f32 %v2266, %v2269
    %v2271 = vmul.f32 %v2267, %v2269
    %2272 = vrot.lane.b32.xlu0 %v1277, 97
    %v2273 = vpop.permute.xlu0 %2272
    %2274 = vrot.lane.b32.xlu0 %v1286, 97
    %v2275 = vpop.permute.xlu0 %2274
    %v2276 = vsel %vm2265, %v2273, %v2275
    %v2277 = vsel %vm2265, %v2275, %v2273
    %s2278 = sld [smem:[#allocation2 + $0xa5]]
    %v2279 = vstv %s2278
    %v2280 = vmul.f32 %v2276, %v2279
    %v2281 = vmul.f32 %v2277, %v2279
    %v2282 = vadd.f32 %v2270, %v2280
    %v2283 = vadd.f32 %v2271, %v2281
    %v2284 = vsel %vm127, %v2282, 0.0
    %v2285 = vsel %vm128, %v2283, 0.0
    %v2286 = vadd.f32 %v2259, %v2284
    %v2287 = vadd.f32 %v2260, %v2285
    %2288 = vrot.lane.b32.xlu0 %v1267, 96
    %v2289 = vpop.permute.xlu0 %2288
    %2290 = vrot.lane.b32.xlu0 %v1268, 96
    %v2291 = vpop.permute.xlu0 %2290
    %vm2292 = vcmp.lt.s32.totalorder %v47, 96
    %v2293 = vsel %vm2292, %v2289, %v2291
    %v2294 = vsel %vm2292, %v2291, %v2289
    %s2295 = sld [smem:[#allocation2 + $0x26]]
    %v2296 = vstv %s2295
    %v2297 = vmul.f32 %v2293, %v2296
    %v2298 = vmul.f32 %v2294, %v2296
    %2299 = vrot.lane.b32.xlu0 %v1277, 96
    %v2300 = vpop.permute.xlu0 %2299
    %2301 = vrot.lane.b32.xlu0 %v1286, 96
    %v2302 = vpop.permute.xlu0 %2301
    %v2303 = vsel %vm2292, %v2300, %v2302
    %v2304 = vsel %vm2292, %v2302, %v2300
    %s2305 = sld [smem:[#allocation2 + $0xa6]]
    %v2306 = vstv %s2305
    %v2307 = vmul.f32 %v2303, %v2306
    %v2308 = vmul.f32 %v2304, %v2306
    %v2309 = vadd.f32 %v2297, %v2307
    %v2310 = vadd.f32 %v2298, %v2308
    %v2311 = vsel %vm121, %v2309, 0.0
    %v2312 = vsel %vm122, %v2310, 0.0
    %v2313 = vadd.f32 %v2286, %v2311
    %v2314 = vadd.f32 %v2287, %v2312
    %2315 = vrot.lane.b32.xlu0 %v1267, 95
    %v2316 = vpop.permute.xlu0 %2315
    %2317 = vrot.lane.b32.xlu0 %v1268, 95
    %v2318 = vpop.permute.xlu0 %2317
    %vm2319 = vcmp.lt.s32.totalorder %v47, 95
    %v2320 = vsel %vm2319, %v2316, %v2318
    %v2321 = vsel %vm2319, %v2318, %v2316
    %s2322 = sld [smem:[#allocation2 + $0x27]]
    %v2323 = vstv %s2322
    %v2324 = vmul.f32 %v2320, %v2323
    %v2325 = vmul.f32 %v2321, %v2323
    %2326 = vrot.lane.b32.xlu0 %v1277, 95
    %v2327 = vpop.permute.xlu0 %2326
    %2328 = vrot.lane.b32.xlu0 %v1286, 95
    %v2329 = vpop.permute.xlu0 %2328
    %v2330 = vsel %vm2319, %v2327, %v2329
    %v2331 = vsel %vm2319, %v2329, %v2327
    %s2332 = sld [smem:[#allocation2 + $0xa7]]
    %v2333 = vstv %s2332
    %v2334 = vmul.f32 %v2330, %v2333
    %v2335 = vmul.f32 %v2331, %v2333
    %v2336 = vadd.f32 %v2324, %v2334
    %v2337 = vadd.f32 %v2325, %v2335
    %v2338 = vsel %vm129, %v2336, 0.0
    %v2339 = vsel %vm130, %v2337, 0.0
    %v2340 = vadd.f32 %v2313, %v2338
    %v2341 = vadd.f32 %v2314, %v2339
    %2342 = vrot.lane.b32.xlu0 %v1267, 94
    %v2343 = vpop.permute.xlu0 %2342
    %2344 = vrot.lane.b32.xlu0 %v1268, 94
    %v2345 = vpop.permute.xlu0 %2344
    %vm2346 = vcmp.lt.s32.totalorder %v47, 94
    %v2347 = vsel %vm2346, %v2343, %v2345
    %v2348 = vsel %vm2346, %v2345, %v2343
    %s2349 = sld [smem:[#allocation2 + $0x28]]
    %v2350 = vstv %s2349
    %v2351 = vmul.f32 %v2347, %v2350
    %v2352 = vmul.f32 %v2348, %v2350
    %2353 = vrot.lane.b32.xlu0 %v1277, 94
    %v2354 = vpop.permute.xlu0 %2353
    %2355 = vrot.lane.b32.xlu0 %v1286, 94
    %v2356 = vpop.permute.xlu0 %2355
    %v2357 = vsel %vm2346, %v2354, %v2356
    %v2358 = vsel %vm2346, %v2356, %v2354
    %s2359 = sld [smem:[#allocation2 + $0xa8]]
    %v2360 = vstv %s2359
    %v2361 = vmul.f32 %v2357, %v2360
    %v2362 = vmul.f32 %v2358, %v2360
    %v2363 = vadd.f32 %v2351, %v2361
    %v2364 = vadd.f32 %v2352, %v2362
    %v2365 = vsel %vm131, %v2363, 0.0
    %v2366 = vsel %vm132, %v2364, 0.0
    %v2367 = vadd.f32 %v2340, %v2365
    %v2368 = vadd.f32 %v2341, %v2366
    %2369 = vrot.lane.b32.xlu0 %v1267, 93
    %v2370 = vpop.permute.xlu0 %2369
    %2371 = vrot.lane.b32.xlu0 %v1268, 93
    %v2372 = vpop.permute.xlu0 %2371
    %vm2373 = vcmp.lt.s32.totalorder %v47, 93
    %v2374 = vsel %vm2373, %v2370, %v2372
    %v2375 = vsel %vm2373, %v2372, %v2370
    %s2376 = sld [smem:[#allocation2 + $0x29]]
    %v2377 = vstv %s2376
    %v2378 = vmul.f32 %v2374, %v2377
    %v2379 = vmul.f32 %v2375, %v2377
    %2380 = vrot.lane.b32.xlu0 %v1277, 93
    %v2381 = vpop.permute.xlu0 %2380
    %2382 = vrot.lane.b32.xlu0 %v1286, 93
    %v2383 = vpop.permute.xlu0 %2382
    %v2384 = vsel %vm2373, %v2381, %v2383
    %v2385 = vsel %vm2373, %v2383, %v2381
    %s2386 = sld [smem:[#allocation2 + $0xa9]]
    %v2387 = vstv %s2386
    %v2388 = vmul.f32 %v2384, %v2387
    %v2389 = vmul.f32 %v2385, %v2387
    %v2390 = vadd.f32 %v2378, %v2388
    %v2391 = vadd.f32 %v2379, %v2389
    %v2392 = vsel %vm133, %v2390, 0.0
    %v2393 = vsel %vm134, %v2391, 0.0
    %v2394 = vadd.f32 %v2367, %v2392
    %v2395 = vadd.f32 %v2368, %v2393
    %2396 = vrot.lane.b32.xlu0 %v1267, 83
    %v2397 = vpop.permute.xlu0 %2396
    %2398 = vrot.lane.b32.xlu0 %v1268, 83
    %v2399 = vpop.permute.xlu0 %2398
    %vm2400 = vcmp.lt.s32.totalorder %v47, 83
    %v2401 = vsel %vm2400, %v2397, %v2399
    %v2402 = vsel %vm2400, %v2399, %v2397
    %s2403 = sld [smem:[#allocation2 + $0x2a]]
    %v2404 = vstv %s2403
    %v2405 = vmul.f32 %v2401, %v2404
    %v2406 = vmul.f32 %v2402, %v2404
    %2407 = vrot.lane.b32.xlu0 %v1277, 83
    %v2408 = vpop.permute.xlu0 %2407
    %2409 = vrot.lane.b32.xlu0 %v1286, 83
    %v2410 = vpop.permute.xlu0 %2409
    %v2411 = vsel %vm2400, %v2408, %v2410
    %v2412 = vsel %vm2400, %v2410, %v2408
    %s2413 = sld [smem:[#allocation2 + $0xaa]]
    %v2414 = vstv %s2413
    %v2415 = vmul.f32 %v2411, %v2414
    %v2416 = vmul.f32 %v2412, %v2414
    %v2417 = vadd.f32 %v2405, %v2415
    %v2418 = vadd.f32 %v2406, %v2416
    %v2419 = vsel %vm137, %v2417, 0.0
    %v2420 = vsel %vm138, %v2418, 0.0
    %v2421 = vadd.f32 %v2394, %v2419
    %v2422 = vadd.f32 %v2395, %v2420
    %2423 = vrot.lane.b32.xlu0 %v1267, 82
    %v2424 = vpop.permute.xlu0 %2423
    %2425 = vrot.lane.b32.xlu0 %v1268, 82
    %v2426 = vpop.permute.xlu0 %2425
    %vm2427 = vcmp.lt.s32.totalorder %v47, 82
    %v2428 = vsel %vm2427, %v2424, %v2426
    %v2429 = vsel %vm2427, %v2426, %v2424
    %s2430 = sld [smem:[#allocation2 + $0x2b]]
    %v2431 = vstv %s2430
    %v2432 = vmul.f32 %v2428, %v2431
    %v2433 = vmul.f32 %v2429, %v2431
    %2434 = vrot.lane.b32.xlu0 %v1277, 82
    %v2435 = vpop.permute.xlu0 %2434
    %2436 = vrot.lane.b32.xlu0 %v1286, 82
    %v2437 = vpop.permute.xlu0 %2436
    %v2438 = vsel %vm2427, %v2435, %v2437
    %v2439 = vsel %vm2427, %v2437, %v2435
    %s2440 = sld [smem:[#allocation2 + $0xab]]
    %v2441 = vstv %s2440
    %v2442 = vmul.f32 %v2438, %v2441
    %v2443 = vmul.f32 %v2439, %v2441
    %v2444 = vadd.f32 %v2432, %v2442
    %v2445 = vadd.f32 %v2433, %v2443
    %v2446 = vsel %vm139, %v2444, 0.0
    %v2447 = vsel %vm140, %v2445, 0.0
    %v2448 = vadd.f32 %v2421, %v2446
    %v2449 = vadd.f32 %v2422, %v2447
    %2450 = vrot.lane.b32.xlu0 %v1267, 81
    %v2451 = vpop.permute.xlu0 %2450
    %2452 = vrot.lane.b32.xlu0 %v1268, 81
    %v2453 = vpop.permute.xlu0 %2452
    %vm2454 = vcmp.lt.s32.totalorder %v47, 81
    %v2455 = vsel %vm2454, %v2451, %v2453
    %v2456 = vsel %vm2454, %v2453, %v2451
    %s2457 = sld [smem:[#allocation2 + $0x2c]]
    %v2458 = vstv %s2457
    %v2459 = vmul.f32 %v2455, %v2458
    %v2460 = vmul.f32 %v2456, %v2458
    %2461 = vrot.lane.b32.xlu0 %v1277, 81
    %v2462 = vpop.permute.xlu0 %2461
    %2463 = vrot.lane.b32.xlu0 %v1286, 81
    %v2464 = vpop.permute.xlu0 %2463
    %v2465 = vsel %vm2454, %v2462, %v2464
    %v2466 = vsel %vm2454, %v2464, %v2462
    %s2467 = sld [smem:[#allocation2 + $0xac]]
    %v2468 = vstv %s2467
    %v2469 = vmul.f32 %v2465, %v2468
    %v2470 = vmul.f32 %v2466, %v2468
    %v2471 = vadd.f32 %v2459, %v2469
    %v2472 = vadd.f32 %v2460, %v2470
    %v2473 = vsel %vm141, %v2471, 0.0
    %v2474 = vsel %vm142, %v2472, 0.0
    %v2475 = vadd.f32 %v2448, %v2473
    %v2476 = vadd.f32 %v2449, %v2474
    %2477 = vrot.lane.b32.xlu0 %v1267, 80
    %v2478 = vpop.permute.xlu0 %2477
    %2479 = vrot.lane.b32.xlu0 %v1268, 80
    %v2480 = vpop.permute.xlu0 %2479
    %vm2481 = vcmp.lt.s32.totalorder %v47, 80
    %v2482 = vsel %vm2481, %v2478, %v2480
    %v2483 = vsel %vm2481, %v2480, %v2478
    %s2484 = sld [smem:[#allocation2 + $0x2d]]
    %v2485 = vstv %s2484
    %v2486 = vmul.f32 %v2482, %v2485
    %v2487 = vmul.f32 %v2483, %v2485
    %2488 = vrot.lane.b32.xlu0 %v1277, 80
    %v2489 = vpop.permute.xlu0 %2488
    %2490 = vrot.lane.b32.xlu0 %v1286, 80
    %v2491 = vpop.permute.xlu0 %2490
    %v2492 = vsel %vm2481, %v2489, %v2491
    %v2493 = vsel %vm2481, %v2491, %v2489
    %s2494 = sld [smem:[#allocation2 + $0xad]]
    %v2495 = vstv %s2494
    %v2496 = vmul.f32 %v2492, %v2495
    %v2497 = vmul.f32 %v2493, %v2495
    %v2498 = vadd.f32 %v2486, %v2496
    %v2499 = vadd.f32 %v2487, %v2497
    %v2500 = vsel %vm135, %v2498, 0.0
    %v2501 = vsel %vm136, %v2499, 0.0
    %v2502 = vadd.f32 %v2475, %v2500
    %v2503 = vadd.f32 %v2476, %v2501
    %2504 = vrot.lane.b32.xlu0 %v1267, 79
    %v2505 = vpop.permute.xlu0 %2504
    %2506 = vrot.lane.b32.xlu0 %v1268, 79
    %v2507 = vpop.permute.xlu0 %2506
    %vm2508 = vcmp.lt.s32.totalorder %v47, 79
    %v2509 = vsel %vm2508, %v2505, %v2507
    %v2510 = vsel %vm2508, %v2507, %v2505
    %s2511 = sld [smem:[#allocation2 + $0x2e]]
    %v2512 = vstv %s2511
    %v2513 = vmul.f32 %v2509, %v2512
    %v2514 = vmul.f32 %v2510, %v2512
    %2515 = vrot.lane.b32.xlu0 %v1277, 79
    %v2516 = vpop.permute.xlu0 %2515
    %2517 = vrot.lane.b32.xlu0 %v1286, 79
    %v2518 = vpop.permute.xlu0 %2517
    %v2519 = vsel %vm2508, %v2516, %v2518
    %v2520 = vsel %vm2508, %v2518, %v2516
    %s2521 = sld [smem:[#allocation2 + $0xae]]
    %v2522 = vstv %s2521
    %v2523 = vmul.f32 %v2519, %v2522
    %v2524 = vmul.f32 %v2520, %v2522
    %v2525 = vadd.f32 %v2513, %v2523
    %v2526 = vadd.f32 %v2514, %v2524
    %v2527 = vsel %vm143, %v2525, 0.0
    %v2528 = vsel %vm144, %v2526, 0.0
    %v2529 = vadd.f32 %v2502, %v2527
    %v2530 = vadd.f32 %v2503, %v2528
    %2531 = vrot.lane.b32.xlu0 %v1267, 78
    %v2532 = vpop.permute.xlu0 %2531
    %2533 = vrot.lane.b32.xlu0 %v1268, 78
    %v2534 = vpop.permute.xlu0 %2533
    %vm2535 = vcmp.lt.s32.totalorder %v47, 78
    %v2536 = vsel %vm2535, %v2532, %v2534
    %v2537 = vsel %vm2535, %v2534, %v2532
    %s2538 = sld [smem:[#allocation2 + $0x2f]]
    %v2539 = vstv %s2538
    %v2540 = vmul.f32 %v2536, %v2539
    %v2541 = vmul.f32 %v2537, %v2539
    %2542 = vrot.lane.b32.xlu0 %v1277, 78
    %v2543 = vpop.permute.xlu0 %2542
    %2544 = vrot.lane.b32.xlu0 %v1286, 78
    %v2545 = vpop.permute.xlu0 %2544
    %v2546 = vsel %vm2535, %v2543, %v2545
    %v2547 = vsel %vm2535, %v2545, %v2543
    %s2548 = sld [smem:[#allocation2 + $0xaf]]
    %v2549 = vstv %s2548
    %v2550 = vmul.f32 %v2546, %v2549
    %v2551 = vmul.f32 %v2547, %v2549
    %v2552 = vadd.f32 %v2540, %v2550
    %v2553 = vadd.f32 %v2541, %v2551
    %v2554 = vsel %vm145, %v2552, 0.0
    %v2555 = vsel %vm146, %v2553, 0.0
    %v2556 = vadd.f32 %v2529, %v2554
    %v2557 = vadd.f32 %v2530, %v2555
    %2558 = vrot.lane.b32.xlu0 %v1267, 77
    %v2559 = vpop.permute.xlu0 %2558
    %2560 = vrot.lane.b32.xlu0 %v1268, 77
    %v2561 = vpop.permute.xlu0 %2560
    %vm2562 = vcmp.lt.s32.totalorder %v47, 77
    %v2563 = vsel %vm2562, %v2559, %v2561
    %v2564 = vsel %vm2562, %v2561, %v2559
    %s2565 = sld [smem:[#allocation2 + $0x30]]
    %v2566 = vstv %s2565
    %v2567 = vmul.f32 %v2563, %v2566
    %v2568 = vmul.f32 %v2564, %v2566
    %2569 = vrot.lane.b32.xlu0 %v1277, 77
    %v2570 = vpop.permute.xlu0 %2569
    %2571 = vrot.lane.b32.xlu0 %v1286, 77
    %v2572 = vpop.permute.xlu0 %2571
    %v2573 = vsel %vm2562, %v2570, %v2572
    %v2574 = vsel %vm2562, %v2572, %v2570
    %s2575 = sld [smem:[#allocation2 + $0xb0]]
    %v2576 = vstv %s2575
    %v2577 = vmul.f32 %v2573, %v2576
    %v2578 = vmul.f32 %v2574, %v2576
    %v2579 = vadd.f32 %v2567, %v2577
    %v2580 = vadd.f32 %v2568, %v2578
    %v2581 = vsel %vm147, %v2579, 0.0
    %v2582 = vsel %vm148, %v2580, 0.0
    %v2583 = vadd.f32 %v2556, %v2581
    %v2584 = vadd.f32 %v2557, %v2582
    %v2585 = vxor.u32 %v2583, 2147483648
    %v2586 = vxor.u32 %v2584, 2147483648
    %v2587 = vmul.f32 %v2585, 1.442695
    %v2588 = vpow.pop %v2587
    %v2589 = vmul.f32 %v2586, 1.442695
    %v2590 = vpow.pop %v2589
    %v2591 = vadd.f32 %v2588, 1.0
    %v2592 = vadd.f32 %v2590, 1.0
    %v2593 = vrcp.pop %v2591
    %v2594 = vmul.f32 1.0, %v2593
    %v2595 = vrcp.pop %v2592
    %v2596 = vmul.f32 1.0, %v2595
    %v2597 = vlaneseq
    %v2598 = vshrl.u32 %v2597, 7
    %v2599 = vsub.s32 0, %v2598
    %v2600 = vrot.slane %v2594, %v2599
    %v2601 = vlaneseq
    %v2602 = vshrl.u32 %v2601, 7
    %v2603 = vsub.s32 0, %v2602
    %v2604 = vrot.slane %v2596, %v2603
    %v2605 = vmul.f32 %v1240, %v2600
    %v2606 = vmul.f32 %v1241, %v2604
    %v2607 = vmul.f32 %v1242, %v2600
    %v2608 = vmul.f32 %v1243, %v2604
    %v2609 = vmul.f32 %v1244, %v2600
    %v2610 = vmul.f32 %v1245, %v2604
    %v2611 = vmul.f32 %v1246, %v2600
    %v2612 = vmul.f32 %v1247, %v2604
    %v2613 = vadd.f32 %v2605, %v204
    %v2614 = vadd.f32 %v2606, %v205
    %v2615 = vadd.f32 %v2607, %v206
    %v2616 = vadd.f32 %v2608, %v207
    %v2617 = vadd.f32 %v2609, %v208
    %v2618 = vadd.f32 %v2610, %v209
    %v2619 = vadd.f32 %v2611, %v210
    %v2620 = vadd.f32 %v2612, %v211
    %v2621 = vmax.f32 %v2613, 0.0
    %v2622 = vmax.f32 %v2614, 0.0
    %v2623 = vmax.f32 %v2615, 0.0
    %v2624 = vmax.f32 %v2616, 0.0
    %v2625 = vmax.f32 %v2617, 0.0
    %v2626 = vmax.f32 %v2618, 0.0
    %v2627 = vmax.f32 %v2619, 0.0
    %v2628 = vmax.f32 %v2620, 0.0
    %2629 = vst [vmem:[#allocation5] sm:$0xff] %v2621
    %2630 = vst [vmem:[#allocation5 + $0x8] sm:$0xff] %v2622
    %2631 = vst [vmem:[#allocation5 + $0x10] sm:$0xff] %v2623
    %2632 = vst [vmem:[#allocation5 + $0x18] sm:$0xff] %v2624
    %2633 = vst [vmem:[#allocation5 + $0x20] sm:$0xff] %v2625
    %2634 = vst [vmem:[#allocation5 + $0x28] sm:$0xff] %v2626
    %2635 = vst [vmem:[#allocation5 + $0x30] sm:$0xff] %v2627
    %2636 = vst [vmem:[#allocation5 + $0x38] sm:$0xff] %v2628
    %s2637 = scalar_lea.vmem %s0, 64
    %v2638 = vld [vmem:[%s2637] sm:$0xff]
    %v2639 = vld [vmem:[%s2637 + $0x8] sm:$0xff]
    %v2640 = vld [vmem:[%s2637 + $0x10] sm:$0xff]
    %v2641 = vld [vmem:[%s2637 + $0x18] sm:$0xff]
    %v2642 = vld [vmem:[%s2637 + $0x20] sm:$0xff]
    %v2643 = vld [vmem:[%s2637 + $0x28] sm:$0xff]
    %v2644 = vld [vmem:[%s2637 + $0x30] sm:$0xff]
    %v2645 = vld [vmem:[%s2637 + $0x38] sm:$0xff]
    %v2646 = vmul.f32 %v2638, %v215
    %v2647 = vmul.f32 %v2639, %v215
    %v2648 = vmul.f32 %v2640, %v220
    %v2649 = vmul.f32 %v2641, %v220
    %v2650 = vmul.f32 %v2642, %v225
    %v2651 = vmul.f32 %v2643, %v225
    %v2652 = vmul.f32 %v2644, %v230
    %v2653 = vmul.f32 %v2645, %v230
    %2654 = vrot.lane.b32.xlu0 %v2638, 17
    %v2655 = vpop.permute.xlu0 %2654
    %2656 = vrot.lane.b32.xlu0 %v2640, 17
    %v2657 = vpop.permute.xlu0 %2656
    %2658 = vrot.lane.b32.xlu0 %v2642, 17
    %v2659 = vpop.permute.xlu0 %2658
    %2660 = vrot.lane.b32.xlu0 %v2644, 17
    %v2661 = vpop.permute.xlu0 %2660
    %2662 = vrot.lane.b32.xlu0 %v2639, 17
    %v2663 = vpop.permute.xlu0 %2662
    %2664 = vrot.lane.b32.xlu0 %v2641, 17
    %v2665 = vpop.permute.xlu0 %2664
    %2666 = vrot.lane.b32.xlu0 %v2643, 17
    %v2667 = vpop.permute.xlu0 %2666
    %2668 = vrot.lane.b32.xlu0 %v2645, 17
    %v2669 = vpop.permute.xlu0 %2668
    %v2670 = vsel %vm256, %v2655, %v2663
    %v2671 = vsel %vm256, %v2657, %v2665
    %v2672 = vsel %vm256, %v2659, %v2667
    %v2673 = vsel %vm256, %v2661, %v2669
    %v2674 = vsel %vm256, %v2663, %v2655
    %v2675 = vsel %vm256, %v2665, %v2657
    %v2676 = vsel %vm256, %v2667, %v2659
    %v2677 = vsel %vm256, %v2669, %v2661
    %v2678 = vsel %vm267, %v2674, 0.0
    %v2679 = vsel %vm268, %v2670, 0.0
    %v2680 = vsel %vm267, %v2675, 0.0
    %v2681 = vsel %vm268, %v2671, 0.0
    %v2682 = vsel %vm267, %v2676, 0.0
    %v2683 = vsel %vm268, %v2672, 0.0
    %v2684 = vsel %vm267, %v2677, 0.0
    %v2685 = vsel %vm268, %v2673, 0.0
    %v2686 = vmul.f32 %v2678, %v280
    %v2687 = vmul.f32 %v2679, %v280
    %v2688 = vmul.f32 %v2680, %v285
    %v2689 = vmul.f32 %v2681, %v285
    %v2690 = vmul.f32 %v2682, %v290
    %v2691 = vmul.f32 %v2683, %v290
    %v2692 = vmul.f32 %v2684, %v295
    %v2693 = vmul.f32 %v2685, %v295
    %v2694 = vadd.f32 %v2646, %v2686
    %v2695 = vadd.f32 %v2647, %v2687
    %v2696 = vadd.f32 %v2648, %v2688
    %v2697 = vadd.f32 %v2649, %v2689
    %v2698 = vadd.f32 %v2650, %v2690
    %v2699 = vadd.f32 %v2651, %v2691
    %v2700 = vadd.f32 %v2652, %v2692
    %v2701 = vadd.f32 %v2653, %v2693
    %2702 = vrot.lane.b32.xlu0 %v2638, 16
    %v2703 = vpop.permute.xlu0 %2702
    %2704 = vrot.lane.b32.xlu0 %v2640, 16
    %v2705 = vpop.permute.xlu0 %2704
    %2706 = vrot.lane.b32.xlu0 %v2642, 16
    %v2707 = vpop.permute.xlu0 %2706
    %2708 = vrot.lane.b32.xlu0 %v2644, 16
    %v2709 = vpop.permute.xlu0 %2708
    %2710 = vrot.lane.b32.xlu0 %v2639, 16
    %v2711 = vpop.permute.xlu0 %2710
    %2712 = vrot.lane.b32.xlu0 %v2641, 16
    %v2713 = vpop.permute.xlu0 %2712
    %2714 = vrot.lane.b32.xlu0 %v2643, 16
    %v2715 = vpop.permute.xlu0 %2714
    %2716 = vrot.lane.b32.xlu0 %v2645, 16
    %v2717 = vpop.permute.xlu0 %2716
    %v2718 = vsel %vm329, %v2703, %v2711
    %v2719 = vsel %vm329, %v2705, %v2713
    %v2720 = vsel %vm329, %v2707, %v2715
    %v2721 = vsel %vm329, %v2709, %v2717
    %v2722 = vsel %vm329, %v2711, %v2703
    %v2723 = vsel %vm329, %v2713, %v2705
    %v2724 = vsel %vm329, %v2715, %v2707
    %v2725 = vsel %vm329, %v2717, %v2709
    %v2726 = vsel %vm340, %v2722, 0.0
    %v2727 = vsel %vm341, %v2718, 0.0
    %v2728 = vsel %vm340, %v2723, 0.0
    %v2729 = vsel %vm341, %v2719, 0.0
    %v2730 = vsel %vm340, %v2724, 0.0
    %v2731 = vsel %vm341, %v2720, 0.0
    %v2732 = vsel %vm340, %v2725, 0.0
    %v2733 = vsel %vm341, %v2721, 0.0
    %v2734 = vmul.f32 %v2726, %v353
    %v2735 = vmul.f32 %v2727, %v353
    %v2736 = vmul.f32 %v2728, %v358
    %v2737 = vmul.f32 %v2729, %v358
    %v2738 = vmul.f32 %v2730, %v363
    %v2739 = vmul.f32 %v2731, %v363
    %v2740 = vmul.f32 %v2732, %v368
    %v2741 = vmul.f32 %v2733, %v368
    %v2742 = vadd.f32 %v2694, %v2734
    %v2743 = vadd.f32 %v2695, %v2735
    %v2744 = vadd.f32 %v2696, %v2736
    %v2745 = vadd.f32 %v2697, %v2737
    %v2746 = vadd.f32 %v2698, %v2738
    %v2747 = vadd.f32 %v2699, %v2739
    %v2748 = vadd.f32 %v2700, %v2740
    %v2749 = vadd.f32 %v2701, %v2741
    %2750 = vrot.lane.b32.xlu0 %v2638, 15
    %v2751 = vpop.permute.xlu0 %2750
    %2752 = vrot.lane.b32.xlu0 %v2640, 15
    %v2753 = vpop.permute.xlu0 %2752
    %2754 = vrot.lane.b32.xlu0 %v2642, 15
    %v2755 = vpop.permute.xlu0 %2754
    %2756 = vrot.lane.b32.xlu0 %v2644, 15
    %v2757 = vpop.permute.xlu0 %2756
    %2758 = vrot.lane.b32.xlu0 %v2639, 15
    %v2759 = vpop.permute.xlu0 %2758
    %2760 = vrot.lane.b32.xlu0 %v2641, 15
    %v2761 = vpop.permute.xlu0 %2760
    %2762 = vrot.lane.b32.xlu0 %v2643, 15
    %v2763 = vpop.permute.xlu0 %2762
    %2764 = vrot.lane.b32.xlu0 %v2645, 15
    %v2765 = vpop.permute.xlu0 %2764
    %v2766 = vsel %vm402, %v2751, %v2759
    %v2767 = vsel %vm402, %v2753, %v2761
    %v2768 = vsel %vm402, %v2755, %v2763
    %v2769 = vsel %vm402, %v2757, %v2765
    %v2770 = vsel %vm402, %v2759, %v2751
    %v2771 = vsel %vm402, %v2761, %v2753
    %v2772 = vsel %vm402, %v2763, %v2755
    %v2773 = vsel %vm402, %v2765, %v2757
    %v2774 = vsel %vm413, %v2770, 0.0
    %v2775 = vsel %vm414, %v2766, 0.0
    %v2776 = vsel %vm413, %v2771, 0.0
    %v2777 = vsel %vm414, %v2767, 0.0
    %v2778 = vsel %vm413, %v2772, 0.0
    %v2779 = vsel %vm414, %v2768, 0.0
    %v2780 = vsel %vm413, %v2773, 0.0
    %v2781 = vsel %vm414, %v2769, 0.0
    %v2782 = vmul.f32 %v2774, %v426
    %v2783 = vmul.f32 %v2775, %v426
    %v2784 = vmul.f32 %v2776, %v431
    %v2785 = vmul.f32 %v2777, %v431
    %v2786 = vmul.f32 %v2778, %v436
    %v2787 = vmul.f32 %v2779, %v436
    %v2788 = vmul.f32 %v2780, %v441
    %v2789 = vmul.f32 %v2781, %v441
    %v2790 = vadd.f32 %v2742, %v2782
    %v2791 = vadd.f32 %v2743, %v2783
    %v2792 = vadd.f32 %v2744, %v2784
    %v2793 = vadd.f32 %v2745, %v2785
    %v2794 = vadd.f32 %v2746, %v2786
    %v2795 = vadd.f32 %v2747, %v2787
    %v2796 = vadd.f32 %v2748, %v2788
    %v2797 = vadd.f32 %v2749, %v2789
    %2798 = vrot.lane.b32.xlu0 %v2638, 1
    %v2799 = vpop.permute.xlu0 %2798
    %2800 = vrot.lane.b32.xlu0 %v2640, 1
    %v2801 = vpop.permute.xlu0 %2800
    %2802 = vrot.lane.b32.xlu0 %v2642, 1
    %v2803 = vpop.permute.xlu0 %2802
    %2804 = vrot.lane.b32.xlu0 %v2644, 1
    %v2805 = vpop.permute.xlu0 %2804
    %2806 = vrot.lane.b32.xlu0 %v2639, 1
    %v2807 = vpop.permute.xlu0 %2806
    %2808 = vrot.lane.b32.xlu0 %v2641, 1
    %v2809 = vpop.permute.xlu0 %2808
    %2810 = vrot.lane.b32.xlu0 %v2643, 1
    %v2811 = vpop.permute.xlu0 %2810
    %2812 = vrot.lane.b32.xlu0 %v2645, 1
    %v2813 = vpop.permute.xlu0 %2812
    %v2814 = vsel %vm475, %v2799, %v2807
    %v2815 = vsel %vm475, %v2801, %v2809
    %v2816 = vsel %vm475, %v2803, %v2811
    %v2817 = vsel %vm475, %v2805, %v2813
    %v2818 = vsel %vm475, %v2807, %v2799
    %v2819 = vsel %vm475, %v2809, %v2801
    %v2820 = vsel %vm475, %v2811, %v2803
    %v2821 = vsel %vm475, %v2813, %v2805
    %v2822 = vsel %vm486, %v2818, 0.0
    %v2823 = vsel %vm487, %v2814, 0.0
    %v2824 = vsel %vm486, %v2819, 0.0
    %v2825 = vsel %vm487, %v2815, 0.0
    %v2826 = vsel %vm486, %v2820, 0.0
    %v2827 = vsel %vm487, %v2816, 0.0
    %v2828 = vsel %vm486, %v2821, 0.0
    %v2829 = vsel %vm487, %v2817, 0.0
    %v2830 = vmul.f32 %v2822, %v499
    %v2831 = vmul.f32 %v2823, %v499
    %v2832 = vmul.f32 %v2824, %v504
    %v2833 = vmul.f32 %v2825, %v504
    %v2834 = vmul.f32 %v2826, %v509
    %v2835 = vmul.f32 %v2827, %v509
    %v2836 = vmul.f32 %v2828, %v514
    %v2837 = vmul.f32 %v2829, %v514
    %v2838 = vadd.f32 %v2790, %v2830
    %v2839 = vadd.f32 %v2791, %v2831
    %v2840 = vadd.f32 %v2792, %v2832
    %v2841 = vadd.f32 %v2793, %v2833
    %v2842 = vadd.f32 %v2794, %v2834
    %v2843 = vadd.f32 %v2795, %v2835
    %v2844 = vadd.f32 %v2796, %v2836
    %v2845 = vadd.f32 %v2797, %v2837
    %2846 = vrot.lane.b32.xlu0 %v2638, 127
    %v2847 = vpop.permute.xlu0 %2846
    %2848 = vrot.lane.b32.xlu0 %v2640, 127
    %v2849 = vpop.permute.xlu0 %2848
    %2850 = vrot.lane.b32.xlu0 %v2642, 127
    %v2851 = vpop.permute.xlu0 %2850
    %2852 = vrot.lane.b32.xlu0 %v2644, 127
    %v2853 = vpop.permute.xlu0 %2852
    %2854 = vrot.lane.b32.xlu0 %v2639, 127
    %v2855 = vpop.permute.xlu0 %2854
    %2856 = vrot.lane.b32.xlu0 %v2641, 127
    %v2857 = vpop.permute.xlu0 %2856
    %2858 = vrot.lane.b32.xlu0 %v2643, 127
    %v2859 = vpop.permute.xlu0 %2858
    %2860 = vrot.lane.b32.xlu0 %v2645, 127
    %v2861 = vpop.permute.xlu0 %2860
    %v2862 = vsel %vm548, %v2847, %v2855
    %v2863 = vsel %vm548, %v2849, %v2857
    %v2864 = vsel %vm548, %v2851, %v2859
    %v2865 = vsel %vm548, %v2853, %v2861
    %v2866 = vsel %vm548, %v2855, %v2847
    %v2867 = vsel %vm548, %v2857, %v2849
    %v2868 = vsel %vm548, %v2859, %v2851
    %v2869 = vsel %vm548, %v2861, %v2853
    %v2870 = vsel %vm559, %v2862, 0.0
    %v2871 = vsel %vm560, %v2866, 0.0
    %v2872 = vsel %vm559, %v2863, 0.0
    %v2873 = vsel %vm560, %v2867, 0.0
    %v2874 = vsel %vm559, %v2864, 0.0
    %v2875 = vsel %vm560, %v2868, 0.0
    %v2876 = vsel %vm559, %v2865, 0.0
    %v2877 = vsel %vm560, %v2869, 0.0
    %v2878 = vmul.f32 %v2870, %v572
    %v2879 = vmul.f32 %v2871, %v572
    %v2880 = vmul.f32 %v2872, %v577
    %v2881 = vmul.f32 %v2873, %v577
    %v2882 = vmul.f32 %v2874, %v582
    %v2883 = vmul.f32 %v2875, %v582
    %v2884 = vmul.f32 %v2876, %v587
    %v2885 = vmul.f32 %v2877, %v587
    %v2886 = vadd.f32 %v2838, %v2878
    %v2887 = vadd.f32 %v2839, %v2879
    %v2888 = vadd.f32 %v2840, %v2880
    %v2889 = vadd.f32 %v2841, %v2881
    %v2890 = vadd.f32 %v2842, %v2882
    %v2891 = vadd.f32 %v2843, %v2883
    %v2892 = vadd.f32 %v2844, %v2884
    %v2893 = vadd.f32 %v2845, %v2885
    %2894 = vrot.lane.b32.xlu0 %v2638, 113
    %v2895 = vpop.permute.xlu0 %2894
    %2896 = vrot.lane.b32.xlu0 %v2640, 113
    %v2897 = vpop.permute.xlu0 %2896
    %2898 = vrot.lane.b32.xlu0 %v2642, 113
    %v2899 = vpop.permute.xlu0 %2898
    %2900 = vrot.lane.b32.xlu0 %v2644, 113
    %v2901 = vpop.permute.xlu0 %2900
    %2902 = vrot.lane.b32.xlu0 %v2639, 113
    %v2903 = vpop.permute.xlu0 %2902
    %2904 = vrot.lane.b32.xlu0 %v2641, 113
    %v2905 = vpop.permute.xlu0 %2904
    %2906 = vrot.lane.b32.xlu0 %v2643, 113
    %v2907 = vpop.permute.xlu0 %2906
    %2908 = vrot.lane.b32.xlu0 %v2645, 113
    %v2909 = vpop.permute.xlu0 %2908
    %v2910 = vsel %vm621, %v2895, %v2903
    %v2911 = vsel %vm621, %v2897, %v2905
    %v2912 = vsel %vm621, %v2899, %v2907
    %v2913 = vsel %vm621, %v2901, %v2909
    %v2914 = vsel %vm621, %v2903, %v2895
    %v2915 = vsel %vm621, %v2905, %v2897
    %v2916 = vsel %vm621, %v2907, %v2899
    %v2917 = vsel %vm621, %v2909, %v2901
    %v2918 = vsel %vm632, %v2910, 0.0
    %v2919 = vsel %vm633, %v2914, 0.0
    %v2920 = vsel %vm632, %v2911, 0.0
    %v2921 = vsel %vm633, %v2915, 0.0
    %v2922 = vsel %vm632, %v2912, 0.0
    %v2923 = vsel %vm633, %v2916, 0.0
    %v2924 = vsel %vm632, %v2913, 0.0
    %v2925 = vsel %vm633, %v2917, 0.0
    %v2926 = vmul.f32 %v2918, %v645
    %v2927 = vmul.f32 %v2919, %v645
    %v2928 = vmul.f32 %v2920, %v650
    %v2929 = vmul.f32 %v2921, %v650
    %v2930 = vmul.f32 %v2922, %v655
    %v2931 = vmul.f32 %v2923, %v655
    %v2932 = vmul.f32 %v2924, %v660
    %v2933 = vmul.f32 %v2925, %v660
    %v2934 = vadd.f32 %v2886, %v2926
    %v2935 = vadd.f32 %v2887, %v2927
    %v2936 = vadd.f32 %v2888, %v2928
    %v2937 = vadd.f32 %v2889, %v2929
    %v2938 = vadd.f32 %v2890, %v2930
    %v2939 = vadd.f32 %v2891, %v2931
    %v2940 = vadd.f32 %v2892, %v2932
    %v2941 = vadd.f32 %v2893, %v2933
    %2942 = vrot.lane.b32.xlu0 %v2638, 112
    %v2943 = vpop.permute.xlu0 %2942
    %2944 = vrot.lane.b32.xlu0 %v2640, 112
    %v2945 = vpop.permute.xlu0 %2944
    %2946 = vrot.lane.b32.xlu0 %v2642, 112
    %v2947 = vpop.permute.xlu0 %2946
    %2948 = vrot.lane.b32.xlu0 %v2644, 112
    %v2949 = vpop.permute.xlu0 %2948
    %2950 = vrot.lane.b32.xlu0 %v2639, 112
    %v2951 = vpop.permute.xlu0 %2950
    %2952 = vrot.lane.b32.xlu0 %v2641, 112
    %v2953 = vpop.permute.xlu0 %2952
    %2954 = vrot.lane.b32.xlu0 %v2643, 112
    %v2955 = vpop.permute.xlu0 %2954
    %2956 = vrot.lane.b32.xlu0 %v2645, 112
    %v2957 = vpop.permute.xlu0 %2956
    %v2958 = vsel %vm694, %v2943, %v2951
    %v2959 = vsel %vm694, %v2945, %v2953
    %v2960 = vsel %vm694, %v2947, %v2955
    %v2961 = vsel %vm694, %v2949, %v2957
    %v2962 = vsel %vm694, %v2951, %v2943
    %v2963 = vsel %vm694, %v2953, %v2945
    %v2964 = vsel %vm694, %v2955, %v2947
    %v2965 = vsel %vm694, %v2957, %v2949
    %v2966 = vsel %vm705, %v2958, 0.0
    %v2967 = vsel %vm706, %v2962, 0.0
    %v2968 = vsel %vm705, %v2959, 0.0
    %v2969 = vsel %vm706, %v2963, 0.0
    %v2970 = vsel %vm705, %v2960, 0.0
    %v2971 = vsel %vm706, %v2964, 0.0
    %v2972 = vsel %vm705, %v2961, 0.0
    %v2973 = vsel %vm706, %v2965, 0.0
    %v2974 = vmul.f32 %v2966, %v718
    %v2975 = vmul.f32 %v2967, %v718
    %v2976 = vmul.f32 %v2968, %v723
    %v2977 = vmul.f32 %v2969, %v723
    %v2978 = vmul.f32 %v2970, %v728
    %v2979 = vmul.f32 %v2971, %v728
    %v2980 = vmul.f32 %v2972, %v733
    %v2981 = vmul.f32 %v2973, %v733
    %v2982 = vadd.f32 %v2934, %v2974
    %v2983 = vadd.f32 %v2935, %v2975
    %v2984 = vadd.f32 %v2936, %v2976
    %v2985 = vadd.f32 %v2937, %v2977
    %v2986 = vadd.f32 %v2938, %v2978
    %v2987 = vadd.f32 %v2939, %v2979
    %v2988 = vadd.f32 %v2940, %v2980
    %v2989 = vadd.f32 %v2941, %v2981
    %2990 = vrot.lane.b32.xlu0 %v2638, 111
    %v2991 = vpop.permute.xlu0 %2990
    %2992 = vrot.lane.b32.xlu0 %v2640, 111
    %v2993 = vpop.permute.xlu0 %2992
    %2994 = vrot.lane.b32.xlu0 %v2642, 111
    %v2995 = vpop.permute.xlu0 %2994
    %2996 = vrot.lane.b32.xlu0 %v2644, 111
    %v2997 = vpop.permute.xlu0 %2996
    %2998 = vrot.lane.b32.xlu0 %v2639, 111
    %v2999 = vpop.permute.xlu0 %2998
    %3000 = vrot.lane.b32.xlu0 %v2641, 111
    %v3001 = vpop.permute.xlu0 %3000
    %3002 = vrot.lane.b32.xlu0 %v2643, 111
    %v3003 = vpop.permute.xlu0 %3002
    %3004 = vrot.lane.b32.xlu0 %v2645, 111
    %v3005 = vpop.permute.xlu0 %3004
    %v3006 = vsel %vm767, %v2991, %v2999
    %v3007 = vsel %vm767, %v2993, %v3001
    %v3008 = vsel %vm767, %v2995, %v3003
    %v3009 = vsel %vm767, %v2997, %v3005
    %v3010 = vsel %vm767, %v2999, %v2991
    %v3011 = vsel %vm767, %v3001, %v2993
    %v3012 = vsel %vm767, %v3003, %v2995
    %v3013 = vsel %vm767, %v3005, %v2997
    %v3014 = vsel %vm778, %v3006, 0.0
    %v3015 = vsel %vm779, %v3010, 0.0
    %v3016 = vsel %vm778, %v3007, 0.0
    %v3017 = vsel %vm779, %v3011, 0.0
    %v3018 = vsel %vm778, %v3008, 0.0
    %v3019 = vsel %vm779, %v3012, 0.0
    %v3020 = vsel %vm778, %v3009, 0.0
    %v3021 = vsel %vm779, %v3013, 0.0
    %v3022 = vmul.f32 %v3014, %v791
    %v3023 = vmul.f32 %v3015, %v791
    %v3024 = vmul.f32 %v3016, %v796
    %v3025 = vmul.f32 %v3017, %v796
    %v3026 = vmul.f32 %v3018, %v801
    %v3027 = vmul.f32 %v3019, %v801
    %v3028 = vmul.f32 %v3020, %v806
    %v3029 = vmul.f32 %v3021, %v806
    %v3030 = vadd.f32 %v2982, %v3022
    %v3031 = vadd.f32 %v2983, %v3023
    %v3032 = vadd.f32 %v2984, %v3024
    %v3033 = vadd.f32 %v2985, %v3025
    %v3034 = vadd.f32 %v2986, %v3026
    %v3035 = vadd.f32 %v2987, %v3027
    %v3036 = vadd.f32 %v2988, %v3028
    %v3037 = vadd.f32 %v2989, %v3029
    %v3038 = vadd.f32 %v3030, %v827
    %v3039 = vadd.f32 %v3031, %v827
    %v3040 = vadd.f32 %v3032, %v832
    %v3041 = vadd.f32 %v3033, %v832
    %v3042 = vadd.f32 %v3034, %v837
    %v3043 = vadd.f32 %v3035, %v837
    %v3044 = vadd.f32 %v3036, %v842
    %v3045 = vadd.f32 %v3037, %v842
    %v3046 = vmax.f32 %v3038, 0.0
    %v3047 = vmax.f32 %v3039, 0.0
    %v3048 = vmax.f32 %v3040, 0.0
    %v3049 = vmax.f32 %v3041, 0.0
    %v3050 = vmax.f32 %v3042, 0.0
    %v3051 = vmax.f32 %v3043, 0.0
    %v3052 = vmax.f32 %v3044, 0.0
    %v3053 = vmax.f32 %v3045, 0.0
    %3054 = vmatprep.subr.mxu0 %v3047
    %3055 = vmatpush1.msra.mxu0 %v3046
    %3056 = vmatprep.subr.mxu0 %v3049
    %3057 = vmatpush1.msra.mxu0 %v3048
    %3058 = vmatprep.subr.mxu0 %v3051
    %3059 = vmatpush1.msra.mxu0 %v3050
    %3060 = vmatprep.subr.mxu0 %v3053
    %3061 = vmatpush1.msra.mxu0 %v3052
    %3062 = vmatprep.subr.mxu0 0.0
    %3063 = vmatpush1.msra.mxu0 0.0
    %3064 = vmatprep.subr.mxu0 0.0
    %3065 = vmatpush1.msra.mxu0 0.0
    %3066 = vmatprep.subr.mxu0 0.0
    %3067 = vmatpush1.msra.mxu0 0.0
    %3068 = vmatprep.subr.mxu0 0.0
    %3069 = vmatpush1.msra.mxu0 0.0
    %3070 = vmatprep.subr.mxu0 0.0
    %3071 = vmatpush1.msra.mxu0 0.0
    %3072 = vmatprep.subr.mxu0 0.0
    %3073 = vmatpush1.msra.mxu0 0.0
    %3074 = vmatprep.subr.mxu0 0.0
    %3075 = vmatpush1.msra.mxu0 0.0
    %3076 = vmatprep.subr.mxu0 0.0
    %3077 = vmatpush1.msra.mxu0 0.0
    %3078 = vmatprep.subr.mxu0 0.0
    %3079 = vmatpush1.msra.mxu0 0.0
    %3080 = vmatprep.subr.mxu0 0.0
    %3081 = vmatpush1.msra.mxu0 0.0
    %3082 = vmatprep.subr.mxu0 0.0
    %3083 = vmatpush1.msra.mxu0 0.0
    %3084 = vmatprep.subr.mxu0 0.0
    %3085 = vmatpush1.msra.mxu0 0.0
    %3086 = vmatprep.subr.mxu0 0.0
    %3087 = vmatpush1.msra.mxu0 0.0
    %3088 = vmatprep.subr.mxu0 0.0
    %3089 = vmatpush1.msra.mxu0 0.0
    %3090 = vmatprep.subr.mxu0 0.0
    %3091 = vmatpush1.msra.mxu0 0.0
    %3092 = vmatprep.subr.mxu0 0.0
    %3093 = vmatpush1.msra.mxu0 0.0
    %3094 = vmatprep.subr.mxu0 0.0
    %3095 = vmatpush1.msra.mxu0 0.0
    %3096 = vmatprep.subr.mxu0 0.0
    %3097 = vmatpush1.msra.mxu0 0.0
    %3098 = vmatprep.subr.mxu0 0.0
    %3099 = vmatpush1.msra.mxu0 0.0
    %3100 = vmatprep.subr.mxu0 0.0
    %3101 = vmatpush1.msra.mxu0 0.0
    %3102 = vmatprep.subr.mxu0 0.0
    %3103 = vmatpush1.msra.mxu0 0.0
    %3104 = vmatprep.subr.mxu0 0.0
    %3105 = vmatpush1.msra.mxu0 0.0
    %3106 = vmatprep.subr.mxu0 0.0
    %3107 = vmatpush1.msra.mxu0 0.0
    %3108 = vmatprep.subr.mxu0 0.0
    %3109 = vmatpush1.msra.mxu0 0.0
    %3110 = vmatprep.subr.mxu0 0.0
    %3111 = vmatpush1.msra.mxu0 0.0
    %3112 = vmatprep.subr.mxu0 0.0
    %3113 = vmatpush1.msra.mxu0 0.0
    %3114 = vmatprep.subr.mxu0 0.0
    %3115 = vmatpush1.msra.mxu0 0.0
    %3116 = vmatprep.subr.mxu0 0.0
    %3117 = vmatpush1.msra.mxu0 0.0
    %3118 = vmatprep.mubr.f32.mxu0 0.0
    %3119 = vmatmul.mubr.f32.gmra.mrb[0].mxu0 %v862
    %v3120 = vpop.f32.mrb[0].mxu0
    %v3121 = vadd.f32 %v827, %v3120
    %v3122 = vpop.f32.mrb[0].mxu0
    %v3123 = vadd.f32 %v827, %v3122
    %3124 = vmatprep.mubr.f32.mxu0 0.0
    %3125 = vmatmul.mubr.f32.gmra.mrb[0].mxu0 %v865
    %v3126 = vpop.f32.mrb[0].mxu0
    %v3127 = vadd.f32 %v832, %v3126
    %v3128 = vpop.f32.mrb[0].mxu0
    %v3129 = vadd.f32 %v832, %v3128
    %3130 = vmatprep.mubr.f32.mxu0 0.0
    %3131 = vmatmul.mubr.f32.gmra.mrb[0].mxu0 %v868
    %v3132 = vpop.f32.mrb[0].mxu0
    %v3133 = vadd.f32 %v837, %v3132
    %v3134 = vpop.f32.mrb[0].mxu0
    %v3135 = vadd.f32 %v837, %v3134
    %3136 = vmatprep.mubr.f32.mxu0 0.0
    %3137 = vmatmul.mubr.f32.gmra.mrb[0].mxu0 %v871
    %v3138 = vpop.f32.mrb[0].mxu0
    %v3139 = vadd.f32 %v842, %v3138
    %v3140 = vpop.f32.mrb[0].mxu0
    %v3141 = vadd.f32 %v842, %v3140
    %3142 = vdwg.mxu0
    %v3143 = vmax.f32 %v3121, 0.0
    %v3144 = vmax.f32 %v3123, 0.0
    %v3145 = vmax.f32 %v3127, 0.0
    %v3146 = vmax.f32 %v3129, 0.0
    %v3147 = vmax.f32 %v3133, 0.0
    %v3148 = vmax.f32 %v3135, 0.0
    %v3149 = vmax.f32 %v3139, 0.0
    %v3150 = vmax.f32 %v3141, 0.0
    %v3151 = vadd.f32 %v3143, %v3144
    %3152 = vadd.xlane.f32.xlu0 %v3151
    %v3153 = vpop.xlane.xlu0 %3152
    %v3154 = vadd.f32 %v3145, %v3146
    %3155 = vadd.xlane.f32.xlu0 %v3154
    %v3156 = vpop.xlane.xlu0 %3155
    %v3157 = vadd.f32 %v3147, %v3148
    %3158 = vadd.xlane.f32.xlu0 %v3157
    %v3159 = vpop.xlane.xlu0 %3158
    %v3160 = vadd.f32 %v3149, %v3150
    %3161 = vadd.xlane.f32.xlu0 %v3160
    %v3162 = vpop.xlane.xlu0 %3161
    %v3163 = vmul.f32 %v3153, %v982
    %v3164 = vmul.f32 %v3156, %v982
    %v3165 = vmul.f32 %v3159, %v982
    %v3166 = vmul.f32 %v3162, %v982
    %v3167 = vmax.f32 %v3143, %v3144
    %3168 = vmax.xlane.f32.xlu0 %v3167
    %v3169 = vpop.xlane.xlu0 %3168
    %v3170 = vmax.f32 %v3145, %v3146
    %3171 = vmax.xlane.f32.xlu0 %v3170
    %v3172 = vpop.xlane.xlu0 %3171
    %v3173 = vmax.f32 %v3147, %v3148
    %3174 = vmax.xlane.f32.xlu0 %v3173
    %v3175 = vpop.xlane.xlu0 %3174
    %v3176 = vmax.f32 %v3149, %v3150
    %3177 = vmax.xlane.f32.xlu0 %v3176
    %v3178 = vpop.xlane.xlu0 %3177
    %v3179 = vsel %vm149, %v3163, %v3169
    %v3180 = vsel %vm149, %v3164, %v3172
    %v3181 = vsel %vm149, %v3165, %v3175
    %v3182 = vsel %vm149, %v3166, %v3178
    %3183 = vmatprep.subr.mxu0 0.0
    %3184 = vmatpush1.msra.mxu0 %v3179
    %3185 = vmatprep.subr.mxu0 0.0
    %3186 = vmatpush1.msra.mxu0 %v3180
    %3187 = vmatprep.subr.mxu0 0.0
    %3188 = vmatpush1.msra.mxu0 %v3181
    %3189 = vmatprep.subr.mxu0 0.0
    %3190 = vmatpush1.msra.mxu0 %v3182
    %3191 = vmatprep.subr.mxu0 0.0
    %3192 = vmatpush1.msra.mxu0 0.0
    %3193 = vmatprep.subr.mxu0 0.0
    %3194 = vmatpush1.msra.mxu0 0.0
    %3195 = vmatprep.subr.mxu0 0.0
    %3196 = vmatpush1.msra.mxu0 0.0
    %3197 = vmatprep.subr.mxu0 0.0
    %3198 = vmatpush1.msra.mxu0 0.0
    %3199 = vmatprep.subr.mxu0 0.0
    %3200 = vmatpush1.msra.mxu0 0.0
    %3201 = vmatprep.subr.mxu0 0.0
    %3202 = vmatpush1.msra.mxu0 0.0
    %3203 = vmatprep.subr.mxu0 0.0
    %3204 = vmatpush1.msra.mxu0 0.0
    %3205 = vmatprep.subr.mxu0 0.0
    %3206 = vmatpush1.msra.mxu0 0.0
    %3207 = vmatprep.subr.mxu0 0.0
    %3208 = vmatpush1.msra.mxu0 0.0
    %3209 = vmatprep.subr.mxu0 0.0
    %3210 = vmatpush1.msra.mxu0 0.0
    %3211 = vmatprep.subr.mxu0 0.0
    %3212 = vmatpush1.msra.mxu0 0.0
    %3213 = vmatprep.subr.mxu0 0.0
    %3214 = vmatpush1.msra.mxu0 0.0
    %3215 = vmatprep.subr.mxu0 0.0
    %3216 = vmatpush1.msra.mxu0 0.0
    %3217 = vmatprep.subr.mxu0 0.0
    %3218 = vmatpush1.msra.mxu0 0.0
    %3219 = vmatprep.subr.mxu0 0.0
    %3220 = vmatpush1.msra.mxu0 0.0
    %3221 = vmatprep.subr.mxu0 0.0
    %3222 = vmatpush1.msra.mxu0 0.0
    %3223 = vmatprep.subr.mxu0 0.0
    %3224 = vmatpush1.msra.mxu0 0.0
    %3225 = vmatprep.subr.mxu0 0.0
    %3226 = vmatpush1.msra.mxu0 0.0
    %3227 = vmatprep.subr.mxu0 0.0
    %3228 = vmatpush1.msra.mxu0 0.0
    %3229 = vmatprep.subr.mxu0 0.0
    %3230 = vmatpush1.msra.mxu0 0.0
    %3231 = vmatprep.subr.mxu0 0.0
    %3232 = vmatpush1.msra.mxu0 0.0
    %3233 = vmatprep.subr.mxu0 0.0
    %3234 = vmatpush1.msra.mxu0 0.0
    %3235 = vmatprep.subr.mxu0 0.0
    %3236 = vmatpush1.msra.mxu0 0.0
    %3237 = vmatprep.subr.mxu0 0.0
    %3238 = vmatpush1.msra.mxu0 0.0
    %3239 = vmatprep.subr.mxu0 0.0
    %3240 = vmatpush1.msra.mxu0 0.0
    %3241 = vmatprep.subr.mxu0 0.0
    %3242 = vmatpush1.msra.mxu0 0.0
    %3243 = vmatprep.subr.mxu0 0.0
    %3244 = vmatpush1.msra.mxu0 0.0
    %3245 = vmatprep.subr.mxu0 0.0
    %3246 = vmatpush1.msra.mxu0 0.0
    %3247 = vmatprep.mubr.f32.mxu0 0.0
    %3248 = vmatmul.mubr.f32.gmra.mrb[0].mxu0 %v1009
    %v3249 = vpop.f32.mrb[0].mxu0
    %v3250 = vadd.f32 %v1006, %v3249
    %v3251 = vpop.f32.mrb[0].mxu0
    %3252 = vdwg.mxu0
    %v3253 = vmax.f32 %v3250, 0.0
    %v3255 = vsel %vm1115, %v3253, 0
    %3257 = vmatprep.subr.mxu0 0.0
    %3258 = vmatpush1.msra.mxu0 %v3255
    %3259 = vmatprep.subr.mxu0 0.0
    %3260 = vmatpush1.msra.mxu0 0.0
    %3261 = vmatprep.subr.mxu0 0.0
    %3262 = vmatpush1.msra.mxu0 0.0
    %3263 = vmatprep.subr.mxu0 0.0
    %3264 = vmatpush1.msra.mxu0 0.0
    %3265 = vmatprep.subr.mxu0 0.0
    %3266 = vmatpush1.msra.mxu0 0.0
    %3267 = vmatprep.subr.mxu0 0.0
    %3268 = vmatpush1.msra.mxu0 0.0
    %3269 = vmatprep.subr.mxu0 0.0
    %3270 = vmatpush1.msra.mxu0 0.0
    %3271 = vmatprep.subr.mxu0 0.0
    %3272 = vmatpush1.msra.mxu0 0.0
    %3273 = vmatprep.subr.mxu0 0.0
    %3274 = vmatpush1.msra.mxu0 0.0
    %3275 = vmatprep.subr.mxu0 0.0
    %3276 = vmatpush1.msra.mxu0 0.0
    %3277 = vmatprep.subr.mxu0 0.0
    %3278 = vmatpush1.msra.mxu0 0.0
    %3279 = vmatprep.subr.mxu0 0.0
    %3280 = vmatpush1.msra.mxu0 0.0
    %3281 = vmatprep.subr.mxu0 0.0
    %3282 = vmatpush1.msra.mxu0 0.0
    %3283 = vmatprep.subr.mxu0 0.0
    %3284 = vmatpush1.msra.mxu0 0.0
    %3285 = vmatprep.subr.mxu0 0.0
    %3286 = vmatpush1.msra.mxu0 0.0
    %3287 = vmatprep.subr.mxu0 0.0
    %3288 = vmatpush1.msra.mxu0 0.0
    %3289 = vmatprep.subr.mxu0 0.0
    %3290 = vmatpush1.msra.mxu0 0.0
    %3291 = vmatprep.subr.mxu0 0.0
    %3292 = vmatpush1.msra.mxu0 0.0
    %3293 = vmatprep.subr.mxu0 0.0
    %3294 = vmatpush1.msra.mxu0 0.0
    %3295 = vmatprep.subr.mxu0 0.0
    %3296 = vmatpush1.msra.mxu0 0.0
    %3297 = vmatprep.subr.mxu0 0.0
    %3298 = vmatpush1.msra.mxu0 0.0
    %3299 = vmatprep.subr.mxu0 0.0
    %3300 = vmatpush1.msra.mxu0 0.0
    %3301 = vmatprep.subr.mxu0 0.0
    %3302 = vmatpush1.msra.mxu0 0.0
    %3303 = vmatprep.subr.mxu0 0.0
    %3304 = vmatpush1.msra.mxu0 0.0
    %3305 = vmatprep.subr.mxu0 0.0
    %3306 = vmatpush1.msra.mxu0 0.0
    %3307 = vmatprep.subr.mxu0 0.0
    %3308 = vmatpush1.msra.mxu0 0.0
    %3309 = vmatprep.subr.mxu0 0.0
    %3310 = vmatpush1.msra.mxu0 0.0
    %3311 = vmatprep.subr.mxu0 0.0
    %3312 = vmatpush1.msra.mxu0 0.0
    %3313 = vmatprep.subr.mxu0 0.0
    %3314 = vmatpush1.msra.mxu0 0.0
    %3315 = vmatprep.subr.mxu0 0.0
    %3316 = vmatpush1.msra.mxu0 0.0
    %3317 = vmatprep.subr.mxu0 0.0
    %3318 = vmatpush1.msra.mxu0 0.0
    %3319 = vmatprep.subr.mxu0 0.0
    %3320 = vmatpush1.msra.mxu0 0.0
    %3321 = vmatprep.mubr.f32.mxu0 0.0
    %3322 = vmatmul.mubr.f32.gmra.mrb[0].mxu0 %v1104
    %v3323 = vpop.f32.mrb[0].mxu0
    %v3324 = vadd.f32 %v1085, %v3323
    %v3325 = vpop.f32.mrb[0].mxu0
    %3326 = vmatprep.mubr.f32.mxu0 0.0
    %3327 = vmatmul.mubr.f32.gmra.mrb[0].mxu0 %v1107
    %v3328 = vpop.f32.mrb[0].mxu0
    %v3329 = vadd.f32 %v1090, %v3328
    %v3330 = vpop.f32.mrb[0].mxu0
    %3331 = vmatprep.mubr.f32.mxu0 0.0
    %3332 = vmatmul.mubr.f32.gmra.mrb[0].mxu0 %v1110
    %v3333 = vpop.f32.mrb[0].mxu0
    %v3334 = vadd.f32 %v1095, %v3333
    %v3335 = vpop.f32.mrb[0].mxu0
    %3336 = vmatprep.mubr.f32.mxu0 0.0
    %3337 = vmatmul.mubr.f32.gmra.mrb[0].mxu0 %v1113
    %v3338 = vpop.f32.mrb[0].mxu0
    %v3339 = vadd.f32 %v1100, %v3338
    %v3340 = vpop.f32.mrb[0].mxu0
    %3341 = vdwg.mxu0
    %v3342 = vsel %vm1102, %v3324, 0.0
    %3343 = vadd.xlane.f32.xlu0 %v3342
    %v3344 = vpop.xlane.xlu0 %3343
    %v3345 = vsel %vm1102, %v3329, 0.0
    %3346 = vadd.xlane.f32.xlu0 %v3345
    %v3347 = vpop.xlane.xlu0 %3346
    %v3348 = vsel %vm1102, %v3334, 0.0
    %3349 = vadd.xlane.f32.xlu0 %v3348
    %v3350 = vpop.xlane.xlu0 %3349
    %v3351 = vsel %vm1102, %v3339, 0.0
    %3352 = vadd.xlane.f32.xlu0 %v3351
    %v3353 = vpop.xlane.xlu0 %3352
    %v3354 = vxor.u32 %v3344, 2147483648
    %v3355 = vxor.u32 %v3347, 2147483648
    %v3356 = vxor.u32 %v3350, 2147483648
    %v3357 = vxor.u32 %v3353, 2147483648
    %v3358 = vmul.f32 %v3354, 1.442695
    %v3359 = vpow.pop %v3358
    %v3360 = vmul.f32 %v3355, 1.442695
    %v3361 = vpow.pop %v3360
    %v3362 = vmul.f32 %v3356, 1.442695
    %v3363 = vpow.pop %v3362
    %v3364 = vmul.f32 %v3357, 1.442695
    %v3365 = vpow.pop %v3364
    %v3366 = vadd.f32 %v3359, 1.0
    %v3367 = vadd.f32 %v3361, 1.0
    %v3368 = vadd.f32 %v3363, 1.0
    %v3369 = vadd.f32 %v3365, 1.0
    %v3370 = vrcp.pop %v3366
    %v3371 = vmul.f32 1.0, %v3370
    %v3372 = vrcp.pop %v3367
    %v3373 = vmul.f32 1.0, %v3372
    %v3374 = vrcp.pop %v3368
    %v3375 = vmul.f32 1.0, %v3374
    %v3376 = vrcp.pop %v3369
    %v3377 = vmul.f32 1.0, %v3376
    %v3378 = vmul.f32 %v3143, %v3371
    %v3379 = vmul.f32 %v3144, %v3371
    %v3380 = vmul.f32 %v3145, %v3373
    %v3381 = vmul.f32 %v3146, %v3373
    %v3382 = vmul.f32 %v3147, %v3375
    %v3383 = vmul.f32 %v3148, %v3375
    %v3384 = vmul.f32 %v3149, %v3377
    %v3385 = vmul.f32 %v3150, %v3377
    %v3386 = vadd.f32 %v3378, %v3380
    %v3387 = vadd.f32 %v3386, %v3382
    %v3388 = vadd.f32 %v3387, %v3384
    %v3389 = vrot.slane %v3388, 4
    %v3390 = vadd.f32 %v3388, %v3389
    %v3391 = vrot.slane %v3390, 2
    %v3392 = vadd.f32 %v3390, %v3391
    %v3393 = vrot.slane %v3392, 1
    %v3394 = vadd.f32 %v3392, %v3393
    %v3395 = vadd.f32 %v3379, %v3381
    %v3396 = vadd.f32 %v3395, %v3383
    %v3397 = vadd.f32 %v3396, %v3385
    %v3398 = vrot.slane %v3397, 4
    %v3399 = vadd.f32 %v3397, %v3398
    %v3400 = vrot.slane %v3399, 2
    %v3401 = vadd.f32 %v3399, %v3400
    %v3402 = vrot.slane %v3401, 1
    %v3403 = vadd.f32 %v3401, %v3402
    %v3404 = vmul.f32 %v3394, %v1266
    %v3405 = vmul.f32 %v3403, %v1266
    %v3406 = vmax.f32 %v3378, %v3382
    %v3407 = vmax.f32 %v3380, %v3384
    %v3408 = vmax.f32 %v3406, %v3407
    %v3409 = vrot.slane %v3408, 4
    %v3410 = vmax.f32 %v3408, %v3409
    %v3411 = vrot.slane %v3410, 2
    %v3412 = vmax.f32 %v3410, %v3411
    %v3413 = vrot.slane %v3412, 1
    %v3414 = vmax.f32 %v3412, %v3413
    %v3415 = vmax.f32 %v3379, %v3383
    %v3416 = vmax.f32 %v3381, %v3385
    %v3417 = vmax.f32 %v3415, %v3416
    %v3418 = vrot.slane %v3417, 4
    %v3419 = vmax.f32 %v3417, %v3418
    %v3420 = vrot.slane %v3419, 2
    %v3421 = vmax.f32 %v3419, %v3420
    %v3422 = vrot.slane %v3421, 1
    %v3423 = vmax.f32 %v3421, %v3422
    %s3424 = sld [smem:[#allocation2 + $0x18]]
    %v3425 = vstv %s3424
    %v3426 = vmul.f32 %v3404, %v3425
    %v3427 = vmul.f32 %v3405, %v3425
    %s3428 = sld [smem:[#allocation2 + $0x98]]
    %v3429 = vstv %s3428
    %v3430 = vmul.f32 %v3414, %v3429
    %v3431 = vmul.f32 %v3423, %v3429
    %v3432 = vadd.f32 %v3426, %v3430
    %v3433 = vadd.f32 %v3427, %v3431
    %3434 = vrot.lane.b32.xlu0 %v3404, 51
    %v3435 = vpop.permute.xlu0 %3434
    %3436 = vrot.lane.b32.xlu0 %v3405, 51
    %v3437 = vpop.permute.xlu0 %3436
    %v3438 = vsel %vm1301, %v3435, %v3437
    %v3439 = vsel %vm1301, %v3437, %v3435
    %s3440 = sld [smem:[#allocation2]]
    %v3441 = vstv %s3440
    %v3442 = vmul.f32 %v3439, %v3441
    %v3443 = vmul.f32 %v3438, %v3441
    %3444 = vrot.lane.b32.xlu0 %v3414, 51
    %v3445 = vpop.permute.xlu0 %3444
    %3446 = vrot.lane.b32.xlu0 %v3423, 51
    %v3447 = vpop.permute.xlu0 %3446
    %v3448 = vsel %vm1301, %v3445, %v3447
    %v3449 = vsel %vm1301, %v3447, %v3445
    %s3450 = sld [smem:[#allocation2 + $0x80]]
    %v3451 = vstv %s3450
    %v3452 = vmul.f32 %v3449, %v3451
    %v3453 = vmul.f32 %v3448, %v3451
    %v3454 = vadd.f32 %v3442, %v3452
    %v3455 = vadd.f32 %v3443, %v3453
    %v3456 = vsel %vm73, %v3454, 0.0
    %v3457 = vsel %vm74, %v3455, 0.0
    %v3458 = vadd.f32 %v3432, %v3456
    %v3459 = vadd.f32 %v3433, %v3457
    %3460 = vrot.lane.b32.xlu0 %v3404, 50
    %v3461 = vpop.permute.xlu0 %3460
    %3462 = vrot.lane.b32.xlu0 %v3405, 50
    %v3463 = vpop.permute.xlu0 %3462
    %v3464 = vsel %vm1328, %v3461, %v3463
    %v3465 = vsel %vm1328, %v3463, %v3461
    %s3466 = sld [smem:[#allocation2 + $0x1]]
    %v3467 = vstv %s3466
    %v3468 = vmul.f32 %v3465, %v3467
    %v3469 = vmul.f32 %v3464, %v3467
    %3470 = vrot.lane.b32.xlu0 %v3414, 50
    %v3471 = vpop.permute.xlu0 %3470
    %3472 = vrot.lane.b32.xlu0 %v3423, 50
    %v3473 = vpop.permute.xlu0 %3472
    %v3474 = vsel %vm1328, %v3471, %v3473
    %v3475 = vsel %vm1328, %v3473, %v3471
    %s3476 = sld [smem:[#allocation2 + $0x81]]
    %v3477 = vstv %s3476
    %v3478 = vmul.f32 %v3475, %v3477
    %v3479 = vmul.f32 %v3474, %v3477
    %v3480 = vadd.f32 %v3468, %v3478
    %v3481 = vadd.f32 %v3469, %v3479
    %v3482 = vsel %vm77, %v3480, 0.0
    %v3483 = vsel %vm78, %v3481, 0.0
    %v3484 = vadd.f32 %v3458, %v3482
    %v3485 = vadd.f32 %v3459, %v3483
    %3486 = vrot.lane.b32.xlu0 %v3404, 49
    %v3487 = vpop.permute.xlu0 %3486
    %3488 = vrot.lane.b32.xlu0 %v3405, 49
    %v3489 = vpop.permute.xlu0 %3488
    %v3490 = vsel %vm1355, %v3487, %v3489
    %v3491 = vsel %vm1355, %v3489, %v3487
    %s3492 = sld [smem:[#allocation2 + $0x2]]
    %v3493 = vstv %s3492
    %v3494 = vmul.f32 %v3491, %v3493
    %v3495 = vmul.f32 %v3490, %v3493
    %3496 = vrot.lane.b32.xlu0 %v3414, 49
    %v3497 = vpop.permute.xlu0 %3496
    %3498 = vrot.lane.b32.xlu0 %v3423, 49
    %v3499 = vpop.permute.xlu0 %3498
    %v3500 = vsel %vm1355, %v3497, %v3499
    %v3501 = vsel %vm1355, %v3499, %v3497
    %s3502 = sld [smem:[#allocation2 + $0x82]]
    %v3503 = vstv %s3502
    %v3504 = vmul.f32 %v3501, %v3503
    %v3505 = vmul.f32 %v3500, %v3503
    %v3506 = vadd.f32 %v3494, %v3504
    %v3507 = vadd.f32 %v3495, %v3505
    %v3508 = vsel %vm79, %v3506, 0.0
    %v3509 = vsel %vm80, %v3507, 0.0
    %v3510 = vadd.f32 %v3484, %v3508
    %v3511 = vadd.f32 %v3485, %v3509
    %3512 = vrot.lane.b32.xlu0 %v3404, 48
    %v3513 = vpop.permute.xlu0 %3512
    %3514 = vrot.lane.b32.xlu0 %v3405, 48
    %v3515 = vpop.permute.xlu0 %3514
    %v3516 = vsel %vm1382, %v3513, %v3515
    %v3517 = vsel %vm1382, %v3515, %v3513
    %s3518 = sld [smem:[#allocation2 + $0x3]]
    %v3519 = vstv %s3518
    %v3520 = vmul.f32 %v3517, %v3519
    %v3521 = vmul.f32 %v3516, %v3519
    %3522 = vrot.lane.b32.xlu0 %v3414, 48
    %v3523 = vpop.permute.xlu0 %3522
    %3524 = vrot.lane.b32.xlu0 %v3423, 48
    %v3525 = vpop.permute.xlu0 %3524
    %v3526 = vsel %vm1382, %v3523, %v3525
    %v3527 = vsel %vm1382, %v3525, %v3523
    %s3528 = sld [smem:[#allocation2 + $0x83]]
    %v3529 = vstv %s3528
    %v3530 = vmul.f32 %v3527, %v3529
    %v3531 = vmul.f32 %v3526, %v3529
    %v3532 = vadd.f32 %v3520, %v3530
    %v3533 = vadd.f32 %v3521, %v3531
    %v3534 = vsel %vm71, %v3532, 0.0
    %v3535 = vsel %vm72, %v3533, 0.0
    %v3536 = vadd.f32 %v3510, %v3534
    %v3537 = vadd.f32 %v3511, %v3535
    %3538 = vrot.lane.b32.xlu0 %v3404, 47
    %v3539 = vpop.permute.xlu0 %3538
    %3540 = vrot.lane.b32.xlu0 %v3405, 47
    %v3541 = vpop.permute.xlu0 %3540
    %v3542 = vsel %vm1409, %v3539, %v3541
    %v3543 = vsel %vm1409, %v3541, %v3539
    %s3544 = sld [smem:[#allocation2 + $0x4]]
    %v3545 = vstv %s3544
    %v3546 = vmul.f32 %v3543, %v3545
    %v3547 = vmul.f32 %v3542, %v3545
    %3548 = vrot.lane.b32.xlu0 %v3414, 47
    %v3549 = vpop.permute.xlu0 %3548
    %3550 = vrot.lane.b32.xlu0 %v3423, 47
    %v3551 = vpop.permute.xlu0 %3550
    %v3552 = vsel %vm1409, %v3549, %v3551
    %v3553 = vsel %vm1409, %v3551, %v3549
    %s3554 = sld [smem:[#allocation2 + $0x84]]
    %v3555 = vstv %s3554
    %v3556 = vmul.f32 %v3553, %v3555
    %v3557 = vmul.f32 %v3552, %v3555
    %v3558 = vadd.f32 %v3546, %v3556
    %v3559 = vadd.f32 %v3547, %v3557
    %v3560 = vsel %vm81, %v3558, 0.0
    %v3561 = vsel %vm82, %v3559, 0.0
    %v3562 = vadd.f32 %v3536, %v3560
    %v3563 = vadd.f32 %v3537, %v3561
    %3564 = vrot.lane.b32.xlu0 %v3404, 46
    %v3565 = vpop.permute.xlu0 %3564
    %3566 = vrot.lane.b32.xlu0 %v3405, 46
    %v3567 = vpop.permute.xlu0 %3566
    %v3568 = vsel %vm1436, %v3565, %v3567
    %v3569 = vsel %vm1436, %v3567, %v3565
    %s3570 = sld [smem:[#allocation2 + $0x5]]
    %v3571 = vstv %s3570
    %v3572 = vmul.f32 %v3569, %v3571
    %v3573 = vmul.f32 %v3568, %v3571
    %3574 = vrot.lane.b32.xlu0 %v3414, 46
    %v3575 = vpop.permute.xlu0 %3574
    %3576 = vrot.lane.b32.xlu0 %v3423, 46
    %v3577 = vpop.permute.xlu0 %3576
    %v3578 = vsel %vm1436, %v3575, %v3577
    %v3579 = vsel %vm1436, %v3577, %v3575
    %s3580 = sld [smem:[#allocation2 + $0x85]]
    %v3581 = vstv %s3580
    %v3582 = vmul.f32 %v3579, %v3581
    %v3583 = vmul.f32 %v3578, %v3581
    %v3584 = vadd.f32 %v3572, %v3582
    %v3585 = vadd.f32 %v3573, %v3583
    %v3586 = vsel %vm85, %v3584, 0.0
    %v3587 = vsel %vm86, %v3585, 0.0
    %v3588 = vadd.f32 %v3562, %v3586
    %v3589 = vadd.f32 %v3563, %v3587
    %3590 = vrot.lane.b32.xlu0 %v3404, 45
    %v3591 = vpop.permute.xlu0 %3590
    %3592 = vrot.lane.b32.xlu0 %v3405, 45
    %v3593 = vpop.permute.xlu0 %3592
    %v3594 = vsel %vm1463, %v3591, %v3593
    %v3595 = vsel %vm1463, %v3593, %v3591
    %s3596 = sld [smem:[#allocation2 + $0x6]]
    %v3597 = vstv %s3596
    %v3598 = vmul.f32 %v3595, %v3597
    %v3599 = vmul.f32 %v3594, %v3597
    %3600 = vrot.lane.b32.xlu0 %v3414, 45
    %v3601 = vpop.permute.xlu0 %3600
    %3602 = vrot.lane.b32.xlu0 %v3423, 45
    %v3603 = vpop.permute.xlu0 %3602
    %v3604 = vsel %vm1463, %v3601, %v3603
    %v3605 = vsel %vm1463, %v3603, %v3601
    %s3606 = sld [smem:[#allocation2 + $0x86]]
    %v3607 = vstv %s3606
    %v3608 = vmul.f32 %v3605, %v3607
    %v3609 = vmul.f32 %v3604, %v3607
    %v3610 = vadd.f32 %v3598, %v3608
    %v3611 = vadd.f32 %v3599, %v3609
    %v3612 = vsel %vm89, %v3610, 0.0
    %v3613 = vsel %vm90, %v3611, 0.0
    %v3614 = vadd.f32 %v3588, %v3612
    %v3615 = vadd.f32 %v3589, %v3613
    %3616 = vrot.lane.b32.xlu0 %v3404, 35
    %v3617 = vpop.permute.xlu0 %3616
    %3618 = vrot.lane.b32.xlu0 %v3405, 35
    %v3619 = vpop.permute.xlu0 %3618
    %v3620 = vsel %vm1490, %v3617, %v3619
    %v3621 = vsel %vm1490, %v3619, %v3617
    %s3622 = sld [smem:[#allocation2 + $0x7]]
    %v3623 = vstv %s3622
    %v3624 = vmul.f32 %v3621, %v3623
    %v3625 = vmul.f32 %v3620, %v3623
    %3626 = vrot.lane.b32.xlu0 %v3414, 35
    %v3627 = vpop.permute.xlu0 %3626
    %3628 = vrot.lane.b32.xlu0 %v3423, 35
    %v3629 = vpop.permute.xlu0 %3628
    %v3630 = vsel %vm1490, %v3627, %v3629
    %v3631 = vsel %vm1490, %v3629, %v3627
    %s3632 = sld [smem:[#allocation2 + $0x87]]
    %v3633 = vstv %s3632
    %v3634 = vmul.f32 %v3631, %v3633
    %v3635 = vmul.f32 %v3630, %v3633
    %v3636 = vadd.f32 %v3624, %v3634
    %v3637 = vadd.f32 %v3625, %v3635
    %v3638 = vsel %vm93, %v3636, 0.0
    %v3639 = vsel %vm94, %v3637, 0.0
    %v3640 = vadd.f32 %v3614, %v3638
    %v3641 = vadd.f32 %v3615, %v3639
    %3642 = vrot.lane.b32.xlu0 %v3404, 34
    %v3643 = vpop.permute.xlu0 %3642
    %3644 = vrot.lane.b32.xlu0 %v3405, 34
    %v3645 = vpop.permute.xlu0 %3644
    %v3646 = vsel %vm1517, %v3643, %v3645
    %v3647 = vsel %vm1517, %v3645, %v3643
    %s3648 = sld [smem:[#allocation2 + $0x8]]
    %v3649 = vstv %s3648
    %v3650 = vmul.f32 %v3647, %v3649
    %v3651 = vmul.f32 %v3646, %v3649
    %3652 = vrot.lane.b32.xlu0 %v3414, 34
    %v3653 = vpop.permute.xlu0 %3652
    %3654 = vrot.lane.b32.xlu0 %v3423, 34
    %v3655 = vpop.permute.xlu0 %3654
    %v3656 = vsel %vm1517, %v3653, %v3655
    %v3657 = vsel %vm1517, %v3655, %v3653
    %s3658 = sld [smem:[#allocation2 + $0x88]]
    %v3659 = vstv %s3658
    %v3660 = vmul.f32 %v3657, %v3659
    %v3661 = vmul.f32 %v3656, %v3659
    %v3662 = vadd.f32 %v3650, %v3660
    %v3663 = vadd.f32 %v3651, %v3661
    %v3664 = vsel %vm95, %v3662, 0.0
    %v3665 = vsel %vm96, %v3663, 0.0
    %v3666 = vadd.f32 %v3640, %v3664
    %v3667 = vadd.f32 %v3641, %v3665
    %3668 = vrot.lane.b32.xlu0 %v3404, 33
    %v3669 = vpop.permute.xlu0 %3668
    %3670 = vrot.lane.b32.xlu0 %v3405, 33
    %v3671 = vpop.permute.xlu0 %3670
    %v3672 = vsel %vm1544, %v3669, %v3671
    %v3673 = vsel %vm1544, %v3671, %v3669
    %s3674 = sld [smem:[#allocation2 + $0x9]]
    %v3675 = vstv %s3674
    %v3676 = vmul.f32 %v3673, %v3675
    %v3677 = vmul.f32 %v3672, %v3675
    %3678 = vrot.lane.b32.xlu0 %v3414, 33
    %v3679 = vpop.permute.xlu0 %3678
    %3680 = vrot.lane.b32.xlu0 %v3423, 33
    %v3681 = vpop.permute.xlu0 %3680
    %v3682 = vsel %vm1544, %v3679, %v3681
    %v3683 = vsel %vm1544, %v3681, %v3679
    %s3684 = sld [smem:[#allocation2 + $0x89]]
    %v3685 = vstv %s3684
    %v3686 = vmul.f32 %v3683, %v3685
    %v3687 = vmul.f32 %v3682, %v3685
    %v3688 = vadd.f32 %v3676, %v3686
    %v3689 = vadd.f32 %v3677, %v3687
    %v3690 = vsel %vm97, %v3688, 0.0
    %v3691 = vsel %vm98, %v3689, 0.0
    %v3692 = vadd.f32 %v3666, %v3690
    %v3693 = vadd.f32 %v3667, %v3691
    %3694 = vrot.lane.b32.xlu0 %v3404, 32
    %v3695 = vpop.permute.xlu0 %3694
    %3696 = vrot.lane.b32.xlu0 %v3405, 32
    %v3697 = vpop.permute.xlu0 %3696
    %v3698 = vsel %vm1571, %v3695, %v3697
    %v3699 = vsel %vm1571, %v3697, %v3695
    %s3700 = sld [smem:[#allocation2 + $0xa]]
    %v3701 = vstv %s3700
    %v3702 = vmul.f32 %v3699, %v3701
    %v3703 = vmul.f32 %v3698, %v3701
    %3704 = vrot.lane.b32.xlu0 %v3414, 32
    %v3705 = vpop.permute.xlu0 %3704
    %3706 = vrot.lane.b32.xlu0 %v3423, 32
    %v3707 = vpop.permute.xlu0 %3706
    %v3708 = vsel %vm1571, %v3705, %v3707
    %v3709 = vsel %vm1571, %v3707, %v3705
    %s3710 = sld [smem:[#allocation2 + $0x8a]]
    %v3711 = vstv %s3710
    %v3712 = vmul.f32 %v3709, %v3711
    %v3713 = vmul.f32 %v3708, %v3711
    %v3714 = vadd.f32 %v3702, %v3712
    %v3715 = vadd.f32 %v3703, %v3713
    %v3716 = vsel %vm91, %v3714, 0.0
    %v3717 = vsel %vm92, %v3715, 0.0
    %v3718 = vadd.f32 %v3692, %v3716
    %v3719 = vadd.f32 %v3693, %v3717
    %3720 = vrot.lane.b32.xlu0 %v3404, 31
    %v3721 = vpop.permute.xlu0 %3720
    %3722 = vrot.lane.b32.xlu0 %v3405, 31
    %v3723 = vpop.permute.xlu0 %3722
    %v3724 = vsel %vm1598, %v3721, %v3723
    %v3725 = vsel %vm1598, %v3723, %v3721
    %s3726 = sld [smem:[#allocation2 + $0xb]]
    %v3727 = vstv %s3726
    %v3728 = vmul.f32 %v3725, %v3727
    %v3729 = vmul.f32 %v3724, %v3727
    %3730 = vrot.lane.b32.xlu0 %v3414, 31
    %v3731 = vpop.permute.xlu0 %3730
    %3732 = vrot.lane.b32.xlu0 %v3423, 31
    %v3733 = vpop.permute.xlu0 %3732
    %v3734 = vsel %vm1598, %v3731, %v3733
    %v3735 = vsel %vm1598, %v3733, %v3731
    %s3736 = sld [smem:[#allocation2 + $0x8b]]
    %v3737 = vstv %s3736
    %v3738 = vmul.f32 %v3735, %v3737
    %v3739 = vmul.f32 %v3734, %v3737
    %v3740 = vadd.f32 %v3728, %v3738
    %v3741 = vadd.f32 %v3729, %v3739
    %v3742 = vsel %vm99, %v3740, 0.0
    %v3743 = vsel %vm100, %v3741, 0.0
    %v3744 = vadd.f32 %v3718, %v3742
    %v3745 = vadd.f32 %v3719, %v3743
    %3746 = vrot.lane.b32.xlu0 %v3404, 30
    %v3747 = vpop.permute.xlu0 %3746
    %3748 = vrot.lane.b32.xlu0 %v3405, 30
    %v3749 = vpop.permute.xlu0 %3748
    %v3750 = vsel %vm1625, %v3747, %v3749
    %v3751 = vsel %vm1625, %v3749, %v3747
    %s3752 = sld [smem:[#allocation2 + $0xc]]
    %v3753 = vstv %s3752
    %v3754 = vmul.f32 %v3751, %v3753
    %v3755 = vmul.f32 %v3750, %v3753
    %3756 = vrot.lane.b32.xlu0 %v3414, 30
    %v3757 = vpop.permute.xlu0 %3756
    %3758 = vrot.lane.b32.xlu0 %v3423, 30
    %v3759 = vpop.permute.xlu0 %3758
    %v3760 = vsel %vm1625, %v3757, %v3759
    %v3761 = vsel %vm1625, %v3759, %v3757
    %s3762 = sld [smem:[#allocation2 + $0x8c]]
    %v3763 = vstv %s3762
    %v3764 = vmul.f32 %v3761, %v3763
    %v3765 = vmul.f32 %v3760, %v3763
    %v3766 = vadd.f32 %v3754, %v3764
    %v3767 = vadd.f32 %v3755, %v3765
    %v3768 = vsel %vm101, %v3766, 0.0
    %v3769 = vsel %vm102, %v3767, 0.0
    %v3770 = vadd.f32 %v3744, %v3768
    %v3771 = vadd.f32 %v3745, %v3769
    %3772 = vrot.lane.b32.xlu0 %v3404, 29
    %v3773 = vpop.permute.xlu0 %3772
    %3774 = vrot.lane.b32.xlu0 %v3405, 29
    %v3775 = vpop.permute.xlu0 %3774
    %v3776 = vsel %vm1652, %v3773, %v3775
    %v3777 = vsel %vm1652, %v3775, %v3773
    %s3778 = sld [smem:[#allocation2 + $0xd]]
    %v3779 = vstv %s3778
    %v3780 = vmul.f32 %v3777, %v3779
    %v3781 = vmul.f32 %v3776, %v3779
    %3782 = vrot.lane.b32.xlu0 %v3414, 29
    %v3783 = vpop.permute.xlu0 %3782
    %3784 = vrot.lane.b32.xlu0 %v3423, 29
    %v3785 = vpop.permute.xlu0 %3784
    %v3786 = vsel %vm1652, %v3783, %v3785
    %v3787 = vsel %vm1652, %v3785, %v3783
    %s3788 = sld [smem:[#allocation2 + $0x8d]]
    %v3789 = vstv %s3788
    %v3790 = vmul.f32 %v3787, %v3789
    %v3791 = vmul.f32 %v3786, %v3789
    %v3792 = vadd.f32 %v3780, %v3790
    %v3793 = vadd.f32 %v3781, %v3791
    %v3794 = vsel %vm103, %v3792, 0.0
    %v3795 = vsel %vm104, %v3793, 0.0
    %v3796 = vadd.f32 %v3770, %v3794
    %v3797 = vadd.f32 %v3771, %v3795
    %3798 = vrot.lane.b32.xlu0 %v3404, 19
    %v3799 = vpop.permute.xlu0 %3798
    %3800 = vrot.lane.b32.xlu0 %v3405, 19
    %v3801 = vpop.permute.xlu0 %3800
    %v3802 = vsel %vm1679, %v3799, %v3801
    %v3803 = vsel %vm1679, %v3801, %v3799
    %s3804 = sld [smem:[#allocation2 + $0xe]]
    %v3805 = vstv %s3804
    %v3806 = vmul.f32 %v3803, %v3805
    %v3807 = vmul.f32 %v3802, %v3805
    %3808 = vrot.lane.b32.xlu0 %v3414, 19
    %v3809 = vpop.permute.xlu0 %3808
    %3810 = vrot.lane.b32.xlu0 %v3423, 19
    %v3811 = vpop.permute.xlu0 %3810
    %v3812 = vsel %vm1679, %v3809, %v3811
    %v3813 = vsel %vm1679, %v3811, %v3809
    %s3814 = sld [smem:[#allocation2 + $0x8e]]
    %v3815 = vstv %s3814
    %v3816 = vmul.f32 %v3813, %v3815
    %v3817 = vmul.f32 %v3812, %v3815
    %v3818 = vadd.f32 %v3806, %v3816
    %v3819 = vadd.f32 %v3807, %v3817
    %v3820 = vsel %vm105, %v3818, 0.0
    %v3821 = vsel %vm106, %v3819, 0.0
    %v3822 = vadd.f32 %v3796, %v3820
    %v3823 = vadd.f32 %v3797, %v3821
    %3824 = vrot.lane.b32.xlu0 %v3404, 18
    %v3825 = vpop.permute.xlu0 %3824
    %3826 = vrot.lane.b32.xlu0 %v3405, 18
    %v3827 = vpop.permute.xlu0 %3826
    %v3828 = vsel %vm1706, %v3825, %v3827
    %v3829 = vsel %vm1706, %v3827, %v3825
    %s3830 = sld [smem:[#allocation2 + $0xf]]
    %v3831 = vstv %s3830
    %v3832 = vmul.f32 %v3829, %v3831
    %v3833 = vmul.f32 %v3828, %v3831
    %3834 = vrot.lane.b32.xlu0 %v3414, 18
    %v3835 = vpop.permute.xlu0 %3834
    %3836 = vrot.lane.b32.xlu0 %v3423, 18
    %v3837 = vpop.permute.xlu0 %3836
    %v3838 = vsel %vm1706, %v3835, %v3837
    %v3839 = vsel %vm1706, %v3837, %v3835
    %s3840 = sld [smem:[#allocation2 + $0x8f]]
    %v3841 = vstv %s3840
    %v3842 = vmul.f32 %v3839, %v3841
    %v3843 = vmul.f32 %v3838, %v3841
    %v3844 = vadd.f32 %v3832, %v3842
    %v3845 = vadd.f32 %v3833, %v3843
    %v3846 = vsel %vm107, %v3844, 0.0
    %v3847 = vsel %vm108, %v3845, 0.0
    %v3848 = vadd.f32 %v3822, %v3846
    %v3849 = vadd.f32 %v3823, %v3847
    %3850 = vrot.lane.b32.xlu0 %v3404, 17
    %v3851 = vpop.permute.xlu0 %3850
    %3852 = vrot.lane.b32.xlu0 %v3405, 17
    %v3853 = vpop.permute.xlu0 %3852
    %v3854 = vsel %vm256, %v3851, %v3853
    %v3855 = vsel %vm256, %v3853, %v3851
    %s3856 = sld [smem:[#allocation2 + $0x10]]
    %v3857 = vstv %s3856
    %v3858 = vmul.f32 %v3855, %v3857
    %v3859 = vmul.f32 %v3854, %v3857
    %3860 = vrot.lane.b32.xlu0 %v3414, 17
    %v3861 = vpop.permute.xlu0 %3860
    %3862 = vrot.lane.b32.xlu0 %v3423, 17
    %v3863 = vpop.permute.xlu0 %3862
    %v3864 = vsel %vm256, %v3861, %v3863
    %v3865 = vsel %vm256, %v3863, %v3861
    %s3866 = sld [smem:[#allocation2 + $0x90]]
    %v3867 = vstv %s3866
    %v3868 = vmul.f32 %v3865, %v3867
    %v3869 = vmul.f32 %v3864, %v3867
    %v3870 = vadd.f32 %v3858, %v3868
    %v3871 = vadd.f32 %v3859, %v3869
    %v3872 = vsel %vm57, %v3870, 0.0
    %v3873 = vsel %vm58, %v3871, 0.0
    %v3874 = vadd.f32 %v3848, %v3872
    %v3875 = vadd.f32 %v3849, %v3873
    %3876 = vrot.lane.b32.xlu0 %v3404, 16
    %v3877 = vpop.permute.xlu0 %3876
    %3878 = vrot.lane.b32.xlu0 %v3405, 16
    %v3879 = vpop.permute.xlu0 %3878
    %v3880 = vsel %vm329, %v3877, %v3879
    %v3881 = vsel %vm329, %v3879, %v3877
    %s3882 = sld [smem:[#allocation2 + $0x11]]
    %v3883 = vstv %s3882
    %v3884 = vmul.f32 %v3881, %v3883
    %v3885 = vmul.f32 %v3880, %v3883
    %3886 = vrot.lane.b32.xlu0 %v3414, 16
    %v3887 = vpop.permute.xlu0 %3886
    %3888 = vrot.lane.b32.xlu0 %v3423, 16
    %v3889 = vpop.permute.xlu0 %3888
    %v3890 = vsel %vm329, %v3887, %v3889
    %v3891 = vsel %vm329, %v3889, %v3887
    %s3892 = sld [smem:[#allocation2 + $0x91]]
    %v3893 = vstv %s3892
    %v3894 = vmul.f32 %v3891, %v3893
    %v3895 = vmul.f32 %v3890, %v3893
    %v3896 = vadd.f32 %v3884, %v3894
    %v3897 = vadd.f32 %v3885, %v3895
    %v3898 = vsel %vm55, %v3896, 0.0
    %v3899 = vsel %vm56, %v3897, 0.0
    %v3900 = vadd.f32 %v3874, %v3898
    %v3901 = vadd.f32 %v3875, %v3899
    %3902 = vrot.lane.b32.xlu0 %v3404, 15
    %v3903 = vpop.permute.xlu0 %3902
    %3904 = vrot.lane.b32.xlu0 %v3405, 15
    %v3905 = vpop.permute.xlu0 %3904
    %v3906 = vsel %vm402, %v3903, %v3905
    %v3907 = vsel %vm402, %v3905, %v3903
    %s3908 = sld [smem:[#allocation2 + $0x12]]
    %v3909 = vstv %s3908
    %v3910 = vmul.f32 %v3907, %v3909
    %v3911 = vmul.f32 %v3906, %v3909
    %3912 = vrot.lane.b32.xlu0 %v3414, 15
    %v3913 = vpop.permute.xlu0 %3912
    %3914 = vrot.lane.b32.xlu0 %v3423, 15
    %v3915 = vpop.permute.xlu0 %3914
    %v3916 = vsel %vm402, %v3913, %v3915
    %v3917 = vsel %vm402, %v3915, %v3913
    %s3918 = sld [smem:[#allocation2 + $0x92]]
    %v3919 = vstv %s3918
    %v3920 = vmul.f32 %v3917, %v3919
    %v3921 = vmul.f32 %v3916, %v3919
    %v3922 = vadd.f32 %v3910, %v3920
    %v3923 = vadd.f32 %v3911, %v3921
    %v3924 = vsel %vm61, %v3922, 0.0
    %v3925 = vsel %vm62, %v3923, 0.0
    %v3926 = vadd.f32 %v3900, %v3924
    %v3927 = vadd.f32 %v3901, %v3925
    %3928 = vrot.lane.b32.xlu0 %v3404, 14
    %v3929 = vpop.permute.xlu0 %3928
    %3930 = vrot.lane.b32.xlu0 %v3405, 14
    %v3931 = vpop.permute.xlu0 %3930
    %v3932 = vsel %vm1811, %v3929, %v3931
    %v3933 = vsel %vm1811, %v3931, %v3929
    %s3934 = sld [smem:[#allocation2 + $0x13]]
    %v3935 = vstv %s3934
    %v3936 = vmul.f32 %v3933, %v3935
    %v3937 = vmul.f32 %v3932, %v3935
    %3938 = vrot.lane.b32.xlu0 %v3414, 14
    %v3939 = vpop.permute.xlu0 %3938
    %3940 = vrot.lane.b32.xlu0 %v3423, 14
    %v3941 = vpop.permute.xlu0 %3940
    %v3942 = vsel %vm1811, %v3939, %v3941
    %v3943 = vsel %vm1811, %v3941, %v3939
    %s3944 = sld [smem:[#allocation2 + $0x93]]
    %v3945 = vstv %s3944
    %v3946 = vmul.f32 %v3943, %v3945
    %v3947 = vmul.f32 %v3942, %v3945
    %v3948 = vadd.f32 %v3936, %v3946
    %v3949 = vadd.f32 %v3937, %v3947
    %v3950 = vsel %vm109, %v3948, 0.0
    %v3951 = vsel %vm110, %v3949, 0.0
    %v3952 = vadd.f32 %v3926, %v3950
    %v3953 = vadd.f32 %v3927, %v3951
    %3954 = vrot.lane.b32.xlu0 %v3404, 13
    %v3955 = vpop.permute.xlu0 %3954
    %3956 = vrot.lane.b32.xlu0 %v3405, 13
    %v3957 = vpop.permute.xlu0 %3956
    %v3958 = vsel %vm1838, %v3955, %v3957
    %v3959 = vsel %vm1838, %v3957, %v3955
    %s3960 = sld [smem:[#allocation2 + $0x14]]
    %v3961 = vstv %s3960
    %v3962 = vmul.f32 %v3959, %v3961
    %v3963 = vmul.f32 %v3958, %v3961
    %3964 = vrot.lane.b32.xlu0 %v3414, 13
    %v3965 = vpop.permute.xlu0 %3964
    %3966 = vrot.lane.b32.xlu0 %v3423, 13
    %v3967 = vpop.permute.xlu0 %3966
    %v3968 = vsel %vm1838, %v3965, %v3967
    %v3969 = vsel %vm1838, %v3967, %v3965
    %s3970 = sld [smem:[#allocation2 + $0x94]]
    %v3971 = vstv %s3970
    %v3972 = vmul.f32 %v3969, %v3971
    %v3973 = vmul.f32 %v3968, %v3971
    %v3974 = vadd.f32 %v3962, %v3972
    %v3975 = vadd.f32 %v3963, %v3973
    %v3976 = vsel %vm111, %v3974, 0.0
    %v3977 = vsel %vm112, %v3975, 0.0
    %v3978 = vadd.f32 %v3952, %v3976
    %v3979 = vadd.f32 %v3953, %v3977
    %3980 = vrot.lane.b32.xlu0 %v3404, 3
    %v3981 = vpop.permute.xlu0 %3980
    %3982 = vrot.lane.b32.xlu0 %v3405, 3
    %v3983 = vpop.permute.xlu0 %3982
    %v3984 = vsel %vm1865, %v3981, %v3983
    %v3985 = vsel %vm1865, %v3983, %v3981
    %s3986 = sld [smem:[#allocation2 + $0x15]]
    %v3987 = vstv %s3986
    %v3988 = vmul.f32 %v3985, %v3987
    %v3989 = vmul.f32 %v3984, %v3987
    %3990 = vrot.lane.b32.xlu0 %v3414, 3
    %v3991 = vpop.permute.xlu0 %3990
    %3992 = vrot.lane.b32.xlu0 %v3423, 3
    %v3993 = vpop.permute.xlu0 %3992
    %v3994 = vsel %vm1865, %v3991, %v3993
    %v3995 = vsel %vm1865, %v3993, %v3991
    %s3996 = sld [smem:[#allocation2 + $0x95]]
    %v3997 = vstv %s3996
    %v3998 = vmul.f32 %v3995, %v3997
    %v3999 = vmul.f32 %v3994, %v3997
    %v4000 = vadd.f32 %v3988, %v3998
    %v4001 = vadd.f32 %v3989, %v3999
    %v4002 = vsel %vm69, %v4000, 0.0
    %v4003 = vsel %vm70, %v4001, 0.0
    %v4004 = vadd.f32 %v3978, %v4002
    %v4005 = vadd.f32 %v3979, %v4003
    %4006 = vrot.lane.b32.xlu0 %v3404, 2
    %v4007 = vpop.permute.xlu0 %4006
    %4008 = vrot.lane.b32.xlu0 %v3405, 2
    %v4009 = vpop.permute.xlu0 %4008
    %v4010 = vsel %vm1892, %v4007, %v4009
    %v4011 = vsel %vm1892, %v4009, %v4007
    %s4012 = sld [smem:[#allocation2 + $0x16]]
    %v4013 = vstv %s4012
    %v4014 = vmul.f32 %v4011, %v4013
    %v4015 = vmul.f32 %v4010, %v4013
    %4016 = vrot.lane.b32.xlu0 %v3414, 2
    %v4017 = vpop.permute.xlu0 %4016
    %4018 = vrot.lane.b32.xlu0 %v3423, 2
    %v4019 = vpop.permute.xlu0 %4018
    %v4020 = vsel %vm1892, %v4017, %v4019
    %v4021 = vsel %vm1892, %v4019, %v4017
    %s4022 = sld [smem:[#allocation2 + $0x96]]
    %v4023 = vstv %s4022
    %v4024 = vmul.f32 %v4021, %v4023
    %v4025 = vmul.f32 %v4020, %v4023
    %v4026 = vadd.f32 %v4014, %v4024
    %v4027 = vadd.f32 %v4015, %v4025
    %v4028 = vsel %vm75, %v4026, 0.0
    %v4029 = vsel %vm76, %v4027, 0.0
    %v4030 = vadd.f32 %v4004, %v4028
    %v4031 = vadd.f32 %v4005, %v4029
    %4032 = vrot.lane.b32.xlu0 %v3404, 1
    %v4033 = vpop.permute.xlu0 %4032
    %4034 = vrot.lane.b32.xlu0 %v3405, 1
    %v4035 = vpop.permute.xlu0 %4034
    %v4036 = vsel %vm475, %v4033, %v4035
    %v4037 = vsel %vm475, %v4035, %v4033
    %s4038 = sld [smem:[#allocation2 + $0x17]]
    %v4039 = vstv %s4038
    %v4040 = vmul.f32 %v4037, %v4039
    %v4041 = vmul.f32 %v4036, %v4039
    %4042 = vrot.lane.b32.xlu0 %v3414, 1
    %v4043 = vpop.permute.xlu0 %4042
    %4044 = vrot.lane.b32.xlu0 %v3423, 1
    %v4045 = vpop.permute.xlu0 %4044
    %v4046 = vsel %vm475, %v4043, %v4045
    %v4047 = vsel %vm475, %v4045, %v4043
    %s4048 = sld [smem:[#allocation2 + $0x97]]
    %v4049 = vstv %s4048
    %v4050 = vmul.f32 %v4047, %v4049
    %v4051 = vmul.f32 %v4046, %v4049
    %v4052 = vadd.f32 %v4040, %v4050
    %v4053 = vadd.f32 %v4041, %v4051
    %v4054 = vsel %vm53, %v4052, 0.0
    %v4055 = vsel %vm54, %v4053, 0.0
    %v4056 = vadd.f32 %v4030, %v4054
    %v4057 = vadd.f32 %v4031, %v4055
    %4058 = vrot.lane.b32.xlu0 %v3404, 127
    %v4059 = vpop.permute.xlu0 %4058
    %4060 = vrot.lane.b32.xlu0 %v3405, 127
    %v4061 = vpop.permute.xlu0 %4060
    %v4062 = vsel %vm548, %v4059, %v4061
    %v4063 = vsel %vm548, %v4061, %v4059
    %s4064 = sld [smem:[#allocation2 + $0x19]]
    %v4065 = vstv %s4064
    %v4066 = vmul.f32 %v4062, %v4065
    %v4067 = vmul.f32 %v4063, %v4065
    %4068 = vrot.lane.b32.xlu0 %v3414, 127
    %v4069 = vpop.permute.xlu0 %4068
    %4070 = vrot.lane.b32.xlu0 %v3423, 127
    %v4071 = vpop.permute.xlu0 %4070
    %v4072 = vsel %vm548, %v4069, %v4071
    %v4073 = vsel %vm548, %v4071, %v4069
    %s4074 = sld [smem:[#allocation2 + $0x99]]
    %v4075 = vstv %s4074
    %v4076 = vmul.f32 %v4072, %v4075
    %v4077 = vmul.f32 %v4073, %v4075
    %v4078 = vadd.f32 %v4066, %v4076
    %v4079 = vadd.f32 %v4067, %v4077
    %v4080 = vsel %vm59, %v4078, 0.0
    %v4081 = vsel %vm60, %v4079, 0.0
    %v4082 = vadd.f32 %v4056, %v4080
    %v4083 = vadd.f32 %v4057, %v4081
    %4084 = vrot.lane.b32.xlu0 %v3404, 126
    %v4085 = vpop.permute.xlu0 %4084
    %4086 = vrot.lane.b32.xlu0 %v3405, 126
    %v4087 = vpop.permute.xlu0 %4086
    %v4088 = vsel %vm1971, %v4085, %v4087
    %v4089 = vsel %vm1971, %v4087, %v4085
    %s4090 = sld [smem:[#allocation2 + $0x1a]]
    %v4091 = vstv %s4090
    %v4092 = vmul.f32 %v4088, %v4091
    %v4093 = vmul.f32 %v4089, %v4091
    %4094 = vrot.lane.b32.xlu0 %v3414, 126
    %v4095 = vpop.permute.xlu0 %4094
    %4096 = vrot.lane.b32.xlu0 %v3423, 126
    %v4097 = vpop.permute.xlu0 %4096
    %v4098 = vsel %vm1971, %v4095, %v4097
    %v4099 = vsel %vm1971, %v4097, %v4095
    %s4100 = sld [smem:[#allocation2 + $0x9a]]
    %v4101 = vstv %s4100
    %v4102 = vmul.f32 %v4098, %v4101
    %v4103 = vmul.f32 %v4099, %v4101
    %v4104 = vadd.f32 %v4092, %v4102
    %v4105 = vadd.f32 %v4093, %v4103
    %v4106 = vsel %vm83, %v4104, 0.0
    %v4107 = vsel %vm84, %v4105, 0.0
    %v4108 = vadd.f32 %v4082, %v4106
    %v4109 = vadd.f32 %v4083, %v4107
    %4110 = vrot.lane.b32.xlu0 %v3404, 125
    %v4111 = vpop.permute.xlu0 %4110
    %4112 = vrot.lane.b32.xlu0 %v3405, 125
    %v4113 = vpop.permute.xlu0 %4112
    %v4114 = vsel %vm1998, %v4111, %v4113
    %v4115 = vsel %vm1998, %v4113, %v4111
    %s4116 = sld [smem:[#allocation2 + $0x1b]]
    %v4117 = vstv %s4116
    %v4118 = vmul.f32 %v4114, %v4117
    %v4119 = vmul.f32 %v4115, %v4117
    %4120 = vrot.lane.b32.xlu0 %v3414, 125
    %v4121 = vpop.permute.xlu0 %4120
    %4122 = vrot.lane.b32.xlu0 %v3423, 125
    %v4123 = vpop.permute.xlu0 %4122
    %v4124 = vsel %vm1998, %v4121, %v4123
    %v4125 = vsel %vm1998, %v4123, %v4121
    %s4126 = sld [smem:[#allocation2 + $0x9b]]
    %v4127 = vstv %s4126
    %v4128 = vmul.f32 %v4124, %v4127
    %v4129 = vmul.f32 %v4125, %v4127
    %v4130 = vadd.f32 %v4118, %v4128
    %v4131 = vadd.f32 %v4119, %v4129
    %v4132 = vsel %vm87, %v4130, 0.0
    %v4133 = vsel %vm88, %v4131, 0.0
    %v4134 = vadd.f32 %v4108, %v4132
    %v4135 = vadd.f32 %v4109, %v4133
    %4136 = vrot.lane.b32.xlu0 %v3404, 115
    %v4137 = vpop.permute.xlu0 %4136
    %4138 = vrot.lane.b32.xlu0 %v3405, 115
    %v4139 = vpop.permute.xlu0 %4138
    %v4140 = vsel %vm2025, %v4137, %v4139
    %v4141 = vsel %vm2025, %v4139, %v4137
    %s4142 = sld [smem:[#allocation2 + $0x1c]]
    %v4143 = vstv %s4142
    %v4144 = vmul.f32 %v4140, %v4143
    %v4145 = vmul.f32 %v4141, %v4143
    %4146 = vrot.lane.b32.xlu0 %v3414, 115
    %v4147 = vpop.permute.xlu0 %4146
    %4148 = vrot.lane.b32.xlu0 %v3423, 115
    %v4149 = vpop.permute.xlu0 %4148
    %v4150 = vsel %vm2025, %v4147, %v4149
    %v4151 = vsel %vm2025, %v4149, %v4147
    %s4152 = sld [smem:[#allocation2 + $0x9c]]
    %v4153 = vstv %s4152
    %v4154 = vmul.f32 %v4150, %v4153
    %v4155 = vmul.f32 %v4151, %v4153
    %v4156 = vadd.f32 %v4144, %v4154
    %v4157 = vadd.f32 %v4145, %v4155
    %v4158 = vsel %vm113, %v4156, 0.0
    %v4159 = vsel %vm114, %v4157, 0.0
    %v4160 = vadd.f32 %v4134, %v4158
    %v4161 = vadd.f32 %v4135, %v4159
    %4162 = vrot.lane.b32.xlu0 %v3404, 114
    %v4163 = vpop.permute.xlu0 %4162
    %4164 = vrot.lane.b32.xlu0 %v3405, 114
    %v4165 = vpop.permute.xlu0 %4164
    %v4166 = vsel %vm2052, %v4163, %v4165
    %v4167 = vsel %vm2052, %v4165, %v4163
    %s4168 = sld [smem:[#allocation2 + $0x1d]]
    %v4169 = vstv %s4168
    %v4170 = vmul.f32 %v4166, %v4169
    %v4171 = vmul.f32 %v4167, %v4169
    %4172 = vrot.lane.b32.xlu0 %v3414, 114
    %v4173 = vpop.permute.xlu0 %4172
    %4174 = vrot.lane.b32.xlu0 %v3423, 114
    %v4175 = vpop.permute.xlu0 %4174
    %v4176 = vsel %vm2052, %v4173, %v4175
    %v4177 = vsel %vm2052, %v4175, %v4173
    %s4178 = sld [smem:[#allocation2 + $0x9d]]
    %v4179 = vstv %s4178
    %v4180 = vmul.f32 %v4176, %v4179
    %v4181 = vmul.f32 %v4177, %v4179
    %v4182 = vadd.f32 %v4170, %v4180
    %v4183 = vadd.f32 %v4171, %v4181
    %v4184 = vsel %vm115, %v4182, 0.0
    %v4185 = vsel %vm116, %v4183, 0.0
    %v4186 = vadd.f32 %v4160, %v4184
    %v4187 = vadd.f32 %v4161, %v4185
    %4188 = vrot.lane.b32.xlu0 %v3404, 113
    %v4189 = vpop.permute.xlu0 %4188
    %4190 = vrot.lane.b32.xlu0 %v3405, 113
    %v4191 = vpop.permute.xlu0 %4190
    %v4192 = vsel %vm621, %v4189, %v4191
    %v4193 = vsel %vm621, %v4191, %v4189
    %s4194 = sld [smem:[#allocation2 + $0x1e]]
    %v4195 = vstv %s4194
    %v4196 = vmul.f32 %v4192, %v4195
    %v4197 = vmul.f32 %v4193, %v4195
    %4198 = vrot.lane.b32.xlu0 %v3414, 113
    %v4199 = vpop.permute.xlu0 %4198
    %4200 = vrot.lane.b32.xlu0 %v3423, 113
    %v4201 = vpop.permute.xlu0 %4200
    %v4202 = vsel %vm621, %v4199, %v4201
    %v4203 = vsel %vm621, %v4201, %v4199
    %s4204 = sld [smem:[#allocation2 + $0x9e]]
    %v4205 = vstv %s4204
    %v4206 = vmul.f32 %v4202, %v4205
    %v4207 = vmul.f32 %v4203, %v4205
    %v4208 = vadd.f32 %v4196, %v4206
    %v4209 = vadd.f32 %v4197, %v4207
    %v4210 = vsel %vm65, %v4208, 0.0
    %v4211 = vsel %vm66, %v4209, 0.0
    %v4212 = vadd.f32 %v4186, %v4210
    %v4213 = vadd.f32 %v4187, %v4211
    %4214 = vrot.lane.b32.xlu0 %v3404, 112
    %v4215 = vpop.permute.xlu0 %4214
    %4216 = vrot.lane.b32.xlu0 %v3405, 112
    %v4217 = vpop.permute.xlu0 %4216
    %v4218 = vsel %vm694, %v4215, %v4217
    %v4219 = vsel %vm694, %v4217, %v4215
    %s4220 = sld [smem:[#allocation2 + $0x1f]]
    %v4221 = vstv %s4220
    %v4222 = vmul.f32 %v4218, %v4221
    %v4223 = vmul.f32 %v4219, %v4221
    %4224 = vrot.lane.b32.xlu0 %v3414, 112
    %v4225 = vpop.permute.xlu0 %4224
    %4226 = vrot.lane.b32.xlu0 %v3423, 112
    %v4227 = vpop.permute.xlu0 %4226
    %v4228 = vsel %vm694, %v4225, %v4227
    %v4229 = vsel %vm694, %v4227, %v4225
    %s4230 = sld [smem:[#allocation2 + $0x9f]]
    %v4231 = vstv %s4230
    %v4232 = vmul.f32 %v4228, %v4231
    %v4233 = vmul.f32 %v4229, %v4231
    %v4234 = vadd.f32 %v4222, %v4232
    %v4235 = vadd.f32 %v4223, %v4233
    %v4236 = vsel %vm63, %v4234, 0.0
    %v4237 = vsel %vm64, %v4235, 0.0
    %v4238 = vadd.f32 %v4212, %v4236
    %v4239 = vadd.f32 %v4213, %v4237
    %4240 = vrot.lane.b32.xlu0 %v3404, 111
    %v4241 = vpop.permute.xlu0 %4240
    %4242 = vrot.lane.b32.xlu0 %v3405, 111
    %v4243 = vpop.permute.xlu0 %4242
    %v4244 = vsel %vm767, %v4241, %v4243
    %v4245 = vsel %vm767, %v4243, %v4241
    %s4246 = sld [smem:[#allocation2 + $0x20]]
    %v4247 = vstv %s4246
    %v4248 = vmul.f32 %v4244, %v4247
    %v4249 = vmul.f32 %v4245, %v4247
    %4250 = vrot.lane.b32.xlu0 %v3414, 111
    %v4251 = vpop.permute.xlu0 %4250
    %4252 = vrot.lane.b32.xlu0 %v3423, 111
    %v4253 = vpop.permute.xlu0 %4252
    %v4254 = vsel %vm767, %v4251, %v4253
    %v4255 = vsel %vm767, %v4253, %v4251
    %s4256 = sld [smem:[#allocation2 + $0xa0]]
    %v4257 = vstv %s4256
    %v4258 = vmul.f32 %v4254, %v4257
    %v4259 = vmul.f32 %v4255, %v4257
    %v4260 = vadd.f32 %v4248, %v4258
    %v4261 = vadd.f32 %v4249, %v4259
    %v4262 = vsel %vm67, %v4260, 0.0
    %v4263 = vsel %vm68, %v4261, 0.0
    %v4264 = vadd.f32 %v4238, %v4262
    %v4265 = vadd.f32 %v4239, %v4263
    %4266 = vrot.lane.b32.xlu0 %v3404, 110
    %v4267 = vpop.permute.xlu0 %4266
    %4268 = vrot.lane.b32.xlu0 %v3405, 110
    %v4269 = vpop.permute.xlu0 %4268
    %v4270 = vsel %vm2157, %v4267, %v4269
    %v4271 = vsel %vm2157, %v4269, %v4267
    %s4272 = sld [smem:[#allocation2 + $0x21]]
    %v4273 = vstv %s4272
    %v4274 = vmul.f32 %v4270, %v4273
    %v4275 = vmul.f32 %v4271, %v4273
    %4276 = vrot.lane.b32.xlu0 %v3414, 110
    %v4277 = vpop.permute.xlu0 %4276
    %4278 = vrot.lane.b32.xlu0 %v3423, 110
    %v4279 = vpop.permute.xlu0 %4278
    %v4280 = vsel %vm2157, %v4277, %v4279
    %v4281 = vsel %vm2157, %v4279, %v4277
    %s4282 = sld [smem:[#allocation2 + $0xa1]]
    %v4283 = vstv %s4282
    %v4284 = vmul.f32 %v4280, %v4283
    %v4285 = vmul.f32 %v4281, %v4283
    %v4286 = vadd.f32 %v4274, %v4284
    %v4287 = vadd.f32 %v4275, %v4285
    %v4288 = vsel %vm117, %v4286, 0.0
    %v4289 = vsel %vm118, %v4287, 0.0
    %v4290 = vadd.f32 %v4264, %v4288
    %v4291 = vadd.f32 %v4265, %v4289
    %4292 = vrot.lane.b32.xlu0 %v3404, 109
    %v4293 = vpop.permute.xlu0 %4292
    %4294 = vrot.lane.b32.xlu0 %v3405, 109
    %v4295 = vpop.permute.xlu0 %4294
    %v4296 = vsel %vm2184, %v4293, %v4295
    %v4297 = vsel %vm2184, %v4295, %v4293
    %s4298 = sld [smem:[#allocation2 + $0x22]]
    %v4299 = vstv %s4298
    %v4300 = vmul.f32 %v4296, %v4299
    %v4301 = vmul.f32 %v4297, %v4299
    %4302 = vrot.lane.b32.xlu0 %v3414, 109
    %v4303 = vpop.permute.xlu0 %4302
    %4304 = vrot.lane.b32.xlu0 %v3423, 109
    %v4305 = vpop.permute.xlu0 %4304
    %v4306 = vsel %vm2184, %v4303, %v4305
    %v4307 = vsel %vm2184, %v4305, %v4303
    %s4308 = sld [smem:[#allocation2 + $0xa2]]
    %v4309 = vstv %s4308
    %v4310 = vmul.f32 %v4306, %v4309
    %v4311 = vmul.f32 %v4307, %v4309
    %v4312 = vadd.f32 %v4300, %v4310
    %v4313 = vadd.f32 %v4301, %v4311
    %v4314 = vsel %vm119, %v4312, 0.0
    %v4315 = vsel %vm120, %v4313, 0.0
    %v4316 = vadd.f32 %v4290, %v4314
    %v4317 = vadd.f32 %v4291, %v4315
    %4318 = vrot.lane.b32.xlu0 %v3404, 99
    %v4319 = vpop.permute.xlu0 %4318
    %4320 = vrot.lane.b32.xlu0 %v3405, 99
    %v4321 = vpop.permute.xlu0 %4320
    %v4322 = vsel %vm2211, %v4319, %v4321
    %v4323 = vsel %vm2211, %v4321, %v4319
    %s4324 = sld [smem:[#allocation2 + $0x23]]
    %v4325 = vstv %s4324
    %v4326 = vmul.f32 %v4322, %v4325
    %v4327 = vmul.f32 %v4323, %v4325
    %4328 = vrot.lane.b32.xlu0 %v3414, 99
    %v4329 = vpop.permute.xlu0 %4328
    %4330 = vrot.lane.b32.xlu0 %v3423, 99
    %v4331 = vpop.permute.xlu0 %4330
    %v4332 = vsel %vm2211, %v4329, %v4331
    %v4333 = vsel %vm2211, %v4331, %v4329
    %s4334 = sld [smem:[#allocation2 + $0xa3]]
    %v4335 = vstv %s4334
    %v4336 = vmul.f32 %v4332, %v4335
    %v4337 = vmul.f32 %v4333, %v4335
    %v4338 = vadd.f32 %v4326, %v4336
    %v4339 = vadd.f32 %v4327, %v4337
    %v4340 = vsel %vm123, %v4338, 0.0
    %v4341 = vsel %vm124, %v4339, 0.0
    %v4342 = vadd.f32 %v4316, %v4340
    %v4343 = vadd.f32 %v4317, %v4341
    %4344 = vrot.lane.b32.xlu0 %v3404, 98
    %v4345 = vpop.permute.xlu0 %4344
    %4346 = vrot.lane.b32.xlu0 %v3405, 98
    %v4347 = vpop.permute.xlu0 %4346
    %v4348 = vsel %vm2238, %v4345, %v4347
    %v4349 = vsel %vm2238, %v4347, %v4345
    %s4350 = sld [smem:[#allocation2 + $0x24]]
    %v4351 = vstv %s4350
    %v4352 = vmul.f32 %v4348, %v4351
    %v4353 = vmul.f32 %v4349, %v4351
    %4354 = vrot.lane.b32.xlu0 %v3414, 98
    %v4355 = vpop.permute.xlu0 %4354
    %4356 = vrot.lane.b32.xlu0 %v3423, 98
    %v4357 = vpop.permute.xlu0 %4356
    %v4358 = vsel %vm2238, %v4355, %v4357
    %v4359 = vsel %vm2238, %v4357, %v4355
    %s4360 = sld [smem:[#allocation2 + $0xa4]]
    %v4361 = vstv %s4360
    %v4362 = vmul.f32 %v4358, %v4361
    %v4363 = vmul.f32 %v4359, %v4361
    %v4364 = vadd.f32 %v4352, %v4362
    %v4365 = vadd.f32 %v4353, %v4363
    %v4366 = vsel %vm125, %v4364, 0.0
    %v4367 = vsel %vm126, %v4365, 0.0
    %v4368 = vadd.f32 %v4342, %v4366
    %v4369 = vadd.f32 %v4343, %v4367
    %4370 = vrot.lane.b32.xlu0 %v3404, 97
    %v4371 = vpop.permute.xlu0 %4370
    %4372 = vrot.lane.b32.xlu0 %v3405, 97
    %v4373 = vpop.permute.xlu0 %4372
    %v4374 = vsel %vm2265, %v4371, %v4373
    %v4375 = vsel %vm2265, %v4373, %v4371
    %s4376 = sld [smem:[#allocation2 + $0x25]]
    %v4377 = vstv %s4376
    %v4378 = vmul.f32 %v4374, %v4377
    %v4379 = vmul.f32 %v4375, %v4377
    %4380 = vrot.lane.b32.xlu0 %v3414, 97
    %v4381 = vpop.permute.xlu0 %4380
    %4382 = vrot.lane.b32.xlu0 %v3423, 97
    %v4383 = vpop.permute.xlu0 %4382
    %v4384 = vsel %vm2265, %v4381, %v4383
    %v4385 = vsel %vm2265, %v4383, %v4381
    %s4386 = sld [smem:[#allocation2 + $0xa5]]
    %v4387 = vstv %s4386
    %v4388 = vmul.f32 %v4384, %v4387
    %v4389 = vmul.f32 %v4385, %v4387
    %v4390 = vadd.f32 %v4378, %v4388
    %v4391 = vadd.f32 %v4379, %v4389
    %v4392 = vsel %vm127, %v4390, 0.0
    %v4393 = vsel %vm128, %v4391, 0.0
    %v4394 = vadd.f32 %v4368, %v4392
    %v4395 = vadd.f32 %v4369, %v4393
    %4396 = vrot.lane.b32.xlu0 %v3404, 96
    %v4397 = vpop.permute.xlu0 %4396
    %4398 = vrot.lane.b32.xlu0 %v3405, 96
    %v4399 = vpop.permute.xlu0 %4398
    %v4400 = vsel %vm2292, %v4397, %v4399
    %v4401 = vsel %vm2292, %v4399, %v4397
    %s4402 = sld [smem:[#allocation2 + $0x26]]
    %v4403 = vstv %s4402
    %v4404 = vmul.f32 %v4400, %v4403
    %v4405 = vmul.f32 %v4401, %v4403
    %4406 = vrot.lane.b32.xlu0 %v3414, 96
    %v4407 = vpop.permute.xlu0 %4406
    %4408 = vrot.lane.b32.xlu0 %v3423, 96
    %v4409 = vpop.permute.xlu0 %4408
    %v4410 = vsel %vm2292, %v4407, %v4409
    %v4411 = vsel %vm2292, %v4409, %v4407
    %s4412 = sld [smem:[#allocation2 + $0xa6]]
    %v4413 = vstv %s4412
    %v4414 = vmul.f32 %v4410, %v4413
    %v4415 = vmul.f32 %v4411, %v4413
    %v4416 = vadd.f32 %v4404, %v4414
    %v4417 = vadd.f32 %v4405, %v4415
    %v4418 = vsel %vm121, %v4416, 0.0
    %v4419 = vsel %vm122, %v4417, 0.0
    %v4420 = vadd.f32 %v4394, %v4418
    %v4421 = vadd.f32 %v4395, %v4419
    %4422 = vrot.lane.b32.xlu0 %v3404, 95
    %v4423 = vpop.permute.xlu0 %4422
    %4424 = vrot.lane.b32.xlu0 %v3405, 95
    %v4425 = vpop.permute.xlu0 %4424
    %v4426 = vsel %vm2319, %v4423, %v4425
    %v4427 = vsel %vm2319, %v4425, %v4423
    %s4428 = sld [smem:[#allocation2 + $0x27]]
    %v4429 = vstv %s4428
    %v4430 = vmul.f32 %v4426, %v4429
    %v4431 = vmul.f32 %v4427, %v4429
    %4432 = vrot.lane.b32.xlu0 %v3414, 95
    %v4433 = vpop.permute.xlu0 %4432
    %4434 = vrot.lane.b32.xlu0 %v3423, 95
    %v4435 = vpop.permute.xlu0 %4434
    %v4436 = vsel %vm2319, %v4433, %v4435
    %v4437 = vsel %vm2319, %v4435, %v4433
    %s4438 = sld [smem:[#allocation2 + $0xa7]]
    %v4439 = vstv %s4438
    %v4440 = vmul.f32 %v4436, %v4439
    %v4441 = vmul.f32 %v4437, %v4439
    %v4442 = vadd.f32 %v4430, %v4440
    %v4443 = vadd.f32 %v4431, %v4441
    %v4444 = vsel %vm129, %v4442, 0.0
    %v4445 = vsel %vm130, %v4443, 0.0
    %v4446 = vadd.f32 %v4420, %v4444
    %v4447 = vadd.f32 %v4421, %v4445
    %4448 = vrot.lane.b32.xlu0 %v3404, 94
    %v4449 = vpop.permute.xlu0 %4448
    %4450 = vrot.lane.b32.xlu0 %v3405, 94
    %v4451 = vpop.permute.xlu0 %4450
    %v4452 = vsel %vm2346, %v4449, %v4451
    %v4453 = vsel %vm2346, %v4451, %v4449
    %s4454 = sld [smem:[#allocation2 + $0x28]]
    %v4455 = vstv %s4454
    %v4456 = vmul.f32 %v4452, %v4455
    %v4457 = vmul.f32 %v4453, %v4455
    %4458 = vrot.lane.b32.xlu0 %v3414, 94
    %v4459 = vpop.permute.xlu0 %4458
    %4460 = vrot.lane.b32.xlu0 %v3423, 94
    %v4461 = vpop.permute.xlu0 %4460
    %v4462 = vsel %vm2346, %v4459, %v4461
    %v4463 = vsel %vm2346, %v4461, %v4459
    %s4464 = sld [smem:[#allocation2 + $0xa8]]
    %v4465 = vstv %s4464
    %v4466 = vmul.f32 %v4462, %v4465
    %v4467 = vmul.f32 %v4463, %v4465
    %v4468 = vadd.f32 %v4456, %v4466
    %v4469 = vadd.f32 %v4457, %v4467
    %v4470 = vsel %vm131, %v4468, 0.0
    %v4471 = vsel %vm132, %v4469, 0.0
    %v4472 = vadd.f32 %v4446, %v4470
    %v4473 = vadd.f32 %v4447, %v4471
    %4474 = vrot.lane.b32.xlu0 %v3404, 93
    %v4475 = vpop.permute.xlu0 %4474
    %4476 = vrot.lane.b32.xlu0 %v3405, 93
    %v4477 = vpop.permute.xlu0 %4476
    %v4478 = vsel %vm2373, %v4475, %v4477
    %v4479 = vsel %vm2373, %v4477, %v4475
    %s4480 = sld [smem:[#allocation2 + $0x29]]
    %v4481 = vstv %s4480
    %v4482 = vmul.f32 %v4478, %v4481
    %v4483 = vmul.f32 %v4479, %v4481
    %4484 = vrot.lane.b32.xlu0 %v3414, 93
    %v4485 = vpop.permute.xlu0 %4484
    %4486 = vrot.lane.b32.xlu0 %v3423, 93
    %v4487 = vpop.permute.xlu0 %4486
    %v4488 = vsel %vm2373, %v4485, %v4487
    %v4489 = vsel %vm2373, %v4487, %v4485
    %s4490 = sld [smem:[#allocation2 + $0xa9]]
    %v4491 = vstv %s4490
    %v4492 = vmul.f32 %v4488, %v4491
    %v4493 = vmul.f32 %v4489, %v4491
    %v4494 = vadd.f32 %v4482, %v4492
    %v4495 = vadd.f32 %v4483, %v4493
    %v4496 = vsel %vm133, %v4494, 0.0
    %v4497 = vsel %vm134, %v4495, 0.0
    %v4498 = vadd.f32 %v4472, %v4496
    %v4499 = vadd.f32 %v4473, %v4497
    %4500 = vrot.lane.b32.xlu0 %v3404, 83
    %v4501 = vpop.permute.xlu0 %4500
    %4502 = vrot.lane.b32.xlu0 %v3405, 83
    %v4503 = vpop.permute.xlu0 %4502
    %v4504 = vsel %vm2400, %v4501, %v4503
    %v4505 = vsel %vm2400, %v4503, %v4501
    %s4506 = sld [smem:[#allocation2 + $0x2a]]
    %v4507 = vstv %s4506
    %v4508 = vmul.f32 %v4504, %v4507
    %v4509 = vmul.f32 %v4505, %v4507
    %4510 = vrot.lane.b32.xlu0 %v3414, 83
    %v4511 = vpop.permute.xlu0 %4510
    %4512 = vrot.lane.b32.xlu0 %v3423, 83
    %v4513 = vpop.permute.xlu0 %4512
    %v4514 = vsel %vm2400, %v4511, %v4513
    %v4515 = vsel %vm2400, %v4513, %v4511
    %s4516 = sld [smem:[#allocation2 + $0xaa]]
    %v4517 = vstv %s4516
    %v4518 = vmul.f32 %v4514, %v4517
    %v4519 = vmul.f32 %v4515, %v4517
    %v4520 = vadd.f32 %v4508, %v4518
    %v4521 = vadd.f32 %v4509, %v4519
    %v4522 = vsel %vm137, %v4520, 0.0
    %v4523 = vsel %vm138, %v4521, 0.0
    %v4524 = vadd.f32 %v4498, %v4522
    %v4525 = vadd.f32 %v4499, %v4523
    %4526 = vrot.lane.b32.xlu0 %v3404, 82
    %v4527 = vpop.permute.xlu0 %4526
    %4528 = vrot.lane.b32.xlu0 %v3405, 82
    %v4529 = vpop.permute.xlu0 %4528
    %v4530 = vsel %vm2427, %v4527, %v4529
    %v4531 = vsel %vm2427, %v4529, %v4527
    %s4532 = sld [smem:[#allocation2 + $0x2b]]
    %v4533 = vstv %s4532
    %v4534 = vmul.f32 %v4530, %v4533
    %v4535 = vmul.f32 %v4531, %v4533
    %4536 = vrot.lane.b32.xlu0 %v3414, 82
    %v4537 = vpop.permute.xlu0 %4536
    %4538 = vrot.lane.b32.xlu0 %v3423, 82
    %v4539 = vpop.permute.xlu0 %4538
    %v4540 = vsel %vm2427, %v4537, %v4539
    %v4541 = vsel %vm2427, %v4539, %v4537
    %s4542 = sld [smem:[#allocation2 + $0xab]]
    %v4543 = vstv %s4542
    %v4544 = vmul.f32 %v4540, %v4543
    %v4545 = vmul.f32 %v4541, %v4543
    %v4546 = vadd.f32 %v4534, %v4544
    %v4547 = vadd.f32 %v4535, %v4545
    %v4548 = vsel %vm139, %v4546, 0.0
    %v4549 = vsel %vm140, %v4547, 0.0
    %v4550 = vadd.f32 %v4524, %v4548
    %v4551 = vadd.f32 %v4525, %v4549
    %4552 = vrot.lane.b32.xlu0 %v3404, 81
    %v4553 = vpop.permute.xlu0 %4552
    %4554 = vrot.lane.b32.xlu0 %v3405, 81
    %v4555 = vpop.permute.xlu0 %4554
    %v4556 = vsel %vm2454, %v4553, %v4555
    %v4557 = vsel %vm2454, %v4555, %v4553
    %s4558 = sld [smem:[#allocation2 + $0x2c]]
    %v4559 = vstv %s4558
    %v4560 = vmul.f32 %v4556, %v4559
    %v4561 = vmul.f32 %v4557, %v4559
    %4562 = vrot.lane.b32.xlu0 %v3414, 81
    %v4563 = vpop.permute.xlu0 %4562
    %4564 = vrot.lane.b32.xlu0 %v3423, 81
    %v4565 = vpop.permute.xlu0 %4564
    %v4566 = vsel %vm2454, %v4563, %v4565
    %v4567 = vsel %vm2454, %v4565, %v4563
    %s4568 = sld [smem:[#allocation2 + $0xac]]
    %v4569 = vstv %s4568
    %v4570 = vmul.f32 %v4566, %v4569
    %v4571 = vmul.f32 %v4567, %v4569
    %v4572 = vadd.f32 %v4560, %v4570
    %v4573 = vadd.f32 %v4561, %v4571
    %v4574 = vsel %vm141, %v4572, 0.0
    %v4575 = vsel %vm142, %v4573, 0.0
    %v4576 = vadd.f32 %v4550, %v4574
    %v4577 = vadd.f32 %v4551, %v4575
    %4578 = vrot.lane.b32.xlu0 %v3404, 80
    %v4579 = vpop.permute.xlu0 %4578
    %4580 = vrot.lane.b32.xlu0 %v3405, 80
    %v4581 = vpop.permute.xlu0 %4580
    %v4582 = vsel %vm2481, %v4579, %v4581
    %v4583 = vsel %vm2481, %v4581, %v4579
    %s4584 = sld [smem:[#allocation2 + $0x2d]]
    %v4585 = vstv %s4584
    %v4586 = vmul.f32 %v4582, %v4585
    %v4587 = vmul.f32 %v4583, %v4585
    %4588 = vrot.lane.b32.xlu0 %v3414, 80
    %v4589 = vpop.permute.xlu0 %4588
    %4590 = vrot.lane.b32.xlu0 %v3423, 80
    %v4591 = vpop.permute.xlu0 %4590
    %v4592 = vsel %vm2481, %v4589, %v4591
    %v4593 = vsel %vm2481, %v4591, %v4589
    %s4594 = sld [smem:[#allocation2 + $0xad]]
    %v4595 = vstv %s4594
    %v4596 = vmul.f32 %v4592, %v4595
    %v4597 = vmul.f32 %v4593, %v4595
    %v4598 = vadd.f32 %v4586, %v4596
    %v4599 = vadd.f32 %v4587, %v4597
    %v4600 = vsel %vm135, %v4598, 0.0
    %v4601 = vsel %vm136, %v4599, 0.0
    %v4602 = vadd.f32 %v4576, %v4600
    %v4603 = vadd.f32 %v4577, %v4601
    %4604 = vrot.lane.b32.xlu0 %v3404, 79
    %v4605 = vpop.permute.xlu0 %4604
    %4606 = vrot.lane.b32.xlu0 %v3405, 79
    %v4607 = vpop.permute.xlu0 %4606
    %v4608 = vsel %vm2508, %v4605, %v4607
    %v4609 = vsel %vm2508, %v4607, %v4605
    %s4610 = sld [smem:[#allocation2 + $0x2e]]
    %v4611 = vstv %s4610
    %v4612 = vmul.f32 %v4608, %v4611
    %v4613 = vmul.f32 %v4609, %v4611
    %4614 = vrot.lane.b32.xlu0 %v3414, 79
    %v4615 = vpop.permute.xlu0 %4614
    %4616 = vrot.lane.b32.xlu0 %v3423, 79
    %v4617 = vpop.permute.xlu0 %4616
    %v4618 = vsel %vm2508, %v4615, %v4617
    %v4619 = vsel %vm2508, %v4617, %v4615
    %s4620 = sld [smem:[#allocation2 + $0xae]]
    %v4621 = vstv %s4620
    %v4622 = vmul.f32 %v4618, %v4621
    %v4623 = vmul.f32 %v4619, %v4621
    %v4624 = vadd.f32 %v4612, %v4622
    %v4625 = vadd.f32 %v4613, %v4623
    %v4626 = vsel %vm143, %v4624, 0.0
    %v4627 = vsel %vm144, %v4625, 0.0
    %v4628 = vadd.f32 %v4602, %v4626
    %v4629 = vadd.f32 %v4603, %v4627
    %4630 = vrot.lane.b32.xlu0 %v3404, 78
    %v4631 = vpop.permute.xlu0 %4630
    %4632 = vrot.lane.b32.xlu0 %v3405, 78
    %v4633 = vpop.permute.xlu0 %4632
    %v4634 = vsel %vm2535, %v4631, %v4633
    %v4635 = vsel %vm2535, %v4633, %v4631
    %s4636 = sld [smem:[#allocation2 + $0x2f]]
    %v4637 = vstv %s4636
    %v4638 = vmul.f32 %v4634, %v4637
    %v4639 = vmul.f32 %v4635, %v4637
    %4640 = vrot.lane.b32.xlu0 %v3414, 78
    %v4641 = vpop.permute.xlu0 %4640
    %4642 = vrot.lane.b32.xlu0 %v3423, 78
    %v4643 = vpop.permute.xlu0 %4642
    %v4644 = vsel %vm2535, %v4641, %v4643
    %v4645 = vsel %vm2535, %v4643, %v4641
    %s4646 = sld [smem:[#allocation2 + $0xaf]]
    %v4647 = vstv %s4646
    %v4648 = vmul.f32 %v4644, %v4647
    %v4649 = vmul.f32 %v4645, %v4647
    %v4650 = vadd.f32 %v4638, %v4648
    %v4651 = vadd.f32 %v4639, %v4649
    %v4652 = vsel %vm145, %v4650, 0.0
    %v4653 = vsel %vm146, %v4651, 0.0
    %v4654 = vadd.f32 %v4628, %v4652
    %v4655 = vadd.f32 %v4629, %v4653
    %4656 = vrot.lane.b32.xlu0 %v3404, 77
    %v4657 = vpop.permute.xlu0 %4656
    %4658 = vrot.lane.b32.xlu0 %v3405, 77
    %v4659 = vpop.permute.xlu0 %4658
    %v4660 = vsel %vm2562, %v4657, %v4659
    %v4661 = vsel %vm2562, %v4659, %v4657
    %s4662 = sld [smem:[#allocation2 + $0x30]]
    %v4663 = vstv %s4662
    %v4664 = vmul.f32 %v4660, %v4663
    %v4665 = vmul.f32 %v4661, %v4663
    %4666 = vrot.lane.b32.xlu0 %v3414, 77
    %v4667 = vpop.permute.xlu0 %4666
    %4668 = vrot.lane.b32.xlu0 %v3423, 77
    %v4669 = vpop.permute.xlu0 %4668
    %v4670 = vsel %vm2562, %v4667, %v4669
    %v4671 = vsel %vm2562, %v4669, %v4667
    %s4672 = sld [smem:[#allocation2 + $0xb0]]
    %v4673 = vstv %s4672
    %v4674 = vmul.f32 %v4670, %v4673
    %v4675 = vmul.f32 %v4671, %v4673
    %v4676 = vadd.f32 %v4664, %v4674
    %v4677 = vadd.f32 %v4665, %v4675
    %v4678 = vsel %vm147, %v4676, 0.0
    %v4679 = vsel %vm148, %v4677, 0.0
    %v4680 = vadd.f32 %v4654, %v4678
    %v4681 = vadd.f32 %v4655, %v4679
    %v4682 = vxor.u32 %v4680, 2147483648
    %v4683 = vxor.u32 %v4681, 2147483648
    %v4684 = vmul.f32 %v4682, 1.442695
    %v4685 = vpow.pop %v4684
    %v4686 = vmul.f32 %v4683, 1.442695
    %v4687 = vpow.pop %v4686
    %v4688 = vadd.f32 %v4685, 1.0
    %v4689 = vadd.f32 %v4687, 1.0
    %v4690 = vrcp.pop %v4688
    %v4691 = vmul.f32 1.0, %v4690
    %v4692 = vrcp.pop %v4689
    %v4693 = vmul.f32 1.0, %v4692
    %v4694 = vlaneseq
    %v4695 = vshrl.u32 %v4694, 7
    %v4696 = vsub.s32 0, %v4695
    %v4697 = vrot.slane %v4691, %v4696
    %v4698 = vlaneseq
    %v4699 = vshrl.u32 %v4698, 7
    %v4700 = vsub.s32 0, %v4699
    %v4701 = vrot.slane %v4693, %v4700
    %v4702 = vmul.f32 %v3378, %v4697
    %v4703 = vmul.f32 %v3379, %v4701
    %v4704 = vmul.f32 %v3380, %v4697
    %v4705 = vmul.f32 %v3381, %v4701
    %v4706 = vmul.f32 %v3382, %v4697
    %v4707 = vmul.f32 %v3383, %v4701
    %v4708 = vmul.f32 %v3384, %v4697
    %v4709 = vmul.f32 %v3385, %v4701
    %v4710 = vadd.f32 %v4702, %v2638
    %v4711 = vadd.f32 %v4703, %v2639
    %v4712 = vadd.f32 %v4704, %v2640
    %v4713 = vadd.f32 %v4705, %v2641
    %v4714 = vadd.f32 %v4706, %v2642
    %v4715 = vadd.f32 %v4707, %v2643
    %v4716 = vadd.f32 %v4708, %v2644
    %v4717 = vadd.f32 %v4709, %v2645
    %v4718 = vmax.f32 %v4710, 0.0
    %v4719 = vmax.f32 %v4711, 0.0
    %v4720 = vmax.f32 %v4712, 0.0
    %v4721 = vmax.f32 %v4713, 0.0
    %v4722 = vmax.f32 %v4714, 0.0
    %v4723 = vmax.f32 %v4715, 0.0
    %v4724 = vmax.f32 %v4716, 0.0
    %v4725 = vmax.f32 %v4717, 0.0
    %s4726 = scalar_lea.vmem [#allocation5], 64
    %4727 = vst [vmem:[%s4726] sm:$0xff] %v4718
    %4728 = vst [vmem:[%s4726 + $0x8] sm:$0xff] %v4719
    %4729 = vst [vmem:[%s4726 + $0x10] sm:$0xff] %v4720
    %4730 = vst [vmem:[%s4726 + $0x18] sm:$0xff] %v4721
    %4731 = vst [vmem:[%s4726 + $0x20] sm:$0xff] %v4722
    %4732 = vst [vmem:[%s4726 + $0x28] sm:$0xff] %v4723
    %4733 = vst [vmem:[%s4726 + $0x30] sm:$0xff] %v4724
    %4734 = vst [vmem:[%s4726 + $0x38] sm:$0xff] %v4725
    // Predicated region
    $region42: #{tpu_custom_call.1} parent=1 // pred_check
      _
    $region43: #{tpu_custom_call.1} parent=1 // pred_check_branch
      %4736 = sbr.rel (0) target = $region45
    $region44: #{tpu_custom_call.1} parent=1 // pred_region
      %s4738 = ssub.s32 2048, 2048
      %4739 = vsyncadd [#allocation3], %s4738
      %s4740 = sshll.u32 [#allocation5], 4
      %s4741 = int_to_ptr.vmem [resolvable:$true] %s4740
      %4746 = dma.vmem_to_hbm [thread:$0]  %s4741, 2048, %s9, [#allocation3], 256, 256, 16
    $region45: #{tpu_custom_call.1} parent=1 // pred_fallthru
      _
    // Predicated region
    $region46: #{tpu_custom_call.1} parent=1 // pred_check
      _
    $region47: #{tpu_custom_call.1} parent=1 // pred_check_branch
      %4748 = sbr.rel (0) target = $region49
    $region48: #{tpu_custom_call.1} parent=1 // pred_region
      %4749 = dma.done [#allocation3], 2048
    $region49: #{tpu_custom_call.1} parent=1 // pred_fallthru
      _
    %4750 = vsyncpa [#allocation3], 1
    %4751 = vsyncpa [#allocation4], 1

</llo_original>
